<compile_context>
chip_gen: v6e
topology: v6e:2x2x1
jax: 0.10.0
libtpu: 0.0.40
codegen_flags: <defaults>
</compile_context>

<pallas_src>
import functools

import jax
import jax.numpy as jnp
from jax import lax
from jax.experimental import pallas as pl
from jax.experimental.pallas import tpu as pltpu


_PARALLEL = pltpu.CompilerParams(dimension_semantics=("parallel",))


# --------------------------------------------------------------------------- #
# Kernels
# --------------------------------------------------------------------------- #
def _conv3x3_kernel(x_ref, w_ref, b_ref, o_ref):
    """3x3 conv (input pre-padded by 1 on H and W) + bias. NHWC, one batch row."""
    _, H, W, C = o_ref.shape
    x = x_ref[...].astype(jnp.float32)          # (1, H+2, W+2, C)
    w = w_ref[...].astype(jnp.float32)          # (3, 3, Cin, Cout)
    acc = jnp.zeros((H * W, C), jnp.float32)
    for kh in range(3):
        for kw in range(3):
            win = x[0, kh:kh + H, kw:kw + W, :].reshape(H * W, C)
            acc = acc + jnp.dot(win, w[kh, kw],
                                preferred_element_type=jnp.float32)
    acc = acc + b_ref[...].astype(jnp.float32)  # (1, C) broadcasts over rows
    o_ref[...] = acc.reshape(1, H, W, C).astype(o_ref.dtype)


def _convh_lrelu_kernel(x_ref, w_ref, b_ref, o_ref, *, ksize):
    """(K,1,1) Conv3d == conv along H only (input pre-padded), + bias + leaky_relu."""
    _, H, W, C = o_ref.shape
    x = x_ref[...].astype(jnp.float32)          # (1, H+K-1, W, C)
    w = w_ref[...].astype(jnp.float32)          # (K, Cin, Cout)
    acc = jnp.zeros((H * W, C), jnp.float32)
    for k in range(ksize):
        win = x[0, k:k + H, :, :].reshape(H * W, C)
        acc = acc + jnp.dot(win, w[k], preferred_element_type=jnp.float32)
    acc = acc + b_ref[...].astype(jnp.float32)
    acc = jnp.where(acc >= 0, acc, 0.01 * acc)  # F.leaky_relu(negative_slope=0.01)
    o_ref[...] = acc.reshape(1, H, W, C).astype(o_ref.dtype)


def _softmax_fuse_kernel(c3_ref, c5_ref, h_ref, fin_ref, o_ref):
    """F_mid = softmax(c3 + c5, channel);  F_out = F_mid * h + F_in  (channel = lanes)."""
    _, H, W, C = o_ref.shape
    s = (c3_ref[...].astype(jnp.float32) +
         c5_ref[...].astype(jnp.float32)).reshape(H * W, C)
    m = jnp.max(s, axis=-1, keepdims=True)
    e = jnp.exp(s - m)
    p = e / jnp.sum(e, axis=-1, keepdims=True)
    h = h_ref[...].astype(jnp.float32).reshape(H * W, C)
    fin = fin_ref[...].astype(jnp.float32).reshape(H * W, C)
    o_ref[...] = (p * h + fin).reshape(1, H, W, C).astype(o_ref.dtype)


# --------------------------------------------------------------------------- #
# pallas_call wrappers
# --------------------------------------------------------------------------- #
def conv2d_3x3(x, w, b):
    """x: (B,H,W,C) NHWC; w: (3,3,Cin,Cout); b: (Cout,)."""
    B, H, W, C = x.shape
    xp = jnp.pad(x, ((0, 0), (1, 1), (1, 1), (0, 0)))
    return pl.pallas_call(
        _conv3x3_kernel,
        out_shape=jax.ShapeDtypeStruct((B, H, W, C), x.dtype),
        grid=(B,),
        in_specs=[
            pl.BlockSpec((1, H + 2, W + 2, C), lambda i: (i, 0, 0, 0)),
            pl.BlockSpec((3, 3, C, C), lambda i: (0, 0, 0, 0)),
            pl.BlockSpec((1, C), lambda i: (0, 0)),
        ],
        out_specs=pl.BlockSpec((1, H, W, C), lambda i: (i, 0, 0, 0)),
        compiler_params=_PARALLEL,
    )(xp, w, b.reshape(1, C))


def conv_h_lrelu(x, w, b, ksize):
    """Conv along H with kernel `ksize` (pad ksize//2) + bias + leaky_relu. NHWC."""
    B, H, W, C = x.shape
    pad = ksize // 2
    xp = jnp.pad(x, ((0, 0), (pad, pad), (0, 0), (0, 0)))
    return pl.pallas_call(
        functools.partial(_convh_lrelu_kernel, ksize=ksize),
        out_shape=jax.ShapeDtypeStruct((B, H, W, C), x.dtype),
        grid=(B,),
        in_specs=[
            pl.BlockSpec((1, H + 2 * pad, W, C), lambda i: (i, 0, 0, 0)),
            pl.BlockSpec((ksize, C, C), lambda i: (0, 0, 0)),
            pl.BlockSpec((1, C), lambda i: (0, 0)),
        ],
        out_specs=pl.BlockSpec((1, H, W, C), lambda i: (i, 0, 0, 0)),
        compiler_params=_PARALLEL,
    )(xp, w, b.reshape(1, C))


def softmax_gate_residual(c3, c5, h, f_in):
    B, H, W, C = f_in.shape
    bspec = pl.BlockSpec((1, H, W, C), lambda i: (i, 0, 0, 0))
    return pl.pallas_call(
        _softmax_fuse_kernel,
        out_shape=jax.ShapeDtypeStruct((B, H, W, C), f_in.dtype),
        grid=(B,),
        in_specs=[bspec, bspec, bspec, bspec],
        out_specs=bspec,
        compiler_params=_PARALLEL,
    )(c3, c5, h, f_in)


# --------------------------------------------------------------------------- #
# ESAB forward (baseline config)
# --------------------------------------------------------------------------- #
# TODO(synk): only the baseline ESAB path (all optional args flags False) is
# implemented; the dilated-conv+BatchNorm, custom-multiscale+ECA, spefe, rcab
# and NonLocalConvBlock branches are not translated here.
def esab_forward(f_in_nchw, params):
    # NCHW (PyTorch) -> NHWC so the channel/softmax axis is lane-dense.
    x = jnp.transpose(f_in_nchw, (0, 2, 3, 1))

    h = conv2d_3x3(x, params["conv2d1_w"], params["conv2d1_b"])
    h = conv2d_3x3(h, params["conv2d2_w"], params["conv2d2_b"])

    c3 = conv_h_lrelu(h, params["conv3d1_w"], params["conv3d1_b"], 3)
    c3 = conv_h_lrelu(c3, params["conv3d2_w"], params["conv3d2_b"], 3)
    c3 = conv_h_lrelu(c3, params["conv3d3_w"], params["conv3d3_b"], 3)

    c5 = conv_h_lrelu(h, params["conv3d4_w"], params["conv3d4_b"], 5)
    c5 = conv_h_lrelu(c5, params["conv3d5_w"], params["conv3d5_b"], 5)
    c5 = conv_h_lrelu(c5, params["conv3d6_w"], params["conv3d6_b"], 5)

    out = softmax_gate_residual(c3, c5, h, x)
    return jnp.transpose(out, (0, 3, 1, 2))


# --------------------------------------------------------------------------- #
# Pure-JAX reference (for correctness check only)
# --------------------------------------------------------------------------- #
def _ref_conv2d(x, w, b):
    w_oihw = jnp.transpose(w, (3, 2, 0, 1))
    y = lax.conv_general_dilated(
        x, w_oihw, (1, 1), ((1, 1), (1, 1)),
        dimension_numbers=("NCHW", "OIHW", "NCHW"),
        precision=lax.Precision.HIGHEST)
    return y + b.reshape(1, -1, 1, 1)


def _ref_convh(x, w, b, k):
    w_oihw = jnp.transpose(w, (2, 1, 0))[:, :, :, None]
    p = k // 2
    y = lax.conv_general_dilated(
        x, w_oihw, (1, 1), ((p, p), (0, 0)),
        dimension_numbers=("NCHW", "OIHW", "NCHW"),
        precision=lax.Precision.HIGHEST)
    return y + b.reshape(1, -1, 1, 1)


def _ref_forward(f_in, params):
    lrelu = lambda v: jnp.where(v >= 0, v, 0.01 * v)
    h = _ref_conv2d(f_in, params["conv2d1_w"], params["conv2d1_b"])
    h = _ref_conv2d(h, params["conv2d2_w"], params["conv2d2_b"])
    c3 = lrelu(_ref_convh(h, params["conv3d1_w"], params["conv3d1_b"], 3))
    c3 = lrelu(_ref_convh(c3, params["conv3d2_w"], params["conv3d2_b"], 3))
    c3 = lrelu(_ref_convh(c3, params["conv3d3_w"], params["conv3d3_b"], 3))
    c5 = lrelu(_ref_convh(h, params["conv3d4_w"], params["conv3d4_b"], 5))
    c5 = lrelu(_ref_convh(c5, params["conv3d5_w"], params["conv3d5_b"], 5))
    c5 = lrelu(_ref_convh(c5, params["conv3d6_w"], params["conv3d6_b"], 5))
    f_mid = jax.nn.softmax(c3 + c5, axis=1)
    return f_mid * h + f_in


if __name__ == "__main__":
    B, C, H, W = 2, 8, 16, 16
    key = jax.random.PRNGKey(0)
    ks = jax.random.split(key, 17)

    def w2d(k):
        return jax.random.normal(k, (3, 3, C, C), jnp.float32) * 0.1

    def wh(k, K):
        return jax.random.normal(k, (K, C, C), jnp.float32) * 0.1

    def bias(k):
        return jax.random.normal(k, (C,), jnp.float32) * 0.1

    params = {
        "conv2d1_w": w2d(ks[0]),  "conv2d1_b": bias(ks[1]),
        "conv2d2_w": w2d(ks[2]),  "conv2d2_b": bias(ks[3]),
        "conv3d1_w": wh(ks[4], 3),  "conv3d1_b": bias(ks[5]),
        "conv3d2_w": wh(ks[6], 3),  "conv3d2_b": bias(ks[7]),
        "conv3d3_w": wh(ks[8], 3),  "conv3d3_b": bias(ks[9]),
        "conv3d4_w": wh(ks[10], 5), "conv3d4_b": bias(ks[11]),
        "conv3d5_w": wh(ks[12], 5), "conv3d5_b": bias(ks[13]),
        "conv3d6_w": wh(ks[14], 5), "conv3d6_b": bias(ks[15]),
    }

    f_in = jax.random.normal(ks[16], (B, C, H, W), jnp.float32)

    out = jax.jit(esab_forward)(f_in, params)
    jax.block_until_ready(out)

    ref = _ref_forward(f_in, params)
    assert out.shape == (B, C, H, W)
    assert jnp.allclose(out, ref, rtol=2e-2, atol=2e-2), \
        float(jnp.max(jnp.abs(out - ref)))

    print("KERNEL_OK")
</pallas_src>

<mosaic_0001>
module attributes {stable_mosaic.version = 11 : i64} {
  func.func @_conv3x3_kernel(%arg0: i32, %arg1: memref<1x18x18x8xf32, #tpu.memory_space<vmem>>, %arg2: memref<3x3x8x8xf32, #tpu.memory_space<vmem>>, %arg3: memref<1x8xf32, #tpu.memory_space<vmem>>, %arg4: memref<1x16x16x8xf32, #tpu.memory_space<vmem>>) attributes {dimension_semantics = [#tpu.dimension_semantics<parallel>], iteration_bounds = array<i64: 2>, scalar_prefetch = 0 : i64, scratch_operands = 0 : i64, tpu.core_type = #tpu.core_type<tc>, window_params = [{transform_indices = @transform_0, window_bounds = array<i64: 1, 18, 18, 8>}, {pipeline_mode = #tpu.pipeline_mode<synchronous>, transform_indices = @transform_1, window_bounds = array<i64: 3, 3, 8, 8>}, {pipeline_mode = #tpu.pipeline_mode<synchronous>, transform_indices = @transform_2, window_bounds = array<i64: 1, 8>}, {transform_indices = @transform_3, window_bounds = array<i64: 1, 16, 16, 8>}]} {
    %c0 = arith.constant 0 : index
    %c0_0 = arith.constant 0 : index
    %c0_1 = arith.constant 0 : index
    %c0_2 = arith.constant 0 : index
    %0 = vector.load %arg1[%c0, %c0_0, %c0_1, %c0_2] : memref<1x18x18x8xf32, #tpu.memory_space<vmem>>, vector<1x18x18x8xf32>
    %c0_3 = arith.constant 0 : index
    %c0_4 = arith.constant 0 : index
    %c0_5 = arith.constant 0 : index
    %c0_6 = arith.constant 0 : index
    %1 = vector.load %arg2[%c0_3, %c0_4, %c0_5, %c0_6] : memref<3x3x8x8xf32, #tpu.memory_space<vmem>>, vector<3x3x8x8xf32>
    %cst = arith.constant 0.000000e+00 : f32
    %2 = vector.broadcast %cst : f32 to vector<256x8xf32>
    %3 = vector.extract_strided_slice %0 {offsets = [0, 0, 0, 0], sizes = [1, 16, 16, 8], strides = [1, 1, 1, 1]} : vector<1x18x18x8xf32> to vector<1x16x16x8xf32>
    %4 = vector.shape_cast %3 : vector<1x16x16x8xf32> to vector<16x16x8xf32>
    %5 = vector.shape_cast %4 : vector<16x16x8xf32> to vector<256x8xf32>
    %6 = vector.extract_strided_slice %1 {offsets = [0, 0, 0, 0], sizes = [1, 1, 8, 8], strides = [1, 1, 1, 1]} : vector<3x3x8x8xf32> to vector<1x1x8x8xf32>
    %7 = vector.shape_cast %6 : vector<1x1x8x8xf32> to vector<8x8xf32>
    %cst_7 = arith.constant dense<0.000000e+00> : vector<256x8xf32>
    %8 = tpu.matmul %5, %7, %cst_7 {dimension_numbers = #tpu.dot_dimension_numbers<[1], [0], [0], [1], [0, 0, 1, 1], [], []>} : vector<256x8xf32>, vector<8x8xf32>, vector<256x8xf32> -> vector<256x8xf32>
    %9 = arith.addf %2, %8 : vector<256x8xf32>
    %10 = vector.extract_strided_slice %0 {offsets = [0, 0, 1, 0], sizes = [1, 16, 16, 8], strides = [1, 1, 1, 1]} : vector<1x18x18x8xf32> to vector<1x16x16x8xf32>
    %11 = vector.shape_cast %10 : vector<1x16x16x8xf32> to vector<16x16x8xf32>
    %12 = vector.shape_cast %11 : vector<16x16x8xf32> to vector<256x8xf32>
    %13 = vector.extract_strided_slice %1 {offsets = [0, 1, 0, 0], sizes = [1, 1, 8, 8], strides = [1, 1, 1, 1]} : vector<3x3x8x8xf32> to vector<1x1x8x8xf32>
    %14 = vector.shape_cast %13 : vector<1x1x8x8xf32> to vector<8x8xf32>
    %cst_8 = arith.constant dense<0.000000e+00> : vector<256x8xf32>
    %15 = tpu.matmul %12, %14, %cst_8 {dimension_numbers = #tpu.dot_dimension_numbers<[1], [0], [0], [1], [0, 0, 1, 1], [], []>} : vector<256x8xf32>, vector<8x8xf32>, vector<256x8xf32> -> vector<256x8xf32>
    %16 = arith.addf %9, %15 : vector<256x8xf32>
    %17 = vector.extract_strided_slice %0 {offsets = [0, 0, 2, 0], sizes = [1, 16, 16, 8], strides = [1, 1, 1, 1]} : vector<1x18x18x8xf32> to vector<1x16x16x8xf32>
    %18 = vector.shape_cast %17 : vector<1x16x16x8xf32> to vector<16x16x8xf32>
    %19 = vector.shape_cast %18 : vector<16x16x8xf32> to vector<256x8xf32>
    %20 = vector.extract_strided_slice %1 {offsets = [0, 2, 0, 0], sizes = [1, 1, 8, 8], strides = [1, 1, 1, 1]} : vector<3x3x8x8xf32> to vector<1x1x8x8xf32>
    %21 = vector.shape_cast %20 : vector<1x1x8x8xf32> to vector<8x8xf32>
    %cst_9 = arith.constant dense<0.000000e+00> : vector<256x8xf32>
    %22 = tpu.matmul %19, %21, %cst_9 {dimension_numbers = #tpu.dot_dimension_numbers<[1], [0], [0], [1], [0, 0, 1, 1], [], []>} : vector<256x8xf32>, vector<8x8xf32>, vector<256x8xf32> -> vector<256x8xf32>
    %23 = arith.addf %16, %22 : vector<256x8xf32>
    %24 = vector.extract_strided_slice %0 {offsets = [0, 1, 0, 0], sizes = [1, 16, 16, 8], strides = [1, 1, 1, 1]} : vector<1x18x18x8xf32> to vector<1x16x16x8xf32>
    %25 = vector.shape_cast %24 : vector<1x16x16x8xf32> to vector<16x16x8xf32>
    %26 = vector.shape_cast %25 : vector<16x16x8xf32> to vector<256x8xf32>
    %27 = vector.extract_strided_slice %1 {offsets = [1, 0, 0, 0], sizes = [1, 1, 8, 8], strides = [1, 1, 1, 1]} : vector<3x3x8x8xf32> to vector<1x1x8x8xf32>
    %28 = vector.shape_cast %27 : vector<1x1x8x8xf32> to vector<8x8xf32>
    %cst_10 = arith.constant dense<0.000000e+00> : vector<256x8xf32>
    %29 = tpu.matmul %26, %28, %cst_10 {dimension_numbers = #tpu.dot_dimension_numbers<[1], [0], [0], [1], [0, 0, 1, 1], [], []>} : vector<256x8xf32>, vector<8x8xf32>, vector<256x8xf32> -> vector<256x8xf32>
    %30 = arith.addf %23, %29 : vector<256x8xf32>
    %31 = vector.extract_strided_slice %0 {offsets = [0, 1, 1, 0], sizes = [1, 16, 16, 8], strides = [1, 1, 1, 1]} : vector<1x18x18x8xf32> to vector<1x16x16x8xf32>
    %32 = vector.shape_cast %31 : vector<1x16x16x8xf32> to vector<16x16x8xf32>
    %33 = vector.shape_cast %32 : vector<16x16x8xf32> to vector<256x8xf32>
    %34 = vector.extract_strided_slice %1 {offsets = [1, 1, 0, 0], sizes = [1, 1, 8, 8], strides = [1, 1, 1, 1]} : vector<3x3x8x8xf32> to vector<1x1x8x8xf32>
    %35 = vector.shape_cast %34 : vector<1x1x8x8xf32> to vector<8x8xf32>
    %cst_11 = arith.constant dense<0.000000e+00> : vector<256x8xf32>
    %36 = tpu.matmul %33, %35, %cst_11 {dimension_numbers = #tpu.dot_dimension_numbers<[1], [0], [0], [1], [0, 0, 1, 1], [], []>} : vector<256x8xf32>, vector<8x8xf32>, vector<256x8xf32> -> vector<256x8xf32>
    %37 = arith.addf %30, %36 : vector<256x8xf32>
    %38 = vector.extract_strided_slice %0 {offsets = [0, 1, 2, 0], sizes = [1, 16, 16, 8], strides = [1, 1, 1, 1]} : vector<1x18x18x8xf32> to vector<1x16x16x8xf32>
    %39 = vector.shape_cast %38 : vector<1x16x16x8xf32> to vector<16x16x8xf32>
    %40 = vector.shape_cast %39 : vector<16x16x8xf32> to vector<256x8xf32>
    %41 = vector.extract_strided_slice %1 {offsets = [1, 2, 0, 0], sizes = [1, 1, 8, 8], strides = [1, 1, 1, 1]} : vector<3x3x8x8xf32> to vector<1x1x8x8xf32>
    %42 = vector.shape_cast %41 : vector<1x1x8x8xf32> to vector<8x8xf32>
    %cst_12 = arith.constant dense<0.000000e+00> : vector<256x8xf32>
    %43 = tpu.matmul %40, %42, %cst_12 {dimension_numbers = #tpu.dot_dimension_numbers<[1], [0], [0], [1], [0, 0, 1, 1], [], []>} : vector<256x8xf32>, vector<8x8xf32>, vector<256x8xf32> -> vector<256x8xf32>
    %44 = arith.addf %37, %43 : vector<256x8xf32>
    %45 = vector.extract_strided_slice %0 {offsets = [0, 2, 0, 0], sizes = [1, 16, 16, 8], strides = [1, 1, 1, 1]} : vector<1x18x18x8xf32> to vector<1x16x16x8xf32>
    %46 = vector.shape_cast %45 : vector<1x16x16x8xf32> to vector<16x16x8xf32>
    %47 = vector.shape_cast %46 : vector<16x16x8xf32> to vector<256x8xf32>
    %48 = vector.extract_strided_slice %1 {offsets = [2, 0, 0, 0], sizes = [1, 1, 8, 8], strides = [1, 1, 1, 1]} : vector<3x3x8x8xf32> to vector<1x1x8x8xf32>
    %49 = vector.shape_cast %48 : vector<1x1x8x8xf32> to vector<8x8xf32>
    %cst_13 = arith.constant dense<0.000000e+00> : vector<256x8xf32>
    %50 = tpu.matmul %47, %49, %cst_13 {dimension_numbers = #tpu.dot_dimension_numbers<[1], [0], [0], [1], [0, 0, 1, 1], [], []>} : vector<256x8xf32>, vector<8x8xf32>, vector<256x8xf32> -> vector<256x8xf32>
    %51 = arith.addf %44, %50 : vector<256x8xf32>
    %52 = vector.extract_strided_slice %0 {offsets = [0, 2, 1, 0], sizes = [1, 16, 16, 8], strides = [1, 1, 1, 1]} : vector<1x18x18x8xf32> to vector<1x16x16x8xf32>
    %53 = vector.shape_cast %52 : vector<1x16x16x8xf32> to vector<16x16x8xf32>
    %54 = vector.shape_cast %53 : vector<16x16x8xf32> to vector<256x8xf32>
    %55 = vector.extract_strided_slice %1 {offsets = [2, 1, 0, 0], sizes = [1, 1, 8, 8], strides = [1, 1, 1, 1]} : vector<3x3x8x8xf32> to vector<1x1x8x8xf32>
    %56 = vector.shape_cast %55 : vector<1x1x8x8xf32> to vector<8x8xf32>
    %cst_14 = arith.constant dense<0.000000e+00> : vector<256x8xf32>
    %57 = tpu.matmul %54, %56, %cst_14 {dimension_numbers = #tpu.dot_dimension_numbers<[1], [0], [0], [1], [0, 0, 1, 1], [], []>} : vector<256x8xf32>, vector<8x8xf32>, vector<256x8xf32> -> vector<256x8xf32>
    %58 = arith.addf %51, %57 : vector<256x8xf32>
    %59 = vector.extract_strided_slice %0 {offsets = [0, 2, 2, 0], sizes = [1, 16, 16, 8], strides = [1, 1, 1, 1]} : vector<1x18x18x8xf32> to vector<1x16x16x8xf32>
    %60 = vector.shape_cast %59 : vector<1x16x16x8xf32> to vector<16x16x8xf32>
    %61 = vector.shape_cast %60 : vector<16x16x8xf32> to vector<256x8xf32>
    %62 = vector.extract_strided_slice %1 {offsets = [2, 2, 0, 0], sizes = [1, 1, 8, 8], strides = [1, 1, 1, 1]} : vector<3x3x8x8xf32> to vector<1x1x8x8xf32>
    %63 = vector.shape_cast %62 : vector<1x1x8x8xf32> to vector<8x8xf32>
    %cst_15 = arith.constant dense<0.000000e+00> : vector<256x8xf32>
    %64 = tpu.matmul %61, %63, %cst_15 {dimension_numbers = #tpu.dot_dimension_numbers<[1], [0], [0], [1], [0, 0, 1, 1], [], []>} : vector<256x8xf32>, vector<8x8xf32>, vector<256x8xf32> -> vector<256x8xf32>
    %65 = arith.addf %58, %64 : vector<256x8xf32>
    %c0_16 = arith.constant 0 : index
    %c0_17 = arith.constant 0 : index
    %66 = vector.load %arg3[%c0_16, %c0_17] : memref<1x8xf32, #tpu.memory_space<vmem>>, vector<1x8xf32>
    %67 = vector.broadcast %66 : vector<1x8xf32> to vector<256x8xf32>
    %68 = arith.addf %65, %67 : vector<256x8xf32>
    %69 = vector.shape_cast %68 : vector<256x8xf32> to vector<1x16x16x8xf32>
    %c0_18 = arith.constant 0 : index
    %c0_19 = arith.constant 0 : index
    %c0_20 = arith.constant 0 : index
    %c0_21 = arith.constant 0 : index
    %70 = vector.load %arg4[%c0_18, %c0_19, %c0_20, %c0_21] : memref<1x16x16x8xf32, #tpu.memory_space<vmem>>, vector<1x16x16x8xf32>
    tpu.vector_store %arg4[%c0_18, %c0_19, %c0_20, %c0_21], %69 {strides = array<i32>} : memref<1x16x16x8xf32, #tpu.memory_space<vmem>>, vector<1x16x16x8xf32>,
    return
  }
  func.func @transform_0(%arg0: i32) -> (i32, i32, i32, i32) {
    %c0_i32 = arith.constant 0 : i32
    %c0_i32_0 = arith.constant 0 : i32
    %c0_i32_1 = arith.constant 0 : i32
    %c0_i32_2 = arith.constant 0 : i32
    return %arg0, %c0_i32, %c0_i32_0, %c0_i32_1 : i32, i32, i32, i32
  }
  func.func @transform_1(%arg0: i32) -> (i32, i32, i32, i32) {
    %c0_i32 = arith.constant 0 : i32
    %c0_i32_0 = arith.constant 0 : i32
    %c0_i32_1 = arith.constant 0 : i32
    %c0_i32_2 = arith.constant 0 : i32
    %c0_i32_3 = arith.constant 0 : i32
    return %c0_i32, %c0_i32_0, %c0_i32_1, %c0_i32_2 : i32, i32, i32, i32
  }
  func.func @transform_2(%arg0: i32) -> (i32, i32) {
    %c0_i32 = arith.constant 0 : i32
    %c0_i32_0 = arith.constant 0 : i32
    %c0_i32_1 = arith.constant 0 : i32
    return %c0_i32, %c0_i32_0 : i32, i32
  }
  func.func @transform_3(%arg0: i32) -> (i32, i32, i32, i32) {
    %c0_i32 = arith.constant 0 : i32
    %c0_i32_0 = arith.constant 0 : i32
    %c0_i32_1 = arith.constant 0 : i32
    %c0_i32_2 = arith.constant 0 : i32
    return %arg0, %c0_i32, %c0_i32_0, %c0_i32_1 : i32, i32, i32, i32
  }
}

module attributes {stable_mosaic.version = 11 : i64} {
  func.func @_convh_lrelu_kernel(%arg0: i32, %arg1: memref<1x20x16x8xf32, #tpu.memory_space<vmem>>, %arg2: memref<5x8x8xf32, #tpu.memory_space<vmem>>, %arg3: memref<1x8xf32, #tpu.memory_space<vmem>>, %arg4: memref<1x16x16x8xf32, #tpu.memory_space<vmem>>) attributes {dimension_semantics = [#tpu.dimension_semantics<parallel>], iteration_bounds = array<i64: 2>, scalar_prefetch = 0 : i64, scratch_operands = 0 : i64, tpu.core_type = #tpu.core_type<tc>, window_params = [{transform_indices = @transform_0, window_bounds = array<i64: 1, 20, 16, 8>}, {pipeline_mode = #tpu.pipeline_mode<synchronous>, transform_indices = @transform_1, window_bounds = array<i64: 5, 8, 8>}, {pipeline_mode = #tpu.pipeline_mode<synchronous>, transform_indices = @transform_2, window_bounds = array<i64: 1, 8>}, {transform_indices = @transform_3, window_bounds = array<i64: 1, 16, 16, 8>}]} {
    %c0 = arith.constant 0 : index
    %c0_0 = arith.constant 0 : index
    %c0_1 = arith.constant 0 : index
    %c0_2 = arith.constant 0 : index
    %0 = vector.load %arg1[%c0, %c0_0, %c0_1, %c0_2] : memref<1x20x16x8xf32, #tpu.memory_space<vmem>>, vector<1x20x16x8xf32>
    %c0_3 = arith.constant 0 : index
    %c0_4 = arith.constant 0 : index
    %c0_5 = arith.constant 0 : index
    %1 = vector.load %arg2[%c0_3, %c0_4, %c0_5] : memref<5x8x8xf32, #tpu.memory_space<vmem>>, vector<5x8x8xf32>
    %cst = arith.constant 0.000000e+00 : f32
    %2 = vector.broadcast %cst : f32 to vector<256x8xf32>
    %3 = vector.extract_strided_slice %0 {offsets = [0, 0, 0, 0], sizes = [1, 16, 16, 8], strides = [1, 1, 1, 1]} : vector<1x20x16x8xf32> to vector<1x16x16x8xf32>
    %4 = vector.shape_cast %3 : vector<1x16x16x8xf32> to vector<16x16x8xf32>
    %5 = vector.shape_cast %4 : vector<16x16x8xf32> to vector<256x8xf32>
    %6 = vector.extract_strided_slice %1 {offsets = [0, 0, 0], sizes = [1, 8, 8], strides = [1, 1, 1]} : vector<5x8x8xf32> to vector<1x8x8xf32>
    %7 = vector.shape_cast %6 : vector<1x8x8xf32> to vector<8x8xf32>
    %cst_6 = arith.constant dense<0.000000e+00> : vector<256x8xf32>
    %8 = tpu.matmul %5, %7, %cst_6 {dimension_numbers = #tpu.dot_dimension_numbers<[1], [0], [0], [1], [0, 0, 1, 1], [], []>} : vector<256x8xf32>, vector<8x8xf32>, vector<256x8xf32> -> vector<256x8xf32>
    %9 = arith.addf %2, %8 : vector<256x8xf32>
    %10 = vector.extract_strided_slice %0 {offsets = [0, 1, 0, 0], sizes = [1, 16, 16, 8], strides = [1, 1, 1, 1]} : vector<1x20x16x8xf32> to vector<1x16x16x8xf32>
    %11 = vector.shape_cast %10 : vector<1x16x16x8xf32> to vector<16x16x8xf32>
    %12 = vector.shape_cast %11 : vector<16x16x8xf32> to vector<256x8xf32>
    %13 = vector.extract_strided_slice %1 {offsets = [1, 0, 0], sizes = [1, 8, 8], strides = [1, 1, 1]} : vector<5x8x8xf32> to vector<1x8x8xf32>
    %14 = vector.shape_cast %13 : vector<1x8x8xf32> to vector<8x8xf32>
    %cst_7 = arith.constant dense<0.000000e+00> : vector<256x8xf32>
    %15 = tpu.matmul %12, %14, %cst_7 {dimension_numbers = #tpu.dot_dimension_numbers<[1], [0], [0], [1], [0, 0, 1, 1], [], []>} : vector<256x8xf32>, vector<8x8xf32>, vector<256x8xf32> -> vector<256x8xf32>
    %16 = arith.addf %9, %15 : vector<256x8xf32>
    %17 = vector.extract_strided_slice %0 {offsets = [0, 2, 0, 0], sizes = [1, 16, 16, 8], strides = [1, 1, 1, 1]} : vector<1x20x16x8xf32> to vector<1x16x16x8xf32>
    %18 = vector.shape_cast %17 : vector<1x16x16x8xf32> to vector<16x16x8xf32>
    %19 = vector.shape_cast %18 : vector<16x16x8xf32> to vector<256x8xf32>
    %20 = vector.extract_strided_slice %1 {offsets = [2, 0, 0], sizes = [1, 8, 8], strides = [1, 1, 1]} : vector<5x8x8xf32> to vector<1x8x8xf32>
    %21 = vector.shape_cast %20 : vector<1x8x8xf32> to vector<8x8xf32>
    %cst_8 = arith.constant dense<0.000000e+00> : vector<256x8xf32>
    %22 = tpu.matmul %19, %21, %cst_8 {dimension_numbers = #tpu.dot_dimension_numbers<[1], [0], [0], [1], [0, 0, 1, 1], [], []>} : vector<256x8xf32>, vector<8x8xf32>, vector<256x8xf32> -> vector<256x8xf32>
    %23 = arith.addf %16, %22 : vector<256x8xf32>
    %24 = vector.extract_strided_slice %0 {offsets = [0, 3, 0, 0], sizes = [1, 16, 16, 8], strides = [1, 1, 1, 1]} : vector<1x20x16x8xf32> to vector<1x16x16x8xf32>
    %25 = vector.shape_cast %24 : vector<1x16x16x8xf32> to vector<16x16x8xf32>
    %26 = vector.shape_cast %25 : vector<16x16x8xf32> to vector<256x8xf32>
    %27 = vector.extract_strided_slice %1 {offsets = [3, 0, 0], sizes = [1, 8, 8], strides = [1, 1, 1]} : vector<5x8x8xf32> to vector<1x8x8xf32>
    %28 = vector.shape_cast %27 : vector<1x8x8xf32> to vector<8x8xf32>
    %cst_9 = arith.constant dense<0.000000e+00> : vector<256x8xf32>
    %29 = tpu.matmul %26, %28, %cst_9 {dimension_numbers = #tpu.dot_dimension_numbers<[1], [0], [0], [1], [0, 0, 1, 1], [], []>} : vector<256x8xf32>, vector<8x8xf32>, vector<256x8xf32> -> vector<256x8xf32>
    %30 = arith.addf %23, %29 : vector<256x8xf32>
    %31 = vector.extract_strided_slice %0 {offsets = [0, 4, 0, 0], sizes = [1, 16, 16, 8], strides = [1, 1, 1, 1]} : vector<1x20x16x8xf32> to vector<1x16x16x8xf32>
    %32 = vector.shape_cast %31 : vector<1x16x16x8xf32> to vector<16x16x8xf32>
    %33 = vector.shape_cast %32 : vector<16x16x8xf32> to vector<256x8xf32>
    %34 = vector.extract_strided_slice %1 {offsets = [4, 0, 0], sizes = [1, 8, 8], strides = [1, 1, 1]} : vector<5x8x8xf32> to vector<1x8x8xf32>
    %35 = vector.shape_cast %34 : vector<1x8x8xf32> to vector<8x8xf32>
    %cst_10 = arith.constant dense<0.000000e+00> : vector<256x8xf32>
    %36 = tpu.matmul %33, %35, %cst_10 {dimension_numbers = #tpu.dot_dimension_numbers<[1], [0], [0], [1], [0, 0, 1, 1], [], []>} : vector<256x8xf32>, vector<8x8xf32>, vector<256x8xf32> -> vector<256x8xf32>
    %37 = arith.addf %30, %36 : vector<256x8xf32>
    %c0_11 = arith.constant 0 : index
    %c0_12 = arith.constant 0 : index
    %38 = vector.load %arg3[%c0_11, %c0_12] : memref<1x8xf32, #tpu.memory_space<vmem>>, vector<1x8xf32>
    %39 = vector.broadcast %38 : vector<1x8xf32> to vector<256x8xf32>
    %40 = arith.addf %37, %39 : vector<256x8xf32>
    %cst_13 = arith.constant 0.000000e+00 : f32
    %41 = vector.broadcast %cst_13 : f32 to vector<256x8xf32>
    %42 = arith.cmpf oge, %40, %41 : vector<256x8xf32>
    %cst_14 = arith.constant 0.00999999977 : f32
    %43 = vector.broadcast %cst_14 : f32 to vector<256x8xf32>
    %44 = arith.mulf %43, %40 : vector<256x8xf32>
    %45 = arith.select %42, %40, %44 : vector<256x8xi1>, vector<256x8xf32>
    %46 = vector.shape_cast %45 : vector<256x8xf32> to vector<1x16x16x8xf32>
    %c0_15 = arith.constant 0 : index
    %c0_16 = arith.constant 0 : index
    %c0_17 = arith.constant 0 : index
    %c0_18 = arith.constant 0 : index
    %47 = vector.load %arg4[%c0_15, %c0_16, %c0_17, %c0_18] : memref<1x16x16x8xf32, #tpu.memory_space<vmem>>, vector<1x16x16x8xf32>
    tpu.vector_store %arg4[%c0_15, %c0_16, %c0_17, %c0_18], %46 {strides = array<i32>} : memref<1x16x16x8xf32, #tpu.memory_space<vmem>>, vector<1x16x16x8xf32>,
    return
  }
  func.func @transform_0(%arg0: i32) -> (i32, i32, i32, i32) {
    %c0_i32 = arith.constant 0 : i32
    %c0_i32_0 = arith.constant 0 : i32
    %c0_i32_1 = arith.constant 0 : i32
    %c0_i32_2 = arith.constant 0 : i32
    return %arg0, %c0_i32, %c0_i32_0, %c0_i32_1 : i32, i32, i32, i32
  }
  func.func @transform_1(%arg0: i32) -> (i32, i32, i32) {
    %c0_i32 = arith.constant 0 : i32
    %c0_i32_0 = arith.constant 0 : i32
    %c0_i32_1 = arith.constant 0 : i32
    %c0_i32_2 = arith.constant 0 : i32
    return %c0_i32, %c0_i32_0, %c0_i32_1 : i32, i32, i32
  }
  func.func @transform_2(%arg0: i32) -> (i32, i32) {
    %c0_i32 = arith.constant 0 : i32
    %c0_i32_0 = arith.constant 0 : i32
    %c0_i32_1 = arith.constant 0 : i32
    return %c0_i32, %c0_i32_0 : i32, i32
  }
  func.func @transform_3(%arg0: i32) -> (i32, i32, i32, i32) {
    %c0_i32 = arith.constant 0 : i32
    %c0_i32_0 = arith.constant 0 : i32
    %c0_i32_1 = arith.constant 0 : i32
    %c0_i32_2 = arith.constant 0 : i32
    return %arg0, %c0_i32, %c0_i32_0, %c0_i32_1 : i32, i32, i32, i32
  }
}

module attributes {stable_mosaic.version = 11 : i64} {
  func.func @_convh_lrelu_kernel(%arg0: i32, %arg1: memref<1x18x16x8xf32, #tpu.memory_space<vmem>>, %arg2: memref<3x8x8xf32, #tpu.memory_space<vmem>>, %arg3: memref<1x8xf32, #tpu.memory_space<vmem>>, %arg4: memref<1x16x16x8xf32, #tpu.memory_space<vmem>>) attributes {dimension_semantics = [#tpu.dimension_semantics<parallel>], iteration_bounds = array<i64: 2>, scalar_prefetch = 0 : i64, scratch_operands = 0 : i64, tpu.core_type = #tpu.core_type<tc>, window_params = [{transform_indices = @transform_0, window_bounds = array<i64: 1, 18, 16, 8>}, {pipeline_mode = #tpu.pipeline_mode<synchronous>, transform_indices = @transform_1, window_bounds = array<i64: 3, 8, 8>}, {pipeline_mode = #tpu.pipeline_mode<synchronous>, transform_indices = @transform_2, window_bounds = array<i64: 1, 8>}, {transform_indices = @transform_3, window_bounds = array<i64: 1, 16, 16, 8>}]} {
    %c0 = arith.constant 0 : index
    %c0_0 = arith.constant 0 : index
    %c0_1 = arith.constant 0 : index
    %c0_2 = arith.constant 0 : index
    %0 = vector.load %arg1[%c0, %c0_0, %c0_1, %c0_2] : memref<1x18x16x8xf32, #tpu.memory_space<vmem>>, vector<1x18x16x8xf32>
    %c0_3 = arith.constant 0 : index
    %c0_4 = arith.constant 0 : index
    %c0_5 = arith.constant 0 : index
    %1 = vector.load %arg2[%c0_3, %c0_4, %c0_5] : memref<3x8x8xf32, #tpu.memory_space<vmem>>, vector<3x8x8xf32>
    %cst = arith.constant 0.000000e+00 : f32
    %2 = vector.broadcast %cst : f32 to vector<256x8xf32>
    %3 = vector.extract_strided_slice %0 {offsets = [0, 0, 0, 0], sizes = [1, 16, 16, 8], strides = [1, 1, 1, 1]} : vector<1x18x16x8xf32> to vector<1x16x16x8xf32>
    %4 = vector.shape_cast %3 : vector<1x16x16x8xf32> to vector<16x16x8xf32>
    %5 = vector.shape_cast %4 : vector<16x16x8xf32> to vector<256x8xf32>
    %6 = vector.extract_strided_slice %1 {offsets = [0, 0, 0], sizes = [1, 8, 8], strides = [1, 1, 1]} : vector<3x8x8xf32> to vector<1x8x8xf32>
    %7 = vector.shape_cast %6 : vector<1x8x8xf32> to vector<8x8xf32>
    %cst_6 = arith.constant dense<0.000000e+00> : vector<256x8xf32>
    %8 = tpu.matmul %5, %7, %cst_6 {dimension_numbers = #tpu.dot_dimension_numbers<[1], [0], [0], [1], [0, 0, 1, 1], [], []>} : vector<256x8xf32>, vector<8x8xf32>, vector<256x8xf32> -> vector<256x8xf32>
    %9 = arith.addf %2, %8 : vector<256x8xf32>
    %10 = vector.extract_strided_slice %0 {offsets = [0, 1, 0, 0], sizes = [1, 16, 16, 8], strides = [1, 1, 1, 1]} : vector<1x18x16x8xf32> to vector<1x16x16x8xf32>
    %11 = vector.shape_cast %10 : vector<1x16x16x8xf32> to vector<16x16x8xf32>
    %12 = vector.shape_cast %11 : vector<16x16x8xf32> to vector<256x8xf32>
    %13 = vector.extract_strided_slice %1 {offsets = [1, 0, 0], sizes = [1, 8, 8], strides = [1, 1, 1]} : vector<3x8x8xf32> to vector<1x8x8xf32>
    %14 = vector.shape_cast %13 : vector<1x8x8xf32> to vector<8x8xf32>
    %cst_7 = arith.constant dense<0.000000e+00> : vector<256x8xf32>
    %15 = tpu.matmul %12, %14, %cst_7 {dimension_numbers = #tpu.dot_dimension_numbers<[1], [0], [0], [1], [0, 0, 1, 1], [], []>} : vector<256x8xf32>, vector<8x8xf32>, vector<256x8xf32> -> vector<256x8xf32>
    %16 = arith.addf %9, %15 : vector<256x8xf32>
    %17 = vector.extract_strided_slice %0 {offsets = [0, 2, 0, 0], sizes = [1, 16, 16, 8], strides = [1, 1, 1, 1]} : vector<1x18x16x8xf32> to vector<1x16x16x8xf32>
    %18 = vector.shape_cast %17 : vector<1x16x16x8xf32> to vector<16x16x8xf32>
    %19 = vector.shape_cast %18 : vector<16x16x8xf32> to vector<256x8xf32>
    %20 = vector.extract_strided_slice %1 {offsets = [2, 0, 0], sizes = [1, 8, 8], strides = [1, 1, 1]} : vector<3x8x8xf32> to vector<1x8x8xf32>
    %21 = vector.shape_cast %20 : vector<1x8x8xf32> to vector<8x8xf32>
    %cst_8 = arith.constant dense<0.000000e+00> : vector<256x8xf32>
    %22 = tpu.matmul %19, %21, %cst_8 {dimension_numbers = #tpu.dot_dimension_numbers<[1], [0], [0], [1], [0, 0, 1, 1], [], []>} : vector<256x8xf32>, vector<8x8xf32>, vector<256x8xf32> -> vector<256x8xf32>
    %23 = arith.addf %16, %22 : vector<256x8xf32>
    %c0_9 = arith.constant 0 : index
    %c0_10 = arith.constant 0 : index
    %24 = vector.load %arg3[%c0_9, %c0_10] : memref<1x8xf32, #tpu.memory_space<vmem>>, vector<1x8xf32>
    %25 = vector.broadcast %24 : vector<1x8xf32> to vector<256x8xf32>
    %26 = arith.addf %23, %25 : vector<256x8xf32>
    %cst_11 = arith.constant 0.000000e+00 : f32
    %27 = vector.broadcast %cst_11 : f32 to vector<256x8xf32>
    %28 = arith.cmpf oge, %26, %27 : vector<256x8xf32>
    %cst_12 = arith.constant 0.00999999977 : f32
    %29 = vector.broadcast %cst_12 : f32 to vector<256x8xf32>
    %30 = arith.mulf %29, %26 : vector<256x8xf32>
    %31 = arith.select %28, %26, %30 : vector<256x8xi1>, vector<256x8xf32>
    %32 = vector.shape_cast %31 : vector<256x8xf32> to vector<1x16x16x8xf32>
    %c0_13 = arith.constant 0 : index
    %c0_14 = arith.constant 0 : index
    %c0_15 = arith.constant 0 : index
    %c0_16 = arith.constant 0 : index
    %33 = vector.load %arg4[%c0_13, %c0_14, %c0_15, %c0_16] : memref<1x16x16x8xf32, #tpu.memory_space<vmem>>, vector<1x16x16x8xf32>
    tpu.vector_store %arg4[%c0_13, %c0_14, %c0_15, %c0_16], %32 {strides = array<i32>} : memref<1x16x16x8xf32, #tpu.memory_space<vmem>>, vector<1x16x16x8xf32>,
    return
  }
  func.func @transform_0(%arg0: i32) -> (i32, i32, i32, i32) {
    %c0_i32 = arith.constant 0 : i32
    %c0_i32_0 = arith.constant 0 : i32
    %c0_i32_1 = arith.constant 0 : i32
    %c0_i32_2 = arith.constant 0 : i32
    return %arg0, %c0_i32, %c0_i32_0, %c0_i32_1 : i32, i32, i32, i32
  }
  func.func @transform_1(%arg0: i32) -> (i32, i32, i32) {
    %c0_i32 = arith.constant 0 : i32
    %c0_i32_0 = arith.constant 0 : i32
    %c0_i32_1 = arith.constant 0 : i32
    %c0_i32_2 = arith.constant 0 : i32
    return %c0_i32, %c0_i32_0, %c0_i32_1 : i32, i32, i32
  }
  func.func @transform_2(%arg0: i32) -> (i32, i32) {
    %c0_i32 = arith.constant 0 : i32
    %c0_i32_0 = arith.constant 0 : i32
    %c0_i32_1 = arith.constant 0 : i32
    return %c0_i32, %c0_i32_0 : i32, i32
  }
  func.func @transform_3(%arg0: i32) -> (i32, i32, i32, i32) {
    %c0_i32 = arith.constant 0 : i32
    %c0_i32_0 = arith.constant 0 : i32
    %c0_i32_1 = arith.constant 0 : i32
    %c0_i32_2 = arith.constant 0 : i32
    return %arg0, %c0_i32, %c0_i32_0, %c0_i32_1 : i32, i32, i32, i32
  }
}

module attributes {stable_mosaic.version = 11 : i64} {
  func.func @_softmax_fuse_kernel(%arg0: i32, %arg1: memref<1x16x16x8xf32, #tpu.memory_space<vmem>>, %arg2: memref<1x16x16x8xf32, #tpu.memory_space<vmem>>, %arg3: memref<1x16x16x8xf32, #tpu.memory_space<vmem>>, %arg4: memref<1x16x16x8xf32, #tpu.memory_space<vmem>>, %arg5: memref<1x16x16x8xf32, #tpu.memory_space<vmem>>) attributes {dimension_semantics = [#tpu.dimension_semantics<parallel>], iteration_bounds = array<i64: 2>, scalar_prefetch = 0 : i64, scratch_operands = 0 : i64, tpu.core_type = #tpu.core_type<tc>, window_params = [{transform_indices = @transform_0, window_bounds = array<i64: 1, 16, 16, 8>}, {transform_indices = @transform_1, window_bounds = array<i64: 1, 16, 16, 8>}, {transform_indices = @transform_2, window_bounds = array<i64: 1, 16, 16, 8>}, {transform_indices = @transform_3, window_bounds = array<i64: 1, 16, 16, 8>}, {transform_indices = @transform_4, window_bounds = array<i64: 1, 16, 16, 8>}]} {
    %c0 = arith.constant 0 : index
    %c0_0 = arith.constant 0 : index
    %c0_1 = arith.constant 0 : index
    %c0_2 = arith.constant 0 : index
    %0 = vector.load %arg1[%c0, %c0_0, %c0_1, %c0_2] : memref<1x16x16x8xf32, #tpu.memory_space<vmem>>, vector<1x16x16x8xf32>
    %c0_3 = arith.constant 0 : index
    %c0_4 = arith.constant 0 : index
    %c0_5 = arith.constant 0 : index
    %c0_6 = arith.constant 0 : index
    %1 = vector.load %arg2[%c0_3, %c0_4, %c0_5, %c0_6] : memref<1x16x16x8xf32, #tpu.memory_space<vmem>>, vector<1x16x16x8xf32>
    %2 = arith.addf %0, %1 : vector<1x16x16x8xf32>
    %3 = vector.shape_cast %2 : vector<1x16x16x8xf32> to vector<256x8xf32>
    %cst = arith.constant dense<0xFF800000> : vector<256xf32>
    %4 = vector.multi_reduction <maximumf>, %3, %cst [1] : vector<256x8xf32> to vector<256xf32>
    %5 = vector.shape_cast %4 : vector<256xf32> to vector<256x1xf32>
    %6 = vector.broadcast %5 : vector<256x1xf32> to vector<256x8xf32>
    %7 = arith.subf %3, %6 : vector<256x8xf32>
    %8 = math.exp %7 : vector<256x8xf32>
    %cst_7 = arith.constant dense<0.000000e+00> : vector<256xf32>
    %9 = vector.multi_reduction <add>, %8, %cst_7 [1] : vector<256x8xf32> to vector<256xf32>
    %10 = vector.shape_cast %9 : vector<256xf32> to vector<256x1xf32>
    %11 = vector.broadcast %10 : vector<256x1xf32> to vector<256x8xf32>
    %12 = arith.divf %8, %11 : vector<256x8xf32>
    %c0_8 = arith.constant 0 : index
    %c0_9 = arith.constant 0 : index
    %c0_10 = arith.constant 0 : index
    %c0_11 = arith.constant 0 : index
    %13 = vector.load %arg3[%c0_8, %c0_9, %c0_10, %c0_11] : memref<1x16x16x8xf32, #tpu.memory_space<vmem>>, vector<1x16x16x8xf32>
    %14 = vector.shape_cast %13 : vector<1x16x16x8xf32> to vector<256x8xf32>
    %c0_12 = arith.constant 0 : index
    %c0_13 = arith.constant 0 : index
    %c0_14 = arith.constant 0 : index
    %c0_15 = arith.constant 0 : index
    %15 = vector.load %arg4[%c0_12, %c0_13, %c0_14, %c0_15] : memref<1x16x16x8xf32, #tpu.memory_space<vmem>>, vector<1x16x16x8xf32>
    %16 = vector.shape_cast %15 : vector<1x16x16x8xf32> to vector<256x8xf32>
    %17 = arith.mulf %12, %14 : vector<256x8xf32>
    %18 = arith.addf %17, %16 : vector<256x8xf32>
    %19 = vector.shape_cast %18 : vector<256x8xf32> to vector<1x16x16x8xf32>
    %c0_16 = arith.constant 0 : index
    %c0_17 = arith.constant 0 : index
    %c0_18 = arith.constant 0 : index
    %c0_19 = arith.constant 0 : index
    %20 = vector.load %arg5[%c0_16, %c0_17, %c0_18, %c0_19] : memref<1x16x16x8xf32, #tpu.memory_space<vmem>>, vector<1x16x16x8xf32>
    tpu.vector_store %arg5[%c0_16, %c0_17, %c0_18, %c0_19], %19 {strides = array<i32>} : memref<1x16x16x8xf32, #tpu.memory_space<vmem>>, vector<1x16x16x8xf32>,
    return
  }
  func.func @transform_0(%arg0: i32) -> (i32, i32, i32, i32) {
    %c0_i32 = arith.constant 0 : i32
    %c0_i32_0 = arith.constant 0 : i32
    %c0_i32_1 = arith.constant 0 : i32
    %c0_i32_2 = arith.constant 0 : i32
    return %arg0, %c0_i32, %c0_i32_0, %c0_i32_1 : i32, i32, i32, i32
  }
  func.func @transform_1(%arg0: i32) -> (i32, i32, i32, i32) {
    %c0_i32 = arith.constant 0 : i32
    %c0_i32_0 = arith.constant 0 : i32
    %c0_i32_1 = arith.constant 0 : i32
    %c0_i32_2 = arith.constant 0 : i32
    return %arg0, %c0_i32, %c0_i32_0, %c0_i32_1 : i32, i32, i32, i32
  }
  func.func @transform_2(%arg0: i32) -> (i32, i32, i32, i32) {
    %c0_i32 = arith.constant 0 : i32
    %c0_i32_0 = arith.constant 0 : i32
    %c0_i32_1 = arith.constant 0 : i32
    %c0_i32_2 = arith.constant 0 : i32
    return %arg0, %c0_i32, %c0_i32_0, %c0_i32_1 : i32, i32, i32, i32
  }
  func.func @transform_3(%arg0: i32) -> (i32, i32, i32, i32) {
    %c0_i32 = arith.constant 0 : i32
    %c0_i32_0 = arith.constant 0 : i32
    %c0_i32_1 = arith.constant 0 : i32
    %c0_i32_2 = arith.constant 0 : i32
    return %arg0, %c0_i32, %c0_i32_0, %c0_i32_1 : i32, i32, i32, i32
  }
  func.func @transform_4(%arg0: i32) -> (i32, i32, i32, i32) {
    %c0_i32 = arith.constant 0 : i32
    %c0_i32_0 = arith.constant 0 : i32
    %c0_i32_1 = arith.constant 0 : i32
    %c0_i32_2 = arith.constant 0 : i32
    return %arg0, %c0_i32, %c0_i32_0, %c0_i32_1 : i32, i32, i32, i32
  }
}

</mosaic_0001>

<llo_original>
// kernel: esab_forward.17
$region0: #{esab_forward.17}
  #allocation0 [shape = 'u32[]', space=smem, size = 0x4, offset = 0x4, fixed_abs, tag = 'smem constant byte address 0x4 - core index']
  #allocation1 [shape = 'u32[144,128]{1,0:T(1,128)}', space=vmem, size = 0x12000, scoped, tag = 'internal scratch']
  %s0 = inlined_call_operand.vmem [shape: f32[2,16,16,8], index: 0, kind: input, shape index: {}]
  %s1 = inlined_call_operand.vmem [shape: f32[2,16,16,8], index: 1, kind: input, shape index: {}]
  %s2 = inlined_call_operand.vmem [shape: f32[2,16,16,8], index: 2, kind: input, shape index: {}]
  %s3 = inlined_call_operand.vmem [shape: f32[2,16,16,8], index: 3, kind: input, shape index: {}]
  %s4 = inlined_call_operand.vmem [shape: f32[2,16,16,8], index: 4, kind: output, shape index: {}]
  %s5 = sld [smem:[#allocation0]]
  $region49: #{esab_forward.17} parent=0
    _
  %s7 = ssub.s32 1, %s5
  %s8 = scalar_select 0, %s7, %s5
  loop: start=0, step=1, limit=4
  $region2: #{esab_forward.17} parent=0 // loop_pre_header
    _
  $region3: #{esab_forward.17} parent=0 // loop_header
    %s10 = sphi 0, %s14
    %p11 = scmp.ge.s32.totalorder %s10, 4
    %s20 = sphi 0, %s22
    %s23 = sphi 0, %s20
    %s24 = sphi 0, %s23
    %s40 = sphi 0, %s24
    %s46 = sphi 0, %s48
    %s49 = sphi 0, %s46
    %s50 = sphi 0, %s49
    %s66 = sphi 0, %s50
    %s72 = sphi 0, %s74
    %s75 = sphi 0, %s72
    %s76 = sphi 0, %s75
    %s92 = sphi 0, %s76
    %s98 = sphi 0, %s100
    %s101 = sphi 0, %s98
    %s102 = sphi 0, %s101
    %s118 = sphi 0, %s102
    %s124 = sphi 0, %s126
    %s127 = sphi 0, %s124
    %s128 = sphi 0, %s127
    %s144 = sphi 0, %s128
  $region4: #{esab_forward.17} parent=0 // loop_header_branch
    %13 = sbr.rel (%p11) target = $region8
  $region5: #{esab_forward.17} parent=0 // loop_body
    %s15 = ssub.s32 %s10, 1
    %s16 = ssub.s32 %s10, 2
    %s17 = sadd.s32 %s10, 1
    %s18 = ssub.s32 %s10, %s17
    %p19 = scmp.eq.s32.totalorder %s18, 0
    %s21 = sadd.s32 %s20, 1
    %s22 = scalar_select %p19, %s20, %s21
    %p25 = pneg %p19
    %p26 = scmp.eq.s32.totalorder %s10, 1
    %p27 = por %p25, %p26
    %p28 = scmp.ne.s32.totalorder %s20, %s23
    %p29 = scmp.eq.s32.totalorder %s10, 0
    %p30 = por %p28, %p29
    %p31 = scmp.ne.s32.totalorder %s20, %s23
    %p32 = scmp.eq.s32.totalorder %s15, 1
    %p33 = por %p31, %p32
    %p34 = scmp.ne.s32.totalorder %s23, %s24
    %p35 = scmp.eq.s32.totalorder %s15, 0
    %p36 = por %p34, %p35
    %p37 = scmp.ne.s32.totalorder %s23, %s24
    %p38 = scmp.eq.s32.totalorder %s16, 1
    %p39 = por %p37, %p38
    %p41 = scmp.ne.s32.totalorder %s24, %s40
    %p42 = scmp.eq.s32.totalorder %s16, 0
    %p43 = por %p41, %p42
    %s44 = ssub.s32 %s10, %s17
    %p45 = scmp.eq.s32.totalorder %s44, 0
    %s47 = sadd.s32 %s46, 1
    %s48 = scalar_select %p45, %s46, %s47
    %p51 = pneg %p45
    %p52 = scmp.eq.s32.totalorder %s10, 1
    %p53 = por %p51, %p52
    %p54 = scmp.ne.s32.totalorder %s46, %s49
    %p55 = scmp.eq.s32.totalorder %s10, 0
    %p56 = por %p54, %p55
    %p57 = scmp.ne.s32.totalorder %s46, %s49
    %p58 = scmp.eq.s32.totalorder %s15, 1
    %p59 = por %p57, %p58
    %p60 = scmp.ne.s32.totalorder %s49, %s50
    %p61 = scmp.eq.s32.totalorder %s15, 0
    %p62 = por %p60, %p61
    %p63 = scmp.ne.s32.totalorder %s49, %s50
    %p64 = scmp.eq.s32.totalorder %s16, 1
    %p65 = por %p63, %p64
    %p67 = scmp.ne.s32.totalorder %s50, %s66
    %p68 = scmp.eq.s32.totalorder %s16, 0
    %p69 = por %p67, %p68
    %s70 = ssub.s32 %s10, %s17
    %p71 = scmp.eq.s32.totalorder %s70, 0
    %s73 = sadd.s32 %s72, 1
    %s74 = scalar_select %p71, %s72, %s73
    %p77 = pneg %p71
    %p78 = scmp.eq.s32.totalorder %s10, 1
    %p79 = por %p77, %p78
    %p80 = scmp.ne.s32.totalorder %s72, %s75
    %p81 = scmp.eq.s32.totalorder %s10, 0
    %p82 = por %p80, %p81
    %p83 = scmp.ne.s32.totalorder %s72, %s75
    %p84 = scmp.eq.s32.totalorder %s15, 1
    %p85 = por %p83, %p84
    %p86 = scmp.ne.s32.totalorder %s75, %s76
    %p87 = scmp.eq.s32.totalorder %s15, 0
    %p88 = por %p86, %p87
    %p89 = scmp.ne.s32.totalorder %s75, %s76
    %p90 = scmp.eq.s32.totalorder %s16, 1
    %p91 = por %p89, %p90
    %p93 = scmp.ne.s32.totalorder %s76, %s92
    %p94 = scmp.eq.s32.totalorder %s16, 0
    %p95 = por %p93, %p94
    %s96 = ssub.s32 %s10, %s17
    %p97 = scmp.eq.s32.totalorder %s96, 0
    %s99 = sadd.s32 %s98, 1
    %s100 = scalar_select %p97, %s98, %s99
    %p103 = pneg %p97
    %p104 = scmp.eq.s32.totalorder %s10, 1
    %p105 = por %p103, %p104
    %p106 = scmp.ne.s32.totalorder %s98, %s101
    %p107 = scmp.eq.s32.totalorder %s10, 0
    %p108 = por %p106, %p107
    %p109 = scmp.ne.s32.totalorder %s98, %s101
    %p110 = scmp.eq.s32.totalorder %s15, 1
    %p111 = por %p109, %p110
    %p112 = scmp.ne.s32.totalorder %s101, %s102
    %p113 = scmp.eq.s32.totalorder %s15, 0
    %p114 = por %p112, %p113
    %p115 = scmp.ne.s32.totalorder %s101, %s102
    %p116 = scmp.eq.s32.totalorder %s16, 1
    %p117 = por %p115, %p116
    %p119 = scmp.ne.s32.totalorder %s102, %s118
    %p120 = scmp.eq.s32.totalorder %s16, 0
    %p121 = por %p119, %p120
    %s122 = ssub.s32 %s10, %s17
    %p123 = scmp.eq.s32.totalorder %s122, 0
    %s125 = sadd.s32 %s124, 1
    %s126 = scalar_select %p123, %s124, %s125
    %p129 = pneg %p123
    %p130 = scmp.eq.s32.totalorder %s10, 1
    %p131 = por %p129, %p130
    %p132 = scmp.ne.s32.totalorder %s124, %s127
    %p133 = scmp.eq.s32.totalorder %s10, 0
    %p134 = por %p132, %p133
    %p135 = scmp.ne.s32.totalorder %s124, %s127
    %p136 = scmp.eq.s32.totalorder %s15, 1
    %p137 = por %p135, %p136
    %p138 = scmp.ne.s32.totalorder %s127, %s128
    %p139 = scmp.eq.s32.totalorder %s15, 0
    %p140 = por %p138, %p139
    %p141 = scmp.ne.s32.totalorder %s127, %s128
    %p142 = scmp.eq.s32.totalorder %s16, 1
    %p143 = por %p141, %p142
    %p145 = scmp.ne.s32.totalorder %s128, %s144
    %p146 = scmp.eq.s32.totalorder %s16, 0
    %p147 = por %p145, %p146
    %p148 = scmp.le.s32.totalorder 1, %s10
    %p149 = scmp.lt.s32.totalorder %s10, 3
    %p150 = pnand %p148, %p149
    %p151 = pneg %p150
    // Predicated region
    $region9: #{esab_forward.17} parent=5 // pred_check
      _
    $region10: #{esab_forward.17} parent=5 // pred_check_branch
      %153 = sbr.rel (%p150) target = $region12
    $region11: #{esab_forward.17} parent=5 // pred_region
      %s154 = ssub.s32 %s10, 1
    $region12: #{esab_forward.17} parent=5 // pred_fallthru
      _
    %p155 = scmp.lt.s32.totalorder %s10, 2
    // Predicated region
    $region13: #{esab_forward.17} parent=5 // pred_check
      %p156 = pneg %p155
    $region14: #{esab_forward.17} parent=5 // pred_check_branch
      %158 = sbr.rel (%p156) target = $region16
    $region15: #{esab_forward.17} parent=5 // pred_region
      // Predicated region
      $region17: #{esab_forward.17} parent=15 // pred_check
        %p159 = pneg %p30
      $region18: #{esab_forward.17} parent=15 // pred_check_branch
        %161 = sbr.rel (%p159) target = $region20
      $region19: #{esab_forward.17} parent=15 // pred_region
        %p162 = scmp.lt.s32.totalorder %s10, 1
        %s163 = scalar_select %p162, %s10, 1
        %s164 = smul.addr %s163, 32
        %s165 = smul.addr %s164, 8
        %s166 = scalar_lea.vmem %s0, %s165
      $region20: #{esab_forward.17} parent=15 // pred_fallthru
        _
      // Predicated region
      $region21: #{esab_forward.17} parent=15 // pred_check
        %p167 = pneg %p56
      $region22: #{esab_forward.17} parent=15 // pred_check_branch
        %169 = sbr.rel (%p167) target = $region24
      $region23: #{esab_forward.17} parent=15 // pred_region
        %p170 = scmp.lt.s32.totalorder %s10, 1
        %s171 = scalar_select %p170, %s10, 1
        %s172 = smul.addr %s171, 32
        %s173 = smul.addr %s172, 8
        %s174 = scalar_lea.vmem %s1, %s173
      $region24: #{esab_forward.17} parent=15 // pred_fallthru
        _
      // Predicated region
      $region25: #{esab_forward.17} parent=15 // pred_check
        %p175 = pneg %p82
      $region26: #{esab_forward.17} parent=15 // pred_check_branch
        %177 = sbr.rel (%p175) target = $region28
      $region27: #{esab_forward.17} parent=15 // pred_region
        %p178 = scmp.lt.s32.totalorder %s10, 1
        %s179 = scalar_select %p178, %s10, 1
        %s180 = smul.addr %s179, 32
        %s181 = smul.addr %s180, 8
        %s182 = scalar_lea.vmem %s2, %s181
      $region28: #{esab_forward.17} parent=15 // pred_fallthru
        _
      // Predicated region
      $region29: #{esab_forward.17} parent=15 // pred_check
        %p183 = pneg %p108
      $region30: #{esab_forward.17} parent=15 // pred_check_branch
        %185 = sbr.rel (%p183) target = $region32
      $region31: #{esab_forward.17} parent=15 // pred_region
        %p186 = scmp.lt.s32.totalorder %s10, 1
        %s187 = scalar_select %p186, %s10, 1
        %s188 = smul.addr %s187, 32
        %s189 = smul.addr %s188, 8
        %s190 = scalar_lea.vmem %s3, %s189
      $region32: #{esab_forward.17} parent=15 // pred_fallthru
        _
    $region16: #{esab_forward.17} parent=5 // pred_fallthru
      _
    %p191 = scmp.le.s32.totalorder 1, %s10
    %p192 = scmp.lt.s32.totalorder %s10, 3
    %p193 = pnand %p191, %p192
    %p194 = pneg %p193
    // Predicated region
    $region33: #{esab_forward.17} parent=5 // pred_check
      _
    $region34: #{esab_forward.17} parent=5 // pred_check_branch
      %196 = sbr.rel (%p193) target = $region36
    $region35: #{esab_forward.17} parent=5 // pred_region
      %s197 = ssub.s32 %s10, 1
      %p198 = scmp.lt.s32.totalorder %s15, 1
      %s199 = scalar_select %p198, %s15, 1
      %s200 = smul.addr %s199, 32
      %s201 = smul.addr %s200, 8
      %s202 = scalar_lea.vmem %s0, %s201
      %p203 = pneg %p36
      %p204 = pneg %p33
      %p205 = scmp.lt.s32.totalorder %s15, 1
      %s206 = scalar_select %p205, %s15, 1
      %s207 = smul.addr %s206, 32
      %s208 = smul.addr %s207, 8
      %s209 = scalar_lea.vmem %s1, %s208
      %p210 = pneg %p62
      %p211 = pneg %p59
      %p212 = scmp.lt.s32.totalorder %s15, 1
      %s213 = scalar_select %p212, %s15, 1
      %s214 = smul.addr %s213, 32
      %s215 = smul.addr %s214, 8
      %s216 = scalar_lea.vmem %s2, %s215
      %p217 = pneg %p88
      %p218 = pneg %p85
      %p219 = scmp.lt.s32.totalorder %s15, 1
      %s220 = scalar_select %p219, %s15, 1
      %s221 = smul.addr %s220, 32
      %s222 = smul.addr %s221, 8
      %s223 = scalar_lea.vmem %s3, %s222
      %p224 = pneg %p114
      %p225 = pneg %p111
      %p226 = pneg %p140
      %p227 = pneg %p137
      %p228 = scmp.lt.s32.totalorder %s15, 1
      %s229 = scalar_select %p228, %s15, 1
      %s230 = smul.addr %s229, 32
      %s231 = smul.addr %s230, 8
      %s232 = scalar_lea.vmem %s4, %s231
      %p233 = scmp.lt.s32.totalorder %s15, 1
      %s234 = scalar_select %p233, %s15, 1
      %s235 = smul.addr %s234, 32
      %s236 = smul.addr %s235, 8
      %s237 = scalar_lea.vmem %s0, %s236
      %p238 = scmp.lt.s32.totalorder %s15, 1
      %s239 = scalar_select %p238, %s15, 1
      %s240 = smul.addr %s239, 32
      %s241 = smul.addr %s240, 8
      %s242 = scalar_lea.vmem %s1, %s241
      %p243 = scmp.lt.s32.totalorder %s15, 1
      %s244 = scalar_select %p243, %s15, 1
      %s245 = smul.addr %s244, 32
      %s246 = smul.addr %s245, 8
      %s247 = scalar_lea.vmem %s2, %s246
      %p248 = scmp.lt.s32.totalorder %s15, 1
      %s249 = scalar_select %p248, %s15, 1
      %s250 = smul.addr %s249, 32
      %s251 = smul.addr %s250, 8
      %s252 = scalar_lea.vmem %s3, %s251
      %p253 = scmp.lt.s32.totalorder %s15, 1
      %s254 = scalar_select %p253, %s15, 1
      %s255 = smul.addr %s254, 32
      %s256 = smul.addr %s255, 8
      %s257 = scalar_lea.vmem %s4, %s256
      %v258 = vld [vmem:[%s237] sm:$0xff]
      %v259 = vld [vmem:[%s237 + $0x8] sm:$0xff]
      %v260 = vld [vmem:[%s237 + $0x10] sm:$0xff]
      %v261 = vld [vmem:[%s237 + $0x18] sm:$0xff]
      %v262 = vld [vmem:[%s237 + $0x20] sm:$0xff]
      %v263 = vld [vmem:[%s237 + $0x28] sm:$0xff]
      %v264 = vld [vmem:[%s237 + $0x30] sm:$0xff]
      %v265 = vld [vmem:[%s237 + $0x38] sm:$0xff]
      %v266 = vld [vmem:[%s237 + $0x40] sm:$0xff]
      %v267 = vld [vmem:[%s237 + $0x48] sm:$0xff]
      %v268 = vld [vmem:[%s237 + $0x50] sm:$0xff]
      %v269 = vld [vmem:[%s237 + $0x58] sm:$0xff]
      %v270 = vld [vmem:[%s237 + $0x60] sm:$0xff]
      %v271 = vld [vmem:[%s237 + $0x68] sm:$0xff]
      %v272 = vld [vmem:[%s237 + $0x70] sm:$0xff]
      %v273 = vld [vmem:[%s237 + $0x78] sm:$0xff]
      %v274 = vld [vmem:[%s237 + $0x80] sm:$0xff]
      %v275 = vld [vmem:[%s237 + $0x88] sm:$0xff]
      %v276 = vld [vmem:[%s237 + $0x90] sm:$0xff]
      %v277 = vld [vmem:[%s237 + $0x98] sm:$0xff]
      %v278 = vld [vmem:[%s237 + $0xa0] sm:$0xff]
      %v279 = vld [vmem:[%s237 + $0xa8] sm:$0xff]
      %v280 = vld [vmem:[%s237 + $0xb0] sm:$0xff]
      %v281 = vld [vmem:[%s237 + $0xb8] sm:$0xff]
      %v282 = vld [vmem:[%s237 + $0xc0] sm:$0xff]
      %v283 = vld [vmem:[%s237 + $0xc8] sm:$0xff]
      %v284 = vld [vmem:[%s237 + $0xd0] sm:$0xff]
      %v285 = vld [vmem:[%s237 + $0xd8] sm:$0xff]
      %v286 = vld [vmem:[%s237 + $0xe0] sm:$0xff]
      %v287 = vld [vmem:[%s237 + $0xe8] sm:$0xff]
      %v288 = vld [vmem:[%s237 + $0xf0] sm:$0xff]
      %v289 = vld [vmem:[%s237 + $0xf8] sm:$0xff]
      %v290 = vld [vmem:[%s242] sm:$0xff]
      %v291 = vld [vmem:[%s242 + $0x8] sm:$0xff]
      %v292 = vld [vmem:[%s242 + $0x10] sm:$0xff]
      %v293 = vld [vmem:[%s242 + $0x18] sm:$0xff]
      %v294 = vld [vmem:[%s242 + $0x20] sm:$0xff]
      %v295 = vld [vmem:[%s242 + $0x28] sm:$0xff]
      %v296 = vld [vmem:[%s242 + $0x30] sm:$0xff]
      %v297 = vld [vmem:[%s242 + $0x38] sm:$0xff]
      %v298 = vld [vmem:[%s242 + $0x40] sm:$0xff]
      %v299 = vld [vmem:[%s242 + $0x48] sm:$0xff]
      %v300 = vld [vmem:[%s242 + $0x50] sm:$0xff]
      %v301 = vld [vmem:[%s242 + $0x58] sm:$0xff]
      %v302 = vld [vmem:[%s242 + $0x60] sm:$0xff]
      %v303 = vld [vmem:[%s242 + $0x68] sm:$0xff]
      %v304 = vld [vmem:[%s242 + $0x70] sm:$0xff]
      %v305 = vld [vmem:[%s242 + $0x78] sm:$0xff]
      %v306 = vld [vmem:[%s242 + $0x80] sm:$0xff]
      %v307 = vld [vmem:[%s242 + $0x88] sm:$0xff]
      %v308 = vld [vmem:[%s242 + $0x90] sm:$0xff]
      %v309 = vld [vmem:[%s242 + $0x98] sm:$0xff]
      %v310 = vld [vmem:[%s242 + $0xa0] sm:$0xff]
      %v311 = vld [vmem:[%s242 + $0xa8] sm:$0xff]
      %v312 = vld [vmem:[%s242 + $0xb0] sm:$0xff]
      %v313 = vld [vmem:[%s242 + $0xb8] sm:$0xff]
      %v314 = vld [vmem:[%s242 + $0xc0] sm:$0xff]
      %v315 = vld [vmem:[%s242 + $0xc8] sm:$0xff]
      %v316 = vld [vmem:[%s242 + $0xd0] sm:$0xff]
      %v317 = vld [vmem:[%s242 + $0xd8] sm:$0xff]
      %v318 = vld [vmem:[%s242 + $0xe0] sm:$0xff]
      %v319 = vld [vmem:[%s242 + $0xe8] sm:$0xff]
      %v320 = vld [vmem:[%s242 + $0xf0] sm:$0xff]
      %v321 = vld [vmem:[%s242 + $0xf8] sm:$0xff]
      %v322 = vadd.f32 %v258, %v290
      %v323 = vadd.f32 %v259, %v291
      %v324 = vadd.f32 %v260, %v292
      %v325 = vadd.f32 %v261, %v293
      %v326 = vadd.f32 %v262, %v294
      %v327 = vadd.f32 %v263, %v295
      %v328 = vadd.f32 %v264, %v296
      %v329 = vadd.f32 %v265, %v297
      %v330 = vadd.f32 %v266, %v298
      %v331 = vadd.f32 %v267, %v299
      %v332 = vadd.f32 %v268, %v300
      %v333 = vadd.f32 %v269, %v301
      %v334 = vadd.f32 %v270, %v302
      %v335 = vadd.f32 %v271, %v303
      %v336 = vadd.f32 %v272, %v304
      %v337 = vadd.f32 %v273, %v305
      %v338 = vadd.f32 %v274, %v306
      %v339 = vadd.f32 %v275, %v307
      %v340 = vadd.f32 %v276, %v308
      %v341 = vadd.f32 %v277, %v309
      %v342 = vadd.f32 %v278, %v310
      %v343 = vadd.f32 %v279, %v311
      %v344 = vadd.f32 %v280, %v312
      %v345 = vadd.f32 %v281, %v313
      %v346 = vadd.f32 %v282, %v314
      %v347 = vadd.f32 %v283, %v315
      %v348 = vadd.f32 %v284, %v316
      %v349 = vadd.f32 %v285, %v317
      %v350 = vadd.f32 %v286, %v318
      %v351 = vadd.f32 %v287, %v319
      %v352 = vadd.f32 %v288, %v320
      %v353 = vadd.f32 %v289, %v321
      %vm354 = vcmask 64512
      %v355 = vsel %vm354, %v322, -inf
      %356 = vmax.xlane.f32.xlu0 %v355
      %v357 = vpop.xlane.xlu0 %356
      %v358 = vsel %vm354, %v323, -inf
      %359 = vmax.xlane.f32.xlu0 %v358
      %v360 = vpop.xlane.xlu0 %359
      %v361 = vsel %vm354, %v324, -inf
      %362 = vmax.xlane.f32.xlu0 %v361
      %v363 = vpop.xlane.xlu0 %362
      %v364 = vsel %vm354, %v325, -inf
      %365 = vmax.xlane.f32.xlu0 %v364
      %v366 = vpop.xlane.xlu0 %365
      %v367 = vsel %vm354, %v326, -inf
      %368 = vmax.xlane.f32.xlu0 %v367
      %v369 = vpop.xlane.xlu0 %368
      %v370 = vsel %vm354, %v327, -inf
      %371 = vmax.xlane.f32.xlu0 %v370
      %v372 = vpop.xlane.xlu0 %371
      %v373 = vsel %vm354, %v328, -inf
      %374 = vmax.xlane.f32.xlu0 %v373
      %v375 = vpop.xlane.xlu0 %374
      %v376 = vsel %vm354, %v329, -inf
      %377 = vmax.xlane.f32.xlu0 %v376
      %v378 = vpop.xlane.xlu0 %377
      %v379 = vsel %vm354, %v330, -inf
      %380 = vmax.xlane.f32.xlu0 %v379
      %v381 = vpop.xlane.xlu0 %380
      %v382 = vsel %vm354, %v331, -inf
      %383 = vmax.xlane.f32.xlu0 %v382
      %v384 = vpop.xlane.xlu0 %383
      %v385 = vsel %vm354, %v332, -inf
      %386 = vmax.xlane.f32.xlu0 %v385
      %v387 = vpop.xlane.xlu0 %386
      %v388 = vsel %vm354, %v333, -inf
      %389 = vmax.xlane.f32.xlu0 %v388
      %v390 = vpop.xlane.xlu0 %389
      %v391 = vsel %vm354, %v334, -inf
      %392 = vmax.xlane.f32.xlu0 %v391
      %v393 = vpop.xlane.xlu0 %392
      %v394 = vsel %vm354, %v335, -inf
      %395 = vmax.xlane.f32.xlu0 %v394
      %v396 = vpop.xlane.xlu0 %395
      %v397 = vsel %vm354, %v336, -inf
      %398 = vmax.xlane.f32.xlu0 %v397
      %v399 = vpop.xlane.xlu0 %398
      %v400 = vsel %vm354, %v337, -inf
      %401 = vmax.xlane.f32.xlu0 %v400
      %v402 = vpop.xlane.xlu0 %401
      %v403 = vsel %vm354, %v338, -inf
      %404 = vmax.xlane.f32.xlu0 %v403
      %v405 = vpop.xlane.xlu0 %404
      %v406 = vsel %vm354, %v339, -inf
      %407 = vmax.xlane.f32.xlu0 %v406
      %v408 = vpop.xlane.xlu0 %407
      %v409 = vsel %vm354, %v340, -inf
      %410 = vmax.xlane.f32.xlu0 %v409
      %v411 = vpop.xlane.xlu0 %410
      %v412 = vsel %vm354, %v341, -inf
      %413 = vmax.xlane.f32.xlu0 %v412
      %v414 = vpop.xlane.xlu0 %413
      %v415 = vsel %vm354, %v342, -inf
      %416 = vmax.xlane.f32.xlu0 %v415
      %v417 = vpop.xlane.xlu0 %416
      %v418 = vsel %vm354, %v343, -inf
      %419 = vmax.xlane.f32.xlu0 %v418
      %v420 = vpop.xlane.xlu0 %419
      %v421 = vsel %vm354, %v344, -inf
      %422 = vmax.xlane.f32.xlu0 %v421
      %v423 = vpop.xlane.xlu0 %422
      %v424 = vsel %vm354, %v345, -inf
      %425 = vmax.xlane.f32.xlu0 %v424
      %v426 = vpop.xlane.xlu0 %425
      %v427 = vsel %vm354, %v346, -inf
      %428 = vmax.xlane.f32.xlu0 %v427
      %v429 = vpop.xlane.xlu0 %428
      %v430 = vsel %vm354, %v347, -inf
      %431 = vmax.xlane.f32.xlu0 %v430
      %v432 = vpop.xlane.xlu0 %431
      %v433 = vsel %vm354, %v348, -inf
      %434 = vmax.xlane.f32.xlu0 %v433
      %v435 = vpop.xlane.xlu0 %434
      %v436 = vsel %vm354, %v349, -inf
      %437 = vmax.xlane.f32.xlu0 %v436
      %v438 = vpop.xlane.xlu0 %437
      %v439 = vsel %vm354, %v350, -inf
      %440 = vmax.xlane.f32.xlu0 %v439
      %v441 = vpop.xlane.xlu0 %440
      %v442 = vsel %vm354, %v351, -inf
      %443 = vmax.xlane.f32.xlu0 %v442
      %v444 = vpop.xlane.xlu0 %443
      %v445 = vsel %vm354, %v352, -inf
      %446 = vmax.xlane.f32.xlu0 %v445
      %v447 = vpop.xlane.xlu0 %446
      %v448 = vsel %vm354, %v353, -inf
      %449 = vmax.xlane.f32.xlu0 %v448
      %v450 = vpop.xlane.xlu0 %449
      %v451 = vsub.f32 %v322, %v357
      %v452 = vsub.f32 %v323, %v360
      %v453 = vsub.f32 %v324, %v363
      %v454 = vsub.f32 %v325, %v366
      %v455 = vsub.f32 %v326, %v369
      %v456 = vsub.f32 %v327, %v372
      %v457 = vsub.f32 %v328, %v375
      %v458 = vsub.f32 %v329, %v378
      %v459 = vsub.f32 %v330, %v381
      %v460 = vsub.f32 %v331, %v384
      %v461 = vsub.f32 %v332, %v387
      %v462 = vsub.f32 %v333, %v390
      %v463 = vsub.f32 %v334, %v393
      %v464 = vsub.f32 %v335, %v396
      %v465 = vsub.f32 %v336, %v399
      %v466 = vsub.f32 %v337, %v402
      %v467 = vsub.f32 %v338, %v405
      %v468 = vsub.f32 %v339, %v408
      %v469 = vsub.f32 %v340, %v411
      %v470 = vsub.f32 %v341, %v414
      %v471 = vsub.f32 %v342, %v417
      %v472 = vsub.f32 %v343, %v420
      %v473 = vsub.f32 %v344, %v423
      %v474 = vsub.f32 %v345, %v426
      %v475 = vsub.f32 %v346, %v429
      %v476 = vsub.f32 %v347, %v432
      %v477 = vsub.f32 %v348, %v435
      %v478 = vsub.f32 %v349, %v438
      %v479 = vsub.f32 %v350, %v441
      %v480 = vsub.f32 %v351, %v444
      %v481 = vsub.f32 %v352, %v447
      %v482 = vsub.f32 %v353, %v450
      %v483 = vmul.f32 %v451, 1.442695
      %v484 = vpow.pop %v483
      %v485 = vmul.f32 %v452, 1.442695
      %v486 = vpow.pop %v485
      %v487 = vmul.f32 %v453, 1.442695
      %v488 = vpow.pop %v487
      %v489 = vmul.f32 %v454, 1.442695
      %v490 = vpow.pop %v489
      %v491 = vmul.f32 %v455, 1.442695
      %v492 = vpow.pop %v491
      %v493 = vmul.f32 %v456, 1.442695
      %v494 = vpow.pop %v493
      %v495 = vmul.f32 %v457, 1.442695
      %v496 = vpow.pop %v495
      %v497 = vmul.f32 %v458, 1.442695
      %v498 = vpow.pop %v497
      %v499 = vmul.f32 %v459, 1.442695
      %v500 = vpow.pop %v499
      %v501 = vmul.f32 %v460, 1.442695
      %v502 = vpow.pop %v501
      %v503 = vmul.f32 %v461, 1.442695
      %v504 = vpow.pop %v503
      %v505 = vmul.f32 %v462, 1.442695
      %v506 = vpow.pop %v505
      %v507 = vmul.f32 %v463, 1.442695
      %v508 = vpow.pop %v507
      %v509 = vmul.f32 %v464, 1.442695
      %v510 = vpow.pop %v509
      %v511 = vmul.f32 %v465, 1.442695
      %v512 = vpow.pop %v511
      %v513 = vmul.f32 %v466, 1.442695
      %v514 = vpow.pop %v513
      %v515 = vmul.f32 %v467, 1.442695
      %v516 = vpow.pop %v515
      %v517 = vmul.f32 %v468, 1.442695
      %v518 = vpow.pop %v517
      %v519 = vmul.f32 %v469, 1.442695
      %v520 = vpow.pop %v519
      %v521 = vmul.f32 %v470, 1.442695
      %v522 = vpow.pop %v521
      %v523 = vmul.f32 %v471, 1.442695
      %v524 = vpow.pop %v523
      %v525 = vmul.f32 %v472, 1.442695
      %v526 = vpow.pop %v525
      %v527 = vmul.f32 %v473, 1.442695
      %v528 = vpow.pop %v527
      %v529 = vmul.f32 %v474, 1.442695
      %v530 = vpow.pop %v529
      %v531 = vmul.f32 %v475, 1.442695
      %v532 = vpow.pop %v531
      %v533 = vmul.f32 %v476, 1.442695
      %v534 = vpow.pop %v533
      %v535 = vmul.f32 %v477, 1.442695
      %v536 = vpow.pop %v535
      %v537 = vmul.f32 %v478, 1.442695
      %v538 = vpow.pop %v537
      %v539 = vmul.f32 %v479, 1.442695
      %v540 = vpow.pop %v539
      %v541 = vmul.f32 %v480, 1.442695
      %v542 = vpow.pop %v541
      %v543 = vmul.f32 %v481, 1.442695
      %v544 = vpow.pop %v543
      %v545 = vmul.f32 %v482, 1.442695
      %v546 = vpow.pop %v545
      %v547 = vsel %vm354, %v484, 0.0
      %548 = vadd.xlane.f32.xlu0 %v547
      %v549 = vpop.xlane.xlu0 %548
      %v550 = vsel %vm354, %v486, 0.0
      %551 = vadd.xlane.f32.xlu0 %v550
      %v552 = vpop.xlane.xlu0 %551
      %v553 = vsel %vm354, %v488, 0.0
      %554 = vadd.xlane.f32.xlu0 %v553
      %v555 = vpop.xlane.xlu0 %554
      %v556 = vsel %vm354, %v490, 0.0
      %557 = vadd.xlane.f32.xlu0 %v556
      %v558 = vpop.xlane.xlu0 %557
      %v559 = vsel %vm354, %v492, 0.0
      %560 = vadd.xlane.f32.xlu0 %v559
      %v561 = vpop.xlane.xlu0 %560
      %v562 = vsel %vm354, %v494, 0.0
      %563 = vadd.xlane.f32.xlu0 %v562
      %v564 = vpop.xlane.xlu0 %563
      %v565 = vsel %vm354, %v496, 0.0
      %566 = vadd.xlane.f32.xlu0 %v565
      %v567 = vpop.xlane.xlu0 %566
      %v568 = vsel %vm354, %v498, 0.0
      %569 = vadd.xlane.f32.xlu0 %v568
      %v570 = vpop.xlane.xlu0 %569
      %v571 = vsel %vm354, %v500, 0.0
      %572 = vadd.xlane.f32.xlu0 %v571
      %v573 = vpop.xlane.xlu0 %572
      %v574 = vsel %vm354, %v502, 0.0
      %575 = vadd.xlane.f32.xlu0 %v574
      %v576 = vpop.xlane.xlu0 %575
      %v577 = vsel %vm354, %v504, 0.0
      %578 = vadd.xlane.f32.xlu0 %v577
      %v579 = vpop.xlane.xlu0 %578
      %v580 = vsel %vm354, %v506, 0.0
      %581 = vadd.xlane.f32.xlu0 %v580
      %v582 = vpop.xlane.xlu0 %581
      %v583 = vsel %vm354, %v508, 0.0
      %584 = vadd.xlane.f32.xlu0 %v583
      %v585 = vpop.xlane.xlu0 %584
      %v586 = vsel %vm354, %v510, 0.0
      %587 = vadd.xlane.f32.xlu0 %v586
      %v588 = vpop.xlane.xlu0 %587
      %v589 = vsel %vm354, %v512, 0.0
      %590 = vadd.xlane.f32.xlu0 %v589
      %v591 = vpop.xlane.xlu0 %590
      %v592 = vsel %vm354, %v514, 0.0
      %593 = vadd.xlane.f32.xlu0 %v592
      %v594 = vpop.xlane.xlu0 %593
      %v595 = vsel %vm354, %v516, 0.0
      %596 = vadd.xlane.f32.xlu0 %v595
      %v597 = vpop.xlane.xlu0 %596
      %v598 = vsel %vm354, %v518, 0.0
      %599 = vadd.xlane.f32.xlu0 %v598
      %v600 = vpop.xlane.xlu0 %599
      %v601 = vsel %vm354, %v520, 0.0
      %602 = vadd.xlane.f32.xlu0 %v601
      %v603 = vpop.xlane.xlu0 %602
      %v604 = vsel %vm354, %v522, 0.0
      %605 = vadd.xlane.f32.xlu0 %v604
      %v606 = vpop.xlane.xlu0 %605
      %v607 = vsel %vm354, %v524, 0.0
      %608 = vadd.xlane.f32.xlu0 %v607
      %v609 = vpop.xlane.xlu0 %608
      %v610 = vsel %vm354, %v526, 0.0
      %611 = vadd.xlane.f32.xlu0 %v610
      %v612 = vpop.xlane.xlu0 %611
      %v613 = vsel %vm354, %v528, 0.0
      %614 = vadd.xlane.f32.xlu0 %v613
      %v615 = vpop.xlane.xlu0 %614
      %v616 = vsel %vm354, %v530, 0.0
      %617 = vadd.xlane.f32.xlu0 %v616
      %v618 = vpop.xlane.xlu0 %617
      %v619 = vsel %vm354, %v532, 0.0
      %620 = vadd.xlane.f32.xlu0 %v619
      %v621 = vpop.xlane.xlu0 %620
      %v622 = vsel %vm354, %v534, 0.0
      %623 = vadd.xlane.f32.xlu0 %v622
      %v624 = vpop.xlane.xlu0 %623
      %v625 = vsel %vm354, %v536, 0.0
      %626 = vadd.xlane.f32.xlu0 %v625
      %v627 = vpop.xlane.xlu0 %626
      %v628 = vsel %vm354, %v538, 0.0
      %629 = vadd.xlane.f32.xlu0 %v628
      %v630 = vpop.xlane.xlu0 %629
      %v631 = vsel %vm354, %v540, 0.0
      %632 = vadd.xlane.f32.xlu0 %v631
      %v633 = vpop.xlane.xlu0 %632
      %v634 = vsel %vm354, %v542, 0.0
      %635 = vadd.xlane.f32.xlu0 %v634
      %v636 = vpop.xlane.xlu0 %635
      %v637 = vsel %vm354, %v544, 0.0
      %638 = vadd.xlane.f32.xlu0 %v637
      %v639 = vpop.xlane.xlu0 %638
      %v640 = vsel %vm354, %v546, 0.0
      %641 = vadd.xlane.f32.xlu0 %v640
      %v642 = vpop.xlane.xlu0 %641
      %v643 = vrcp.pop %v549
      %v644 = vmul.f32 %v484, %v643
      %v645 = vrcp.pop %v552
      %v646 = vmul.f32 %v486, %v645
      %v647 = vrcp.pop %v555
      %v648 = vmul.f32 %v488, %v647
      %v649 = vrcp.pop %v558
      %v650 = vmul.f32 %v490, %v649
      %v651 = vrcp.pop %v561
      %v652 = vmul.f32 %v492, %v651
      %v653 = vrcp.pop %v564
      %v654 = vmul.f32 %v494, %v653
      %v655 = vrcp.pop %v567
      %v656 = vmul.f32 %v496, %v655
      %v657 = vrcp.pop %v570
      %v658 = vmul.f32 %v498, %v657
      %v659 = vrcp.pop %v573
      %v660 = vmul.f32 %v500, %v659
      %v661 = vrcp.pop %v576
      %v662 = vmul.f32 %v502, %v661
      %v663 = vrcp.pop %v579
      %v664 = vmul.f32 %v504, %v663
      %v665 = vrcp.pop %v582
      %v666 = vmul.f32 %v506, %v665
      %v667 = vrcp.pop %v585
      %v668 = vmul.f32 %v508, %v667
      %v669 = vrcp.pop %v588
      %v670 = vmul.f32 %v510, %v669
      %v671 = vrcp.pop %v591
      %v672 = vmul.f32 %v512, %v671
      %v673 = vrcp.pop %v594
      %v674 = vmul.f32 %v514, %v673
      %v675 = vrcp.pop %v597
      %v676 = vmul.f32 %v516, %v675
      %v677 = vrcp.pop %v600
      %v678 = vmul.f32 %v518, %v677
      %v679 = vrcp.pop %v603
      %v680 = vmul.f32 %v520, %v679
      %v681 = vrcp.pop %v606
      %v682 = vmul.f32 %v522, %v681
      %v683 = vrcp.pop %v609
      %v684 = vmul.f32 %v524, %v683
      %v685 = vrcp.pop %v612
      %v686 = vmul.f32 %v526, %v685
      %v687 = vrcp.pop %v615
      %v688 = vmul.f32 %v528, %v687
      %v689 = vrcp.pop %v618
      %v690 = vmul.f32 %v530, %v689
      %v691 = vrcp.pop %v621
      %v692 = vmul.f32 %v532, %v691
      %v693 = vrcp.pop %v624
      %v694 = vmul.f32 %v534, %v693
      %v695 = vrcp.pop %v627
      %v696 = vmul.f32 %v536, %v695
      %v697 = vrcp.pop %v630
      %v698 = vmul.f32 %v538, %v697
      %v699 = vrcp.pop %v633
      %v700 = vmul.f32 %v540, %v699
      %v701 = vrcp.pop %v636
      %v702 = vmul.f32 %v542, %v701
      %v703 = vrcp.pop %v639
      %v704 = vmul.f32 %v544, %v703
      %v705 = vrcp.pop %v642
      %v706 = vmul.f32 %v546, %v705
      %v707 = vld [vmem:[%s247] sm:$0xff]
      %v708 = vld [vmem:[%s247 + $0x8] sm:$0xff]
      %v709 = vld [vmem:[%s247 + $0x10] sm:$0xff]
      %v710 = vld [vmem:[%s247 + $0x18] sm:$0xff]
      %v711 = vld [vmem:[%s247 + $0x20] sm:$0xff]
      %v712 = vld [vmem:[%s247 + $0x28] sm:$0xff]
      %v713 = vld [vmem:[%s247 + $0x30] sm:$0xff]
      %v714 = vld [vmem:[%s247 + $0x38] sm:$0xff]
      %v715 = vld [vmem:[%s247 + $0x40] sm:$0xff]
      %v716 = vld [vmem:[%s247 + $0x48] sm:$0xff]
      %v717 = vld [vmem:[%s247 + $0x50] sm:$0xff]
      %v718 = vld [vmem:[%s247 + $0x58] sm:$0xff]
      %v719 = vld [vmem:[%s247 + $0x60] sm:$0xff]
      %v720 = vld [vmem:[%s247 + $0x68] sm:$0xff]
      %v721 = vld [vmem:[%s247 + $0x70] sm:$0xff]
      %v722 = vld [vmem:[%s247 + $0x78] sm:$0xff]
      %v723 = vld [vmem:[%s247 + $0x80] sm:$0xff]
      %v724 = vld [vmem:[%s247 + $0x88] sm:$0xff]
      %v725 = vld [vmem:[%s247 + $0x90] sm:$0xff]
      %v726 = vld [vmem:[%s247 + $0x98] sm:$0xff]
      %v727 = vld [vmem:[%s247 + $0xa0] sm:$0xff]
      %v728 = vld [vmem:[%s247 + $0xa8] sm:$0xff]
      %v729 = vld [vmem:[%s247 + $0xb0] sm:$0xff]
      %v730 = vld [vmem:[%s247 + $0xb8] sm:$0xff]
      %v731 = vld [vmem:[%s247 + $0xc0] sm:$0xff]
      %v732 = vld [vmem:[%s247 + $0xc8] sm:$0xff]
      %v733 = vld [vmem:[%s247 + $0xd0] sm:$0xff]
      %v734 = vld [vmem:[%s247 + $0xd8] sm:$0xff]
      %v735 = vld [vmem:[%s247 + $0xe0] sm:$0xff]
      %v736 = vld [vmem:[%s247 + $0xe8] sm:$0xff]
      %v737 = vld [vmem:[%s247 + $0xf0] sm:$0xff]
      %v738 = vld [vmem:[%s247 + $0xf8] sm:$0xff]
      %v739 = vld [vmem:[%s252] sm:$0xff]
      %v740 = vld [vmem:[%s252 + $0x8] sm:$0xff]
      %v741 = vld [vmem:[%s252 + $0x10] sm:$0xff]
      %v742 = vld [vmem:[%s252 + $0x18] sm:$0xff]
      %v743 = vld [vmem:[%s252 + $0x20] sm:$0xff]
      %v744 = vld [vmem:[%s252 + $0x28] sm:$0xff]
      %v745 = vld [vmem:[%s252 + $0x30] sm:$0xff]
      %v746 = vld [vmem:[%s252 + $0x38] sm:$0xff]
      %v747 = vld [vmem:[%s252 + $0x40] sm:$0xff]
      %v748 = vld [vmem:[%s252 + $0x48] sm:$0xff]
      %v749 = vld [vmem:[%s252 + $0x50] sm:$0xff]
      %v750 = vld [vmem:[%s252 + $0x58] sm:$0xff]
      %v751 = vld [vmem:[%s252 + $0x60] sm:$0xff]
      %v752 = vld [vmem:[%s252 + $0x68] sm:$0xff]
      %v753 = vld [vmem:[%s252 + $0x70] sm:$0xff]
      %v754 = vld [vmem:[%s252 + $0x78] sm:$0xff]
      %v755 = vld [vmem:[%s252 + $0x80] sm:$0xff]
      %v756 = vld [vmem:[%s252 + $0x88] sm:$0xff]
      %v757 = vld [vmem:[%s252 + $0x90] sm:$0xff]
      %v758 = vld [vmem:[%s252 + $0x98] sm:$0xff]
      %v759 = vld [vmem:[%s252 + $0xa0] sm:$0xff]
      %v760 = vld [vmem:[%s252 + $0xa8] sm:$0xff]
      %v761 = vld [vmem:[%s252 + $0xb0] sm:$0xff]
      %v762 = vld [vmem:[%s252 + $0xb8] sm:$0xff]
      %v763 = vld [vmem:[%s252 + $0xc0] sm:$0xff]
      %v764 = vld [vmem:[%s252 + $0xc8] sm:$0xff]
      %v765 = vld [vmem:[%s252 + $0xd0] sm:$0xff]
      %v766 = vld [vmem:[%s252 + $0xd8] sm:$0xff]
      %v767 = vld [vmem:[%s252 + $0xe0] sm:$0xff]
      %v768 = vld [vmem:[%s252 + $0xe8] sm:$0xff]
      %v769 = vld [vmem:[%s252 + $0xf0] sm:$0xff]
      %v770 = vld [vmem:[%s252 + $0xf8] sm:$0xff]
      %v771 = vmul.f32 %v644, %v707
      %v772 = vmul.f32 %v646, %v708
      %v773 = vmul.f32 %v648, %v709
      %v774 = vmul.f32 %v650, %v710
      %v775 = vmul.f32 %v652, %v711
      %v776 = vmul.f32 %v654, %v712
      %v777 = vmul.f32 %v656, %v713
      %v778 = vmul.f32 %v658, %v714
      %v779 = vmul.f32 %v660, %v715
      %v780 = vmul.f32 %v662, %v716
      %v781 = vmul.f32 %v664, %v717
      %v782 = vmul.f32 %v666, %v718
      %v783 = vmul.f32 %v668, %v719
      %v784 = vmul.f32 %v670, %v720
      %v785 = vmul.f32 %v672, %v721
      %v786 = vmul.f32 %v674, %v722
      %v787 = vmul.f32 %v676, %v723
      %v788 = vmul.f32 %v678, %v724
      %v789 = vmul.f32 %v680, %v725
      %v790 = vmul.f32 %v682, %v726
      %v791 = vmul.f32 %v684, %v727
      %v792 = vmul.f32 %v686, %v728
      %v793 = vmul.f32 %v688, %v729
      %v794 = vmul.f32 %v690, %v730
      %v795 = vmul.f32 %v692, %v731
      %v796 = vmul.f32 %v694, %v732
      %v797 = vmul.f32 %v696, %v733
      %v798 = vmul.f32 %v698, %v734
      %v799 = vmul.f32 %v700, %v735
      %v800 = vmul.f32 %v702, %v736
      %v801 = vmul.f32 %v704, %v737
      %v802 = vmul.f32 %v706, %v738
      %v803 = vadd.f32 %v771, %v739
      %v804 = vadd.f32 %v772, %v740
      %v805 = vadd.f32 %v773, %v741
      %v806 = vadd.f32 %v774, %v742
      %v807 = vadd.f32 %v775, %v743
      %v808 = vadd.f32 %v776, %v744
      %v809 = vadd.f32 %v777, %v745
      %v810 = vadd.f32 %v778, %v746
      %v811 = vadd.f32 %v779, %v747
      %v812 = vadd.f32 %v780, %v748
      %v813 = vadd.f32 %v781, %v749
      %v814 = vadd.f32 %v782, %v750
      %v815 = vadd.f32 %v783, %v751
      %v816 = vadd.f32 %v784, %v752
      %v817 = vadd.f32 %v785, %v753
      %v818 = vadd.f32 %v786, %v754
      %v819 = vadd.f32 %v787, %v755
      %v820 = vadd.f32 %v788, %v756
      %v821 = vadd.f32 %v789, %v757
      %v822 = vadd.f32 %v790, %v758
      %v823 = vadd.f32 %v791, %v759
      %v824 = vadd.f32 %v792, %v760
      %v825 = vadd.f32 %v793, %v761
      %v826 = vadd.f32 %v794, %v762
      %v827 = vadd.f32 %v795, %v763
      %v828 = vadd.f32 %v796, %v764
      %v829 = vadd.f32 %v797, %v765
      %v830 = vadd.f32 %v798, %v766
      %v831 = vadd.f32 %v799, %v767
      %v832 = vadd.f32 %v800, %v768
      %v833 = vadd.f32 %v801, %v769
      %v834 = vadd.f32 %v802, %v770
      %835 = vst.msk [vmem:[%s257] sm:$0xff] %vm354, %v803
      %836 = vst.msk [vmem:[%s257 + $0x8] sm:$0xff] %vm354, %v804
      %837 = vst.msk [vmem:[%s257 + $0x10] sm:$0xff] %vm354, %v805
      %838 = vst.msk [vmem:[%s257 + $0x18] sm:$0xff] %vm354, %v806
      %839 = vst.msk [vmem:[%s257 + $0x20] sm:$0xff] %vm354, %v807
      %840 = vst.msk [vmem:[%s257 + $0x28] sm:$0xff] %vm354, %v808
      %841 = vst.msk [vmem:[%s257 + $0x30] sm:$0xff] %vm354, %v809
      %842 = vst.msk [vmem:[%s257 + $0x38] sm:$0xff] %vm354, %v810
      %843 = vst.msk [vmem:[%s257 + $0x40] sm:$0xff] %vm354, %v811
      %844 = vst.msk [vmem:[%s257 + $0x48] sm:$0xff] %vm354, %v812
      %845 = vst.msk [vmem:[%s257 + $0x50] sm:$0xff] %vm354, %v813
      %846 = vst.msk [vmem:[%s257 + $0x58] sm:$0xff] %vm354, %v814
      %847 = vst.msk [vmem:[%s257 + $0x60] sm:$0xff] %vm354, %v815
      %848 = vst.msk [vmem:[%s257 + $0x68] sm:$0xff] %vm354, %v816
      %849 = vst.msk [vmem:[%s257 + $0x70] sm:$0xff] %vm354, %v817
      %850 = vst.msk [vmem:[%s257 + $0x78] sm:$0xff] %vm354, %v818
      %851 = vst.msk [vmem:[%s257 + $0x80] sm:$0xff] %vm354, %v819
      %852 = vst.msk [vmem:[%s257 + $0x88] sm:$0xff] %vm354, %v820
      %853 = vst.msk [vmem:[%s257 + $0x90] sm:$0xff] %vm354, %v821
      %854 = vst.msk [vmem:[%s257 + $0x98] sm:$0xff] %vm354, %v822
      %855 = vst.msk [vmem:[%s257 + $0xa0] sm:$0xff] %vm354, %v823
      %856 = vst.msk [vmem:[%s257 + $0xa8] sm:$0xff] %vm354, %v824
      %857 = vst.msk [vmem:[%s257 + $0xb0] sm:$0xff] %vm354, %v825
      %858 = vst.msk [vmem:[%s257 + $0xb8] sm:$0xff] %vm354, %v826
      %859 = vst.msk [vmem:[%s257 + $0xc0] sm:$0xff] %vm354, %v827
      %860 = vst.msk [vmem:[%s257 + $0xc8] sm:$0xff] %vm354, %v828
      %861 = vst.msk [vmem:[%s257 + $0xd0] sm:$0xff] %vm354, %v829
      %862 = vst.msk [vmem:[%s257 + $0xd8] sm:$0xff] %vm354, %v830
      %863 = vst.msk [vmem:[%s257 + $0xe0] sm:$0xff] %vm354, %v831
      %864 = vst.msk [vmem:[%s257 + $0xe8] sm:$0xff] %vm354, %v832
      %865 = vst.msk [vmem:[%s257 + $0xf0] sm:$0xff] %vm354, %v833
      %866 = vst.msk [vmem:[%s257 + $0xf8] sm:$0xff] %vm354, %v834
      %p867 = scmp.lt.s32.totalorder %s15, 1
      %s868 = scalar_select %p867, %s15, 1
      %s869 = smul.addr %s868, 32
      %s870 = smul.addr %s869, 8
      %s871 = scalar_lea.vmem %s4, %s870
      // Predicated region
      $region37: #{esab_forward.17} parent=35 // pred_check
        %p872 = pneg %p137
      $region38: #{esab_forward.17} parent=35 // pred_check_branch
        %874 = sbr.rel (%p872) target = $region40
      $region39: #{esab_forward.17} parent=35 // pred_region
        _
      $region40: #{esab_forward.17} parent=35 // pred_fallthru
        _
    $region36: #{esab_forward.17} parent=5 // pred_fallthru
      _
    %p875 = scmp.le.s32.totalorder 2, %s10
    // Predicated region
    $region41: #{esab_forward.17} parent=5 // pred_check
      %p876 = pneg %p875
    $region42: #{esab_forward.17} parent=5 // pred_check_branch
      %878 = sbr.rel (%p876) target = $region44
    $region43: #{esab_forward.17} parent=5 // pred_region
      %s879 = ssub.s32 %s10, 2
      // Predicated region
      $region45: #{esab_forward.17} parent=43 // pred_check
        %p880 = pneg %p143
      $region46: #{esab_forward.17} parent=43 // pred_check_branch
        %882 = sbr.rel (%p880) target = $region48
      $region47: #{esab_forward.17} parent=43 // pred_region
        %p883 = scmp.lt.s32.totalorder %s16, 1
        %s884 = scalar_select %p883, %s16, 1
        %s885 = smul.addr %s884, 32
        %s886 = smul.addr %s885, 8
        %s887 = scalar_lea.vmem %s4, %s886
      $region48: #{esab_forward.17} parent=43 // pred_fallthru
        _
    $region44: #{esab_forward.17} parent=5 // pred_fallthru
      _
  $region6: #{esab_forward.17} parent=0 // loop_footer
    %s14 = sadd.s32 1, %s10
  $region7: #{esab_forward.17} parent=0 // loop_footer_branch
    %9 = sbr.rel target = $region3
  $region8: #{esab_forward.17} parent=0 // loop_exit
    _

// kernel: esab_forward.11
$region0: #{esab_forward.11}
  #allocation0 [shape = 'u32[]', space=smem, size = 0x4, offset = 0x4, fixed_abs, tag = 'smem constant byte address 0x4 - core index']
  #allocation1 [shape = 'u32[144,128]{1,0:T(1,128)}', space=vmem, size = 0x12000, scoped, tag = 'internal scratch']
  %s0 = inlined_call_operand.vmem [shape: f32[2,18,16,8], index: 0, kind: input, shape index: {}]
  %s1 = inlined_call_operand.vmem [shape: f32[3,8,8], index: 1, kind: input, shape index: {}]
  %s2 = inlined_call_operand.vmem [shape: f32[1,8], index: 2, kind: input, shape index: {}]
  %s3 = inlined_call_operand.vmem [shape: f32[2,16,16,8], index: 3, kind: output, shape index: {}]
  %s4 = sld [smem:[#allocation0]]
  $region45: #{esab_forward.11} parent=0
    _
  %s6 = ssub.s32 1, %s4
  %s7 = scalar_select 0, %s6, %s4
  loop: start=0, step=1, limit=4
  $region2: #{esab_forward.11} parent=0 // loop_pre_header
    _
  $region3: #{esab_forward.11} parent=0 // loop_header
    %s9 = sphi 0, %s13
    %p10 = scmp.ge.s32.totalorder %s9, 4
    %s19 = sphi 0, %s21
    %s22 = sphi 0, %s19
    %s23 = sphi 0, %s22
    %s39 = sphi 0, %s23
    %s43 = sphi 0, %s43
    %s45 = sphi 0, %s43
    %s46 = sphi 0, %s45
    %s60 = sphi 0, %s46
    %s64 = sphi 0, %s64
    %s66 = sphi 0, %s64
    %s67 = sphi 0, %s66
    %s81 = sphi 0, %s67
    %s87 = sphi 0, %s89
    %s90 = sphi 0, %s87
    %s91 = sphi 0, %s90
    %s107 = sphi 0, %s91
  $region4: #{esab_forward.11} parent=0 // loop_header_branch
    %12 = sbr.rel (%p10) target = $region8
  $region5: #{esab_forward.11} parent=0 // loop_body
    %s14 = ssub.s32 %s9, 1
    %s15 = ssub.s32 %s9, 2
    %s16 = sadd.s32 %s9, 1
    %s17 = ssub.s32 %s9, %s16
    %p18 = scmp.eq.s32.totalorder %s17, 0
    %s20 = sadd.s32 %s19, 1
    %s21 = scalar_select %p18, %s19, %s20
    %p24 = pneg %p18
    %p25 = scmp.eq.s32.totalorder %s9, 1
    %p26 = por %p24, %p25
    %p27 = scmp.ne.s32.totalorder %s19, %s22
    %p28 = scmp.eq.s32.totalorder %s9, 0
    %p29 = por %p27, %p28
    %p30 = scmp.ne.s32.totalorder %s19, %s22
    %p31 = scmp.eq.s32.totalorder %s14, 1
    %p32 = por %p30, %p31
    %p33 = scmp.ne.s32.totalorder %s22, %s23
    %p34 = scmp.eq.s32.totalorder %s14, 0
    %p35 = por %p33, %p34
    %p36 = scmp.ne.s32.totalorder %s22, %s23
    %p37 = scmp.eq.s32.totalorder %s15, 1
    %p38 = por %p36, %p37
    %p40 = scmp.ne.s32.totalorder %s23, %s39
    %p41 = scmp.eq.s32.totalorder %s15, 0
    %p42 = por %p40, %p41
    %s44 = sadd.s32 %s43, 1
    %p47 = scmp.eq.s32.totalorder %s9, 1
    %p48 = scmp.ne.s32.totalorder %s43, %s45
    %p49 = scmp.eq.s32.totalorder %s9, 0
    %p50 = por %p48, %p49
    %p51 = scmp.ne.s32.totalorder %s43, %s45
    %p52 = scmp.eq.s32.totalorder %s14, 1
    %p53 = por %p51, %p52
    %p54 = scmp.ne.s32.totalorder %s45, %s46
    %p55 = scmp.eq.s32.totalorder %s14, 0
    %p56 = por %p54, %p55
    %p57 = scmp.ne.s32.totalorder %s45, %s46
    %p58 = scmp.eq.s32.totalorder %s15, 1
    %p59 = por %p57, %p58
    %p61 = scmp.ne.s32.totalorder %s46, %s60
    %p62 = scmp.eq.s32.totalorder %s15, 0
    %p63 = por %p61, %p62
    %s65 = sadd.s32 %s64, 1
    %p68 = scmp.eq.s32.totalorder %s9, 1
    %p69 = scmp.ne.s32.totalorder %s64, %s66
    %p70 = scmp.eq.s32.totalorder %s9, 0
    %p71 = por %p69, %p70
    %p72 = scmp.ne.s32.totalorder %s64, %s66
    %p73 = scmp.eq.s32.totalorder %s14, 1
    %p74 = por %p72, %p73
    %p75 = scmp.ne.s32.totalorder %s66, %s67
    %p76 = scmp.eq.s32.totalorder %s14, 0
    %p77 = por %p75, %p76
    %p78 = scmp.ne.s32.totalorder %s66, %s67
    %p79 = scmp.eq.s32.totalorder %s15, 1
    %p80 = por %p78, %p79
    %p82 = scmp.ne.s32.totalorder %s67, %s81
    %p83 = scmp.eq.s32.totalorder %s15, 0
    %p84 = por %p82, %p83
    %s85 = ssub.s32 %s9, %s16
    %p86 = scmp.eq.s32.totalorder %s85, 0
    %s88 = sadd.s32 %s87, 1
    %s89 = scalar_select %p86, %s87, %s88
    %p92 = pneg %p86
    %p93 = scmp.eq.s32.totalorder %s9, 1
    %p94 = por %p92, %p93
    %p95 = scmp.ne.s32.totalorder %s87, %s90
    %p96 = scmp.eq.s32.totalorder %s9, 0
    %p97 = por %p95, %p96
    %p98 = scmp.ne.s32.totalorder %s87, %s90
    %p99 = scmp.eq.s32.totalorder %s14, 1
    %p100 = por %p98, %p99
    %p101 = scmp.ne.s32.totalorder %s90, %s91
    %p102 = scmp.eq.s32.totalorder %s14, 0
    %p103 = por %p101, %p102
    %p104 = scmp.ne.s32.totalorder %s90, %s91
    %p105 = scmp.eq.s32.totalorder %s15, 1
    %p106 = por %p104, %p105
    %p108 = scmp.ne.s32.totalorder %s91, %s107
    %p109 = scmp.eq.s32.totalorder %s15, 0
    %p110 = por %p108, %p109
    %p111 = scmp.le.s32.totalorder 1, %s9
    %p112 = scmp.lt.s32.totalorder %s9, 3
    %p113 = pnand %p111, %p112
    %p114 = pneg %p113
    // Predicated region
    $region9: #{esab_forward.11} parent=5 // pred_check
      _
    $region10: #{esab_forward.11} parent=5 // pred_check_branch
      %116 = sbr.rel (%p113) target = $region12
    $region11: #{esab_forward.11} parent=5 // pred_region
      %s117 = ssub.s32 %s9, 1
      // Predicated region
      $region13: #{esab_forward.11} parent=11 // pred_check
        %p118 = pneg %p56
      $region14: #{esab_forward.11} parent=11 // pred_check_branch
        %120 = sbr.rel (%p118) target = $region16
      $region15: #{esab_forward.11} parent=11 // pred_region
        _
      $region16: #{esab_forward.11} parent=11 // pred_fallthru
        _
      // Predicated region
      $region17: #{esab_forward.11} parent=11 // pred_check
        %p121 = pneg %p77
      $region18: #{esab_forward.11} parent=11 // pred_check_branch
        %123 = sbr.rel (%p121) target = $region20
      $region19: #{esab_forward.11} parent=11 // pred_region
        _
      $region20: #{esab_forward.11} parent=11 // pred_fallthru
        _
    $region12: #{esab_forward.11} parent=5 // pred_fallthru
      _
    %p124 = scmp.lt.s32.totalorder %s9, 2
    // Predicated region
    $region21: #{esab_forward.11} parent=5 // pred_check
      %p125 = pneg %p124
    $region22: #{esab_forward.11} parent=5 // pred_check_branch
      %127 = sbr.rel (%p125) target = $region24
    $region23: #{esab_forward.11} parent=5 // pred_region
      // Predicated region
      $region25: #{esab_forward.11} parent=23 // pred_check
        %p128 = pneg %p29
      $region26: #{esab_forward.11} parent=23 // pred_check_branch
        %130 = sbr.rel (%p128) target = $region28
      $region27: #{esab_forward.11} parent=23 // pred_region
        %p131 = scmp.lt.s32.totalorder %s9, 1
        %s132 = scalar_select %p131, %s9, 1
        %s133 = smul.addr %s132, 36
        %s134 = smul.addr %s133, 8
        %s135 = scalar_lea.vmem %s0, %s134
      $region28: #{esab_forward.11} parent=23 // pred_fallthru
        _
    $region24: #{esab_forward.11} parent=5 // pred_fallthru
      _
    %p136 = scmp.le.s32.totalorder 1, %s9
    %p137 = scmp.lt.s32.totalorder %s9, 3
    %p138 = pnand %p136, %p137
    %p139 = pneg %p138
    // Predicated region
    $region29: #{esab_forward.11} parent=5 // pred_check
      _
    $region30: #{esab_forward.11} parent=5 // pred_check_branch
      %141 = sbr.rel (%p138) target = $region32
    $region31: #{esab_forward.11} parent=5 // pred_region
      %s142 = ssub.s32 %s9, 1
      %p143 = scmp.lt.s32.totalorder %s14, 1
      %s144 = scalar_select %p143, %s14, 1
      %s145 = smul.addr %s144, 36
      %s146 = smul.addr %s145, 8
      %s147 = scalar_lea.vmem %s0, %s146
      %p148 = pneg %p35
      %p149 = pneg %p32
      %p150 = pneg %p56
      %p151 = pneg %p53
      %p152 = pneg %p77
      %p153 = pneg %p74
      %p154 = pneg %p103
      %p155 = pneg %p100
      %p156 = scmp.lt.s32.totalorder %s14, 1
      %s157 = scalar_select %p156, %s14, 1
      %s158 = smul.addr %s157, 32
      %s159 = smul.addr %s158, 8
      %s160 = scalar_lea.vmem %s3, %s159
      %p161 = scmp.lt.s32.totalorder %s14, 1
      %s162 = scalar_select %p161, %s14, 1
      %s163 = smul.addr %s162, 36
      %s164 = smul.addr %s163, 8
      %s165 = scalar_lea.vmem %s0, %s164
      %p166 = scmp.lt.s32.totalorder %s14, 1
      %s167 = scalar_select %p166, %s14, 1
      %s168 = smul.addr %s167, 32
      %s169 = smul.addr %s168, 8
      %s170 = scalar_lea.vmem %s3, %s169
      %v171 = vld [vmem:[%s165] sm:$0xff]
      %v172 = vld [vmem:[%s165 + $0x8] sm:$0xff]
      %v173 = vld [vmem:[%s165 + $0x10] sm:$0xff]
      %v174 = vld [vmem:[%s165 + $0x18] sm:$0xff]
      %v175 = vld [vmem:[%s165 + $0x20] sm:$0xff]
      %v176 = vld [vmem:[%s165 + $0x28] sm:$0xff]
      %v177 = vld [vmem:[%s165 + $0x30] sm:$0xff]
      %v178 = vld [vmem:[%s165 + $0x38] sm:$0xff]
      %v179 = vld [vmem:[%s165 + $0x40] sm:$0xff]
      %v180 = vld [vmem:[%s165 + $0x48] sm:$0xff]
      %v181 = vld [vmem:[%s165 + $0x50] sm:$0xff]
      %v182 = vld [vmem:[%s165 + $0x58] sm:$0xff]
      %v183 = vld [vmem:[%s165 + $0x60] sm:$0xff]
      %v184 = vld [vmem:[%s165 + $0x68] sm:$0xff]
      %v185 = vld [vmem:[%s165 + $0x70] sm:$0xff]
      %v186 = vld [vmem:[%s165 + $0x78] sm:$0xff]
      %v187 = vld [vmem:[%s165 + $0x80] sm:$0xff]
      %v188 = vld [vmem:[%s165 + $0x88] sm:$0xff]
      %v189 = vld [vmem:[%s165 + $0x90] sm:$0xff]
      %v190 = vld [vmem:[%s165 + $0x98] sm:$0xff]
      %v191 = vld [vmem:[%s165 + $0xa0] sm:$0xff]
      %v192 = vld [vmem:[%s165 + $0xa8] sm:$0xff]
      %v193 = vld [vmem:[%s165 + $0xb0] sm:$0xff]
      %v194 = vld [vmem:[%s165 + $0xb8] sm:$0xff]
      %v195 = vld [vmem:[%s165 + $0xc0] sm:$0xff]
      %v196 = vld [vmem:[%s165 + $0xc8] sm:$0xff]
      %v197 = vld [vmem:[%s165 + $0xd0] sm:$0xff]
      %v198 = vld [vmem:[%s165 + $0xd8] sm:$0xff]
      %v199 = vld [vmem:[%s165 + $0xe0] sm:$0xff]
      %v200 = vld [vmem:[%s165 + $0xe8] sm:$0xff]
      %v201 = vld [vmem:[%s165 + $0xf0] sm:$0xff]
      %v202 = vld [vmem:[%s165 + $0xf8] sm:$0xff]
      %v203 = vld [vmem:[%s165 + $0x100] sm:$0xff]
      %v204 = vld [vmem:[%s165 + $0x108] sm:$0xff]
      %v205 = vld [vmem:[%s165 + $0x110] sm:$0xff]
      %v206 = vld [vmem:[%s165 + $0x118] sm:$0xff]
      %v207 = vld [vmem:[%s1] sm:$0xff]
      %v208 = vld [vmem:[%s1 + $0x8] sm:$0xff]
      %v209 = vld [vmem:[%s1 + $0x10] sm:$0xff]
      %vm210 = vcmask 64512
      %v212 = vsel %vm210, %v173, 0
      %v215 = vsel %vm210, %v174, 0
      %v218 = vsel %vm210, %v175, 0
      %v221 = vsel %vm210, %v176, 0
      %v224 = vsel %vm210, %v177, 0
      %v227 = vsel %vm210, %v178, 0
      %v230 = vsel %vm210, %v179, 0
      %v233 = vsel %vm210, %v180, 0
      %v236 = vsel %vm210, %v181, 0
      %v239 = vsel %vm210, %v182, 0
      %v242 = vsel %vm210, %v183, 0
      %v245 = vsel %vm210, %v184, 0
      %v248 = vsel %vm210, %v185, 0
      %v251 = vsel %vm210, %v186, 0
      %v254 = vsel %vm210, %v187, 0
      %v257 = vsel %vm210, %v188, 0
      %v260 = vsel %vm210, %v189, 0
      %v263 = vsel %vm210, %v190, 0
      %v266 = vsel %vm210, %v191, 0
      %v269 = vsel %vm210, %v192, 0
      %v272 = vsel %vm210, %v193, 0
      %v275 = vsel %vm210, %v194, 0
      %v278 = vsel %vm210, %v195, 0
      %v281 = vsel %vm210, %v196, 0
      %v284 = vsel %vm210, %v197, 0
      %v287 = vsel %vm210, %v198, 0
      %v290 = vsel %vm210, %v199, 0
      %v293 = vsel %vm210, %v200, 0
      %v296 = vsel %vm210, %v201, 0
      %v299 = vsel %vm210, %v202, 0
      %v302 = vsel %vm210, %v203, 0
      %v305 = vsel %vm210, %v204, 0
      %307 = vmatprep.subr.mxu0 0.0
      %308 = vmatpush1.msra.mxu0 0.0
      %309 = vmatprep.subr.mxu0 0.0
      %310 = vmatpush1.msra.mxu0 0.0
      %311 = vmatprep.subr.mxu0 0.0
      %312 = vmatpush1.msra.mxu0 0.0
      %313 = vmatprep.subr.mxu0 0.0
      %314 = vmatpush1.msra.mxu0 0.0
      %315 = vmatprep.subr.mxu0 0.0
      %316 = vmatpush1.msra.mxu0 0.0
      %317 = vmatprep.subr.mxu0 0.0
      %318 = vmatpush1.msra.mxu0 0.0
      %319 = vmatprep.subr.mxu0 0.0
      %320 = vmatpush1.msra.mxu0 0.0
      %321 = vmatprep.subr.mxu0 0.0
      %322 = vmatpush1.msra.mxu0 0.0
      %323 = vmatprep.subr.mxu0 0.0
      %324 = vmatpush1.msra.mxu0 0.0
      %325 = vmatprep.subr.mxu0 0.0
      %326 = vmatpush1.msra.mxu0 0.0
      %327 = vmatprep.subr.mxu0 0.0
      %328 = vmatpush1.msra.mxu0 0.0
      %329 = vmatprep.subr.mxu0 0.0
      %330 = vmatpush1.msra.mxu0 0.0
      %331 = vmatprep.subr.mxu0 0.0
      %332 = vmatpush1.msra.mxu0 0.0
      %333 = vmatprep.subr.mxu0 0.0
      %334 = vmatpush1.msra.mxu0 0.0
      %335 = vmatprep.subr.mxu0 0.0
      %336 = vmatpush1.msra.mxu0 0.0
      %337 = vmatprep.subr.mxu0 0.0
      %338 = vmatpush1.msra.mxu0 %v208
      %339 = vmatprep.subr.mxu0 0.0
      %340 = vmatpush2.msra.mxu0 0.0
      %341 = vmatprep.subr.mxu0 0.0
      %342 = vmatpush2.msra.mxu0 0.0
      %343 = vmatprep.subr.mxu0 0.0
      %344 = vmatpush2.msra.mxu0 0.0
      %345 = vmatprep.subr.mxu0 0.0
      %346 = vmatpush2.msra.mxu0 0.0
      %347 = vmatprep.subr.mxu0 0.0
      %348 = vmatpush2.msra.mxu0 0.0
      %349 = vmatprep.subr.mxu0 0.0
      %350 = vmatpush2.msra.mxu0 0.0
      %351 = vmatprep.subr.mxu0 0.0
      %352 = vmatpush2.msra.mxu0 0.0
      %353 = vmatprep.subr.mxu0 0.0
      %354 = vmatpush2.msra.mxu0 0.0
      %355 = vmatprep.subr.mxu0 0.0
      %356 = vmatpush2.msra.mxu0 0.0
      %357 = vmatprep.subr.mxu0 0.0
      %358 = vmatpush2.msra.mxu0 0.0
      %359 = vmatprep.subr.mxu0 0.0
      %360 = vmatpush2.msra.mxu0 0.0
      %361 = vmatprep.subr.mxu0 0.0
      %362 = vmatpush2.msra.mxu0 0.0
      %363 = vmatprep.subr.mxu0 0.0
      %364 = vmatpush2.msra.mxu0 0.0
      %365 = vmatprep.subr.mxu0 0.0
      %366 = vmatpush2.msra.mxu0 0.0
      %367 = vmatprep.subr.mxu0 0.0
      %368 = vmatpush2.msra.mxu0 0.0
      %369 = vmatprep.subr.mxu0 0.0
      %370 = vmatpush2.msra.mxu0 0.0
      %371 = vmatprep.mubr.f32.mxu0 0.0
      %372 = vmatmul.mubr.f32.gmra.mxu0 %v212
      %v373 = vpop.f32.mrf.mxu0
      %v374 = vadd.f32 0.0, %v373
      %v375 = vpop.f32.mrf.mxu0
      %376 = vmatprep.mubr.f32.mxu0 0.0
      %377 = vmatmul.mubr.f32.gmra.mxu0 %v215
      %v378 = vpop.f32.mrf.mxu0
      %v379 = vadd.f32 0.0, %v378
      %v380 = vpop.f32.mrf.mxu0
      %381 = vmatprep.mubr.f32.mxu0 0.0
      %382 = vmatmul.mubr.f32.gmra.mxu0 %v218
      %v383 = vpop.f32.mrf.mxu0
      %v384 = vadd.f32 0.0, %v383
      %v385 = vpop.f32.mrf.mxu0
      %386 = vmatprep.mubr.f32.mxu0 0.0
      %387 = vmatmul.mubr.f32.gmra.mxu0 %v221
      %v388 = vpop.f32.mrf.mxu0
      %v389 = vadd.f32 0.0, %v388
      %v390 = vpop.f32.mrf.mxu0
      %391 = vmatprep.mubr.f32.mxu0 0.0
      %392 = vmatmul.mubr.f32.gmra.mxu0 %v224
      %v393 = vpop.f32.mrf.mxu0
      %v394 = vadd.f32 0.0, %v393
      %v395 = vpop.f32.mrf.mxu0
      %396 = vmatprep.mubr.f32.mxu0 0.0
      %397 = vmatmul.mubr.f32.gmra.mxu0 %v227
      %v398 = vpop.f32.mrf.mxu0
      %v399 = vadd.f32 0.0, %v398
      %v400 = vpop.f32.mrf.mxu0
      %401 = vmatprep.mubr.f32.mxu0 0.0
      %402 = vmatmul.mubr.f32.gmra.mxu0 %v230
      %v403 = vpop.f32.mrf.mxu0
      %v404 = vadd.f32 0.0, %v403
      %v405 = vpop.f32.mrf.mxu0
      %406 = vmatprep.mubr.f32.mxu0 0.0
      %407 = vmatmul.mubr.f32.gmra.mxu0 %v233
      %v408 = vpop.f32.mrf.mxu0
      %v409 = vadd.f32 0.0, %v408
      %v410 = vpop.f32.mrf.mxu0
      %411 = vmatprep.mubr.f32.mxu0 0.0
      %412 = vmatmul.mubr.f32.gmra.mxu0 %v236
      %v413 = vpop.f32.mrf.mxu0
      %v414 = vadd.f32 0.0, %v413
      %v415 = vpop.f32.mrf.mxu0
      %416 = vmatprep.mubr.f32.mxu0 0.0
      %417 = vmatmul.mubr.f32.gmra.mxu0 %v239
      %v418 = vpop.f32.mrf.mxu0
      %v419 = vadd.f32 0.0, %v418
      %v420 = vpop.f32.mrf.mxu0
      %421 = vmatprep.mubr.f32.mxu0 0.0
      %422 = vmatmul.mubr.f32.gmra.mxu0 %v242
      %v423 = vpop.f32.mrf.mxu0
      %v424 = vadd.f32 0.0, %v423
      %v425 = vpop.f32.mrf.mxu0
      %426 = vmatprep.mubr.f32.mxu0 0.0
      %427 = vmatmul.mubr.f32.gmra.mxu0 %v245
      %v428 = vpop.f32.mrf.mxu0
      %v429 = vadd.f32 0.0, %v428
      %v430 = vpop.f32.mrf.mxu0
      %431 = vmatprep.mubr.f32.mxu0 0.0
      %432 = vmatmul.mubr.f32.gmra.mxu0 %v248
      %v433 = vpop.f32.mrf.mxu0
      %v434 = vadd.f32 0.0, %v433
      %v435 = vpop.f32.mrf.mxu0
      %436 = vmatprep.mubr.f32.mxu0 0.0
      %437 = vmatmul.mubr.f32.gmra.mxu0 %v251
      %v438 = vpop.f32.mrf.mxu0
      %v439 = vadd.f32 0.0, %v438
      %v440 = vpop.f32.mrf.mxu0
      %441 = vmatprep.mubr.f32.mxu0 0.0
      %442 = vmatmul.mubr.f32.gmra.mxu0 %v254
      %v443 = vpop.f32.mrf.mxu0
      %v444 = vadd.f32 0.0, %v443
      %v445 = vpop.f32.mrf.mxu0
      %446 = vmatprep.mubr.f32.mxu0 0.0
      %447 = vmatmul.mubr.f32.gmra.mxu0 %v257
      %v448 = vpop.f32.mrf.mxu0
      %v449 = vadd.f32 0.0, %v448
      %v450 = vpop.f32.mrf.mxu0
      %451 = vmatprep.mubr.f32.mxu0 0.0
      %452 = vmatmul.mubr.f32.gmra.mxu0 %v260
      %v453 = vpop.f32.mrf.mxu0
      %v454 = vadd.f32 0.0, %v453
      %v455 = vpop.f32.mrf.mxu0
      %456 = vmatprep.mubr.f32.mxu0 0.0
      %457 = vmatmul.mubr.f32.gmra.mxu0 %v263
      %v458 = vpop.f32.mrf.mxu0
      %v459 = vadd.f32 0.0, %v458
      %v460 = vpop.f32.mrf.mxu0
      %461 = vmatprep.mubr.f32.mxu0 0.0
      %462 = vmatmul.mubr.f32.gmra.mxu0 %v266
      %v463 = vpop.f32.mrf.mxu0
      %v464 = vadd.f32 0.0, %v463
      %v465 = vpop.f32.mrf.mxu0
      %466 = vmatprep.mubr.f32.mxu0 0.0
      %467 = vmatmul.mubr.f32.gmra.mxu0 %v269
      %v468 = vpop.f32.mrf.mxu0
      %v469 = vadd.f32 0.0, %v468
      %v470 = vpop.f32.mrf.mxu0
      %471 = vmatprep.mubr.f32.mxu0 0.0
      %472 = vmatmul.mubr.f32.gmra.mxu0 %v272
      %v473 = vpop.f32.mrf.mxu0
      %v474 = vadd.f32 0.0, %v473
      %v475 = vpop.f32.mrf.mxu0
      %476 = vmatprep.mubr.f32.mxu0 0.0
      %477 = vmatmul.mubr.f32.gmra.mxu0 %v275
      %v478 = vpop.f32.mrf.mxu0
      %v479 = vadd.f32 0.0, %v478
      %v480 = vpop.f32.mrf.mxu0
      %481 = vmatprep.mubr.f32.mxu0 0.0
      %482 = vmatmul.mubr.f32.gmra.mxu0 %v278
      %v483 = vpop.f32.mrf.mxu0
      %v484 = vadd.f32 0.0, %v483
      %v485 = vpop.f32.mrf.mxu0
      %486 = vmatprep.mubr.f32.mxu0 0.0
      %487 = vmatmul.mubr.f32.gmra.mxu0 %v281
      %v488 = vpop.f32.mrf.mxu0
      %v489 = vadd.f32 0.0, %v488
      %v490 = vpop.f32.mrf.mxu0
      %491 = vmatprep.mubr.f32.mxu0 0.0
      %492 = vmatmul.mubr.f32.gmra.mxu0 %v284
      %v493 = vpop.f32.mrf.mxu0
      %v494 = vadd.f32 0.0, %v493
      %v495 = vpop.f32.mrf.mxu0
      %496 = vmatprep.mubr.f32.mxu0 0.0
      %497 = vmatmul.mubr.f32.gmra.mxu0 %v287
      %v498 = vpop.f32.mrf.mxu0
      %v499 = vadd.f32 0.0, %v498
      %v500 = vpop.f32.mrf.mxu0
      %501 = vmatprep.mubr.f32.mxu0 0.0
      %502 = vmatmul.mubr.f32.gmra.mxu0 %v290
      %v503 = vpop.f32.mrf.mxu0
      %v504 = vadd.f32 0.0, %v503
      %v505 = vpop.f32.mrf.mxu0
      %506 = vmatprep.mubr.f32.mxu0 0.0
      %507 = vmatmul.mubr.f32.gmra.mxu0 %v293
      %v508 = vpop.f32.mrf.mxu0
      %v509 = vadd.f32 0.0, %v508
      %v510 = vpop.f32.mrf.mxu0
      %511 = vmatprep.mubr.f32.mxu0 0.0
      %512 = vmatmul.mubr.f32.gmra.mxu0 %v296
      %v513 = vpop.f32.mrf.mxu0
      %v514 = vadd.f32 0.0, %v513
      %v515 = vpop.f32.mrf.mxu0
      %516 = vmatprep.mubr.f32.mxu0 0.0
      %517 = vmatmul.mubr.f32.gmra.mxu0 %v299
      %v518 = vpop.f32.mrf.mxu0
      %v519 = vadd.f32 0.0, %v518
      %v520 = vpop.f32.mrf.mxu0
      %521 = vmatprep.mubr.f32.mxu0 0.0
      %522 = vmatmul.mubr.f32.gmra.mxu0 %v302
      %v523 = vpop.f32.mrf.mxu0
      %v524 = vadd.f32 0.0, %v523
      %v525 = vpop.f32.mrf.mxu0
      %526 = vmatprep.mubr.f32.mxu0 0.0
      %527 = vmatmul.mubr.f32.gmra.mxu0 %v305
      %v528 = vpop.f32.mrf.mxu0
      %v529 = vadd.f32 0.0, %v528
      %v530 = vpop.f32.mrf.mxu0
      %531 = vdwg.mxu0
      %v533 = vsel %vm210, %v171, 0
      %v536 = vsel %vm210, %v172, 0
      %538 = vmatprep.subr.mxu0 0.0
      %539 = vmatpush1.msra.mxu0 0.0
      %540 = vmatprep.subr.mxu0 0.0
      %541 = vmatpush1.msra.mxu0 0.0
      %542 = vmatprep.subr.mxu0 0.0
      %543 = vmatpush1.msra.mxu0 0.0
      %544 = vmatprep.subr.mxu0 0.0
      %545 = vmatpush1.msra.mxu0 0.0
      %546 = vmatprep.subr.mxu0 0.0
      %547 = vmatpush1.msra.mxu0 0.0
      %548 = vmatprep.subr.mxu0 0.0
      %549 = vmatpush1.msra.mxu0 0.0
      %550 = vmatprep.subr.mxu0 0.0
      %551 = vmatpush1.msra.mxu0 0.0
      %552 = vmatprep.subr.mxu0 0.0
      %553 = vmatpush1.msra.mxu0 0.0
      %554 = vmatprep.subr.mxu0 0.0
      %555 = vmatpush1.msra.mxu0 0.0
      %556 = vmatprep.subr.mxu0 0.0
      %557 = vmatpush1.msra.mxu0 0.0
      %558 = vmatprep.subr.mxu0 0.0
      %559 = vmatpush1.msra.mxu0 0.0
      %560 = vmatprep.subr.mxu0 0.0
      %561 = vmatpush1.msra.mxu0 0.0
      %562 = vmatprep.subr.mxu0 0.0
      %563 = vmatpush1.msra.mxu0 0.0
      %564 = vmatprep.subr.mxu0 0.0
      %565 = vmatpush1.msra.mxu0 0.0
      %566 = vmatprep.subr.mxu0 0.0
      %567 = vmatpush1.msra.mxu0 0.0
      %568 = vmatprep.subr.mxu0 0.0
      %569 = vmatpush1.msra.mxu0 %v207
      %570 = vmatprep.subr.mxu0 0.0
      %571 = vmatpush2.msra.mxu0 0.0
      %572 = vmatprep.subr.mxu0 0.0
      %573 = vmatpush2.msra.mxu0 0.0
      %574 = vmatprep.subr.mxu0 0.0
      %575 = vmatpush2.msra.mxu0 0.0
      %576 = vmatprep.subr.mxu0 0.0
      %577 = vmatpush2.msra.mxu0 0.0
      %578 = vmatprep.subr.mxu0 0.0
      %579 = vmatpush2.msra.mxu0 0.0
      %580 = vmatprep.subr.mxu0 0.0
      %581 = vmatpush2.msra.mxu0 0.0
      %582 = vmatprep.subr.mxu0 0.0
      %583 = vmatpush2.msra.mxu0 0.0
      %584 = vmatprep.subr.mxu0 0.0
      %585 = vmatpush2.msra.mxu0 0.0
      %586 = vmatprep.subr.mxu0 0.0
      %587 = vmatpush2.msra.mxu0 0.0
      %588 = vmatprep.subr.mxu0 0.0
      %589 = vmatpush2.msra.mxu0 0.0
      %590 = vmatprep.subr.mxu0 0.0
      %591 = vmatpush2.msra.mxu0 0.0
      %592 = vmatprep.subr.mxu0 0.0
      %593 = vmatpush2.msra.mxu0 0.0
      %594 = vmatprep.subr.mxu0 0.0
      %595 = vmatpush2.msra.mxu0 0.0
      %596 = vmatprep.subr.mxu0 0.0
      %597 = vmatpush2.msra.mxu0 0.0
      %598 = vmatprep.subr.mxu0 0.0
      %599 = vmatpush2.msra.mxu0 0.0
      %600 = vmatprep.subr.mxu0 0.0
      %601 = vmatpush2.msra.mxu0 0.0
      %602 = vmatprep.mubr.f32.mxu0 0.0
      %603 = vmatmul.mubr.f32.gmra.mxu0 %v533
      %v604 = vpop.f32.mrf.mxu0
      %v605 = vadd.f32 %v374, %v604
      %v606 = vpop.f32.mrf.mxu0
      %607 = vmatprep.mubr.f32.mxu0 0.0
      %608 = vmatmul.mubr.f32.gmra.mxu0 %v536
      %v609 = vpop.f32.mrf.mxu0
      %v610 = vadd.f32 %v379, %v609
      %v611 = vpop.f32.mrf.mxu0
      %612 = vmatprep.mubr.f32.mxu0 0.0
      %613 = vmatmul.mubr.f32.gmra.mxu0 %v212
      %v614 = vpop.f32.mrf.mxu0
      %v615 = vadd.f32 %v384, %v614
      %v616 = vpop.f32.mrf.mxu0
      %617 = vmatprep.mubr.f32.mxu0 0.0
      %618 = vmatmul.mubr.f32.gmra.mxu0 %v215
      %v619 = vpop.f32.mrf.mxu0
      %v620 = vadd.f32 %v389, %v619
      %v621 = vpop.f32.mrf.mxu0
      %622 = vmatprep.mubr.f32.mxu0 0.0
      %623 = vmatmul.mubr.f32.gmra.mxu0 %v218
      %v624 = vpop.f32.mrf.mxu0
      %v625 = vadd.f32 %v394, %v624
      %v626 = vpop.f32.mrf.mxu0
      %627 = vmatprep.mubr.f32.mxu0 0.0
      %628 = vmatmul.mubr.f32.gmra.mxu0 %v221
      %v629 = vpop.f32.mrf.mxu0
      %v630 = vadd.f32 %v399, %v629
      %v631 = vpop.f32.mrf.mxu0
      %632 = vmatprep.mubr.f32.mxu0 0.0
      %633 = vmatmul.mubr.f32.gmra.mxu0 %v224
      %v634 = vpop.f32.mrf.mxu0
      %v635 = vadd.f32 %v404, %v634
      %v636 = vpop.f32.mrf.mxu0
      %637 = vmatprep.mubr.f32.mxu0 0.0
      %638 = vmatmul.mubr.f32.gmra.mxu0 %v227
      %v639 = vpop.f32.mrf.mxu0
      %v640 = vadd.f32 %v409, %v639
      %v641 = vpop.f32.mrf.mxu0
      %642 = vmatprep.mubr.f32.mxu0 0.0
      %643 = vmatmul.mubr.f32.gmra.mxu0 %v230
      %v644 = vpop.f32.mrf.mxu0
      %v645 = vadd.f32 %v414, %v644
      %v646 = vpop.f32.mrf.mxu0
      %647 = vmatprep.mubr.f32.mxu0 0.0
      %648 = vmatmul.mubr.f32.gmra.mxu0 %v233
      %v649 = vpop.f32.mrf.mxu0
      %v650 = vadd.f32 %v419, %v649
      %v651 = vpop.f32.mrf.mxu0
      %652 = vmatprep.mubr.f32.mxu0 0.0
      %653 = vmatmul.mubr.f32.gmra.mxu0 %v236
      %v654 = vpop.f32.mrf.mxu0
      %v655 = vadd.f32 %v424, %v654
      %v656 = vpop.f32.mrf.mxu0
      %657 = vmatprep.mubr.f32.mxu0 0.0
      %658 = vmatmul.mubr.f32.gmra.mxu0 %v239
      %v659 = vpop.f32.mrf.mxu0
      %v660 = vadd.f32 %v429, %v659
      %v661 = vpop.f32.mrf.mxu0
      %662 = vmatprep.mubr.f32.mxu0 0.0
      %663 = vmatmul.mubr.f32.gmra.mxu0 %v242
      %v664 = vpop.f32.mrf.mxu0
      %v665 = vadd.f32 %v434, %v664
      %v666 = vpop.f32.mrf.mxu0
      %667 = vmatprep.mubr.f32.mxu0 0.0
      %668 = vmatmul.mubr.f32.gmra.mxu0 %v245
      %v669 = vpop.f32.mrf.mxu0
      %v670 = vadd.f32 %v439, %v669
      %v671 = vpop.f32.mrf.mxu0
      %672 = vmatprep.mubr.f32.mxu0 0.0
      %673 = vmatmul.mubr.f32.gmra.mxu0 %v248
      %v674 = vpop.f32.mrf.mxu0
      %v675 = vadd.f32 %v444, %v674
      %v676 = vpop.f32.mrf.mxu0
      %677 = vmatprep.mubr.f32.mxu0 0.0
      %678 = vmatmul.mubr.f32.gmra.mxu0 %v251
      %v679 = vpop.f32.mrf.mxu0
      %v680 = vadd.f32 %v449, %v679
      %v681 = vpop.f32.mrf.mxu0
      %682 = vmatprep.mubr.f32.mxu0 0.0
      %683 = vmatmul.mubr.f32.gmra.mxu0 %v254
      %v684 = vpop.f32.mrf.mxu0
      %v685 = vadd.f32 %v454, %v684
      %v686 = vpop.f32.mrf.mxu0
      %687 = vmatprep.mubr.f32.mxu0 0.0
      %688 = vmatmul.mubr.f32.gmra.mxu0 %v257
      %v689 = vpop.f32.mrf.mxu0
      %v690 = vadd.f32 %v459, %v689
      %v691 = vpop.f32.mrf.mxu0
      %692 = vmatprep.mubr.f32.mxu0 0.0
      %693 = vmatmul.mubr.f32.gmra.mxu0 %v260
      %v694 = vpop.f32.mrf.mxu0
      %v695 = vadd.f32 %v464, %v694
      %v696 = vpop.f32.mrf.mxu0
      %697 = vmatprep.mubr.f32.mxu0 0.0
      %698 = vmatmul.mubr.f32.gmra.mxu0 %v263
      %v699 = vpop.f32.mrf.mxu0
      %v700 = vadd.f32 %v469, %v699
      %v701 = vpop.f32.mrf.mxu0
      %702 = vmatprep.mubr.f32.mxu0 0.0
      %703 = vmatmul.mubr.f32.gmra.mxu0 %v266
      %v704 = vpop.f32.mrf.mxu0
      %v705 = vadd.f32 %v474, %v704
      %v706 = vpop.f32.mrf.mxu0
      %707 = vmatprep.mubr.f32.mxu0 0.0
      %708 = vmatmul.mubr.f32.gmra.mxu0 %v269
      %v709 = vpop.f32.mrf.mxu0
      %v710 = vadd.f32 %v479, %v709
      %v711 = vpop.f32.mrf.mxu0
      %712 = vmatprep.mubr.f32.mxu0 0.0
      %713 = vmatmul.mubr.f32.gmra.mxu0 %v272
      %v714 = vpop.f32.mrf.mxu0
      %v715 = vadd.f32 %v484, %v714
      %v716 = vpop.f32.mrf.mxu0
      %717 = vmatprep.mubr.f32.mxu0 0.0
      %718 = vmatmul.mubr.f32.gmra.mxu0 %v275
      %v719 = vpop.f32.mrf.mxu0
      %v720 = vadd.f32 %v489, %v719
      %v721 = vpop.f32.mrf.mxu0
      %722 = vmatprep.mubr.f32.mxu0 0.0
      %723 = vmatmul.mubr.f32.gmra.mxu0 %v278
      %v724 = vpop.f32.mrf.mxu0
      %v725 = vadd.f32 %v494, %v724
      %v726 = vpop.f32.mrf.mxu0
      %727 = vmatprep.mubr.f32.mxu0 0.0
      %728 = vmatmul.mubr.f32.gmra.mxu0 %v281
      %v729 = vpop.f32.mrf.mxu0
      %v730 = vadd.f32 %v499, %v729
      %v731 = vpop.f32.mrf.mxu0
      %732 = vmatprep.mubr.f32.mxu0 0.0
      %733 = vmatmul.mubr.f32.gmra.mxu0 %v284
      %v734 = vpop.f32.mrf.mxu0
      %v735 = vadd.f32 %v504, %v734
      %v736 = vpop.f32.mrf.mxu0
      %737 = vmatprep.mubr.f32.mxu0 0.0
      %738 = vmatmul.mubr.f32.gmra.mxu0 %v287
      %v739 = vpop.f32.mrf.mxu0
      %v740 = vadd.f32 %v509, %v739
      %v741 = vpop.f32.mrf.mxu0
      %742 = vmatprep.mubr.f32.mxu0 0.0
      %743 = vmatmul.mubr.f32.gmra.mxu0 %v290
      %v744 = vpop.f32.mrf.mxu0
      %v745 = vadd.f32 %v514, %v744
      %v746 = vpop.f32.mrf.mxu0
      %747 = vmatprep.mubr.f32.mxu0 0.0
      %748 = vmatmul.mubr.f32.gmra.mxu0 %v293
      %v749 = vpop.f32.mrf.mxu0
      %v750 = vadd.f32 %v519, %v749
      %v751 = vpop.f32.mrf.mxu0
      %752 = vmatprep.mubr.f32.mxu0 0.0
      %753 = vmatmul.mubr.f32.gmra.mxu0 %v296
      %v754 = vpop.f32.mrf.mxu0
      %v755 = vadd.f32 %v524, %v754
      %v756 = vpop.f32.mrf.mxu0
      %757 = vmatprep.mubr.f32.mxu0 0.0
      %758 = vmatmul.mubr.f32.gmra.mxu0 %v299
      %v759 = vpop.f32.mrf.mxu0
      %v760 = vadd.f32 %v529, %v759
      %v761 = vpop.f32.mrf.mxu0
      %762 = vdwg.mxu0
      %v764 = vsel %vm210, %v205, 0
      %v767 = vsel %vm210, %v206, 0
      %769 = vmatprep.subr.mxu0 0.0
      %770 = vmatpush1.msra.mxu0 0.0
      %771 = vmatprep.subr.mxu0 0.0
      %772 = vmatpush1.msra.mxu0 0.0
      %773 = vmatprep.subr.mxu0 0.0
      %774 = vmatpush1.msra.mxu0 0.0
      %775 = vmatprep.subr.mxu0 0.0
      %776 = vmatpush1.msra.mxu0 0.0
      %777 = vmatprep.subr.mxu0 0.0
      %778 = vmatpush1.msra.mxu0 0.0
      %779 = vmatprep.subr.mxu0 0.0
      %780 = vmatpush1.msra.mxu0 0.0
      %781 = vmatprep.subr.mxu0 0.0
      %782 = vmatpush1.msra.mxu0 0.0
      %783 = vmatprep.subr.mxu0 0.0
      %784 = vmatpush1.msra.mxu0 0.0
      %785 = vmatprep.subr.mxu0 0.0
      %786 = vmatpush1.msra.mxu0 0.0
      %787 = vmatprep.subr.mxu0 0.0
      %788 = vmatpush1.msra.mxu0 0.0
      %789 = vmatprep.subr.mxu0 0.0
      %790 = vmatpush1.msra.mxu0 0.0
      %791 = vmatprep.subr.mxu0 0.0
      %792 = vmatpush1.msra.mxu0 0.0
      %793 = vmatprep.subr.mxu0 0.0
      %794 = vmatpush1.msra.mxu0 0.0
      %795 = vmatprep.subr.mxu0 0.0
      %796 = vmatpush1.msra.mxu0 0.0
      %797 = vmatprep.subr.mxu0 0.0
      %798 = vmatpush1.msra.mxu0 0.0
      %799 = vmatprep.subr.mxu0 0.0
      %800 = vmatpush1.msra.mxu0 %v209
      %801 = vmatprep.subr.mxu0 0.0
      %802 = vmatpush2.msra.mxu0 0.0
      %803 = vmatprep.subr.mxu0 0.0
      %804 = vmatpush2.msra.mxu0 0.0
      %805 = vmatprep.subr.mxu0 0.0
      %806 = vmatpush2.msra.mxu0 0.0
      %807 = vmatprep.subr.mxu0 0.0
      %808 = vmatpush2.msra.mxu0 0.0
      %809 = vmatprep.subr.mxu0 0.0
      %810 = vmatpush2.msra.mxu0 0.0
      %811 = vmatprep.subr.mxu0 0.0
      %812 = vmatpush2.msra.mxu0 0.0
      %813 = vmatprep.subr.mxu0 0.0
      %814 = vmatpush2.msra.mxu0 0.0
      %815 = vmatprep.subr.mxu0 0.0
      %816 = vmatpush2.msra.mxu0 0.0
      %817 = vmatprep.subr.mxu0 0.0
      %818 = vmatpush2.msra.mxu0 0.0
      %819 = vmatprep.subr.mxu0 0.0
      %820 = vmatpush2.msra.mxu0 0.0
      %821 = vmatprep.subr.mxu0 0.0
      %822 = vmatpush2.msra.mxu0 0.0
      %823 = vmatprep.subr.mxu0 0.0
      %824 = vmatpush2.msra.mxu0 0.0
      %825 = vmatprep.subr.mxu0 0.0
      %826 = vmatpush2.msra.mxu0 0.0
      %827 = vmatprep.subr.mxu0 0.0
      %828 = vmatpush2.msra.mxu0 0.0
      %829 = vmatprep.subr.mxu0 0.0
      %830 = vmatpush2.msra.mxu0 0.0
      %831 = vmatprep.subr.mxu0 0.0
      %832 = vmatpush2.msra.mxu0 0.0
      %833 = vmatprep.mubr.f32.mxu0 0.0
      %834 = vmatmul.mubr.f32.gmra.mxu0 %v218
      %v835 = vpop.f32.mrf.mxu0
      %v836 = vadd.f32 0.0, %v835
      %v837 = vpop.f32.mrf.mxu0
      %838 = vmatprep.mubr.f32.mxu0 0.0
      %839 = vmatmul.mubr.f32.gmra.mxu0 %v221
      %v840 = vpop.f32.mrf.mxu0
      %v841 = vadd.f32 0.0, %v840
      %v842 = vpop.f32.mrf.mxu0
      %843 = vmatprep.mubr.f32.mxu0 0.0
      %844 = vmatmul.mubr.f32.gmra.mxu0 %v224
      %v845 = vpop.f32.mrf.mxu0
      %v846 = vadd.f32 0.0, %v845
      %v847 = vpop.f32.mrf.mxu0
      %848 = vmatprep.mubr.f32.mxu0 0.0
      %849 = vmatmul.mubr.f32.gmra.mxu0 %v227
      %v850 = vpop.f32.mrf.mxu0
      %v851 = vadd.f32 0.0, %v850
      %v852 = vpop.f32.mrf.mxu0
      %853 = vmatprep.mubr.f32.mxu0 0.0
      %854 = vmatmul.mubr.f32.gmra.mxu0 %v230
      %v855 = vpop.f32.mrf.mxu0
      %v856 = vadd.f32 0.0, %v855
      %v857 = vpop.f32.mrf.mxu0
      %858 = vmatprep.mubr.f32.mxu0 0.0
      %859 = vmatmul.mubr.f32.gmra.mxu0 %v233
      %v860 = vpop.f32.mrf.mxu0
      %v861 = vadd.f32 0.0, %v860
      %v862 = vpop.f32.mrf.mxu0
      %863 = vmatprep.mubr.f32.mxu0 0.0
      %864 = vmatmul.mubr.f32.gmra.mxu0 %v236
      %v865 = vpop.f32.mrf.mxu0
      %v866 = vadd.f32 0.0, %v865
      %v867 = vpop.f32.mrf.mxu0
      %868 = vmatprep.mubr.f32.mxu0 0.0
      %869 = vmatmul.mubr.f32.gmra.mxu0 %v239
      %v870 = vpop.f32.mrf.mxu0
      %v871 = vadd.f32 0.0, %v870
      %v872 = vpop.f32.mrf.mxu0
      %873 = vmatprep.mubr.f32.mxu0 0.0
      %874 = vmatmul.mubr.f32.gmra.mxu0 %v242
      %v875 = vpop.f32.mrf.mxu0
      %v876 = vadd.f32 0.0, %v875
      %v877 = vpop.f32.mrf.mxu0
      %878 = vmatprep.mubr.f32.mxu0 0.0
      %879 = vmatmul.mubr.f32.gmra.mxu0 %v245
      %v880 = vpop.f32.mrf.mxu0
      %v881 = vadd.f32 0.0, %v880
      %v882 = vpop.f32.mrf.mxu0
      %883 = vmatprep.mubr.f32.mxu0 0.0
      %884 = vmatmul.mubr.f32.gmra.mxu0 %v248
      %v885 = vpop.f32.mrf.mxu0
      %v886 = vadd.f32 0.0, %v885
      %v887 = vpop.f32.mrf.mxu0
      %888 = vmatprep.mubr.f32.mxu0 0.0
      %889 = vmatmul.mubr.f32.gmra.mxu0 %v251
      %v890 = vpop.f32.mrf.mxu0
      %v891 = vadd.f32 0.0, %v890
      %v892 = vpop.f32.mrf.mxu0
      %893 = vmatprep.mubr.f32.mxu0 0.0
      %894 = vmatmul.mubr.f32.gmra.mxu0 %v254
      %v895 = vpop.f32.mrf.mxu0
      %v896 = vadd.f32 0.0, %v895
      %v897 = vpop.f32.mrf.mxu0
      %898 = vmatprep.mubr.f32.mxu0 0.0
      %899 = vmatmul.mubr.f32.gmra.mxu0 %v257
      %v900 = vpop.f32.mrf.mxu0
      %v901 = vadd.f32 0.0, %v900
      %v902 = vpop.f32.mrf.mxu0
      %903 = vmatprep.mubr.f32.mxu0 0.0
      %904 = vmatmul.mubr.f32.gmra.mxu0 %v260
      %v905 = vpop.f32.mrf.mxu0
      %v906 = vadd.f32 0.0, %v905
      %v907 = vpop.f32.mrf.mxu0
      %908 = vmatprep.mubr.f32.mxu0 0.0
      %909 = vmatmul.mubr.f32.gmra.mxu0 %v263
      %v910 = vpop.f32.mrf.mxu0
      %v911 = vadd.f32 0.0, %v910
      %v912 = vpop.f32.mrf.mxu0
      %913 = vmatprep.mubr.f32.mxu0 0.0
      %914 = vmatmul.mubr.f32.gmra.mxu0 %v266
      %v915 = vpop.f32.mrf.mxu0
      %v916 = vadd.f32 0.0, %v915
      %v917 = vpop.f32.mrf.mxu0
      %918 = vmatprep.mubr.f32.mxu0 0.0
      %919 = vmatmul.mubr.f32.gmra.mxu0 %v269
      %v920 = vpop.f32.mrf.mxu0
      %v921 = vadd.f32 0.0, %v920
      %v922 = vpop.f32.mrf.mxu0
      %923 = vmatprep.mubr.f32.mxu0 0.0
      %924 = vmatmul.mubr.f32.gmra.mxu0 %v272
      %v925 = vpop.f32.mrf.mxu0
      %v926 = vadd.f32 0.0, %v925
      %v927 = vpop.f32.mrf.mxu0
      %928 = vmatprep.mubr.f32.mxu0 0.0
      %929 = vmatmul.mubr.f32.gmra.mxu0 %v275
      %v930 = vpop.f32.mrf.mxu0
      %v931 = vadd.f32 0.0, %v930
      %v932 = vpop.f32.mrf.mxu0
      %933 = vmatprep.mubr.f32.mxu0 0.0
      %934 = vmatmul.mubr.f32.gmra.mxu0 %v278
      %v935 = vpop.f32.mrf.mxu0
      %v936 = vadd.f32 0.0, %v935
      %v937 = vpop.f32.mrf.mxu0
      %938 = vmatprep.mubr.f32.mxu0 0.0
      %939 = vmatmul.mubr.f32.gmra.mxu0 %v281
      %v940 = vpop.f32.mrf.mxu0
      %v941 = vadd.f32 0.0, %v940
      %v942 = vpop.f32.mrf.mxu0
      %943 = vmatprep.mubr.f32.mxu0 0.0
      %944 = vmatmul.mubr.f32.gmra.mxu0 %v284
      %v945 = vpop.f32.mrf.mxu0
      %v946 = vadd.f32 0.0, %v945
      %v947 = vpop.f32.mrf.mxu0
      %948 = vmatprep.mubr.f32.mxu0 0.0
      %949 = vmatmul.mubr.f32.gmra.mxu0 %v287
      %v950 = vpop.f32.mrf.mxu0
      %v951 = vadd.f32 0.0, %v950
      %v952 = vpop.f32.mrf.mxu0
      %953 = vmatprep.mubr.f32.mxu0 0.0
      %954 = vmatmul.mubr.f32.gmra.mxu0 %v290
      %v955 = vpop.f32.mrf.mxu0
      %v956 = vadd.f32 0.0, %v955
      %v957 = vpop.f32.mrf.mxu0
      %958 = vmatprep.mubr.f32.mxu0 0.0
      %959 = vmatmul.mubr.f32.gmra.mxu0 %v293
      %v960 = vpop.f32.mrf.mxu0
      %v961 = vadd.f32 0.0, %v960
      %v962 = vpop.f32.mrf.mxu0
      %963 = vmatprep.mubr.f32.mxu0 0.0
      %964 = vmatmul.mubr.f32.gmra.mxu0 %v296
      %v965 = vpop.f32.mrf.mxu0
      %v966 = vadd.f32 0.0, %v965
      %v967 = vpop.f32.mrf.mxu0
      %968 = vmatprep.mubr.f32.mxu0 0.0
      %969 = vmatmul.mubr.f32.gmra.mxu0 %v299
      %v970 = vpop.f32.mrf.mxu0
      %v971 = vadd.f32 0.0, %v970
      %v972 = vpop.f32.mrf.mxu0
      %973 = vmatprep.mubr.f32.mxu0 0.0
      %974 = vmatmul.mubr.f32.gmra.mxu0 %v302
      %v975 = vpop.f32.mrf.mxu0
      %v976 = vadd.f32 0.0, %v975
      %v977 = vpop.f32.mrf.mxu0
      %978 = vmatprep.mubr.f32.mxu0 0.0
      %979 = vmatmul.mubr.f32.gmra.mxu0 %v305
      %v980 = vpop.f32.mrf.mxu0
      %v981 = vadd.f32 0.0, %v980
      %v982 = vpop.f32.mrf.mxu0
      %983 = vmatprep.mubr.f32.mxu0 0.0
      %984 = vmatmul.mubr.f32.gmra.mxu0 %v764
      %v985 = vpop.f32.mrf.mxu0
      %v986 = vadd.f32 0.0, %v985
      %v987 = vpop.f32.mrf.mxu0
      %988 = vmatprep.mubr.f32.mxu0 0.0
      %989 = vmatmul.mubr.f32.gmra.mxu0 %v767
      %v990 = vpop.f32.mrf.mxu0
      %v991 = vadd.f32 0.0, %v990
      %v992 = vpop.f32.mrf.mxu0
      %993 = vdwg.mxu0
      %v994 = vadd.f32 %v605, %v836
      %v995 = vadd.f32 %v610, %v841
      %v996 = vadd.f32 %v615, %v846
      %v997 = vadd.f32 %v620, %v851
      %v998 = vadd.f32 %v625, %v856
      %v999 = vadd.f32 %v630, %v861
      %v1000 = vadd.f32 %v635, %v866
      %v1001 = vadd.f32 %v640, %v871
      %v1002 = vadd.f32 %v645, %v876
      %v1003 = vadd.f32 %v650, %v881
      %v1004 = vadd.f32 %v655, %v886
      %v1005 = vadd.f32 %v660, %v891
      %v1006 = vadd.f32 %v665, %v896
      %v1007 = vadd.f32 %v670, %v901
      %v1008 = vadd.f32 %v675, %v906
      %v1009 = vadd.f32 %v680, %v911
      %v1010 = vadd.f32 %v685, %v916
      %v1011 = vadd.f32 %v690, %v921
      %v1012 = vadd.f32 %v695, %v926
      %v1013 = vadd.f32 %v700, %v931
      %v1014 = vadd.f32 %v705, %v936
      %v1015 = vadd.f32 %v710, %v941
      %v1016 = vadd.f32 %v715, %v946
      %v1017 = vadd.f32 %v720, %v951
      %v1018 = vadd.f32 %v725, %v956
      %v1019 = vadd.f32 %v730, %v961
      %v1020 = vadd.f32 %v735, %v966
      %v1021 = vadd.f32 %v740, %v971
      %v1022 = vadd.f32 %v745, %v976
      %v1023 = vadd.f32 %v750, %v981
      %v1024 = vadd.f32 %v755, %v986
      %v1025 = vadd.f32 %v760, %v991
      %v1026 = vld [vmem:[%s2] sm:$0x1]
      %v1028 = vlaneseq
      %v1029 = vshrl.u32 %v1028, 7
      %v1030 = vsub.s32 0, %v1029
      %v1031 = vrot.slane %v1026, %v1030
      %v1033 = vadd.f32 %v994, %v1031
      %v1034 = vadd.f32 %v995, %v1031
      %v1035 = vadd.f32 %v996, %v1031
      %v1036 = vadd.f32 %v997, %v1031
      %v1037 = vadd.f32 %v998, %v1031
      %v1038 = vadd.f32 %v999, %v1031
      %v1039 = vadd.f32 %v1000, %v1031
      %v1040 = vadd.f32 %v1001, %v1031
      %v1041 = vadd.f32 %v1002, %v1031
      %v1042 = vadd.f32 %v1003, %v1031
      %v1043 = vadd.f32 %v1004, %v1031
      %v1044 = vadd.f32 %v1005, %v1031
      %v1045 = vadd.f32 %v1006, %v1031
      %v1046 = vadd.f32 %v1007, %v1031
      %v1047 = vadd.f32 %v1008, %v1031
      %v1048 = vadd.f32 %v1009, %v1031
      %v1049 = vadd.f32 %v1010, %v1031
      %v1050 = vadd.f32 %v1011, %v1031
      %v1051 = vadd.f32 %v1012, %v1031
      %v1052 = vadd.f32 %v1013, %v1031
      %v1053 = vadd.f32 %v1014, %v1031
      %v1054 = vadd.f32 %v1015, %v1031
      %v1055 = vadd.f32 %v1016, %v1031
      %v1056 = vadd.f32 %v1017, %v1031
      %v1057 = vadd.f32 %v1018, %v1031
      %v1058 = vadd.f32 %v1019, %v1031
      %v1059 = vadd.f32 %v1020, %v1031
      %v1060 = vadd.f32 %v1021, %v1031
      %v1061 = vadd.f32 %v1022, %v1031
      %v1062 = vadd.f32 %v1023, %v1031
      %v1063 = vadd.f32 %v1024, %v1031
      %v1064 = vadd.f32 %v1025, %v1031
      %vm1065 = vcmp.ge.f32.partialorder %v1033, 0.0
      %vm1066 = vcmp.ge.f32.partialorder %v1034, 0.0
      %vm1067 = vcmp.ge.f32.partialorder %v1035, 0.0
      %vm1068 = vcmp.ge.f32.partialorder %v1036, 0.0
      %vm1069 = vcmp.ge.f32.partialorder %v1037, 0.0
      %vm1070 = vcmp.ge.f32.partialorder %v1038, 0.0
      %vm1071 = vcmp.ge.f32.partialorder %v1039, 0.0
      %vm1072 = vcmp.ge.f32.partialorder %v1040, 0.0
      %vm1073 = vcmp.ge.f32.partialorder %v1041, 0.0
      %vm1074 = vcmp.ge.f32.partialorder %v1042, 0.0
      %vm1075 = vcmp.ge.f32.partialorder %v1043, 0.0
      %vm1076 = vcmp.ge.f32.partialorder %v1044, 0.0
      %vm1077 = vcmp.ge.f32.partialorder %v1045, 0.0
      %vm1078 = vcmp.ge.f32.partialorder %v1046, 0.0
      %vm1079 = vcmp.ge.f32.partialorder %v1047, 0.0
      %vm1080 = vcmp.ge.f32.partialorder %v1048, 0.0
      %vm1081 = vcmp.ge.f32.partialorder %v1049, 0.0
      %vm1082 = vcmp.ge.f32.partialorder %v1050, 0.0
      %vm1083 = vcmp.ge.f32.partialorder %v1051, 0.0
      %vm1084 = vcmp.ge.f32.partialorder %v1052, 0.0
      %vm1085 = vcmp.ge.f32.partialorder %v1053, 0.0
      %vm1086 = vcmp.ge.f32.partialorder %v1054, 0.0
      %vm1087 = vcmp.ge.f32.partialorder %v1055, 0.0
      %vm1088 = vcmp.ge.f32.partialorder %v1056, 0.0
      %vm1089 = vcmp.ge.f32.partialorder %v1057, 0.0
      %vm1090 = vcmp.ge.f32.partialorder %v1058, 0.0
      %vm1091 = vcmp.ge.f32.partialorder %v1059, 0.0
      %vm1092 = vcmp.ge.f32.partialorder %v1060, 0.0
      %vm1093 = vcmp.ge.f32.partialorder %v1061, 0.0
      %vm1094 = vcmp.ge.f32.partialorder %v1062, 0.0
      %vm1095 = vcmp.ge.f32.partialorder %v1063, 0.0
      %vm1096 = vcmp.ge.f32.partialorder %v1064, 0.0
      %v1097 = vmul.f32 %v1033, 0.01
      %v1098 = vmul.f32 %v1034, 0.01
      %v1099 = vmul.f32 %v1035, 0.01
      %v1100 = vmul.f32 %v1036, 0.01
      %v1101 = vmul.f32 %v1037, 0.01
      %v1102 = vmul.f32 %v1038, 0.01
      %v1103 = vmul.f32 %v1039, 0.01
      %v1104 = vmul.f32 %v1040, 0.01
      %v1105 = vmul.f32 %v1041, 0.01
      %v1106 = vmul.f32 %v1042, 0.01
      %v1107 = vmul.f32 %v1043, 0.01
      %v1108 = vmul.f32 %v1044, 0.01
      %v1109 = vmul.f32 %v1045, 0.01
      %v1110 = vmul.f32 %v1046, 0.01
      %v1111 = vmul.f32 %v1047, 0.01
      %v1112 = vmul.f32 %v1048, 0.01
      %v1113 = vmul.f32 %v1049, 0.01
      %v1114 = vmul.f32 %v1050, 0.01
      %v1115 = vmul.f32 %v1051, 0.01
      %v1116 = vmul.f32 %v1052, 0.01
      %v1117 = vmul.f32 %v1053, 0.01
      %v1118 = vmul.f32 %v1054, 0.01
      %v1119 = vmul.f32 %v1055, 0.01
      %v1120 = vmul.f32 %v1056, 0.01
      %v1121 = vmul.f32 %v1057, 0.01
      %v1122 = vmul.f32 %v1058, 0.01
      %v1123 = vmul.f32 %v1059, 0.01
      %v1124 = vmul.f32 %v1060, 0.01
      %v1125 = vmul.f32 %v1061, 0.01
      %v1126 = vmul.f32 %v1062, 0.01
      %v1127 = vmul.f32 %v1063, 0.01
      %v1128 = vmul.f32 %v1064, 0.01
      %v1129 = vsel %vm1065, %v1033, %v1097
      %v1130 = vsel %vm1066, %v1034, %v1098
      %v1131 = vsel %vm1067, %v1035, %v1099
      %v1132 = vsel %vm1068, %v1036, %v1100
      %v1133 = vsel %vm1069, %v1037, %v1101
      %v1134 = vsel %vm1070, %v1038, %v1102
      %v1135 = vsel %vm1071, %v1039, %v1103
      %v1136 = vsel %vm1072, %v1040, %v1104
      %v1137 = vsel %vm1073, %v1041, %v1105
      %v1138 = vsel %vm1074, %v1042, %v1106
      %v1139 = vsel %vm1075, %v1043, %v1107
      %v1140 = vsel %vm1076, %v1044, %v1108
      %v1141 = vsel %vm1077, %v1045, %v1109
      %v1142 = vsel %vm1078, %v1046, %v1110
      %v1143 = vsel %vm1079, %v1047, %v1111
      %v1144 = vsel %vm1080, %v1048, %v1112
      %v1145 = vsel %vm1081, %v1049, %v1113
      %v1146 = vsel %vm1082, %v1050, %v1114
      %v1147 = vsel %vm1083, %v1051, %v1115
      %v1148 = vsel %vm1084, %v1052, %v1116
      %v1149 = vsel %vm1085, %v1053, %v1117
      %v1150 = vsel %vm1086, %v1054, %v1118
      %v1151 = vsel %vm1087, %v1055, %v1119
      %v1152 = vsel %vm1088, %v1056, %v1120
      %v1153 = vsel %vm1089, %v1057, %v1121
      %v1154 = vsel %vm1090, %v1058, %v1122
      %v1155 = vsel %vm1091, %v1059, %v1123
      %v1156 = vsel %vm1092, %v1060, %v1124
      %v1157 = vsel %vm1093, %v1061, %v1125
      %v1158 = vsel %vm1094, %v1062, %v1126
      %v1159 = vsel %vm1095, %v1063, %v1127
      %v1160 = vsel %vm1096, %v1064, %v1128
      %1161 = vst.msk [vmem:[%s170] sm:$0xff] %vm210, %v1129
      %1162 = vst.msk [vmem:[%s170 + $0x8] sm:$0xff] %vm210, %v1130
      %1163 = vst.msk [vmem:[%s170 + $0x10] sm:$0xff] %vm210, %v1131
      %1164 = vst.msk [vmem:[%s170 + $0x18] sm:$0xff] %vm210, %v1132
      %1165 = vst.msk [vmem:[%s170 + $0x20] sm:$0xff] %vm210, %v1133
      %1166 = vst.msk [vmem:[%s170 + $0x28] sm:$0xff] %vm210, %v1134
      %1167 = vst.msk [vmem:[%s170 + $0x30] sm:$0xff] %vm210, %v1135
      %1168 = vst.msk [vmem:[%s170 + $0x38] sm:$0xff] %vm210, %v1136
      %1169 = vst.msk [vmem:[%s170 + $0x40] sm:$0xff] %vm210, %v1137
      %1170 = vst.msk [vmem:[%s170 + $0x48] sm:$0xff] %vm210, %v1138
      %1171 = vst.msk [vmem:[%s170 + $0x50] sm:$0xff] %vm210, %v1139
      %1172 = vst.msk [vmem:[%s170 + $0x58] sm:$0xff] %vm210, %v1140
      %1173 = vst.msk [vmem:[%s170 + $0x60] sm:$0xff] %vm210, %v1141
      %1174 = vst.msk [vmem:[%s170 + $0x68] sm:$0xff] %vm210, %v1142
      %1175 = vst.msk [vmem:[%s170 + $0x70] sm:$0xff] %vm210, %v1143
      %1176 = vst.msk [vmem:[%s170 + $0x78] sm:$0xff] %vm210, %v1144
      %1177 = vst.msk [vmem:[%s170 + $0x80] sm:$0xff] %vm210, %v1145
      %1178 = vst.msk [vmem:[%s170 + $0x88] sm:$0xff] %vm210, %v1146
      %1179 = vst.msk [vmem:[%s170 + $0x90] sm:$0xff] %vm210, %v1147
      %1180 = vst.msk [vmem:[%s170 + $0x98] sm:$0xff] %vm210, %v1148
      %1181 = vst.msk [vmem:[%s170 + $0xa0] sm:$0xff] %vm210, %v1149
      %1182 = vst.msk [vmem:[%s170 + $0xa8] sm:$0xff] %vm210, %v1150
      %1183 = vst.msk [vmem:[%s170 + $0xb0] sm:$0xff] %vm210, %v1151
      %1184 = vst.msk [vmem:[%s170 + $0xb8] sm:$0xff] %vm210, %v1152
      %1185 = vst.msk [vmem:[%s170 + $0xc0] sm:$0xff] %vm210, %v1153
      %1186 = vst.msk [vmem:[%s170 + $0xc8] sm:$0xff] %vm210, %v1154
      %1187 = vst.msk [vmem:[%s170 + $0xd0] sm:$0xff] %vm210, %v1155
      %1188 = vst.msk [vmem:[%s170 + $0xd8] sm:$0xff] %vm210, %v1156
      %1189 = vst.msk [vmem:[%s170 + $0xe0] sm:$0xff] %vm210, %v1157
      %1190 = vst.msk [vmem:[%s170 + $0xe8] sm:$0xff] %vm210, %v1158
      %1191 = vst.msk [vmem:[%s170 + $0xf0] sm:$0xff] %vm210, %v1159
      %1192 = vst.msk [vmem:[%s170 + $0xf8] sm:$0xff] %vm210, %v1160
      %p1193 = scmp.lt.s32.totalorder %s14, 1
      %s1194 = scalar_select %p1193, %s14, 1
      %s1195 = smul.addr %s1194, 32
      %s1196 = smul.addr %s1195, 8
      %s1197 = scalar_lea.vmem %s3, %s1196
      // Predicated region
      $region33: #{esab_forward.11} parent=31 // pred_check
        %p1198 = pneg %p100
      $region34: #{esab_forward.11} parent=31 // pred_check_branch
        %1200 = sbr.rel (%p1198) target = $region36
      $region35: #{esab_forward.11} parent=31 // pred_region
        _
      $region36: #{esab_forward.11} parent=31 // pred_fallthru
        _
    $region32: #{esab_forward.11} parent=5 // pred_fallthru
      _
    %p1201 = scmp.le.s32.totalorder 2, %s9
    // Predicated region
    $region37: #{esab_forward.11} parent=5 // pred_check
      %p1202 = pneg %p1201
    $region38: #{esab_forward.11} parent=5 // pred_check_branch
      %1204 = sbr.rel (%p1202) target = $region40
    $region39: #{esab_forward.11} parent=5 // pred_region
      %s1205 = ssub.s32 %s9, 2
      // Predicated region
      $region41: #{esab_forward.11} parent=39 // pred_check
        %p1206 = pneg %p106
      $region42: #{esab_forward.11} parent=39 // pred_check_branch
        %1208 = sbr.rel (%p1206) target = $region44
      $region43: #{esab_forward.11} parent=39 // pred_region
        %p1209 = scmp.lt.s32.totalorder %s15, 1
        %s1210 = scalar_select %p1209, %s15, 1
        %s1211 = smul.addr %s1210, 32
        %s1212 = smul.addr %s1211, 8
        %s1213 = scalar_lea.vmem %s3, %s1212
      $region44: #{esab_forward.11} parent=39 // pred_fallthru
        _
    $region40: #{esab_forward.11} parent=5 // pred_fallthru
      _
  $region6: #{esab_forward.11} parent=0 // loop_footer
    %s13 = sadd.s32 1, %s9
  $region7: #{esab_forward.11} parent=0 // loop_footer_branch
    %8 = sbr.rel target = $region3
  $region8: #{esab_forward.11} parent=0 // loop_exit
    _

// kernel: esab_forward.9
$region0: #{esab_forward.9}
  #allocation0 [shape = 'u32[]', space=smem, size = 0x4, offset = 0x4, fixed_abs, tag = 'smem constant byte address 0x4 - core index']
  #allocation1 [shape = 'u32[144,128]{1,0:T(1,128)}', space=vmem, size = 0x12000, scoped, tag = 'internal scratch']
  %s0 = inlined_call_operand.vmem [shape: f32[2,18,18,8], index: 0, kind: input, shape index: {}]
  %s1 = inlined_call_operand.vmem [shape: f32[3,3,8,8], index: 1, kind: input, shape index: {}]
  %s2 = inlined_call_operand.vmem [shape: f32[1,8], index: 2, kind: input, shape index: {}]
  %s3 = inlined_call_operand.vmem [shape: f32[2,16,16,8], index: 3, kind: output, shape index: {}]
  %s4 = sld [smem:[#allocation0]]
  $region45: #{esab_forward.9} parent=0
    _
  %s6 = ssub.s32 1, %s4
  %s7 = scalar_select 0, %s6, %s4
  loop: start=0, step=1, limit=4
  $region2: #{esab_forward.9} parent=0 // loop_pre_header
    _
  $region3: #{esab_forward.9} parent=0 // loop_header
    %s9 = sphi 0, %s13
    %p10 = scmp.ge.s32.totalorder %s9, 4
    %s19 = sphi 0, %s21
    %s22 = sphi 0, %s19
    %s23 = sphi 0, %s22
    %s39 = sphi 0, %s23
    %s43 = sphi 0, %s43
    %s45 = sphi 0, %s43
    %s46 = sphi 0, %s45
    %s60 = sphi 0, %s46
    %s64 = sphi 0, %s64
    %s66 = sphi 0, %s64
    %s67 = sphi 0, %s66
    %s81 = sphi 0, %s67
    %s87 = sphi 0, %s89
    %s90 = sphi 0, %s87
    %s91 = sphi 0, %s90
    %s107 = sphi 0, %s91
  $region4: #{esab_forward.9} parent=0 // loop_header_branch
    %12 = sbr.rel (%p10) target = $region8
  $region5: #{esab_forward.9} parent=0 // loop_body
    %s14 = ssub.s32 %s9, 1
    %s15 = ssub.s32 %s9, 2
    %s16 = sadd.s32 %s9, 1
    %s17 = ssub.s32 %s9, %s16
    %p18 = scmp.eq.s32.totalorder %s17, 0
    %s20 = sadd.s32 %s19, 1
    %s21 = scalar_select %p18, %s19, %s20
    %p24 = pneg %p18
    %p25 = scmp.eq.s32.totalorder %s9, 1
    %p26 = por %p24, %p25
    %p27 = scmp.ne.s32.totalorder %s19, %s22
    %p28 = scmp.eq.s32.totalorder %s9, 0
    %p29 = por %p27, %p28
    %p30 = scmp.ne.s32.totalorder %s19, %s22
    %p31 = scmp.eq.s32.totalorder %s14, 1
    %p32 = por %p30, %p31
    %p33 = scmp.ne.s32.totalorder %s22, %s23
    %p34 = scmp.eq.s32.totalorder %s14, 0
    %p35 = por %p33, %p34
    %p36 = scmp.ne.s32.totalorder %s22, %s23
    %p37 = scmp.eq.s32.totalorder %s15, 1
    %p38 = por %p36, %p37
    %p40 = scmp.ne.s32.totalorder %s23, %s39
    %p41 = scmp.eq.s32.totalorder %s15, 0
    %p42 = por %p40, %p41
    %s44 = sadd.s32 %s43, 1
    %p47 = scmp.eq.s32.totalorder %s9, 1
    %p48 = scmp.ne.s32.totalorder %s43, %s45
    %p49 = scmp.eq.s32.totalorder %s9, 0
    %p50 = por %p48, %p49
    %p51 = scmp.ne.s32.totalorder %s43, %s45
    %p52 = scmp.eq.s32.totalorder %s14, 1
    %p53 = por %p51, %p52
    %p54 = scmp.ne.s32.totalorder %s45, %s46
    %p55 = scmp.eq.s32.totalorder %s14, 0
    %p56 = por %p54, %p55
    %p57 = scmp.ne.s32.totalorder %s45, %s46
    %p58 = scmp.eq.s32.totalorder %s15, 1
    %p59 = por %p57, %p58
    %p61 = scmp.ne.s32.totalorder %s46, %s60
    %p62 = scmp.eq.s32.totalorder %s15, 0
    %p63 = por %p61, %p62
    %s65 = sadd.s32 %s64, 1
    %p68 = scmp.eq.s32.totalorder %s9, 1
    %p69 = scmp.ne.s32.totalorder %s64, %s66
    %p70 = scmp.eq.s32.totalorder %s9, 0
    %p71 = por %p69, %p70
    %p72 = scmp.ne.s32.totalorder %s64, %s66
    %p73 = scmp.eq.s32.totalorder %s14, 1
    %p74 = por %p72, %p73
    %p75 = scmp.ne.s32.totalorder %s66, %s67
    %p76 = scmp.eq.s32.totalorder %s14, 0
    %p77 = por %p75, %p76
    %p78 = scmp.ne.s32.totalorder %s66, %s67
    %p79 = scmp.eq.s32.totalorder %s15, 1
    %p80 = por %p78, %p79
    %p82 = scmp.ne.s32.totalorder %s67, %s81
    %p83 = scmp.eq.s32.totalorder %s15, 0
    %p84 = por %p82, %p83
    %s85 = ssub.s32 %s9, %s16
    %p86 = scmp.eq.s32.totalorder %s85, 0
    %s88 = sadd.s32 %s87, 1
    %s89 = scalar_select %p86, %s87, %s88
    %p92 = pneg %p86
    %p93 = scmp.eq.s32.totalorder %s9, 1
    %p94 = por %p92, %p93
    %p95 = scmp.ne.s32.totalorder %s87, %s90
    %p96 = scmp.eq.s32.totalorder %s9, 0
    %p97 = por %p95, %p96
    %p98 = scmp.ne.s32.totalorder %s87, %s90
    %p99 = scmp.eq.s32.totalorder %s14, 1
    %p100 = por %p98, %p99
    %p101 = scmp.ne.s32.totalorder %s90, %s91
    %p102 = scmp.eq.s32.totalorder %s14, 0
    %p103 = por %p101, %p102
    %p104 = scmp.ne.s32.totalorder %s90, %s91
    %p105 = scmp.eq.s32.totalorder %s15, 1
    %p106 = por %p104, %p105
    %p108 = scmp.ne.s32.totalorder %s91, %s107
    %p109 = scmp.eq.s32.totalorder %s15, 0
    %p110 = por %p108, %p109
    %p111 = scmp.le.s32.totalorder 1, %s9
    %p112 = scmp.lt.s32.totalorder %s9, 3
    %p113 = pnand %p111, %p112
    %p114 = pneg %p113
    // Predicated region
    $region9: #{esab_forward.9} parent=5 // pred_check
      _
    $region10: #{esab_forward.9} parent=5 // pred_check_branch
      %116 = sbr.rel (%p113) target = $region12
    $region11: #{esab_forward.9} parent=5 // pred_region
      %s117 = ssub.s32 %s9, 1
      // Predicated region
      $region13: #{esab_forward.9} parent=11 // pred_check
        %p118 = pneg %p56
      $region14: #{esab_forward.9} parent=11 // pred_check_branch
        %120 = sbr.rel (%p118) target = $region16
      $region15: #{esab_forward.9} parent=11 // pred_region
        _
      $region16: #{esab_forward.9} parent=11 // pred_fallthru
        _
      // Predicated region
      $region17: #{esab_forward.9} parent=11 // pred_check
        %p121 = pneg %p77
      $region18: #{esab_forward.9} parent=11 // pred_check_branch
        %123 = sbr.rel (%p121) target = $region20
      $region19: #{esab_forward.9} parent=11 // pred_region
        _
      $region20: #{esab_forward.9} parent=11 // pred_fallthru
        _
    $region12: #{esab_forward.9} parent=5 // pred_fallthru
      _
    %p124 = scmp.lt.s32.totalorder %s9, 2
    // Predicated region
    $region21: #{esab_forward.9} parent=5 // pred_check
      %p125 = pneg %p124
    $region22: #{esab_forward.9} parent=5 // pred_check_branch
      %127 = sbr.rel (%p125) target = $region24
    $region23: #{esab_forward.9} parent=5 // pred_region
      // Predicated region
      $region25: #{esab_forward.9} parent=23 // pred_check
        %p128 = pneg %p29
      $region26: #{esab_forward.9} parent=23 // pred_check_branch
        %130 = sbr.rel (%p128) target = $region28
      $region27: #{esab_forward.9} parent=23 // pred_region
        %p131 = scmp.lt.s32.totalorder %s9, 1
        %s132 = scalar_select %p131, %s9, 1
        %s133 = smul.addr %s132, 54
        %s134 = smul.addr %s133, 8
        %s135 = scalar_lea.vmem %s0, %s134
      $region28: #{esab_forward.9} parent=23 // pred_fallthru
        _
    $region24: #{esab_forward.9} parent=5 // pred_fallthru
      _
    %p136 = scmp.le.s32.totalorder 1, %s9
    %p137 = scmp.lt.s32.totalorder %s9, 3
    %p138 = pnand %p136, %p137
    %p139 = pneg %p138
    // Predicated region
    $region29: #{esab_forward.9} parent=5 // pred_check
      _
    $region30: #{esab_forward.9} parent=5 // pred_check_branch
      %141 = sbr.rel (%p138) target = $region32
    $region31: #{esab_forward.9} parent=5 // pred_region
      %s142 = ssub.s32 %s9, 1
      %p143 = scmp.lt.s32.totalorder %s14, 1
      %s144 = scalar_select %p143, %s14, 1
      %s145 = smul.addr %s144, 54
      %s146 = smul.addr %s145, 8
      %s147 = scalar_lea.vmem %s0, %s146
      %p148 = pneg %p35
      %p149 = pneg %p32
      %p150 = pneg %p56
      %p151 = pneg %p53
      %p152 = pneg %p77
      %p153 = pneg %p74
      %p154 = pneg %p103
      %p155 = pneg %p100
      %p156 = scmp.lt.s32.totalorder %s14, 1
      %s157 = scalar_select %p156, %s14, 1
      %s158 = smul.addr %s157, 32
      %s159 = smul.addr %s158, 8
      %s160 = scalar_lea.vmem %s3, %s159
      %p161 = scmp.lt.s32.totalorder %s14, 1
      %s162 = scalar_select %p161, %s14, 1
      %s163 = smul.addr %s162, 54
      %s164 = smul.addr %s163, 8
      %s165 = scalar_lea.vmem %s0, %s164
      %p166 = scmp.lt.s32.totalorder %s14, 1
      %s167 = scalar_select %p166, %s14, 1
      %s168 = smul.addr %s167, 32
      %s169 = smul.addr %s168, 8
      %s170 = scalar_lea.vmem %s3, %s169
      %v171 = vld [vmem:[%s165] sm:$0xff]
      %v172 = vld [vmem:[%s165 + $0x8] sm:$0xff]
      %v173 = vld [vmem:[%s165 + $0x10] sm:$0x3]
      %v174 = vld [vmem:[%s165 + $0x18] sm:$0xff]
      %v175 = vld [vmem:[%s165 + $0x20] sm:$0xff]
      %v176 = vld [vmem:[%s165 + $0x28] sm:$0x3]
      %v177 = vld [vmem:[%s165 + $0x30] sm:$0xff]
      %v178 = vld [vmem:[%s165 + $0x38] sm:$0xff]
      %v179 = vld [vmem:[%s165 + $0x40] sm:$0x3]
      %v180 = vld [vmem:[%s165 + $0x48] sm:$0xff]
      %v181 = vld [vmem:[%s165 + $0x50] sm:$0xff]
      %v182 = vld [vmem:[%s165 + $0x58] sm:$0x3]
      %v183 = vld [vmem:[%s165 + $0x60] sm:$0xff]
      %v184 = vld [vmem:[%s165 + $0x68] sm:$0xff]
      %v185 = vld [vmem:[%s165 + $0x70] sm:$0x3]
      %v186 = vld [vmem:[%s165 + $0x78] sm:$0xff]
      %v187 = vld [vmem:[%s165 + $0x80] sm:$0xff]
      %v188 = vld [vmem:[%s165 + $0x88] sm:$0x3]
      %v189 = vld [vmem:[%s165 + $0x90] sm:$0xff]
      %v190 = vld [vmem:[%s165 + $0x98] sm:$0xff]
      %v191 = vld [vmem:[%s165 + $0xa0] sm:$0x3]
      %v192 = vld [vmem:[%s165 + $0xa8] sm:$0xff]
      %v193 = vld [vmem:[%s165 + $0xb0] sm:$0xff]
      %v194 = vld [vmem:[%s165 + $0xb8] sm:$0x3]
      %v195 = vld [vmem:[%s165 + $0xc0] sm:$0xff]
      %v196 = vld [vmem:[%s165 + $0xc8] sm:$0xff]
      %v197 = vld [vmem:[%s165 + $0xd0] sm:$0x3]
      %v198 = vld [vmem:[%s165 + $0xd8] sm:$0xff]
      %v199 = vld [vmem:[%s165 + $0xe0] sm:$0xff]
      %v200 = vld [vmem:[%s165 + $0xe8] sm:$0x3]
      %v201 = vld [vmem:[%s165 + $0xf0] sm:$0xff]
      %v202 = vld [vmem:[%s165 + $0xf8] sm:$0xff]
      %v203 = vld [vmem:[%s165 + $0x100] sm:$0x3]
      %v204 = vld [vmem:[%s165 + $0x108] sm:$0xff]
      %v205 = vld [vmem:[%s165 + $0x110] sm:$0xff]
      %v206 = vld [vmem:[%s165 + $0x118] sm:$0x3]
      %v207 = vld [vmem:[%s165 + $0x120] sm:$0xff]
      %v208 = vld [vmem:[%s165 + $0x128] sm:$0xff]
      %v209 = vld [vmem:[%s165 + $0x130] sm:$0x3]
      %v210 = vld [vmem:[%s165 + $0x138] sm:$0xff]
      %v211 = vld [vmem:[%s165 + $0x140] sm:$0xff]
      %v212 = vld [vmem:[%s165 + $0x148] sm:$0x3]
      %v213 = vld [vmem:[%s165 + $0x150] sm:$0xff]
      %v214 = vld [vmem:[%s165 + $0x158] sm:$0xff]
      %v215 = vld [vmem:[%s165 + $0x160] sm:$0x3]
      %v216 = vld [vmem:[%s165 + $0x168] sm:$0xff]
      %v217 = vld [vmem:[%s165 + $0x170] sm:$0xff]
      %v218 = vld [vmem:[%s165 + $0x178] sm:$0x3]
      %v219 = vld [vmem:[%s165 + $0x180] sm:$0xff]
      %v220 = vld [vmem:[%s165 + $0x188] sm:$0xff]
      %v221 = vld [vmem:[%s165 + $0x190] sm:$0x3]
      %v222 = vld [vmem:[%s165 + $0x198] sm:$0xff]
      %v223 = vld [vmem:[%s165 + $0x1a0] sm:$0xff]
      %v224 = vld [vmem:[%s165 + $0x1a8] sm:$0x3]
      %v225 = vld [vmem:[%s1] sm:$0xff]
      %v226 = vld [vmem:[%s1 + $0x8] sm:$0xff]
      %v227 = vld [vmem:[%s1 + $0x10] sm:$0xff]
      %v228 = vld [vmem:[%s1 + $0x18] sm:$0xff]
      %v229 = vld [vmem:[%s1 + $0x20] sm:$0xff]
      %v230 = vld [vmem:[%s1 + $0x28] sm:$0xff]
      %v231 = vld [vmem:[%s1 + $0x30] sm:$0xff]
      %v232 = vld [vmem:[%s1 + $0x38] sm:$0xff]
      %v233 = vld [vmem:[%s1 + $0x40] sm:$0xff]
      %vm282 = vcmask 1046528
      %v283 = vrot.slane %v171, 1
      %v284 = vrot.slane %v172, 1
      %v285 = vsel %vm282, %v283, %v284
      %v286 = vrot.slane %v173, 1
      %v287 = vsel %vm282, %v284, %v286
      %v288 = vrot.slane %v174, 1
      %v289 = vrot.slane %v175, 1
      %v290 = vsel %vm282, %v288, %v289
      %v291 = vrot.slane %v176, 1
      %v292 = vsel %vm282, %v289, %v291
      %v293 = vrot.slane %v177, 1
      %v294 = vrot.slane %v178, 1
      %v295 = vsel %vm282, %v293, %v294
      %v296 = vrot.slane %v179, 1
      %v297 = vsel %vm282, %v294, %v296
      %v298 = vrot.slane %v180, 1
      %v299 = vrot.slane %v181, 1
      %v300 = vsel %vm282, %v298, %v299
      %v301 = vrot.slane %v182, 1
      %v302 = vsel %vm282, %v299, %v301
      %v303 = vrot.slane %v183, 1
      %v304 = vrot.slane %v184, 1
      %v305 = vsel %vm282, %v303, %v304
      %v306 = vrot.slane %v185, 1
      %v307 = vsel %vm282, %v304, %v306
      %v308 = vrot.slane %v186, 1
      %v309 = vrot.slane %v187, 1
      %v310 = vsel %vm282, %v308, %v309
      %v311 = vrot.slane %v188, 1
      %v312 = vsel %vm282, %v309, %v311
      %v313 = vrot.slane %v189, 1
      %v314 = vrot.slane %v190, 1
      %v315 = vsel %vm282, %v313, %v314
      %v316 = vrot.slane %v191, 1
      %v317 = vsel %vm282, %v314, %v316
      %v318 = vrot.slane %v192, 1
      %v319 = vrot.slane %v193, 1
      %v320 = vsel %vm282, %v318, %v319
      %v321 = vrot.slane %v194, 1
      %v322 = vsel %vm282, %v319, %v321
      %v323 = vrot.slane %v195, 1
      %v324 = vrot.slane %v196, 1
      %v325 = vsel %vm282, %v323, %v324
      %v326 = vrot.slane %v197, 1
      %v327 = vsel %vm282, %v324, %v326
      %v328 = vrot.slane %v198, 1
      %v329 = vrot.slane %v199, 1
      %v330 = vsel %vm282, %v328, %v329
      %v331 = vrot.slane %v200, 1
      %v332 = vsel %vm282, %v329, %v331
      %v333 = vrot.slane %v201, 1
      %v334 = vrot.slane %v202, 1
      %v335 = vsel %vm282, %v333, %v334
      %v336 = vrot.slane %v203, 1
      %v337 = vsel %vm282, %v334, %v336
      %v338 = vrot.slane %v204, 1
      %v339 = vrot.slane %v205, 1
      %v340 = vsel %vm282, %v338, %v339
      %v341 = vrot.slane %v206, 1
      %v342 = vsel %vm282, %v339, %v341
      %v343 = vrot.slane %v207, 1
      %v344 = vrot.slane %v208, 1
      %v345 = vsel %vm282, %v343, %v344
      %v346 = vrot.slane %v209, 1
      %v347 = vsel %vm282, %v344, %v346
      %v348 = vrot.slane %v210, 1
      %v349 = vrot.slane %v211, 1
      %v350 = vsel %vm282, %v348, %v349
      %v351 = vrot.slane %v212, 1
      %v352 = vsel %vm282, %v349, %v351
      %v353 = vrot.slane %v213, 1
      %v354 = vrot.slane %v214, 1
      %v355 = vsel %vm282, %v353, %v354
      %v356 = vrot.slane %v215, 1
      %v357 = vsel %vm282, %v354, %v356
      %v358 = vrot.slane %v216, 1
      %v359 = vrot.slane %v217, 1
      %v360 = vsel %vm282, %v358, %v359
      %v361 = vrot.slane %v218, 1
      %v362 = vsel %vm282, %v359, %v361
      %vm363 = vcmask 64512
      %v364 = vsel %vm363, %v285, 0
      %v366 = vsel %vm363, %v287, 0
      %v368 = vsel %vm363, %v290, 0
      %v370 = vsel %vm363, %v292, 0
      %v372 = vsel %vm363, %v295, 0
      %v374 = vsel %vm363, %v297, 0
      %v376 = vsel %vm363, %v300, 0
      %v378 = vsel %vm363, %v302, 0
      %v380 = vsel %vm363, %v305, 0
      %v382 = vsel %vm363, %v307, 0
      %v384 = vsel %vm363, %v310, 0
      %v386 = vsel %vm363, %v312, 0
      %v388 = vsel %vm363, %v315, 0
      %v390 = vsel %vm363, %v317, 0
      %v392 = vsel %vm363, %v320, 0
      %v394 = vsel %vm363, %v322, 0
      %v396 = vsel %vm363, %v325, 0
      %v398 = vsel %vm363, %v327, 0
      %v400 = vsel %vm363, %v330, 0
      %v402 = vsel %vm363, %v332, 0
      %v404 = vsel %vm363, %v335, 0
      %v406 = vsel %vm363, %v337, 0
      %v408 = vsel %vm363, %v340, 0
      %v410 = vsel %vm363, %v342, 0
      %v412 = vsel %vm363, %v345, 0
      %v414 = vsel %vm363, %v347, 0
      %v416 = vsel %vm363, %v350, 0
      %v418 = vsel %vm363, %v352, 0
      %v420 = vsel %vm363, %v355, 0
      %v422 = vsel %vm363, %v357, 0
      %v424 = vsel %vm363, %v360, 0
      %v426 = vsel %vm363, %v362, 0
      %428 = vmatprep.subr.mxu0 0.0
      %429 = vmatpush1.msra.mxu0 0.0
      %430 = vmatprep.subr.mxu0 0.0
      %431 = vmatpush1.msra.mxu0 0.0
      %432 = vmatprep.subr.mxu0 0.0
      %433 = vmatpush1.msra.mxu0 0.0
      %434 = vmatprep.subr.mxu0 0.0
      %435 = vmatpush1.msra.mxu0 0.0
      %436 = vmatprep.subr.mxu0 0.0
      %437 = vmatpush1.msra.mxu0 0.0
      %438 = vmatprep.subr.mxu0 0.0
      %439 = vmatpush1.msra.mxu0 0.0
      %440 = vmatprep.subr.mxu0 0.0
      %441 = vmatpush1.msra.mxu0 0.0
      %442 = vmatprep.subr.mxu0 0.0
      %443 = vmatpush1.msra.mxu0 0.0
      %444 = vmatprep.subr.mxu0 0.0
      %445 = vmatpush1.msra.mxu0 0.0
      %446 = vmatprep.subr.mxu0 0.0
      %447 = vmatpush1.msra.mxu0 0.0
      %448 = vmatprep.subr.mxu0 0.0
      %449 = vmatpush1.msra.mxu0 0.0
      %450 = vmatprep.subr.mxu0 0.0
      %451 = vmatpush1.msra.mxu0 0.0
      %452 = vmatprep.subr.mxu0 0.0
      %453 = vmatpush1.msra.mxu0 0.0
      %454 = vmatprep.subr.mxu0 0.0
      %455 = vmatpush1.msra.mxu0 0.0
      %456 = vmatprep.subr.mxu0 0.0
      %457 = vmatpush1.msra.mxu0 0.0
      %458 = vmatprep.subr.mxu0 0.0
      %459 = vmatpush1.msra.mxu0 %v226
      %460 = vmatprep.subr.mxu0 0.0
      %461 = vmatpush2.msra.mxu0 0.0
      %462 = vmatprep.subr.mxu0 0.0
      %463 = vmatpush2.msra.mxu0 0.0
      %464 = vmatprep.subr.mxu0 0.0
      %465 = vmatpush2.msra.mxu0 0.0
      %466 = vmatprep.subr.mxu0 0.0
      %467 = vmatpush2.msra.mxu0 0.0
      %468 = vmatprep.subr.mxu0 0.0
      %469 = vmatpush2.msra.mxu0 0.0
      %470 = vmatprep.subr.mxu0 0.0
      %471 = vmatpush2.msra.mxu0 0.0
      %472 = vmatprep.subr.mxu0 0.0
      %473 = vmatpush2.msra.mxu0 0.0
      %474 = vmatprep.subr.mxu0 0.0
      %475 = vmatpush2.msra.mxu0 0.0
      %476 = vmatprep.subr.mxu0 0.0
      %477 = vmatpush2.msra.mxu0 0.0
      %478 = vmatprep.subr.mxu0 0.0
      %479 = vmatpush2.msra.mxu0 0.0
      %480 = vmatprep.subr.mxu0 0.0
      %481 = vmatpush2.msra.mxu0 0.0
      %482 = vmatprep.subr.mxu0 0.0
      %483 = vmatpush2.msra.mxu0 0.0
      %484 = vmatprep.subr.mxu0 0.0
      %485 = vmatpush2.msra.mxu0 0.0
      %486 = vmatprep.subr.mxu0 0.0
      %487 = vmatpush2.msra.mxu0 0.0
      %488 = vmatprep.subr.mxu0 0.0
      %489 = vmatpush2.msra.mxu0 0.0
      %490 = vmatprep.subr.mxu0 0.0
      %491 = vmatpush2.msra.mxu0 0.0
      %492 = vmatprep.mubr.f32.mxu0 0.0
      %493 = vmatmul.mubr.f32.gmra.mxu0 %v364
      %v494 = vpop.f32.mrf.mxu0
      %v495 = vadd.f32 0.0, %v494
      %v496 = vpop.f32.mrf.mxu0
      %497 = vmatprep.mubr.f32.mxu0 0.0
      %498 = vmatmul.mubr.f32.gmra.mxu0 %v366
      %v499 = vpop.f32.mrf.mxu0
      %v500 = vadd.f32 0.0, %v499
      %v501 = vpop.f32.mrf.mxu0
      %502 = vmatprep.mubr.f32.mxu0 0.0
      %503 = vmatmul.mubr.f32.gmra.mxu0 %v368
      %v504 = vpop.f32.mrf.mxu0
      %v505 = vadd.f32 0.0, %v504
      %v506 = vpop.f32.mrf.mxu0
      %507 = vmatprep.mubr.f32.mxu0 0.0
      %508 = vmatmul.mubr.f32.gmra.mxu0 %v370
      %v509 = vpop.f32.mrf.mxu0
      %v510 = vadd.f32 0.0, %v509
      %v511 = vpop.f32.mrf.mxu0
      %512 = vmatprep.mubr.f32.mxu0 0.0
      %513 = vmatmul.mubr.f32.gmra.mxu0 %v372
      %v514 = vpop.f32.mrf.mxu0
      %v515 = vadd.f32 0.0, %v514
      %v516 = vpop.f32.mrf.mxu0
      %517 = vmatprep.mubr.f32.mxu0 0.0
      %518 = vmatmul.mubr.f32.gmra.mxu0 %v374
      %v519 = vpop.f32.mrf.mxu0
      %v520 = vadd.f32 0.0, %v519
      %v521 = vpop.f32.mrf.mxu0
      %522 = vmatprep.mubr.f32.mxu0 0.0
      %523 = vmatmul.mubr.f32.gmra.mxu0 %v376
      %v524 = vpop.f32.mrf.mxu0
      %v525 = vadd.f32 0.0, %v524
      %v526 = vpop.f32.mrf.mxu0
      %527 = vmatprep.mubr.f32.mxu0 0.0
      %528 = vmatmul.mubr.f32.gmra.mxu0 %v378
      %v529 = vpop.f32.mrf.mxu0
      %v530 = vadd.f32 0.0, %v529
      %v531 = vpop.f32.mrf.mxu0
      %532 = vmatprep.mubr.f32.mxu0 0.0
      %533 = vmatmul.mubr.f32.gmra.mxu0 %v380
      %v534 = vpop.f32.mrf.mxu0
      %v535 = vadd.f32 0.0, %v534
      %v536 = vpop.f32.mrf.mxu0
      %537 = vmatprep.mubr.f32.mxu0 0.0
      %538 = vmatmul.mubr.f32.gmra.mxu0 %v382
      %v539 = vpop.f32.mrf.mxu0
      %v540 = vadd.f32 0.0, %v539
      %v541 = vpop.f32.mrf.mxu0
      %542 = vmatprep.mubr.f32.mxu0 0.0
      %543 = vmatmul.mubr.f32.gmra.mxu0 %v384
      %v544 = vpop.f32.mrf.mxu0
      %v545 = vadd.f32 0.0, %v544
      %v546 = vpop.f32.mrf.mxu0
      %547 = vmatprep.mubr.f32.mxu0 0.0
      %548 = vmatmul.mubr.f32.gmra.mxu0 %v386
      %v549 = vpop.f32.mrf.mxu0
      %v550 = vadd.f32 0.0, %v549
      %v551 = vpop.f32.mrf.mxu0
      %552 = vmatprep.mubr.f32.mxu0 0.0
      %553 = vmatmul.mubr.f32.gmra.mxu0 %v388
      %v554 = vpop.f32.mrf.mxu0
      %v555 = vadd.f32 0.0, %v554
      %v556 = vpop.f32.mrf.mxu0
      %557 = vmatprep.mubr.f32.mxu0 0.0
      %558 = vmatmul.mubr.f32.gmra.mxu0 %v390
      %v559 = vpop.f32.mrf.mxu0
      %v560 = vadd.f32 0.0, %v559
      %v561 = vpop.f32.mrf.mxu0
      %562 = vmatprep.mubr.f32.mxu0 0.0
      %563 = vmatmul.mubr.f32.gmra.mxu0 %v392
      %v564 = vpop.f32.mrf.mxu0
      %v565 = vadd.f32 0.0, %v564
      %v566 = vpop.f32.mrf.mxu0
      %567 = vmatprep.mubr.f32.mxu0 0.0
      %568 = vmatmul.mubr.f32.gmra.mxu0 %v394
      %v569 = vpop.f32.mrf.mxu0
      %v570 = vadd.f32 0.0, %v569
      %v571 = vpop.f32.mrf.mxu0
      %572 = vmatprep.mubr.f32.mxu0 0.0
      %573 = vmatmul.mubr.f32.gmra.mxu0 %v396
      %v574 = vpop.f32.mrf.mxu0
      %v575 = vadd.f32 0.0, %v574
      %v576 = vpop.f32.mrf.mxu0
      %577 = vmatprep.mubr.f32.mxu0 0.0
      %578 = vmatmul.mubr.f32.gmra.mxu0 %v398
      %v579 = vpop.f32.mrf.mxu0
      %v580 = vadd.f32 0.0, %v579
      %v581 = vpop.f32.mrf.mxu0
      %582 = vmatprep.mubr.f32.mxu0 0.0
      %583 = vmatmul.mubr.f32.gmra.mxu0 %v400
      %v584 = vpop.f32.mrf.mxu0
      %v585 = vadd.f32 0.0, %v584
      %v586 = vpop.f32.mrf.mxu0
      %587 = vmatprep.mubr.f32.mxu0 0.0
      %588 = vmatmul.mubr.f32.gmra.mxu0 %v402
      %v589 = vpop.f32.mrf.mxu0
      %v590 = vadd.f32 0.0, %v589
      %v591 = vpop.f32.mrf.mxu0
      %592 = vmatprep.mubr.f32.mxu0 0.0
      %593 = vmatmul.mubr.f32.gmra.mxu0 %v404
      %v594 = vpop.f32.mrf.mxu0
      %v595 = vadd.f32 0.0, %v594
      %v596 = vpop.f32.mrf.mxu0
      %597 = vmatprep.mubr.f32.mxu0 0.0
      %598 = vmatmul.mubr.f32.gmra.mxu0 %v406
      %v599 = vpop.f32.mrf.mxu0
      %v600 = vadd.f32 0.0, %v599
      %v601 = vpop.f32.mrf.mxu0
      %602 = vmatprep.mubr.f32.mxu0 0.0
      %603 = vmatmul.mubr.f32.gmra.mxu0 %v408
      %v604 = vpop.f32.mrf.mxu0
      %v605 = vadd.f32 0.0, %v604
      %v606 = vpop.f32.mrf.mxu0
      %607 = vmatprep.mubr.f32.mxu0 0.0
      %608 = vmatmul.mubr.f32.gmra.mxu0 %v410
      %v609 = vpop.f32.mrf.mxu0
      %v610 = vadd.f32 0.0, %v609
      %v611 = vpop.f32.mrf.mxu0
      %612 = vmatprep.mubr.f32.mxu0 0.0
      %613 = vmatmul.mubr.f32.gmra.mxu0 %v412
      %v614 = vpop.f32.mrf.mxu0
      %v615 = vadd.f32 0.0, %v614
      %v616 = vpop.f32.mrf.mxu0
      %617 = vmatprep.mubr.f32.mxu0 0.0
      %618 = vmatmul.mubr.f32.gmra.mxu0 %v414
      %v619 = vpop.f32.mrf.mxu0
      %v620 = vadd.f32 0.0, %v619
      %v621 = vpop.f32.mrf.mxu0
      %622 = vmatprep.mubr.f32.mxu0 0.0
      %623 = vmatmul.mubr.f32.gmra.mxu0 %v416
      %v624 = vpop.f32.mrf.mxu0
      %v625 = vadd.f32 0.0, %v624
      %v626 = vpop.f32.mrf.mxu0
      %627 = vmatprep.mubr.f32.mxu0 0.0
      %628 = vmatmul.mubr.f32.gmra.mxu0 %v418
      %v629 = vpop.f32.mrf.mxu0
      %v630 = vadd.f32 0.0, %v629
      %v631 = vpop.f32.mrf.mxu0
      %632 = vmatprep.mubr.f32.mxu0 0.0
      %633 = vmatmul.mubr.f32.gmra.mxu0 %v420
      %v634 = vpop.f32.mrf.mxu0
      %v635 = vadd.f32 0.0, %v634
      %v636 = vpop.f32.mrf.mxu0
      %637 = vmatprep.mubr.f32.mxu0 0.0
      %638 = vmatmul.mubr.f32.gmra.mxu0 %v422
      %v639 = vpop.f32.mrf.mxu0
      %v640 = vadd.f32 0.0, %v639
      %v641 = vpop.f32.mrf.mxu0
      %642 = vmatprep.mubr.f32.mxu0 0.0
      %643 = vmatmul.mubr.f32.gmra.mxu0 %v424
      %v644 = vpop.f32.mrf.mxu0
      %v645 = vadd.f32 0.0, %v644
      %v646 = vpop.f32.mrf.mxu0
      %647 = vmatprep.mubr.f32.mxu0 0.0
      %648 = vmatmul.mubr.f32.gmra.mxu0 %v426
      %v649 = vpop.f32.mrf.mxu0
      %v650 = vadd.f32 0.0, %v649
      %v651 = vpop.f32.mrf.mxu0
      %652 = vdwg.mxu0
      %v653 = vsel %vm363, %v171, 0
      %v655 = vsel %vm363, %v172, 0
      %v657 = vsel %vm363, %v174, 0
      %v659 = vsel %vm363, %v175, 0
      %v661 = vsel %vm363, %v177, 0
      %v663 = vsel %vm363, %v178, 0
      %v665 = vsel %vm363, %v180, 0
      %v667 = vsel %vm363, %v181, 0
      %v669 = vsel %vm363, %v183, 0
      %v671 = vsel %vm363, %v184, 0
      %v673 = vsel %vm363, %v186, 0
      %v675 = vsel %vm363, %v187, 0
      %v677 = vsel %vm363, %v189, 0
      %v679 = vsel %vm363, %v190, 0
      %v681 = vsel %vm363, %v192, 0
      %v683 = vsel %vm363, %v193, 0
      %v685 = vsel %vm363, %v195, 0
      %v687 = vsel %vm363, %v196, 0
      %v689 = vsel %vm363, %v198, 0
      %v691 = vsel %vm363, %v199, 0
      %v693 = vsel %vm363, %v201, 0
      %v695 = vsel %vm363, %v202, 0
      %v697 = vsel %vm363, %v204, 0
      %v699 = vsel %vm363, %v205, 0
      %v701 = vsel %vm363, %v207, 0
      %v703 = vsel %vm363, %v208, 0
      %v705 = vsel %vm363, %v210, 0
      %v707 = vsel %vm363, %v211, 0
      %v709 = vsel %vm363, %v213, 0
      %v711 = vsel %vm363, %v214, 0
      %v713 = vsel %vm363, %v216, 0
      %v715 = vsel %vm363, %v217, 0
      %717 = vmatprep.subr.mxu0 0.0
      %718 = vmatpush1.msra.mxu0 0.0
      %719 = vmatprep.subr.mxu0 0.0
      %720 = vmatpush1.msra.mxu0 0.0
      %721 = vmatprep.subr.mxu0 0.0
      %722 = vmatpush1.msra.mxu0 0.0
      %723 = vmatprep.subr.mxu0 0.0
      %724 = vmatpush1.msra.mxu0 0.0
      %725 = vmatprep.subr.mxu0 0.0
      %726 = vmatpush1.msra.mxu0 0.0
      %727 = vmatprep.subr.mxu0 0.0
      %728 = vmatpush1.msra.mxu0 0.0
      %729 = vmatprep.subr.mxu0 0.0
      %730 = vmatpush1.msra.mxu0 0.0
      %731 = vmatprep.subr.mxu0 0.0
      %732 = vmatpush1.msra.mxu0 0.0
      %733 = vmatprep.subr.mxu0 0.0
      %734 = vmatpush1.msra.mxu0 0.0
      %735 = vmatprep.subr.mxu0 0.0
      %736 = vmatpush1.msra.mxu0 0.0
      %737 = vmatprep.subr.mxu0 0.0
      %738 = vmatpush1.msra.mxu0 0.0
      %739 = vmatprep.subr.mxu0 0.0
      %740 = vmatpush1.msra.mxu0 0.0
      %741 = vmatprep.subr.mxu0 0.0
      %742 = vmatpush1.msra.mxu0 0.0
      %743 = vmatprep.subr.mxu0 0.0
      %744 = vmatpush1.msra.mxu0 0.0
      %745 = vmatprep.subr.mxu0 0.0
      %746 = vmatpush1.msra.mxu0 0.0
      %747 = vmatprep.subr.mxu0 0.0
      %748 = vmatpush1.msra.mxu0 %v225
      %749 = vmatprep.subr.mxu0 0.0
      %750 = vmatpush2.msra.mxu0 0.0
      %751 = vmatprep.subr.mxu0 0.0
      %752 = vmatpush2.msra.mxu0 0.0
      %753 = vmatprep.subr.mxu0 0.0
      %754 = vmatpush2.msra.mxu0 0.0
      %755 = vmatprep.subr.mxu0 0.0
      %756 = vmatpush2.msra.mxu0 0.0
      %757 = vmatprep.subr.mxu0 0.0
      %758 = vmatpush2.msra.mxu0 0.0
      %759 = vmatprep.subr.mxu0 0.0
      %760 = vmatpush2.msra.mxu0 0.0
      %761 = vmatprep.subr.mxu0 0.0
      %762 = vmatpush2.msra.mxu0 0.0
      %763 = vmatprep.subr.mxu0 0.0
      %764 = vmatpush2.msra.mxu0 0.0
      %765 = vmatprep.subr.mxu0 0.0
      %766 = vmatpush2.msra.mxu0 0.0
      %767 = vmatprep.subr.mxu0 0.0
      %768 = vmatpush2.msra.mxu0 0.0
      %769 = vmatprep.subr.mxu0 0.0
      %770 = vmatpush2.msra.mxu0 0.0
      %771 = vmatprep.subr.mxu0 0.0
      %772 = vmatpush2.msra.mxu0 0.0
      %773 = vmatprep.subr.mxu0 0.0
      %774 = vmatpush2.msra.mxu0 0.0
      %775 = vmatprep.subr.mxu0 0.0
      %776 = vmatpush2.msra.mxu0 0.0
      %777 = vmatprep.subr.mxu0 0.0
      %778 = vmatpush2.msra.mxu0 0.0
      %779 = vmatprep.subr.mxu0 0.0
      %780 = vmatpush2.msra.mxu0 0.0
      %781 = vmatprep.mubr.f32.mxu0 0.0
      %782 = vmatmul.mubr.f32.gmra.mxu0 %v653
      %v783 = vpop.f32.mrf.mxu0
      %v784 = vadd.f32 %v495, %v783
      %v785 = vpop.f32.mrf.mxu0
      %786 = vmatprep.mubr.f32.mxu0 0.0
      %787 = vmatmul.mubr.f32.gmra.mxu0 %v655
      %v788 = vpop.f32.mrf.mxu0
      %v789 = vadd.f32 %v500, %v788
      %v790 = vpop.f32.mrf.mxu0
      %791 = vmatprep.mubr.f32.mxu0 0.0
      %792 = vmatmul.mubr.f32.gmra.mxu0 %v657
      %v793 = vpop.f32.mrf.mxu0
      %v794 = vadd.f32 %v505, %v793
      %v795 = vpop.f32.mrf.mxu0
      %796 = vmatprep.mubr.f32.mxu0 0.0
      %797 = vmatmul.mubr.f32.gmra.mxu0 %v659
      %v798 = vpop.f32.mrf.mxu0
      %v799 = vadd.f32 %v510, %v798
      %v800 = vpop.f32.mrf.mxu0
      %801 = vmatprep.mubr.f32.mxu0 0.0
      %802 = vmatmul.mubr.f32.gmra.mxu0 %v661
      %v803 = vpop.f32.mrf.mxu0
      %v804 = vadd.f32 %v515, %v803
      %v805 = vpop.f32.mrf.mxu0
      %806 = vmatprep.mubr.f32.mxu0 0.0
      %807 = vmatmul.mubr.f32.gmra.mxu0 %v663
      %v808 = vpop.f32.mrf.mxu0
      %v809 = vadd.f32 %v520, %v808
      %v810 = vpop.f32.mrf.mxu0
      %811 = vmatprep.mubr.f32.mxu0 0.0
      %812 = vmatmul.mubr.f32.gmra.mxu0 %v665
      %v813 = vpop.f32.mrf.mxu0
      %v814 = vadd.f32 %v525, %v813
      %v815 = vpop.f32.mrf.mxu0
      %816 = vmatprep.mubr.f32.mxu0 0.0
      %817 = vmatmul.mubr.f32.gmra.mxu0 %v667
      %v818 = vpop.f32.mrf.mxu0
      %v819 = vadd.f32 %v530, %v818
      %v820 = vpop.f32.mrf.mxu0
      %821 = vmatprep.mubr.f32.mxu0 0.0
      %822 = vmatmul.mubr.f32.gmra.mxu0 %v669
      %v823 = vpop.f32.mrf.mxu0
      %v824 = vadd.f32 %v535, %v823
      %v825 = vpop.f32.mrf.mxu0
      %826 = vmatprep.mubr.f32.mxu0 0.0
      %827 = vmatmul.mubr.f32.gmra.mxu0 %v671
      %v828 = vpop.f32.mrf.mxu0
      %v829 = vadd.f32 %v540, %v828
      %v830 = vpop.f32.mrf.mxu0
      %831 = vmatprep.mubr.f32.mxu0 0.0
      %832 = vmatmul.mubr.f32.gmra.mxu0 %v673
      %v833 = vpop.f32.mrf.mxu0
      %v834 = vadd.f32 %v545, %v833
      %v835 = vpop.f32.mrf.mxu0
      %836 = vmatprep.mubr.f32.mxu0 0.0
      %837 = vmatmul.mubr.f32.gmra.mxu0 %v675
      %v838 = vpop.f32.mrf.mxu0
      %v839 = vadd.f32 %v550, %v838
      %v840 = vpop.f32.mrf.mxu0
      %841 = vmatprep.mubr.f32.mxu0 0.0
      %842 = vmatmul.mubr.f32.gmra.mxu0 %v677
      %v843 = vpop.f32.mrf.mxu0
      %v844 = vadd.f32 %v555, %v843
      %v845 = vpop.f32.mrf.mxu0
      %846 = vmatprep.mubr.f32.mxu0 0.0
      %847 = vmatmul.mubr.f32.gmra.mxu0 %v679
      %v848 = vpop.f32.mrf.mxu0
      %v849 = vadd.f32 %v560, %v848
      %v850 = vpop.f32.mrf.mxu0
      %851 = vmatprep.mubr.f32.mxu0 0.0
      %852 = vmatmul.mubr.f32.gmra.mxu0 %v681
      %v853 = vpop.f32.mrf.mxu0
      %v854 = vadd.f32 %v565, %v853
      %v855 = vpop.f32.mrf.mxu0
      %856 = vmatprep.mubr.f32.mxu0 0.0
      %857 = vmatmul.mubr.f32.gmra.mxu0 %v683
      %v858 = vpop.f32.mrf.mxu0
      %v859 = vadd.f32 %v570, %v858
      %v860 = vpop.f32.mrf.mxu0
      %861 = vmatprep.mubr.f32.mxu0 0.0
      %862 = vmatmul.mubr.f32.gmra.mxu0 %v685
      %v863 = vpop.f32.mrf.mxu0
      %v864 = vadd.f32 %v575, %v863
      %v865 = vpop.f32.mrf.mxu0
      %866 = vmatprep.mubr.f32.mxu0 0.0
      %867 = vmatmul.mubr.f32.gmra.mxu0 %v687
      %v868 = vpop.f32.mrf.mxu0
      %v869 = vadd.f32 %v580, %v868
      %v870 = vpop.f32.mrf.mxu0
      %871 = vmatprep.mubr.f32.mxu0 0.0
      %872 = vmatmul.mubr.f32.gmra.mxu0 %v689
      %v873 = vpop.f32.mrf.mxu0
      %v874 = vadd.f32 %v585, %v873
      %v875 = vpop.f32.mrf.mxu0
      %876 = vmatprep.mubr.f32.mxu0 0.0
      %877 = vmatmul.mubr.f32.gmra.mxu0 %v691
      %v878 = vpop.f32.mrf.mxu0
      %v879 = vadd.f32 %v590, %v878
      %v880 = vpop.f32.mrf.mxu0
      %881 = vmatprep.mubr.f32.mxu0 0.0
      %882 = vmatmul.mubr.f32.gmra.mxu0 %v693
      %v883 = vpop.f32.mrf.mxu0
      %v884 = vadd.f32 %v595, %v883
      %v885 = vpop.f32.mrf.mxu0
      %886 = vmatprep.mubr.f32.mxu0 0.0
      %887 = vmatmul.mubr.f32.gmra.mxu0 %v695
      %v888 = vpop.f32.mrf.mxu0
      %v889 = vadd.f32 %v600, %v888
      %v890 = vpop.f32.mrf.mxu0
      %891 = vmatprep.mubr.f32.mxu0 0.0
      %892 = vmatmul.mubr.f32.gmra.mxu0 %v697
      %v893 = vpop.f32.mrf.mxu0
      %v894 = vadd.f32 %v605, %v893
      %v895 = vpop.f32.mrf.mxu0
      %896 = vmatprep.mubr.f32.mxu0 0.0
      %897 = vmatmul.mubr.f32.gmra.mxu0 %v699
      %v898 = vpop.f32.mrf.mxu0
      %v899 = vadd.f32 %v610, %v898
      %v900 = vpop.f32.mrf.mxu0
      %901 = vmatprep.mubr.f32.mxu0 0.0
      %902 = vmatmul.mubr.f32.gmra.mxu0 %v701
      %v903 = vpop.f32.mrf.mxu0
      %v904 = vadd.f32 %v615, %v903
      %v905 = vpop.f32.mrf.mxu0
      %906 = vmatprep.mubr.f32.mxu0 0.0
      %907 = vmatmul.mubr.f32.gmra.mxu0 %v703
      %v908 = vpop.f32.mrf.mxu0
      %v909 = vadd.f32 %v620, %v908
      %v910 = vpop.f32.mrf.mxu0
      %911 = vmatprep.mubr.f32.mxu0 0.0
      %912 = vmatmul.mubr.f32.gmra.mxu0 %v705
      %v913 = vpop.f32.mrf.mxu0
      %v914 = vadd.f32 %v625, %v913
      %v915 = vpop.f32.mrf.mxu0
      %916 = vmatprep.mubr.f32.mxu0 0.0
      %917 = vmatmul.mubr.f32.gmra.mxu0 %v707
      %v918 = vpop.f32.mrf.mxu0
      %v919 = vadd.f32 %v630, %v918
      %v920 = vpop.f32.mrf.mxu0
      %921 = vmatprep.mubr.f32.mxu0 0.0
      %922 = vmatmul.mubr.f32.gmra.mxu0 %v709
      %v923 = vpop.f32.mrf.mxu0
      %v924 = vadd.f32 %v635, %v923
      %v925 = vpop.f32.mrf.mxu0
      %926 = vmatprep.mubr.f32.mxu0 0.0
      %927 = vmatmul.mubr.f32.gmra.mxu0 %v711
      %v928 = vpop.f32.mrf.mxu0
      %v929 = vadd.f32 %v640, %v928
      %v930 = vpop.f32.mrf.mxu0
      %931 = vmatprep.mubr.f32.mxu0 0.0
      %932 = vmatmul.mubr.f32.gmra.mxu0 %v713
      %v933 = vpop.f32.mrf.mxu0
      %v934 = vadd.f32 %v645, %v933
      %v935 = vpop.f32.mrf.mxu0
      %936 = vmatprep.mubr.f32.mxu0 0.0
      %937 = vmatmul.mubr.f32.gmra.mxu0 %v715
      %v938 = vpop.f32.mrf.mxu0
      %v939 = vadd.f32 %v650, %v938
      %v940 = vpop.f32.mrf.mxu0
      %941 = vdwg.mxu0
      %vm942 = vcmask 1045504
      %v943 = vrot.slane %v171, 2
      %v944 = vrot.slane %v172, 2
      %v945 = vsel %vm942, %v943, %v944
      %v946 = vrot.slane %v173, 2
      %v947 = vsel %vm942, %v944, %v946
      %v948 = vrot.slane %v174, 2
      %v949 = vrot.slane %v175, 2
      %v950 = vsel %vm942, %v948, %v949
      %v951 = vrot.slane %v176, 2
      %v952 = vsel %vm942, %v949, %v951
      %v953 = vrot.slane %v177, 2
      %v954 = vrot.slane %v178, 2
      %v955 = vsel %vm942, %v953, %v954
      %v956 = vrot.slane %v179, 2
      %v957 = vsel %vm942, %v954, %v956
      %v958 = vrot.slane %v180, 2
      %v959 = vrot.slane %v181, 2
      %v960 = vsel %vm942, %v958, %v959
      %v961 = vrot.slane %v182, 2
      %v962 = vsel %vm942, %v959, %v961
      %v963 = vrot.slane %v183, 2
      %v964 = vrot.slane %v184, 2
      %v965 = vsel %vm942, %v963, %v964
      %v966 = vrot.slane %v185, 2
      %v967 = vsel %vm942, %v964, %v966
      %v968 = vrot.slane %v186, 2
      %v969 = vrot.slane %v187, 2
      %v970 = vsel %vm942, %v968, %v969
      %v971 = vrot.slane %v188, 2
      %v972 = vsel %vm942, %v969, %v971
      %v973 = vrot.slane %v189, 2
      %v974 = vrot.slane %v190, 2
      %v975 = vsel %vm942, %v973, %v974
      %v976 = vrot.slane %v191, 2
      %v977 = vsel %vm942, %v974, %v976
      %v978 = vrot.slane %v192, 2
      %v979 = vrot.slane %v193, 2
      %v980 = vsel %vm942, %v978, %v979
      %v981 = vrot.slane %v194, 2
      %v982 = vsel %vm942, %v979, %v981
      %v983 = vrot.slane %v195, 2
      %v984 = vrot.slane %v196, 2
      %v985 = vsel %vm942, %v983, %v984
      %v986 = vrot.slane %v197, 2
      %v987 = vsel %vm942, %v984, %v986
      %v988 = vrot.slane %v198, 2
      %v989 = vrot.slane %v199, 2
      %v990 = vsel %vm942, %v988, %v989
      %v991 = vrot.slane %v200, 2
      %v992 = vsel %vm942, %v989, %v991
      %v993 = vrot.slane %v201, 2
      %v994 = vrot.slane %v202, 2
      %v995 = vsel %vm942, %v993, %v994
      %v996 = vrot.slane %v203, 2
      %v997 = vsel %vm942, %v994, %v996
      %v998 = vrot.slane %v204, 2
      %v999 = vrot.slane %v205, 2
      %v1000 = vsel %vm942, %v998, %v999
      %v1001 = vrot.slane %v206, 2
      %v1002 = vsel %vm942, %v999, %v1001
      %v1003 = vrot.slane %v207, 2
      %v1004 = vrot.slane %v208, 2
      %v1005 = vsel %vm942, %v1003, %v1004
      %v1006 = vrot.slane %v209, 2
      %v1007 = vsel %vm942, %v1004, %v1006
      %v1008 = vrot.slane %v210, 2
      %v1009 = vrot.slane %v211, 2
      %v1010 = vsel %vm942, %v1008, %v1009
      %v1011 = vrot.slane %v212, 2
      %v1012 = vsel %vm942, %v1009, %v1011
      %v1013 = vrot.slane %v213, 2
      %v1014 = vrot.slane %v214, 2
      %v1015 = vsel %vm942, %v1013, %v1014
      %v1016 = vrot.slane %v215, 2
      %v1017 = vsel %vm942, %v1014, %v1016
      %v1018 = vrot.slane %v216, 2
      %v1019 = vrot.slane %v217, 2
      %v1020 = vsel %vm942, %v1018, %v1019
      %v1021 = vrot.slane %v218, 2
      %v1022 = vsel %vm942, %v1019, %v1021
      %v1023 = vsel %vm363, %v945, 0
      %v1025 = vsel %vm363, %v947, 0
      %v1027 = vsel %vm363, %v950, 0
      %v1029 = vsel %vm363, %v952, 0
      %v1031 = vsel %vm363, %v955, 0
      %v1033 = vsel %vm363, %v957, 0
      %v1035 = vsel %vm363, %v960, 0
      %v1037 = vsel %vm363, %v962, 0
      %v1039 = vsel %vm363, %v965, 0
      %v1041 = vsel %vm363, %v967, 0
      %v1043 = vsel %vm363, %v970, 0
      %v1045 = vsel %vm363, %v972, 0
      %v1047 = vsel %vm363, %v975, 0
      %v1049 = vsel %vm363, %v977, 0
      %v1051 = vsel %vm363, %v980, 0
      %v1053 = vsel %vm363, %v982, 0
      %v1055 = vsel %vm363, %v985, 0
      %v1057 = vsel %vm363, %v987, 0
      %v1059 = vsel %vm363, %v990, 0
      %v1061 = vsel %vm363, %v992, 0
      %v1063 = vsel %vm363, %v995, 0
      %v1065 = vsel %vm363, %v997, 0
      %v1067 = vsel %vm363, %v1000, 0
      %v1069 = vsel %vm363, %v1002, 0
      %v1071 = vsel %vm363, %v1005, 0
      %v1073 = vsel %vm363, %v1007, 0
      %v1075 = vsel %vm363, %v1010, 0
      %v1077 = vsel %vm363, %v1012, 0
      %v1079 = vsel %vm363, %v1015, 0
      %v1081 = vsel %vm363, %v1017, 0
      %v1083 = vsel %vm363, %v1020, 0
      %v1085 = vsel %vm363, %v1022, 0
      %1087 = vmatprep.subr.mxu0 0.0
      %1088 = vmatpush1.msra.mxu0 0.0
      %1089 = vmatprep.subr.mxu0 0.0
      %1090 = vmatpush1.msra.mxu0 0.0
      %1091 = vmatprep.subr.mxu0 0.0
      %1092 = vmatpush1.msra.mxu0 0.0
      %1093 = vmatprep.subr.mxu0 0.0
      %1094 = vmatpush1.msra.mxu0 0.0
      %1095 = vmatprep.subr.mxu0 0.0
      %1096 = vmatpush1.msra.mxu0 0.0
      %1097 = vmatprep.subr.mxu0 0.0
      %1098 = vmatpush1.msra.mxu0 0.0
      %1099 = vmatprep.subr.mxu0 0.0
      %1100 = vmatpush1.msra.mxu0 0.0
      %1101 = vmatprep.subr.mxu0 0.0
      %1102 = vmatpush1.msra.mxu0 0.0
      %1103 = vmatprep.subr.mxu0 0.0
      %1104 = vmatpush1.msra.mxu0 0.0
      %1105 = vmatprep.subr.mxu0 0.0
      %1106 = vmatpush1.msra.mxu0 0.0
      %1107 = vmatprep.subr.mxu0 0.0
      %1108 = vmatpush1.msra.mxu0 0.0
      %1109 = vmatprep.subr.mxu0 0.0
      %1110 = vmatpush1.msra.mxu0 0.0
      %1111 = vmatprep.subr.mxu0 0.0
      %1112 = vmatpush1.msra.mxu0 0.0
      %1113 = vmatprep.subr.mxu0 0.0
      %1114 = vmatpush1.msra.mxu0 0.0
      %1115 = vmatprep.subr.mxu0 0.0
      %1116 = vmatpush1.msra.mxu0 0.0
      %1117 = vmatprep.subr.mxu0 0.0
      %1118 = vmatpush1.msra.mxu0 %v227
      %1119 = vmatprep.subr.mxu0 0.0
      %1120 = vmatpush2.msra.mxu0 0.0
      %1121 = vmatprep.subr.mxu0 0.0
      %1122 = vmatpush2.msra.mxu0 0.0
      %1123 = vmatprep.subr.mxu0 0.0
      %1124 = vmatpush2.msra.mxu0 0.0
      %1125 = vmatprep.subr.mxu0 0.0
      %1126 = vmatpush2.msra.mxu0 0.0
      %1127 = vmatprep.subr.mxu0 0.0
      %1128 = vmatpush2.msra.mxu0 0.0
      %1129 = vmatprep.subr.mxu0 0.0
      %1130 = vmatpush2.msra.mxu0 0.0
      %1131 = vmatprep.subr.mxu0 0.0
      %1132 = vmatpush2.msra.mxu0 0.0
      %1133 = vmatprep.subr.mxu0 0.0
      %1134 = vmatpush2.msra.mxu0 0.0
      %1135 = vmatprep.subr.mxu0 0.0
      %1136 = vmatpush2.msra.mxu0 0.0
      %1137 = vmatprep.subr.mxu0 0.0
      %1138 = vmatpush2.msra.mxu0 0.0
      %1139 = vmatprep.subr.mxu0 0.0
      %1140 = vmatpush2.msra.mxu0 0.0
      %1141 = vmatprep.subr.mxu0 0.0
      %1142 = vmatpush2.msra.mxu0 0.0
      %1143 = vmatprep.subr.mxu0 0.0
      %1144 = vmatpush2.msra.mxu0 0.0
      %1145 = vmatprep.subr.mxu0 0.0
      %1146 = vmatpush2.msra.mxu0 0.0
      %1147 = vmatprep.subr.mxu0 0.0
      %1148 = vmatpush2.msra.mxu0 0.0
      %1149 = vmatprep.subr.mxu0 0.0
      %1150 = vmatpush2.msra.mxu0 0.0
      %1151 = vmatprep.mubr.f32.mxu0 0.0
      %1152 = vmatmul.mubr.f32.gmra.mxu0 %v1023
      %v1153 = vpop.f32.mrf.mxu0
      %v1154 = vadd.f32 0.0, %v1153
      %v1155 = vpop.f32.mrf.mxu0
      %1156 = vmatprep.mubr.f32.mxu0 0.0
      %1157 = vmatmul.mubr.f32.gmra.mxu0 %v1025
      %v1158 = vpop.f32.mrf.mxu0
      %v1159 = vadd.f32 0.0, %v1158
      %v1160 = vpop.f32.mrf.mxu0
      %1161 = vmatprep.mubr.f32.mxu0 0.0
      %1162 = vmatmul.mubr.f32.gmra.mxu0 %v1027
      %v1163 = vpop.f32.mrf.mxu0
      %v1164 = vadd.f32 0.0, %v1163
      %v1165 = vpop.f32.mrf.mxu0
      %1166 = vmatprep.mubr.f32.mxu0 0.0
      %1167 = vmatmul.mubr.f32.gmra.mxu0 %v1029
      %v1168 = vpop.f32.mrf.mxu0
      %v1169 = vadd.f32 0.0, %v1168
      %v1170 = vpop.f32.mrf.mxu0
      %1171 = vmatprep.mubr.f32.mxu0 0.0
      %1172 = vmatmul.mubr.f32.gmra.mxu0 %v1031
      %v1173 = vpop.f32.mrf.mxu0
      %v1174 = vadd.f32 0.0, %v1173
      %v1175 = vpop.f32.mrf.mxu0
      %1176 = vmatprep.mubr.f32.mxu0 0.0
      %1177 = vmatmul.mubr.f32.gmra.mxu0 %v1033
      %v1178 = vpop.f32.mrf.mxu0
      %v1179 = vadd.f32 0.0, %v1178
      %v1180 = vpop.f32.mrf.mxu0
      %1181 = vmatprep.mubr.f32.mxu0 0.0
      %1182 = vmatmul.mubr.f32.gmra.mxu0 %v1035
      %v1183 = vpop.f32.mrf.mxu0
      %v1184 = vadd.f32 0.0, %v1183
      %v1185 = vpop.f32.mrf.mxu0
      %1186 = vmatprep.mubr.f32.mxu0 0.0
      %1187 = vmatmul.mubr.f32.gmra.mxu0 %v1037
      %v1188 = vpop.f32.mrf.mxu0
      %v1189 = vadd.f32 0.0, %v1188
      %v1190 = vpop.f32.mrf.mxu0
      %1191 = vmatprep.mubr.f32.mxu0 0.0
      %1192 = vmatmul.mubr.f32.gmra.mxu0 %v1039
      %v1193 = vpop.f32.mrf.mxu0
      %v1194 = vadd.f32 0.0, %v1193
      %v1195 = vpop.f32.mrf.mxu0
      %1196 = vmatprep.mubr.f32.mxu0 0.0
      %1197 = vmatmul.mubr.f32.gmra.mxu0 %v1041
      %v1198 = vpop.f32.mrf.mxu0
      %v1199 = vadd.f32 0.0, %v1198
      %v1200 = vpop.f32.mrf.mxu0
      %1201 = vmatprep.mubr.f32.mxu0 0.0
      %1202 = vmatmul.mubr.f32.gmra.mxu0 %v1043
      %v1203 = vpop.f32.mrf.mxu0
      %v1204 = vadd.f32 0.0, %v1203
      %v1205 = vpop.f32.mrf.mxu0
      %1206 = vmatprep.mubr.f32.mxu0 0.0
      %1207 = vmatmul.mubr.f32.gmra.mxu0 %v1045
      %v1208 = vpop.f32.mrf.mxu0
      %v1209 = vadd.f32 0.0, %v1208
      %v1210 = vpop.f32.mrf.mxu0
      %1211 = vmatprep.mubr.f32.mxu0 0.0
      %1212 = vmatmul.mubr.f32.gmra.mxu0 %v1047
      %v1213 = vpop.f32.mrf.mxu0
      %v1214 = vadd.f32 0.0, %v1213
      %v1215 = vpop.f32.mrf.mxu0
      %1216 = vmatprep.mubr.f32.mxu0 0.0
      %1217 = vmatmul.mubr.f32.gmra.mxu0 %v1049
      %v1218 = vpop.f32.mrf.mxu0
      %v1219 = vadd.f32 0.0, %v1218
      %v1220 = vpop.f32.mrf.mxu0
      %1221 = vmatprep.mubr.f32.mxu0 0.0
      %1222 = vmatmul.mubr.f32.gmra.mxu0 %v1051
      %v1223 = vpop.f32.mrf.mxu0
      %v1224 = vadd.f32 0.0, %v1223
      %v1225 = vpop.f32.mrf.mxu0
      %1226 = vmatprep.mubr.f32.mxu0 0.0
      %1227 = vmatmul.mubr.f32.gmra.mxu0 %v1053
      %v1228 = vpop.f32.mrf.mxu0
      %v1229 = vadd.f32 0.0, %v1228
      %v1230 = vpop.f32.mrf.mxu0
      %1231 = vmatprep.mubr.f32.mxu0 0.0
      %1232 = vmatmul.mubr.f32.gmra.mxu0 %v1055
      %v1233 = vpop.f32.mrf.mxu0
      %v1234 = vadd.f32 0.0, %v1233
      %v1235 = vpop.f32.mrf.mxu0
      %1236 = vmatprep.mubr.f32.mxu0 0.0
      %1237 = vmatmul.mubr.f32.gmra.mxu0 %v1057
      %v1238 = vpop.f32.mrf.mxu0
      %v1239 = vadd.f32 0.0, %v1238
      %v1240 = vpop.f32.mrf.mxu0
      %1241 = vmatprep.mubr.f32.mxu0 0.0
      %1242 = vmatmul.mubr.f32.gmra.mxu0 %v1059
      %v1243 = vpop.f32.mrf.mxu0
      %v1244 = vadd.f32 0.0, %v1243
      %v1245 = vpop.f32.mrf.mxu0
      %1246 = vmatprep.mubr.f32.mxu0 0.0
      %1247 = vmatmul.mubr.f32.gmra.mxu0 %v1061
      %v1248 = vpop.f32.mrf.mxu0
      %v1249 = vadd.f32 0.0, %v1248
      %v1250 = vpop.f32.mrf.mxu0
      %1251 = vmatprep.mubr.f32.mxu0 0.0
      %1252 = vmatmul.mubr.f32.gmra.mxu0 %v1063
      %v1253 = vpop.f32.mrf.mxu0
      %v1254 = vadd.f32 0.0, %v1253
      %v1255 = vpop.f32.mrf.mxu0
      %1256 = vmatprep.mubr.f32.mxu0 0.0
      %1257 = vmatmul.mubr.f32.gmra.mxu0 %v1065
      %v1258 = vpop.f32.mrf.mxu0
      %v1259 = vadd.f32 0.0, %v1258
      %v1260 = vpop.f32.mrf.mxu0
      %1261 = vmatprep.mubr.f32.mxu0 0.0
      %1262 = vmatmul.mubr.f32.gmra.mxu0 %v1067
      %v1263 = vpop.f32.mrf.mxu0
      %v1264 = vadd.f32 0.0, %v1263
      %v1265 = vpop.f32.mrf.mxu0
      %1266 = vmatprep.mubr.f32.mxu0 0.0
      %1267 = vmatmul.mubr.f32.gmra.mxu0 %v1069
      %v1268 = vpop.f32.mrf.mxu0
      %v1269 = vadd.f32 0.0, %v1268
      %v1270 = vpop.f32.mrf.mxu0
      %1271 = vmatprep.mubr.f32.mxu0 0.0
      %1272 = vmatmul.mubr.f32.gmra.mxu0 %v1071
      %v1273 = vpop.f32.mrf.mxu0
      %v1274 = vadd.f32 0.0, %v1273
      %v1275 = vpop.f32.mrf.mxu0
      %1276 = vmatprep.mubr.f32.mxu0 0.0
      %1277 = vmatmul.mubr.f32.gmra.mxu0 %v1073
      %v1278 = vpop.f32.mrf.mxu0
      %v1279 = vadd.f32 0.0, %v1278
      %v1280 = vpop.f32.mrf.mxu0
      %1281 = vmatprep.mubr.f32.mxu0 0.0
      %1282 = vmatmul.mubr.f32.gmra.mxu0 %v1075
      %v1283 = vpop.f32.mrf.mxu0
      %v1284 = vadd.f32 0.0, %v1283
      %v1285 = vpop.f32.mrf.mxu0
      %1286 = vmatprep.mubr.f32.mxu0 0.0
      %1287 = vmatmul.mubr.f32.gmra.mxu0 %v1077
      %v1288 = vpop.f32.mrf.mxu0
      %v1289 = vadd.f32 0.0, %v1288
      %v1290 = vpop.f32.mrf.mxu0
      %1291 = vmatprep.mubr.f32.mxu0 0.0
      %1292 = vmatmul.mubr.f32.gmra.mxu0 %v1079
      %v1293 = vpop.f32.mrf.mxu0
      %v1294 = vadd.f32 0.0, %v1293
      %v1295 = vpop.f32.mrf.mxu0
      %1296 = vmatprep.mubr.f32.mxu0 0.0
      %1297 = vmatmul.mubr.f32.gmra.mxu0 %v1081
      %v1298 = vpop.f32.mrf.mxu0
      %v1299 = vadd.f32 0.0, %v1298
      %v1300 = vpop.f32.mrf.mxu0
      %1301 = vmatprep.mubr.f32.mxu0 0.0
      %1302 = vmatmul.mubr.f32.gmra.mxu0 %v1083
      %v1303 = vpop.f32.mrf.mxu0
      %v1304 = vadd.f32 0.0, %v1303
      %v1305 = vpop.f32.mrf.mxu0
      %1306 = vmatprep.mubr.f32.mxu0 0.0
      %1307 = vmatmul.mubr.f32.gmra.mxu0 %v1085
      %v1308 = vpop.f32.mrf.mxu0
      %v1309 = vadd.f32 0.0, %v1308
      %v1310 = vpop.f32.mrf.mxu0
      %1311 = vdwg.mxu0
      %v1312 = vadd.f32 %v784, %v1154
      %v1313 = vadd.f32 %v789, %v1159
      %v1314 = vadd.f32 %v794, %v1164
      %v1315 = vadd.f32 %v799, %v1169
      %v1316 = vadd.f32 %v804, %v1174
      %v1317 = vadd.f32 %v809, %v1179
      %v1318 = vadd.f32 %v814, %v1184
      %v1319 = vadd.f32 %v819, %v1189
      %v1320 = vadd.f32 %v824, %v1194
      %v1321 = vadd.f32 %v829, %v1199
      %v1322 = vadd.f32 %v834, %v1204
      %v1323 = vadd.f32 %v839, %v1209
      %v1324 = vadd.f32 %v844, %v1214
      %v1325 = vadd.f32 %v849, %v1219
      %v1326 = vadd.f32 %v854, %v1224
      %v1327 = vadd.f32 %v859, %v1229
      %v1328 = vadd.f32 %v864, %v1234
      %v1329 = vadd.f32 %v869, %v1239
      %v1330 = vadd.f32 %v874, %v1244
      %v1331 = vadd.f32 %v879, %v1249
      %v1332 = vadd.f32 %v884, %v1254
      %v1333 = vadd.f32 %v889, %v1259
      %v1334 = vadd.f32 %v894, %v1264
      %v1335 = vadd.f32 %v899, %v1269
      %v1336 = vadd.f32 %v904, %v1274
      %v1337 = vadd.f32 %v909, %v1279
      %v1338 = vadd.f32 %v914, %v1284
      %v1339 = vadd.f32 %v919, %v1289
      %v1340 = vadd.f32 %v924, %v1294
      %v1341 = vadd.f32 %v929, %v1299
      %v1342 = vadd.f32 %v934, %v1304
      %v1343 = vadd.f32 %v939, %v1309
      %v1345 = vsel %vm363, %v219, 0
      %v1348 = vsel %vm363, %v220, 0
      %1350 = vmatprep.subr.mxu0 0.0
      %1351 = vmatpush1.msra.mxu0 0.0
      %1352 = vmatprep.subr.mxu0 0.0
      %1353 = vmatpush1.msra.mxu0 0.0
      %1354 = vmatprep.subr.mxu0 0.0
      %1355 = vmatpush1.msra.mxu0 0.0
      %1356 = vmatprep.subr.mxu0 0.0
      %1357 = vmatpush1.msra.mxu0 0.0
      %1358 = vmatprep.subr.mxu0 0.0
      %1359 = vmatpush1.msra.mxu0 0.0
      %1360 = vmatprep.subr.mxu0 0.0
      %1361 = vmatpush1.msra.mxu0 0.0
      %1362 = vmatprep.subr.mxu0 0.0
      %1363 = vmatpush1.msra.mxu0 0.0
      %1364 = vmatprep.subr.mxu0 0.0
      %1365 = vmatpush1.msra.mxu0 0.0
      %1366 = vmatprep.subr.mxu0 0.0
      %1367 = vmatpush1.msra.mxu0 0.0
      %1368 = vmatprep.subr.mxu0 0.0
      %1369 = vmatpush1.msra.mxu0 0.0
      %1370 = vmatprep.subr.mxu0 0.0
      %1371 = vmatpush1.msra.mxu0 0.0
      %1372 = vmatprep.subr.mxu0 0.0
      %1373 = vmatpush1.msra.mxu0 0.0
      %1374 = vmatprep.subr.mxu0 0.0
      %1375 = vmatpush1.msra.mxu0 0.0
      %1376 = vmatprep.subr.mxu0 0.0
      %1377 = vmatpush1.msra.mxu0 0.0
      %1378 = vmatprep.subr.mxu0 0.0
      %1379 = vmatpush1.msra.mxu0 0.0
      %1380 = vmatprep.subr.mxu0 0.0
      %1381 = vmatpush1.msra.mxu0 %v228
      %1382 = vmatprep.subr.mxu0 0.0
      %1383 = vmatpush2.msra.mxu0 0.0
      %1384 = vmatprep.subr.mxu0 0.0
      %1385 = vmatpush2.msra.mxu0 0.0
      %1386 = vmatprep.subr.mxu0 0.0
      %1387 = vmatpush2.msra.mxu0 0.0
      %1388 = vmatprep.subr.mxu0 0.0
      %1389 = vmatpush2.msra.mxu0 0.0
      %1390 = vmatprep.subr.mxu0 0.0
      %1391 = vmatpush2.msra.mxu0 0.0
      %1392 = vmatprep.subr.mxu0 0.0
      %1393 = vmatpush2.msra.mxu0 0.0
      %1394 = vmatprep.subr.mxu0 0.0
      %1395 = vmatpush2.msra.mxu0 0.0
      %1396 = vmatprep.subr.mxu0 0.0
      %1397 = vmatpush2.msra.mxu0 0.0
      %1398 = vmatprep.subr.mxu0 0.0
      %1399 = vmatpush2.msra.mxu0 0.0
      %1400 = vmatprep.subr.mxu0 0.0
      %1401 = vmatpush2.msra.mxu0 0.0
      %1402 = vmatprep.subr.mxu0 0.0
      %1403 = vmatpush2.msra.mxu0 0.0
      %1404 = vmatprep.subr.mxu0 0.0
      %1405 = vmatpush2.msra.mxu0 0.0
      %1406 = vmatprep.subr.mxu0 0.0
      %1407 = vmatpush2.msra.mxu0 0.0
      %1408 = vmatprep.subr.mxu0 0.0
      %1409 = vmatpush2.msra.mxu0 0.0
      %1410 = vmatprep.subr.mxu0 0.0
      %1411 = vmatpush2.msra.mxu0 0.0
      %1412 = vmatprep.subr.mxu0 0.0
      %1413 = vmatpush2.msra.mxu0 0.0
      %1414 = vmatprep.mubr.f32.mxu0 0.0
      %1415 = vmatmul.mubr.f32.gmra.mxu0 %v657
      %v1416 = vpop.f32.mrf.mxu0
      %v1417 = vadd.f32 0.0, %v1416
      %v1418 = vpop.f32.mrf.mxu0
      %1419 = vmatprep.mubr.f32.mxu0 0.0
      %1420 = vmatmul.mubr.f32.gmra.mxu0 %v659
      %v1421 = vpop.f32.mrf.mxu0
      %v1422 = vadd.f32 0.0, %v1421
      %v1423 = vpop.f32.mrf.mxu0
      %1424 = vmatprep.mubr.f32.mxu0 0.0
      %1425 = vmatmul.mubr.f32.gmra.mxu0 %v661
      %v1426 = vpop.f32.mrf.mxu0
      %v1427 = vadd.f32 0.0, %v1426
      %v1428 = vpop.f32.mrf.mxu0
      %1429 = vmatprep.mubr.f32.mxu0 0.0
      %1430 = vmatmul.mubr.f32.gmra.mxu0 %v663
      %v1431 = vpop.f32.mrf.mxu0
      %v1432 = vadd.f32 0.0, %v1431
      %v1433 = vpop.f32.mrf.mxu0
      %1434 = vmatprep.mubr.f32.mxu0 0.0
      %1435 = vmatmul.mubr.f32.gmra.mxu0 %v665
      %v1436 = vpop.f32.mrf.mxu0
      %v1437 = vadd.f32 0.0, %v1436
      %v1438 = vpop.f32.mrf.mxu0
      %1439 = vmatprep.mubr.f32.mxu0 0.0
      %1440 = vmatmul.mubr.f32.gmra.mxu0 %v667
      %v1441 = vpop.f32.mrf.mxu0
      %v1442 = vadd.f32 0.0, %v1441
      %v1443 = vpop.f32.mrf.mxu0
      %1444 = vmatprep.mubr.f32.mxu0 0.0
      %1445 = vmatmul.mubr.f32.gmra.mxu0 %v669
      %v1446 = vpop.f32.mrf.mxu0
      %v1447 = vadd.f32 0.0, %v1446
      %v1448 = vpop.f32.mrf.mxu0
      %1449 = vmatprep.mubr.f32.mxu0 0.0
      %1450 = vmatmul.mubr.f32.gmra.mxu0 %v671
      %v1451 = vpop.f32.mrf.mxu0
      %v1452 = vadd.f32 0.0, %v1451
      %v1453 = vpop.f32.mrf.mxu0
      %1454 = vmatprep.mubr.f32.mxu0 0.0
      %1455 = vmatmul.mubr.f32.gmra.mxu0 %v673
      %v1456 = vpop.f32.mrf.mxu0
      %v1457 = vadd.f32 0.0, %v1456
      %v1458 = vpop.f32.mrf.mxu0
      %1459 = vmatprep.mubr.f32.mxu0 0.0
      %1460 = vmatmul.mubr.f32.gmra.mxu0 %v675
      %v1461 = vpop.f32.mrf.mxu0
      %v1462 = vadd.f32 0.0, %v1461
      %v1463 = vpop.f32.mrf.mxu0
      %1464 = vmatprep.mubr.f32.mxu0 0.0
      %1465 = vmatmul.mubr.f32.gmra.mxu0 %v677
      %v1466 = vpop.f32.mrf.mxu0
      %v1467 = vadd.f32 0.0, %v1466
      %v1468 = vpop.f32.mrf.mxu0
      %1469 = vmatprep.mubr.f32.mxu0 0.0
      %1470 = vmatmul.mubr.f32.gmra.mxu0 %v679
      %v1471 = vpop.f32.mrf.mxu0
      %v1472 = vadd.f32 0.0, %v1471
      %v1473 = vpop.f32.mrf.mxu0
      %1474 = vmatprep.mubr.f32.mxu0 0.0
      %1475 = vmatmul.mubr.f32.gmra.mxu0 %v681
      %v1476 = vpop.f32.mrf.mxu0
      %v1477 = vadd.f32 0.0, %v1476
      %v1478 = vpop.f32.mrf.mxu0
      %1479 = vmatprep.mubr.f32.mxu0 0.0
      %1480 = vmatmul.mubr.f32.gmra.mxu0 %v683
      %v1481 = vpop.f32.mrf.mxu0
      %v1482 = vadd.f32 0.0, %v1481
      %v1483 = vpop.f32.mrf.mxu0
      %1484 = vmatprep.mubr.f32.mxu0 0.0
      %1485 = vmatmul.mubr.f32.gmra.mxu0 %v685
      %v1486 = vpop.f32.mrf.mxu0
      %v1487 = vadd.f32 0.0, %v1486
      %v1488 = vpop.f32.mrf.mxu0
      %1489 = vmatprep.mubr.f32.mxu0 0.0
      %1490 = vmatmul.mubr.f32.gmra.mxu0 %v687
      %v1491 = vpop.f32.mrf.mxu0
      %v1492 = vadd.f32 0.0, %v1491
      %v1493 = vpop.f32.mrf.mxu0
      %1494 = vmatprep.mubr.f32.mxu0 0.0
      %1495 = vmatmul.mubr.f32.gmra.mxu0 %v689
      %v1496 = vpop.f32.mrf.mxu0
      %v1497 = vadd.f32 0.0, %v1496
      %v1498 = vpop.f32.mrf.mxu0
      %1499 = vmatprep.mubr.f32.mxu0 0.0
      %1500 = vmatmul.mubr.f32.gmra.mxu0 %v691
      %v1501 = vpop.f32.mrf.mxu0
      %v1502 = vadd.f32 0.0, %v1501
      %v1503 = vpop.f32.mrf.mxu0
      %1504 = vmatprep.mubr.f32.mxu0 0.0
      %1505 = vmatmul.mubr.f32.gmra.mxu0 %v693
      %v1506 = vpop.f32.mrf.mxu0
      %v1507 = vadd.f32 0.0, %v1506
      %v1508 = vpop.f32.mrf.mxu0
      %1509 = vmatprep.mubr.f32.mxu0 0.0
      %1510 = vmatmul.mubr.f32.gmra.mxu0 %v695
      %v1511 = vpop.f32.mrf.mxu0
      %v1512 = vadd.f32 0.0, %v1511
      %v1513 = vpop.f32.mrf.mxu0
      %1514 = vmatprep.mubr.f32.mxu0 0.0
      %1515 = vmatmul.mubr.f32.gmra.mxu0 %v697
      %v1516 = vpop.f32.mrf.mxu0
      %v1517 = vadd.f32 0.0, %v1516
      %v1518 = vpop.f32.mrf.mxu0
      %1519 = vmatprep.mubr.f32.mxu0 0.0
      %1520 = vmatmul.mubr.f32.gmra.mxu0 %v699
      %v1521 = vpop.f32.mrf.mxu0
      %v1522 = vadd.f32 0.0, %v1521
      %v1523 = vpop.f32.mrf.mxu0
      %1524 = vmatprep.mubr.f32.mxu0 0.0
      %1525 = vmatmul.mubr.f32.gmra.mxu0 %v701
      %v1526 = vpop.f32.mrf.mxu0
      %v1527 = vadd.f32 0.0, %v1526
      %v1528 = vpop.f32.mrf.mxu0
      %1529 = vmatprep.mubr.f32.mxu0 0.0
      %1530 = vmatmul.mubr.f32.gmra.mxu0 %v703
      %v1531 = vpop.f32.mrf.mxu0
      %v1532 = vadd.f32 0.0, %v1531
      %v1533 = vpop.f32.mrf.mxu0
      %1534 = vmatprep.mubr.f32.mxu0 0.0
      %1535 = vmatmul.mubr.f32.gmra.mxu0 %v705
      %v1536 = vpop.f32.mrf.mxu0
      %v1537 = vadd.f32 0.0, %v1536
      %v1538 = vpop.f32.mrf.mxu0
      %1539 = vmatprep.mubr.f32.mxu0 0.0
      %1540 = vmatmul.mubr.f32.gmra.mxu0 %v707
      %v1541 = vpop.f32.mrf.mxu0
      %v1542 = vadd.f32 0.0, %v1541
      %v1543 = vpop.f32.mrf.mxu0
      %1544 = vmatprep.mubr.f32.mxu0 0.0
      %1545 = vmatmul.mubr.f32.gmra.mxu0 %v709
      %v1546 = vpop.f32.mrf.mxu0
      %v1547 = vadd.f32 0.0, %v1546
      %v1548 = vpop.f32.mrf.mxu0
      %1549 = vmatprep.mubr.f32.mxu0 0.0
      %1550 = vmatmul.mubr.f32.gmra.mxu0 %v711
      %v1551 = vpop.f32.mrf.mxu0
      %v1552 = vadd.f32 0.0, %v1551
      %v1553 = vpop.f32.mrf.mxu0
      %1554 = vmatprep.mubr.f32.mxu0 0.0
      %1555 = vmatmul.mubr.f32.gmra.mxu0 %v713
      %v1556 = vpop.f32.mrf.mxu0
      %v1557 = vadd.f32 0.0, %v1556
      %v1558 = vpop.f32.mrf.mxu0
      %1559 = vmatprep.mubr.f32.mxu0 0.0
      %1560 = vmatmul.mubr.f32.gmra.mxu0 %v715
      %v1561 = vpop.f32.mrf.mxu0
      %v1562 = vadd.f32 0.0, %v1561
      %v1563 = vpop.f32.mrf.mxu0
      %1564 = vmatprep.mubr.f32.mxu0 0.0
      %1565 = vmatmul.mubr.f32.gmra.mxu0 %v1345
      %v1566 = vpop.f32.mrf.mxu0
      %v1567 = vadd.f32 0.0, %v1566
      %v1568 = vpop.f32.mrf.mxu0
      %1569 = vmatprep.mubr.f32.mxu0 0.0
      %1570 = vmatmul.mubr.f32.gmra.mxu0 %v1348
      %v1571 = vpop.f32.mrf.mxu0
      %v1572 = vadd.f32 0.0, %v1571
      %v1573 = vpop.f32.mrf.mxu0
      %1574 = vdwg.mxu0
      %v1575 = vadd.f32 %v1312, %v1417
      %v1576 = vadd.f32 %v1313, %v1422
      %v1577 = vadd.f32 %v1314, %v1427
      %v1578 = vadd.f32 %v1315, %v1432
      %v1579 = vadd.f32 %v1316, %v1437
      %v1580 = vadd.f32 %v1317, %v1442
      %v1581 = vadd.f32 %v1318, %v1447
      %v1582 = vadd.f32 %v1319, %v1452
      %v1583 = vadd.f32 %v1320, %v1457
      %v1584 = vadd.f32 %v1321, %v1462
      %v1585 = vadd.f32 %v1322, %v1467
      %v1586 = vadd.f32 %v1323, %v1472
      %v1587 = vadd.f32 %v1324, %v1477
      %v1588 = vadd.f32 %v1325, %v1482
      %v1589 = vadd.f32 %v1326, %v1487
      %v1590 = vadd.f32 %v1327, %v1492
      %v1591 = vadd.f32 %v1328, %v1497
      %v1592 = vadd.f32 %v1329, %v1502
      %v1593 = vadd.f32 %v1330, %v1507
      %v1594 = vadd.f32 %v1331, %v1512
      %v1595 = vadd.f32 %v1332, %v1517
      %v1596 = vadd.f32 %v1333, %v1522
      %v1597 = vadd.f32 %v1334, %v1527
      %v1598 = vadd.f32 %v1335, %v1532
      %v1599 = vadd.f32 %v1336, %v1537
      %v1600 = vadd.f32 %v1337, %v1542
      %v1601 = vadd.f32 %v1338, %v1547
      %v1602 = vadd.f32 %v1339, %v1552
      %v1603 = vadd.f32 %v1340, %v1557
      %v1604 = vadd.f32 %v1341, %v1562
      %v1605 = vadd.f32 %v1342, %v1567
      %v1606 = vadd.f32 %v1343, %v1572
      %v1608 = vrot.slane %v219, 1
      %v1609 = vrot.slane %v220, 1
      %v1610 = vsel %vm282, %v1608, %v1609
      %v1611 = vrot.slane %v221, 1
      %v1612 = vsel %vm282, %v1609, %v1611
      %v1613 = vsel %vm363, %v1610, 0
      %v1615 = vsel %vm363, %v1612, 0
      %1617 = vmatprep.subr.mxu0 0.0
      %1618 = vmatpush1.msra.mxu0 0.0
      %1619 = vmatprep.subr.mxu0 0.0
      %1620 = vmatpush1.msra.mxu0 0.0
      %1621 = vmatprep.subr.mxu0 0.0
      %1622 = vmatpush1.msra.mxu0 0.0
      %1623 = vmatprep.subr.mxu0 0.0
      %1624 = vmatpush1.msra.mxu0 0.0
      %1625 = vmatprep.subr.mxu0 0.0
      %1626 = vmatpush1.msra.mxu0 0.0
      %1627 = vmatprep.subr.mxu0 0.0
      %1628 = vmatpush1.msra.mxu0 0.0
      %1629 = vmatprep.subr.mxu0 0.0
      %1630 = vmatpush1.msra.mxu0 0.0
      %1631 = vmatprep.subr.mxu0 0.0
      %1632 = vmatpush1.msra.mxu0 0.0
      %1633 = vmatprep.subr.mxu0 0.0
      %1634 = vmatpush1.msra.mxu0 0.0
      %1635 = vmatprep.subr.mxu0 0.0
      %1636 = vmatpush1.msra.mxu0 0.0
      %1637 = vmatprep.subr.mxu0 0.0
      %1638 = vmatpush1.msra.mxu0 0.0
      %1639 = vmatprep.subr.mxu0 0.0
      %1640 = vmatpush1.msra.mxu0 0.0
      %1641 = vmatprep.subr.mxu0 0.0
      %1642 = vmatpush1.msra.mxu0 0.0
      %1643 = vmatprep.subr.mxu0 0.0
      %1644 = vmatpush1.msra.mxu0 0.0
      %1645 = vmatprep.subr.mxu0 0.0
      %1646 = vmatpush1.msra.mxu0 0.0
      %1647 = vmatprep.subr.mxu0 0.0
      %1648 = vmatpush1.msra.mxu0 %v229
      %1649 = vmatprep.subr.mxu0 0.0
      %1650 = vmatpush2.msra.mxu0 0.0
      %1651 = vmatprep.subr.mxu0 0.0
      %1652 = vmatpush2.msra.mxu0 0.0
      %1653 = vmatprep.subr.mxu0 0.0
      %1654 = vmatpush2.msra.mxu0 0.0
      %1655 = vmatprep.subr.mxu0 0.0
      %1656 = vmatpush2.msra.mxu0 0.0
      %1657 = vmatprep.subr.mxu0 0.0
      %1658 = vmatpush2.msra.mxu0 0.0
      %1659 = vmatprep.subr.mxu0 0.0
      %1660 = vmatpush2.msra.mxu0 0.0
      %1661 = vmatprep.subr.mxu0 0.0
      %1662 = vmatpush2.msra.mxu0 0.0
      %1663 = vmatprep.subr.mxu0 0.0
      %1664 = vmatpush2.msra.mxu0 0.0
      %1665 = vmatprep.subr.mxu0 0.0
      %1666 = vmatpush2.msra.mxu0 0.0
      %1667 = vmatprep.subr.mxu0 0.0
      %1668 = vmatpush2.msra.mxu0 0.0
      %1669 = vmatprep.subr.mxu0 0.0
      %1670 = vmatpush2.msra.mxu0 0.0
      %1671 = vmatprep.subr.mxu0 0.0
      %1672 = vmatpush2.msra.mxu0 0.0
      %1673 = vmatprep.subr.mxu0 0.0
      %1674 = vmatpush2.msra.mxu0 0.0
      %1675 = vmatprep.subr.mxu0 0.0
      %1676 = vmatpush2.msra.mxu0 0.0
      %1677 = vmatprep.subr.mxu0 0.0
      %1678 = vmatpush2.msra.mxu0 0.0
      %1679 = vmatprep.subr.mxu0 0.0
      %1680 = vmatpush2.msra.mxu0 0.0
      %1681 = vmatprep.mubr.f32.mxu0 0.0
      %1682 = vmatmul.mubr.f32.gmra.mxu0 %v368
      %v1683 = vpop.f32.mrf.mxu0
      %v1684 = vadd.f32 0.0, %v1683
      %v1685 = vpop.f32.mrf.mxu0
      %1686 = vmatprep.mubr.f32.mxu0 0.0
      %1687 = vmatmul.mubr.f32.gmra.mxu0 %v370
      %v1688 = vpop.f32.mrf.mxu0
      %v1689 = vadd.f32 0.0, %v1688
      %v1690 = vpop.f32.mrf.mxu0
      %1691 = vmatprep.mubr.f32.mxu0 0.0
      %1692 = vmatmul.mubr.f32.gmra.mxu0 %v372
      %v1693 = vpop.f32.mrf.mxu0
      %v1694 = vadd.f32 0.0, %v1693
      %v1695 = vpop.f32.mrf.mxu0
      %1696 = vmatprep.mubr.f32.mxu0 0.0
      %1697 = vmatmul.mubr.f32.gmra.mxu0 %v374
      %v1698 = vpop.f32.mrf.mxu0
      %v1699 = vadd.f32 0.0, %v1698
      %v1700 = vpop.f32.mrf.mxu0
      %1701 = vmatprep.mubr.f32.mxu0 0.0
      %1702 = vmatmul.mubr.f32.gmra.mxu0 %v376
      %v1703 = vpop.f32.mrf.mxu0
      %v1704 = vadd.f32 0.0, %v1703
      %v1705 = vpop.f32.mrf.mxu0
      %1706 = vmatprep.mubr.f32.mxu0 0.0
      %1707 = vmatmul.mubr.f32.gmra.mxu0 %v378
      %v1708 = vpop.f32.mrf.mxu0
      %v1709 = vadd.f32 0.0, %v1708
      %v1710 = vpop.f32.mrf.mxu0
      %1711 = vmatprep.mubr.f32.mxu0 0.0
      %1712 = vmatmul.mubr.f32.gmra.mxu0 %v380
      %v1713 = vpop.f32.mrf.mxu0
      %v1714 = vadd.f32 0.0, %v1713
      %v1715 = vpop.f32.mrf.mxu0
      %1716 = vmatprep.mubr.f32.mxu0 0.0
      %1717 = vmatmul.mubr.f32.gmra.mxu0 %v382
      %v1718 = vpop.f32.mrf.mxu0
      %v1719 = vadd.f32 0.0, %v1718
      %v1720 = vpop.f32.mrf.mxu0
      %1721 = vmatprep.mubr.f32.mxu0 0.0
      %1722 = vmatmul.mubr.f32.gmra.mxu0 %v384
      %v1723 = vpop.f32.mrf.mxu0
      %v1724 = vadd.f32 0.0, %v1723
      %v1725 = vpop.f32.mrf.mxu0
      %1726 = vmatprep.mubr.f32.mxu0 0.0
      %1727 = vmatmul.mubr.f32.gmra.mxu0 %v386
      %v1728 = vpop.f32.mrf.mxu0
      %v1729 = vadd.f32 0.0, %v1728
      %v1730 = vpop.f32.mrf.mxu0
      %1731 = vmatprep.mubr.f32.mxu0 0.0
      %1732 = vmatmul.mubr.f32.gmra.mxu0 %v388
      %v1733 = vpop.f32.mrf.mxu0
      %v1734 = vadd.f32 0.0, %v1733
      %v1735 = vpop.f32.mrf.mxu0
      %1736 = vmatprep.mubr.f32.mxu0 0.0
      %1737 = vmatmul.mubr.f32.gmra.mxu0 %v390
      %v1738 = vpop.f32.mrf.mxu0
      %v1739 = vadd.f32 0.0, %v1738
      %v1740 = vpop.f32.mrf.mxu0
      %1741 = vmatprep.mubr.f32.mxu0 0.0
      %1742 = vmatmul.mubr.f32.gmra.mxu0 %v392
      %v1743 = vpop.f32.mrf.mxu0
      %v1744 = vadd.f32 0.0, %v1743
      %v1745 = vpop.f32.mrf.mxu0
      %1746 = vmatprep.mubr.f32.mxu0 0.0
      %1747 = vmatmul.mubr.f32.gmra.mxu0 %v394
      %v1748 = vpop.f32.mrf.mxu0
      %v1749 = vadd.f32 0.0, %v1748
      %v1750 = vpop.f32.mrf.mxu0
      %1751 = vmatprep.mubr.f32.mxu0 0.0
      %1752 = vmatmul.mubr.f32.gmra.mxu0 %v396
      %v1753 = vpop.f32.mrf.mxu0
      %v1754 = vadd.f32 0.0, %v1753
      %v1755 = vpop.f32.mrf.mxu0
      %1756 = vmatprep.mubr.f32.mxu0 0.0
      %1757 = vmatmul.mubr.f32.gmra.mxu0 %v398
      %v1758 = vpop.f32.mrf.mxu0
      %v1759 = vadd.f32 0.0, %v1758
      %v1760 = vpop.f32.mrf.mxu0
      %1761 = vmatprep.mubr.f32.mxu0 0.0
      %1762 = vmatmul.mubr.f32.gmra.mxu0 %v400
      %v1763 = vpop.f32.mrf.mxu0
      %v1764 = vadd.f32 0.0, %v1763
      %v1765 = vpop.f32.mrf.mxu0
      %1766 = vmatprep.mubr.f32.mxu0 0.0
      %1767 = vmatmul.mubr.f32.gmra.mxu0 %v402
      %v1768 = vpop.f32.mrf.mxu0
      %v1769 = vadd.f32 0.0, %v1768
      %v1770 = vpop.f32.mrf.mxu0
      %1771 = vmatprep.mubr.f32.mxu0 0.0
      %1772 = vmatmul.mubr.f32.gmra.mxu0 %v404
      %v1773 = vpop.f32.mrf.mxu0
      %v1774 = vadd.f32 0.0, %v1773
      %v1775 = vpop.f32.mrf.mxu0
      %1776 = vmatprep.mubr.f32.mxu0 0.0
      %1777 = vmatmul.mubr.f32.gmra.mxu0 %v406
      %v1778 = vpop.f32.mrf.mxu0
      %v1779 = vadd.f32 0.0, %v1778
      %v1780 = vpop.f32.mrf.mxu0
      %1781 = vmatprep.mubr.f32.mxu0 0.0
      %1782 = vmatmul.mubr.f32.gmra.mxu0 %v408
      %v1783 = vpop.f32.mrf.mxu0
      %v1784 = vadd.f32 0.0, %v1783
      %v1785 = vpop.f32.mrf.mxu0
      %1786 = vmatprep.mubr.f32.mxu0 0.0
      %1787 = vmatmul.mubr.f32.gmra.mxu0 %v410
      %v1788 = vpop.f32.mrf.mxu0
      %v1789 = vadd.f32 0.0, %v1788
      %v1790 = vpop.f32.mrf.mxu0
      %1791 = vmatprep.mubr.f32.mxu0 0.0
      %1792 = vmatmul.mubr.f32.gmra.mxu0 %v412
      %v1793 = vpop.f32.mrf.mxu0
      %v1794 = vadd.f32 0.0, %v1793
      %v1795 = vpop.f32.mrf.mxu0
      %1796 = vmatprep.mubr.f32.mxu0 0.0
      %1797 = vmatmul.mubr.f32.gmra.mxu0 %v414
      %v1798 = vpop.f32.mrf.mxu0
      %v1799 = vadd.f32 0.0, %v1798
      %v1800 = vpop.f32.mrf.mxu0
      %1801 = vmatprep.mubr.f32.mxu0 0.0
      %1802 = vmatmul.mubr.f32.gmra.mxu0 %v416
      %v1803 = vpop.f32.mrf.mxu0
      %v1804 = vadd.f32 0.0, %v1803
      %v1805 = vpop.f32.mrf.mxu0
      %1806 = vmatprep.mubr.f32.mxu0 0.0
      %1807 = vmatmul.mubr.f32.gmra.mxu0 %v418
      %v1808 = vpop.f32.mrf.mxu0
      %v1809 = vadd.f32 0.0, %v1808
      %v1810 = vpop.f32.mrf.mxu0
      %1811 = vmatprep.mubr.f32.mxu0 0.0
      %1812 = vmatmul.mubr.f32.gmra.mxu0 %v420
      %v1813 = vpop.f32.mrf.mxu0
      %v1814 = vadd.f32 0.0, %v1813
      %v1815 = vpop.f32.mrf.mxu0
      %1816 = vmatprep.mubr.f32.mxu0 0.0
      %1817 = vmatmul.mubr.f32.gmra.mxu0 %v422
      %v1818 = vpop.f32.mrf.mxu0
      %v1819 = vadd.f32 0.0, %v1818
      %v1820 = vpop.f32.mrf.mxu0
      %1821 = vmatprep.mubr.f32.mxu0 0.0
      %1822 = vmatmul.mubr.f32.gmra.mxu0 %v424
      %v1823 = vpop.f32.mrf.mxu0
      %v1824 = vadd.f32 0.0, %v1823
      %v1825 = vpop.f32.mrf.mxu0
      %1826 = vmatprep.mubr.f32.mxu0 0.0
      %1827 = vmatmul.mubr.f32.gmra.mxu0 %v426
      %v1828 = vpop.f32.mrf.mxu0
      %v1829 = vadd.f32 0.0, %v1828
      %v1830 = vpop.f32.mrf.mxu0
      %1831 = vmatprep.mubr.f32.mxu0 0.0
      %1832 = vmatmul.mubr.f32.gmra.mxu0 %v1613
      %v1833 = vpop.f32.mrf.mxu0
      %v1834 = vadd.f32 0.0, %v1833
      %v1835 = vpop.f32.mrf.mxu0
      %1836 = vmatprep.mubr.f32.mxu0 0.0
      %1837 = vmatmul.mubr.f32.gmra.mxu0 %v1615
      %v1838 = vpop.f32.mrf.mxu0
      %v1839 = vadd.f32 0.0, %v1838
      %v1840 = vpop.f32.mrf.mxu0
      %1841 = vdwg.mxu0
      %v1842 = vadd.f32 %v1575, %v1684
      %v1843 = vadd.f32 %v1576, %v1689
      %v1844 = vadd.f32 %v1577, %v1694
      %v1845 = vadd.f32 %v1578, %v1699
      %v1846 = vadd.f32 %v1579, %v1704
      %v1847 = vadd.f32 %v1580, %v1709
      %v1848 = vadd.f32 %v1581, %v1714
      %v1849 = vadd.f32 %v1582, %v1719
      %v1850 = vadd.f32 %v1583, %v1724
      %v1851 = vadd.f32 %v1584, %v1729
      %v1852 = vadd.f32 %v1585, %v1734
      %v1853 = vadd.f32 %v1586, %v1739
      %v1854 = vadd.f32 %v1587, %v1744
      %v1855 = vadd.f32 %v1588, %v1749
      %v1856 = vadd.f32 %v1589, %v1754
      %v1857 = vadd.f32 %v1590, %v1759
      %v1858 = vadd.f32 %v1591, %v1764
      %v1859 = vadd.f32 %v1592, %v1769
      %v1860 = vadd.f32 %v1593, %v1774
      %v1861 = vadd.f32 %v1594, %v1779
      %v1862 = vadd.f32 %v1595, %v1784
      %v1863 = vadd.f32 %v1596, %v1789
      %v1864 = vadd.f32 %v1597, %v1794
      %v1865 = vadd.f32 %v1598, %v1799
      %v1866 = vadd.f32 %v1599, %v1804
      %v1867 = vadd.f32 %v1600, %v1809
      %v1868 = vadd.f32 %v1601, %v1814
      %v1869 = vadd.f32 %v1602, %v1819
      %v1870 = vadd.f32 %v1603, %v1824
      %v1871 = vadd.f32 %v1604, %v1829
      %v1872 = vadd.f32 %v1605, %v1834
      %v1873 = vadd.f32 %v1606, %v1839
      %v1874 = vrot.slane %v219, 2
      %v1875 = vrot.slane %v220, 2
      %v1876 = vsel %vm942, %v1874, %v1875
      %v1877 = vrot.slane %v221, 2
      %v1878 = vsel %vm942, %v1875, %v1877
      %v1879 = vsel %vm363, %v1876, 0
      %v1881 = vsel %vm363, %v1878, 0
      %1883 = vmatprep.subr.mxu0 0.0
      %1884 = vmatpush1.msra.mxu0 0.0
      %1885 = vmatprep.subr.mxu0 0.0
      %1886 = vmatpush1.msra.mxu0 0.0
      %1887 = vmatprep.subr.mxu0 0.0
      %1888 = vmatpush1.msra.mxu0 0.0
      %1889 = vmatprep.subr.mxu0 0.0
      %1890 = vmatpush1.msra.mxu0 0.0
      %1891 = vmatprep.subr.mxu0 0.0
      %1892 = vmatpush1.msra.mxu0 0.0
      %1893 = vmatprep.subr.mxu0 0.0
      %1894 = vmatpush1.msra.mxu0 0.0
      %1895 = vmatprep.subr.mxu0 0.0
      %1896 = vmatpush1.msra.mxu0 0.0
      %1897 = vmatprep.subr.mxu0 0.0
      %1898 = vmatpush1.msra.mxu0 0.0
      %1899 = vmatprep.subr.mxu0 0.0
      %1900 = vmatpush1.msra.mxu0 0.0
      %1901 = vmatprep.subr.mxu0 0.0
      %1902 = vmatpush1.msra.mxu0 0.0
      %1903 = vmatprep.subr.mxu0 0.0
      %1904 = vmatpush1.msra.mxu0 0.0
      %1905 = vmatprep.subr.mxu0 0.0
      %1906 = vmatpush1.msra.mxu0 0.0
      %1907 = vmatprep.subr.mxu0 0.0
      %1908 = vmatpush1.msra.mxu0 0.0
      %1909 = vmatprep.subr.mxu0 0.0
      %1910 = vmatpush1.msra.mxu0 0.0
      %1911 = vmatprep.subr.mxu0 0.0
      %1912 = vmatpush1.msra.mxu0 0.0
      %1913 = vmatprep.subr.mxu0 0.0
      %1914 = vmatpush1.msra.mxu0 %v230
      %1915 = vmatprep.subr.mxu0 0.0
      %1916 = vmatpush2.msra.mxu0 0.0
      %1917 = vmatprep.subr.mxu0 0.0
      %1918 = vmatpush2.msra.mxu0 0.0
      %1919 = vmatprep.subr.mxu0 0.0
      %1920 = vmatpush2.msra.mxu0 0.0
      %1921 = vmatprep.subr.mxu0 0.0
      %1922 = vmatpush2.msra.mxu0 0.0
      %1923 = vmatprep.subr.mxu0 0.0
      %1924 = vmatpush2.msra.mxu0 0.0
      %1925 = vmatprep.subr.mxu0 0.0
      %1926 = vmatpush2.msra.mxu0 0.0
      %1927 = vmatprep.subr.mxu0 0.0
      %1928 = vmatpush2.msra.mxu0 0.0
      %1929 = vmatprep.subr.mxu0 0.0
      %1930 = vmatpush2.msra.mxu0 0.0
      %1931 = vmatprep.subr.mxu0 0.0
      %1932 = vmatpush2.msra.mxu0 0.0
      %1933 = vmatprep.subr.mxu0 0.0
      %1934 = vmatpush2.msra.mxu0 0.0
      %1935 = vmatprep.subr.mxu0 0.0
      %1936 = vmatpush2.msra.mxu0 0.0
      %1937 = vmatprep.subr.mxu0 0.0
      %1938 = vmatpush2.msra.mxu0 0.0
      %1939 = vmatprep.subr.mxu0 0.0
      %1940 = vmatpush2.msra.mxu0 0.0
      %1941 = vmatprep.subr.mxu0 0.0
      %1942 = vmatpush2.msra.mxu0 0.0
      %1943 = vmatprep.subr.mxu0 0.0
      %1944 = vmatpush2.msra.mxu0 0.0
      %1945 = vmatprep.subr.mxu0 0.0
      %1946 = vmatpush2.msra.mxu0 0.0
      %1947 = vmatprep.mubr.f32.mxu0 0.0
      %1948 = vmatmul.mubr.f32.gmra.mxu0 %v1027
      %v1949 = vpop.f32.mrf.mxu0
      %v1950 = vadd.f32 0.0, %v1949
      %v1951 = vpop.f32.mrf.mxu0
      %1952 = vmatprep.mubr.f32.mxu0 0.0
      %1953 = vmatmul.mubr.f32.gmra.mxu0 %v1029
      %v1954 = vpop.f32.mrf.mxu0
      %v1955 = vadd.f32 0.0, %v1954
      %v1956 = vpop.f32.mrf.mxu0
      %1957 = vmatprep.mubr.f32.mxu0 0.0
      %1958 = vmatmul.mubr.f32.gmra.mxu0 %v1031
      %v1959 = vpop.f32.mrf.mxu0
      %v1960 = vadd.f32 0.0, %v1959
      %v1961 = vpop.f32.mrf.mxu0
      %1962 = vmatprep.mubr.f32.mxu0 0.0
      %1963 = vmatmul.mubr.f32.gmra.mxu0 %v1033
      %v1964 = vpop.f32.mrf.mxu0
      %v1965 = vadd.f32 0.0, %v1964
      %v1966 = vpop.f32.mrf.mxu0
      %1967 = vmatprep.mubr.f32.mxu0 0.0
      %1968 = vmatmul.mubr.f32.gmra.mxu0 %v1035
      %v1969 = vpop.f32.mrf.mxu0
      %v1970 = vadd.f32 0.0, %v1969
      %v1971 = vpop.f32.mrf.mxu0
      %1972 = vmatprep.mubr.f32.mxu0 0.0
      %1973 = vmatmul.mubr.f32.gmra.mxu0 %v1037
      %v1974 = vpop.f32.mrf.mxu0
      %v1975 = vadd.f32 0.0, %v1974
      %v1976 = vpop.f32.mrf.mxu0
      %1977 = vmatprep.mubr.f32.mxu0 0.0
      %1978 = vmatmul.mubr.f32.gmra.mxu0 %v1039
      %v1979 = vpop.f32.mrf.mxu0
      %v1980 = vadd.f32 0.0, %v1979
      %v1981 = vpop.f32.mrf.mxu0
      %1982 = vmatprep.mubr.f32.mxu0 0.0
      %1983 = vmatmul.mubr.f32.gmra.mxu0 %v1041
      %v1984 = vpop.f32.mrf.mxu0
      %v1985 = vadd.f32 0.0, %v1984
      %v1986 = vpop.f32.mrf.mxu0
      %1987 = vmatprep.mubr.f32.mxu0 0.0
      %1988 = vmatmul.mubr.f32.gmra.mxu0 %v1043
      %v1989 = vpop.f32.mrf.mxu0
      %v1990 = vadd.f32 0.0, %v1989
      %v1991 = vpop.f32.mrf.mxu0
      %1992 = vmatprep.mubr.f32.mxu0 0.0
      %1993 = vmatmul.mubr.f32.gmra.mxu0 %v1045
      %v1994 = vpop.f32.mrf.mxu0
      %v1995 = vadd.f32 0.0, %v1994
      %v1996 = vpop.f32.mrf.mxu0
      %1997 = vmatprep.mubr.f32.mxu0 0.0
      %1998 = vmatmul.mubr.f32.gmra.mxu0 %v1047
      %v1999 = vpop.f32.mrf.mxu0
      %v2000 = vadd.f32 0.0, %v1999
      %v2001 = vpop.f32.mrf.mxu0
      %2002 = vmatprep.mubr.f32.mxu0 0.0
      %2003 = vmatmul.mubr.f32.gmra.mxu0 %v1049
      %v2004 = vpop.f32.mrf.mxu0
      %v2005 = vadd.f32 0.0, %v2004
      %v2006 = vpop.f32.mrf.mxu0
      %2007 = vmatprep.mubr.f32.mxu0 0.0
      %2008 = vmatmul.mubr.f32.gmra.mxu0 %v1051
      %v2009 = vpop.f32.mrf.mxu0
      %v2010 = vadd.f32 0.0, %v2009
      %v2011 = vpop.f32.mrf.mxu0
      %2012 = vmatprep.mubr.f32.mxu0 0.0
      %2013 = vmatmul.mubr.f32.gmra.mxu0 %v1053
      %v2014 = vpop.f32.mrf.mxu0
      %v2015 = vadd.f32 0.0, %v2014
      %v2016 = vpop.f32.mrf.mxu0
      %2017 = vmatprep.mubr.f32.mxu0 0.0
      %2018 = vmatmul.mubr.f32.gmra.mxu0 %v1055
      %v2019 = vpop.f32.mrf.mxu0
      %v2020 = vadd.f32 0.0, %v2019
      %v2021 = vpop.f32.mrf.mxu0
      %2022 = vmatprep.mubr.f32.mxu0 0.0
      %2023 = vmatmul.mubr.f32.gmra.mxu0 %v1057
      %v2024 = vpop.f32.mrf.mxu0
      %v2025 = vadd.f32 0.0, %v2024
      %v2026 = vpop.f32.mrf.mxu0
      %2027 = vmatprep.mubr.f32.mxu0 0.0
      %2028 = vmatmul.mubr.f32.gmra.mxu0 %v1059
      %v2029 = vpop.f32.mrf.mxu0
      %v2030 = vadd.f32 0.0, %v2029
      %v2031 = vpop.f32.mrf.mxu0
      %2032 = vmatprep.mubr.f32.mxu0 0.0
      %2033 = vmatmul.mubr.f32.gmra.mxu0 %v1061
      %v2034 = vpop.f32.mrf.mxu0
      %v2035 = vadd.f32 0.0, %v2034
      %v2036 = vpop.f32.mrf.mxu0
      %2037 = vmatprep.mubr.f32.mxu0 0.0
      %2038 = vmatmul.mubr.f32.gmra.mxu0 %v1063
      %v2039 = vpop.f32.mrf.mxu0
      %v2040 = vadd.f32 0.0, %v2039
      %v2041 = vpop.f32.mrf.mxu0
      %2042 = vmatprep.mubr.f32.mxu0 0.0
      %2043 = vmatmul.mubr.f32.gmra.mxu0 %v1065
      %v2044 = vpop.f32.mrf.mxu0
      %v2045 = vadd.f32 0.0, %v2044
      %v2046 = vpop.f32.mrf.mxu0
      %2047 = vmatprep.mubr.f32.mxu0 0.0
      %2048 = vmatmul.mubr.f32.gmra.mxu0 %v1067
      %v2049 = vpop.f32.mrf.mxu0
      %v2050 = vadd.f32 0.0, %v2049
      %v2051 = vpop.f32.mrf.mxu0
      %2052 = vmatprep.mubr.f32.mxu0 0.0
      %2053 = vmatmul.mubr.f32.gmra.mxu0 %v1069
      %v2054 = vpop.f32.mrf.mxu0
      %v2055 = vadd.f32 0.0, %v2054
      %v2056 = vpop.f32.mrf.mxu0
      %2057 = vmatprep.mubr.f32.mxu0 0.0
      %2058 = vmatmul.mubr.f32.gmra.mxu0 %v1071
      %v2059 = vpop.f32.mrf.mxu0
      %v2060 = vadd.f32 0.0, %v2059
      %v2061 = vpop.f32.mrf.mxu0
      %2062 = vmatprep.mubr.f32.mxu0 0.0
      %2063 = vmatmul.mubr.f32.gmra.mxu0 %v1073
      %v2064 = vpop.f32.mrf.mxu0
      %v2065 = vadd.f32 0.0, %v2064
      %v2066 = vpop.f32.mrf.mxu0
      %2067 = vmatprep.mubr.f32.mxu0 0.0
      %2068 = vmatmul.mubr.f32.gmra.mxu0 %v1075
      %v2069 = vpop.f32.mrf.mxu0
      %v2070 = vadd.f32 0.0, %v2069
      %v2071 = vpop.f32.mrf.mxu0
      %2072 = vmatprep.mubr.f32.mxu0 0.0
      %2073 = vmatmul.mubr.f32.gmra.mxu0 %v1077
      %v2074 = vpop.f32.mrf.mxu0
      %v2075 = vadd.f32 0.0, %v2074
      %v2076 = vpop.f32.mrf.mxu0
      %2077 = vmatprep.mubr.f32.mxu0 0.0
      %2078 = vmatmul.mubr.f32.gmra.mxu0 %v1079
      %v2079 = vpop.f32.mrf.mxu0
      %v2080 = vadd.f32 0.0, %v2079
      %v2081 = vpop.f32.mrf.mxu0
      %2082 = vmatprep.mubr.f32.mxu0 0.0
      %2083 = vmatmul.mubr.f32.gmra.mxu0 %v1081
      %v2084 = vpop.f32.mrf.mxu0
      %v2085 = vadd.f32 0.0, %v2084
      %v2086 = vpop.f32.mrf.mxu0
      %2087 = vmatprep.mubr.f32.mxu0 0.0
      %2088 = vmatmul.mubr.f32.gmra.mxu0 %v1083
      %v2089 = vpop.f32.mrf.mxu0
      %v2090 = vadd.f32 0.0, %v2089
      %v2091 = vpop.f32.mrf.mxu0
      %2092 = vmatprep.mubr.f32.mxu0 0.0
      %2093 = vmatmul.mubr.f32.gmra.mxu0 %v1085
      %v2094 = vpop.f32.mrf.mxu0
      %v2095 = vadd.f32 0.0, %v2094
      %v2096 = vpop.f32.mrf.mxu0
      %2097 = vmatprep.mubr.f32.mxu0 0.0
      %2098 = vmatmul.mubr.f32.gmra.mxu0 %v1879
      %v2099 = vpop.f32.mrf.mxu0
      %v2100 = vadd.f32 0.0, %v2099
      %v2101 = vpop.f32.mrf.mxu0
      %2102 = vmatprep.mubr.f32.mxu0 0.0
      %2103 = vmatmul.mubr.f32.gmra.mxu0 %v1881
      %v2104 = vpop.f32.mrf.mxu0
      %v2105 = vadd.f32 0.0, %v2104
      %v2106 = vpop.f32.mrf.mxu0
      %2107 = vdwg.mxu0
      %v2108 = vadd.f32 %v1842, %v1950
      %v2109 = vadd.f32 %v1843, %v1955
      %v2110 = vadd.f32 %v1844, %v1960
      %v2111 = vadd.f32 %v1845, %v1965
      %v2112 = vadd.f32 %v1846, %v1970
      %v2113 = vadd.f32 %v1847, %v1975
      %v2114 = vadd.f32 %v1848, %v1980
      %v2115 = vadd.f32 %v1849, %v1985
      %v2116 = vadd.f32 %v1850, %v1990
      %v2117 = vadd.f32 %v1851, %v1995
      %v2118 = vadd.f32 %v1852, %v2000
      %v2119 = vadd.f32 %v1853, %v2005
      %v2120 = vadd.f32 %v1854, %v2010
      %v2121 = vadd.f32 %v1855, %v2015
      %v2122 = vadd.f32 %v1856, %v2020
      %v2123 = vadd.f32 %v1857, %v2025
      %v2124 = vadd.f32 %v1858, %v2030
      %v2125 = vadd.f32 %v1859, %v2035
      %v2126 = vadd.f32 %v1860, %v2040
      %v2127 = vadd.f32 %v1861, %v2045
      %v2128 = vadd.f32 %v1862, %v2050
      %v2129 = vadd.f32 %v1863, %v2055
      %v2130 = vadd.f32 %v1864, %v2060
      %v2131 = vadd.f32 %v1865, %v2065
      %v2132 = vadd.f32 %v1866, %v2070
      %v2133 = vadd.f32 %v1867, %v2075
      %v2134 = vadd.f32 %v1868, %v2080
      %v2135 = vadd.f32 %v1869, %v2085
      %v2136 = vadd.f32 %v1870, %v2090
      %v2137 = vadd.f32 %v1871, %v2095
      %v2138 = vadd.f32 %v1872, %v2100
      %v2139 = vadd.f32 %v1873, %v2105
      %v2141 = vsel %vm363, %v222, 0
      %v2144 = vsel %vm363, %v223, 0
      %2146 = vmatprep.subr.mxu0 0.0
      %2147 = vmatpush1.msra.mxu0 0.0
      %2148 = vmatprep.subr.mxu0 0.0
      %2149 = vmatpush1.msra.mxu0 0.0
      %2150 = vmatprep.subr.mxu0 0.0
      %2151 = vmatpush1.msra.mxu0 0.0
      %2152 = vmatprep.subr.mxu0 0.0
      %2153 = vmatpush1.msra.mxu0 0.0
      %2154 = vmatprep.subr.mxu0 0.0
      %2155 = vmatpush1.msra.mxu0 0.0
      %2156 = vmatprep.subr.mxu0 0.0
      %2157 = vmatpush1.msra.mxu0 0.0
      %2158 = vmatprep.subr.mxu0 0.0
      %2159 = vmatpush1.msra.mxu0 0.0
      %2160 = vmatprep.subr.mxu0 0.0
      %2161 = vmatpush1.msra.mxu0 0.0
      %2162 = vmatprep.subr.mxu0 0.0
      %2163 = vmatpush1.msra.mxu0 0.0
      %2164 = vmatprep.subr.mxu0 0.0
      %2165 = vmatpush1.msra.mxu0 0.0
      %2166 = vmatprep.subr.mxu0 0.0
      %2167 = vmatpush1.msra.mxu0 0.0
      %2168 = vmatprep.subr.mxu0 0.0
      %2169 = vmatpush1.msra.mxu0 0.0
      %2170 = vmatprep.subr.mxu0 0.0
      %2171 = vmatpush1.msra.mxu0 0.0
      %2172 = vmatprep.subr.mxu0 0.0
      %2173 = vmatpush1.msra.mxu0 0.0
      %2174 = vmatprep.subr.mxu0 0.0
      %2175 = vmatpush1.msra.mxu0 0.0
      %2176 = vmatprep.subr.mxu0 0.0
      %2177 = vmatpush1.msra.mxu0 %v231
      %2178 = vmatprep.subr.mxu0 0.0
      %2179 = vmatpush2.msra.mxu0 0.0
      %2180 = vmatprep.subr.mxu0 0.0
      %2181 = vmatpush2.msra.mxu0 0.0
      %2182 = vmatprep.subr.mxu0 0.0
      %2183 = vmatpush2.msra.mxu0 0.0
      %2184 = vmatprep.subr.mxu0 0.0
      %2185 = vmatpush2.msra.mxu0 0.0
      %2186 = vmatprep.subr.mxu0 0.0
      %2187 = vmatpush2.msra.mxu0 0.0
      %2188 = vmatprep.subr.mxu0 0.0
      %2189 = vmatpush2.msra.mxu0 0.0
      %2190 = vmatprep.subr.mxu0 0.0
      %2191 = vmatpush2.msra.mxu0 0.0
      %2192 = vmatprep.subr.mxu0 0.0
      %2193 = vmatpush2.msra.mxu0 0.0
      %2194 = vmatprep.subr.mxu0 0.0
      %2195 = vmatpush2.msra.mxu0 0.0
      %2196 = vmatprep.subr.mxu0 0.0
      %2197 = vmatpush2.msra.mxu0 0.0
      %2198 = vmatprep.subr.mxu0 0.0
      %2199 = vmatpush2.msra.mxu0 0.0
      %2200 = vmatprep.subr.mxu0 0.0
      %2201 = vmatpush2.msra.mxu0 0.0
      %2202 = vmatprep.subr.mxu0 0.0
      %2203 = vmatpush2.msra.mxu0 0.0
      %2204 = vmatprep.subr.mxu0 0.0
      %2205 = vmatpush2.msra.mxu0 0.0
      %2206 = vmatprep.subr.mxu0 0.0
      %2207 = vmatpush2.msra.mxu0 0.0
      %2208 = vmatprep.subr.mxu0 0.0
      %2209 = vmatpush2.msra.mxu0 0.0
      %2210 = vmatprep.mubr.f32.mxu0 0.0
      %2211 = vmatmul.mubr.f32.gmra.mxu0 %v661
      %v2212 = vpop.f32.mrf.mxu0
      %v2213 = vadd.f32 0.0, %v2212
      %v2214 = vpop.f32.mrf.mxu0
      %2215 = vmatprep.mubr.f32.mxu0 0.0
      %2216 = vmatmul.mubr.f32.gmra.mxu0 %v663
      %v2217 = vpop.f32.mrf.mxu0
      %v2218 = vadd.f32 0.0, %v2217
      %v2219 = vpop.f32.mrf.mxu0
      %2220 = vmatprep.mubr.f32.mxu0 0.0
      %2221 = vmatmul.mubr.f32.gmra.mxu0 %v665
      %v2222 = vpop.f32.mrf.mxu0
      %v2223 = vadd.f32 0.0, %v2222
      %v2224 = vpop.f32.mrf.mxu0
      %2225 = vmatprep.mubr.f32.mxu0 0.0
      %2226 = vmatmul.mubr.f32.gmra.mxu0 %v667
      %v2227 = vpop.f32.mrf.mxu0
      %v2228 = vadd.f32 0.0, %v2227
      %v2229 = vpop.f32.mrf.mxu0
      %2230 = vmatprep.mubr.f32.mxu0 0.0
      %2231 = vmatmul.mubr.f32.gmra.mxu0 %v669
      %v2232 = vpop.f32.mrf.mxu0
      %v2233 = vadd.f32 0.0, %v2232
      %v2234 = vpop.f32.mrf.mxu0
      %2235 = vmatprep.mubr.f32.mxu0 0.0
      %2236 = vmatmul.mubr.f32.gmra.mxu0 %v671
      %v2237 = vpop.f32.mrf.mxu0
      %v2238 = vadd.f32 0.0, %v2237
      %v2239 = vpop.f32.mrf.mxu0
      %2240 = vmatprep.mubr.f32.mxu0 0.0
      %2241 = vmatmul.mubr.f32.gmra.mxu0 %v673
      %v2242 = vpop.f32.mrf.mxu0
      %v2243 = vadd.f32 0.0, %v2242
      %v2244 = vpop.f32.mrf.mxu0
      %2245 = vmatprep.mubr.f32.mxu0 0.0
      %2246 = vmatmul.mubr.f32.gmra.mxu0 %v675
      %v2247 = vpop.f32.mrf.mxu0
      %v2248 = vadd.f32 0.0, %v2247
      %v2249 = vpop.f32.mrf.mxu0
      %2250 = vmatprep.mubr.f32.mxu0 0.0
      %2251 = vmatmul.mubr.f32.gmra.mxu0 %v677
      %v2252 = vpop.f32.mrf.mxu0
      %v2253 = vadd.f32 0.0, %v2252
      %v2254 = vpop.f32.mrf.mxu0
      %2255 = vmatprep.mubr.f32.mxu0 0.0
      %2256 = vmatmul.mubr.f32.gmra.mxu0 %v679
      %v2257 = vpop.f32.mrf.mxu0
      %v2258 = vadd.f32 0.0, %v2257
      %v2259 = vpop.f32.mrf.mxu0
      %2260 = vmatprep.mubr.f32.mxu0 0.0
      %2261 = vmatmul.mubr.f32.gmra.mxu0 %v681
      %v2262 = vpop.f32.mrf.mxu0
      %v2263 = vadd.f32 0.0, %v2262
      %v2264 = vpop.f32.mrf.mxu0
      %2265 = vmatprep.mubr.f32.mxu0 0.0
      %2266 = vmatmul.mubr.f32.gmra.mxu0 %v683
      %v2267 = vpop.f32.mrf.mxu0
      %v2268 = vadd.f32 0.0, %v2267
      %v2269 = vpop.f32.mrf.mxu0
      %2270 = vmatprep.mubr.f32.mxu0 0.0
      %2271 = vmatmul.mubr.f32.gmra.mxu0 %v685
      %v2272 = vpop.f32.mrf.mxu0
      %v2273 = vadd.f32 0.0, %v2272
      %v2274 = vpop.f32.mrf.mxu0
      %2275 = vmatprep.mubr.f32.mxu0 0.0
      %2276 = vmatmul.mubr.f32.gmra.mxu0 %v687
      %v2277 = vpop.f32.mrf.mxu0
      %v2278 = vadd.f32 0.0, %v2277
      %v2279 = vpop.f32.mrf.mxu0
      %2280 = vmatprep.mubr.f32.mxu0 0.0
      %2281 = vmatmul.mubr.f32.gmra.mxu0 %v689
      %v2282 = vpop.f32.mrf.mxu0
      %v2283 = vadd.f32 0.0, %v2282
      %v2284 = vpop.f32.mrf.mxu0
      %2285 = vmatprep.mubr.f32.mxu0 0.0
      %2286 = vmatmul.mubr.f32.gmra.mxu0 %v691
      %v2287 = vpop.f32.mrf.mxu0
      %v2288 = vadd.f32 0.0, %v2287
      %v2289 = vpop.f32.mrf.mxu0
      %2290 = vmatprep.mubr.f32.mxu0 0.0
      %2291 = vmatmul.mubr.f32.gmra.mxu0 %v693
      %v2292 = vpop.f32.mrf.mxu0
      %v2293 = vadd.f32 0.0, %v2292
      %v2294 = vpop.f32.mrf.mxu0
      %2295 = vmatprep.mubr.f32.mxu0 0.0
      %2296 = vmatmul.mubr.f32.gmra.mxu0 %v695
      %v2297 = vpop.f32.mrf.mxu0
      %v2298 = vadd.f32 0.0, %v2297
      %v2299 = vpop.f32.mrf.mxu0
      %2300 = vmatprep.mubr.f32.mxu0 0.0
      %2301 = vmatmul.mubr.f32.gmra.mxu0 %v697
      %v2302 = vpop.f32.mrf.mxu0
      %v2303 = vadd.f32 0.0, %v2302
      %v2304 = vpop.f32.mrf.mxu0
      %2305 = vmatprep.mubr.f32.mxu0 0.0
      %2306 = vmatmul.mubr.f32.gmra.mxu0 %v699
      %v2307 = vpop.f32.mrf.mxu0
      %v2308 = vadd.f32 0.0, %v2307
      %v2309 = vpop.f32.mrf.mxu0
      %2310 = vmatprep.mubr.f32.mxu0 0.0
      %2311 = vmatmul.mubr.f32.gmra.mxu0 %v701
      %v2312 = vpop.f32.mrf.mxu0
      %v2313 = vadd.f32 0.0, %v2312
      %v2314 = vpop.f32.mrf.mxu0
      %2315 = vmatprep.mubr.f32.mxu0 0.0
      %2316 = vmatmul.mubr.f32.gmra.mxu0 %v703
      %v2317 = vpop.f32.mrf.mxu0
      %v2318 = vadd.f32 0.0, %v2317
      %v2319 = vpop.f32.mrf.mxu0
      %2320 = vmatprep.mubr.f32.mxu0 0.0
      %2321 = vmatmul.mubr.f32.gmra.mxu0 %v705
      %v2322 = vpop.f32.mrf.mxu0
      %v2323 = vadd.f32 0.0, %v2322
      %v2324 = vpop.f32.mrf.mxu0
      %2325 = vmatprep.mubr.f32.mxu0 0.0
      %2326 = vmatmul.mubr.f32.gmra.mxu0 %v707
      %v2327 = vpop.f32.mrf.mxu0
      %v2328 = vadd.f32 0.0, %v2327
      %v2329 = vpop.f32.mrf.mxu0
      %2330 = vmatprep.mubr.f32.mxu0 0.0
      %2331 = vmatmul.mubr.f32.gmra.mxu0 %v709
      %v2332 = vpop.f32.mrf.mxu0
      %v2333 = vadd.f32 0.0, %v2332
      %v2334 = vpop.f32.mrf.mxu0
      %2335 = vmatprep.mubr.f32.mxu0 0.0
      %2336 = vmatmul.mubr.f32.gmra.mxu0 %v711
      %v2337 = vpop.f32.mrf.mxu0
      %v2338 = vadd.f32 0.0, %v2337
      %v2339 = vpop.f32.mrf.mxu0
      %2340 = vmatprep.mubr.f32.mxu0 0.0
      %2341 = vmatmul.mubr.f32.gmra.mxu0 %v713
      %v2342 = vpop.f32.mrf.mxu0
      %v2343 = vadd.f32 0.0, %v2342
      %v2344 = vpop.f32.mrf.mxu0
      %2345 = vmatprep.mubr.f32.mxu0 0.0
      %2346 = vmatmul.mubr.f32.gmra.mxu0 %v715
      %v2347 = vpop.f32.mrf.mxu0
      %v2348 = vadd.f32 0.0, %v2347
      %v2349 = vpop.f32.mrf.mxu0
      %2350 = vmatprep.mubr.f32.mxu0 0.0
      %2351 = vmatmul.mubr.f32.gmra.mxu0 %v1345
      %v2352 = vpop.f32.mrf.mxu0
      %v2353 = vadd.f32 0.0, %v2352
      %v2354 = vpop.f32.mrf.mxu0
      %2355 = vmatprep.mubr.f32.mxu0 0.0
      %2356 = vmatmul.mubr.f32.gmra.mxu0 %v1348
      %v2357 = vpop.f32.mrf.mxu0
      %v2358 = vadd.f32 0.0, %v2357
      %v2359 = vpop.f32.mrf.mxu0
      %2360 = vmatprep.mubr.f32.mxu0 0.0
      %2361 = vmatmul.mubr.f32.gmra.mxu0 %v2141
      %v2362 = vpop.f32.mrf.mxu0
      %v2363 = vadd.f32 0.0, %v2362
      %v2364 = vpop.f32.mrf.mxu0
      %2365 = vmatprep.mubr.f32.mxu0 0.0
      %2366 = vmatmul.mubr.f32.gmra.mxu0 %v2144
      %v2367 = vpop.f32.mrf.mxu0
      %v2368 = vadd.f32 0.0, %v2367
      %v2369 = vpop.f32.mrf.mxu0
      %2370 = vdwg.mxu0
      %v2371 = vadd.f32 %v2108, %v2213
      %v2372 = vadd.f32 %v2109, %v2218
      %v2373 = vadd.f32 %v2110, %v2223
      %v2374 = vadd.f32 %v2111, %v2228
      %v2375 = vadd.f32 %v2112, %v2233
      %v2376 = vadd.f32 %v2113, %v2238
      %v2377 = vadd.f32 %v2114, %v2243
      %v2378 = vadd.f32 %v2115, %v2248
      %v2379 = vadd.f32 %v2116, %v2253
      %v2380 = vadd.f32 %v2117, %v2258
      %v2381 = vadd.f32 %v2118, %v2263
      %v2382 = vadd.f32 %v2119, %v2268
      %v2383 = vadd.f32 %v2120, %v2273
      %v2384 = vadd.f32 %v2121, %v2278
      %v2385 = vadd.f32 %v2122, %v2283
      %v2386 = vadd.f32 %v2123, %v2288
      %v2387 = vadd.f32 %v2124, %v2293
      %v2388 = vadd.f32 %v2125, %v2298
      %v2389 = vadd.f32 %v2126, %v2303
      %v2390 = vadd.f32 %v2127, %v2308
      %v2391 = vadd.f32 %v2128, %v2313
      %v2392 = vadd.f32 %v2129, %v2318
      %v2393 = vadd.f32 %v2130, %v2323
      %v2394 = vadd.f32 %v2131, %v2328
      %v2395 = vadd.f32 %v2132, %v2333
      %v2396 = vadd.f32 %v2133, %v2338
      %v2397 = vadd.f32 %v2134, %v2343
      %v2398 = vadd.f32 %v2135, %v2348
      %v2399 = vadd.f32 %v2136, %v2353
      %v2400 = vadd.f32 %v2137, %v2358
      %v2401 = vadd.f32 %v2138, %v2363
      %v2402 = vadd.f32 %v2139, %v2368
      %v2404 = vrot.slane %v222, 1
      %v2405 = vrot.slane %v223, 1
      %v2406 = vsel %vm282, %v2404, %v2405
      %v2407 = vrot.slane %v224, 1
      %v2408 = vsel %vm282, %v2405, %v2407
      %v2409 = vsel %vm363, %v2406, 0
      %v2411 = vsel %vm363, %v2408, 0
      %2413 = vmatprep.subr.mxu0 0.0
      %2414 = vmatpush1.msra.mxu0 0.0
      %2415 = vmatprep.subr.mxu0 0.0
      %2416 = vmatpush1.msra.mxu0 0.0
      %2417 = vmatprep.subr.mxu0 0.0
      %2418 = vmatpush1.msra.mxu0 0.0
      %2419 = vmatprep.subr.mxu0 0.0
      %2420 = vmatpush1.msra.mxu0 0.0
      %2421 = vmatprep.subr.mxu0 0.0
      %2422 = vmatpush1.msra.mxu0 0.0
      %2423 = vmatprep.subr.mxu0 0.0
      %2424 = vmatpush1.msra.mxu0 0.0
      %2425 = vmatprep.subr.mxu0 0.0
      %2426 = vmatpush1.msra.mxu0 0.0
      %2427 = vmatprep.subr.mxu0 0.0
      %2428 = vmatpush1.msra.mxu0 0.0
      %2429 = vmatprep.subr.mxu0 0.0
      %2430 = vmatpush1.msra.mxu0 0.0
      %2431 = vmatprep.subr.mxu0 0.0
      %2432 = vmatpush1.msra.mxu0 0.0
      %2433 = vmatprep.subr.mxu0 0.0
      %2434 = vmatpush1.msra.mxu0 0.0
      %2435 = vmatprep.subr.mxu0 0.0
      %2436 = vmatpush1.msra.mxu0 0.0
      %2437 = vmatprep.subr.mxu0 0.0
      %2438 = vmatpush1.msra.mxu0 0.0
      %2439 = vmatprep.subr.mxu0 0.0
      %2440 = vmatpush1.msra.mxu0 0.0
      %2441 = vmatprep.subr.mxu0 0.0
      %2442 = vmatpush1.msra.mxu0 0.0
      %2443 = vmatprep.subr.mxu0 0.0
      %2444 = vmatpush1.msra.mxu0 %v232
      %2445 = vmatprep.subr.mxu0 0.0
      %2446 = vmatpush2.msra.mxu0 0.0
      %2447 = vmatprep.subr.mxu0 0.0
      %2448 = vmatpush2.msra.mxu0 0.0
      %2449 = vmatprep.subr.mxu0 0.0
      %2450 = vmatpush2.msra.mxu0 0.0
      %2451 = vmatprep.subr.mxu0 0.0
      %2452 = vmatpush2.msra.mxu0 0.0
      %2453 = vmatprep.subr.mxu0 0.0
      %2454 = vmatpush2.msra.mxu0 0.0
      %2455 = vmatprep.subr.mxu0 0.0
      %2456 = vmatpush2.msra.mxu0 0.0
      %2457 = vmatprep.subr.mxu0 0.0
      %2458 = vmatpush2.msra.mxu0 0.0
      %2459 = vmatprep.subr.mxu0 0.0
      %2460 = vmatpush2.msra.mxu0 0.0
      %2461 = vmatprep.subr.mxu0 0.0
      %2462 = vmatpush2.msra.mxu0 0.0
      %2463 = vmatprep.subr.mxu0 0.0
      %2464 = vmatpush2.msra.mxu0 0.0
      %2465 = vmatprep.subr.mxu0 0.0
      %2466 = vmatpush2.msra.mxu0 0.0
      %2467 = vmatprep.subr.mxu0 0.0
      %2468 = vmatpush2.msra.mxu0 0.0
      %2469 = vmatprep.subr.mxu0 0.0
      %2470 = vmatpush2.msra.mxu0 0.0
      %2471 = vmatprep.subr.mxu0 0.0
      %2472 = vmatpush2.msra.mxu0 0.0
      %2473 = vmatprep.subr.mxu0 0.0
      %2474 = vmatpush2.msra.mxu0 0.0
      %2475 = vmatprep.subr.mxu0 0.0
      %2476 = vmatpush2.msra.mxu0 0.0
      %2477 = vmatprep.mubr.f32.mxu0 0.0
      %2478 = vmatmul.mubr.f32.gmra.mxu0 %v372
      %v2479 = vpop.f32.mrf.mxu0
      %v2480 = vadd.f32 0.0, %v2479
      %v2481 = vpop.f32.mrf.mxu0
      %2482 = vmatprep.mubr.f32.mxu0 0.0
      %2483 = vmatmul.mubr.f32.gmra.mxu0 %v374
      %v2484 = vpop.f32.mrf.mxu0
      %v2485 = vadd.f32 0.0, %v2484
      %v2486 = vpop.f32.mrf.mxu0
      %2487 = vmatprep.mubr.f32.mxu0 0.0
      %2488 = vmatmul.mubr.f32.gmra.mxu0 %v376
      %v2489 = vpop.f32.mrf.mxu0
      %v2490 = vadd.f32 0.0, %v2489
      %v2491 = vpop.f32.mrf.mxu0
      %2492 = vmatprep.mubr.f32.mxu0 0.0
      %2493 = vmatmul.mubr.f32.gmra.mxu0 %v378
      %v2494 = vpop.f32.mrf.mxu0
      %v2495 = vadd.f32 0.0, %v2494
      %v2496 = vpop.f32.mrf.mxu0
      %2497 = vmatprep.mubr.f32.mxu0 0.0
      %2498 = vmatmul.mubr.f32.gmra.mxu0 %v380
      %v2499 = vpop.f32.mrf.mxu0
      %v2500 = vadd.f32 0.0, %v2499
      %v2501 = vpop.f32.mrf.mxu0
      %2502 = vmatprep.mubr.f32.mxu0 0.0
      %2503 = vmatmul.mubr.f32.gmra.mxu0 %v382
      %v2504 = vpop.f32.mrf.mxu0
      %v2505 = vadd.f32 0.0, %v2504
      %v2506 = vpop.f32.mrf.mxu0
      %2507 = vmatprep.mubr.f32.mxu0 0.0
      %2508 = vmatmul.mubr.f32.gmra.mxu0 %v384
      %v2509 = vpop.f32.mrf.mxu0
      %v2510 = vadd.f32 0.0, %v2509
      %v2511 = vpop.f32.mrf.mxu0
      %2512 = vmatprep.mubr.f32.mxu0 0.0
      %2513 = vmatmul.mubr.f32.gmra.mxu0 %v386
      %v2514 = vpop.f32.mrf.mxu0
      %v2515 = vadd.f32 0.0, %v2514
      %v2516 = vpop.f32.mrf.mxu0
      %2517 = vmatprep.mubr.f32.mxu0 0.0
      %2518 = vmatmul.mubr.f32.gmra.mxu0 %v388
      %v2519 = vpop.f32.mrf.mxu0
      %v2520 = vadd.f32 0.0, %v2519
      %v2521 = vpop.f32.mrf.mxu0
      %2522 = vmatprep.mubr.f32.mxu0 0.0
      %2523 = vmatmul.mubr.f32.gmra.mxu0 %v390
      %v2524 = vpop.f32.mrf.mxu0
      %v2525 = vadd.f32 0.0, %v2524
      %v2526 = vpop.f32.mrf.mxu0
      %2527 = vmatprep.mubr.f32.mxu0 0.0
      %2528 = vmatmul.mubr.f32.gmra.mxu0 %v392
      %v2529 = vpop.f32.mrf.mxu0
      %v2530 = vadd.f32 0.0, %v2529
      %v2531 = vpop.f32.mrf.mxu0
      %2532 = vmatprep.mubr.f32.mxu0 0.0
      %2533 = vmatmul.mubr.f32.gmra.mxu0 %v394
      %v2534 = vpop.f32.mrf.mxu0
      %v2535 = vadd.f32 0.0, %v2534
      %v2536 = vpop.f32.mrf.mxu0
      %2537 = vmatprep.mubr.f32.mxu0 0.0
      %2538 = vmatmul.mubr.f32.gmra.mxu0 %v396
      %v2539 = vpop.f32.mrf.mxu0
      %v2540 = vadd.f32 0.0, %v2539
      %v2541 = vpop.f32.mrf.mxu0
      %2542 = vmatprep.mubr.f32.mxu0 0.0
      %2543 = vmatmul.mubr.f32.gmra.mxu0 %v398
      %v2544 = vpop.f32.mrf.mxu0
      %v2545 = vadd.f32 0.0, %v2544
      %v2546 = vpop.f32.mrf.mxu0
      %2547 = vmatprep.mubr.f32.mxu0 0.0
      %2548 = vmatmul.mubr.f32.gmra.mxu0 %v400
      %v2549 = vpop.f32.mrf.mxu0
      %v2550 = vadd.f32 0.0, %v2549
      %v2551 = vpop.f32.mrf.mxu0
      %2552 = vmatprep.mubr.f32.mxu0 0.0
      %2553 = vmatmul.mubr.f32.gmra.mxu0 %v402
      %v2554 = vpop.f32.mrf.mxu0
      %v2555 = vadd.f32 0.0, %v2554
      %v2556 = vpop.f32.mrf.mxu0
      %2557 = vmatprep.mubr.f32.mxu0 0.0
      %2558 = vmatmul.mubr.f32.gmra.mxu0 %v404
      %v2559 = vpop.f32.mrf.mxu0
      %v2560 = vadd.f32 0.0, %v2559
      %v2561 = vpop.f32.mrf.mxu0
      %2562 = vmatprep.mubr.f32.mxu0 0.0
      %2563 = vmatmul.mubr.f32.gmra.mxu0 %v406
      %v2564 = vpop.f32.mrf.mxu0
      %v2565 = vadd.f32 0.0, %v2564
      %v2566 = vpop.f32.mrf.mxu0
      %2567 = vmatprep.mubr.f32.mxu0 0.0
      %2568 = vmatmul.mubr.f32.gmra.mxu0 %v408
      %v2569 = vpop.f32.mrf.mxu0
      %v2570 = vadd.f32 0.0, %v2569
      %v2571 = vpop.f32.mrf.mxu0
      %2572 = vmatprep.mubr.f32.mxu0 0.0
      %2573 = vmatmul.mubr.f32.gmra.mxu0 %v410
      %v2574 = vpop.f32.mrf.mxu0
      %v2575 = vadd.f32 0.0, %v2574
      %v2576 = vpop.f32.mrf.mxu0
      %2577 = vmatprep.mubr.f32.mxu0 0.0
      %2578 = vmatmul.mubr.f32.gmra.mxu0 %v412
      %v2579 = vpop.f32.mrf.mxu0
      %v2580 = vadd.f32 0.0, %v2579
      %v2581 = vpop.f32.mrf.mxu0
      %2582 = vmatprep.mubr.f32.mxu0 0.0
      %2583 = vmatmul.mubr.f32.gmra.mxu0 %v414
      %v2584 = vpop.f32.mrf.mxu0
      %v2585 = vadd.f32 0.0, %v2584
      %v2586 = vpop.f32.mrf.mxu0
      %2587 = vmatprep.mubr.f32.mxu0 0.0
      %2588 = vmatmul.mubr.f32.gmra.mxu0 %v416
      %v2589 = vpop.f32.mrf.mxu0
      %v2590 = vadd.f32 0.0, %v2589
      %v2591 = vpop.f32.mrf.mxu0
      %2592 = vmatprep.mubr.f32.mxu0 0.0
      %2593 = vmatmul.mubr.f32.gmra.mxu0 %v418
      %v2594 = vpop.f32.mrf.mxu0
      %v2595 = vadd.f32 0.0, %v2594
      %v2596 = vpop.f32.mrf.mxu0
      %2597 = vmatprep.mubr.f32.mxu0 0.0
      %2598 = vmatmul.mubr.f32.gmra.mxu0 %v420
      %v2599 = vpop.f32.mrf.mxu0
      %v2600 = vadd.f32 0.0, %v2599
      %v2601 = vpop.f32.mrf.mxu0
      %2602 = vmatprep.mubr.f32.mxu0 0.0
      %2603 = vmatmul.mubr.f32.gmra.mxu0 %v422
      %v2604 = vpop.f32.mrf.mxu0
      %v2605 = vadd.f32 0.0, %v2604
      %v2606 = vpop.f32.mrf.mxu0
      %2607 = vmatprep.mubr.f32.mxu0 0.0
      %2608 = vmatmul.mubr.f32.gmra.mxu0 %v424
      %v2609 = vpop.f32.mrf.mxu0
      %v2610 = vadd.f32 0.0, %v2609
      %v2611 = vpop.f32.mrf.mxu0
      %2612 = vmatprep.mubr.f32.mxu0 0.0
      %2613 = vmatmul.mubr.f32.gmra.mxu0 %v426
      %v2614 = vpop.f32.mrf.mxu0
      %v2615 = vadd.f32 0.0, %v2614
      %v2616 = vpop.f32.mrf.mxu0
      %2617 = vmatprep.mubr.f32.mxu0 0.0
      %2618 = vmatmul.mubr.f32.gmra.mxu0 %v1613
      %v2619 = vpop.f32.mrf.mxu0
      %v2620 = vadd.f32 0.0, %v2619
      %v2621 = vpop.f32.mrf.mxu0
      %2622 = vmatprep.mubr.f32.mxu0 0.0
      %2623 = vmatmul.mubr.f32.gmra.mxu0 %v1615
      %v2624 = vpop.f32.mrf.mxu0
      %v2625 = vadd.f32 0.0, %v2624
      %v2626 = vpop.f32.mrf.mxu0
      %2627 = vmatprep.mubr.f32.mxu0 0.0
      %2628 = vmatmul.mubr.f32.gmra.mxu0 %v2409
      %v2629 = vpop.f32.mrf.mxu0
      %v2630 = vadd.f32 0.0, %v2629
      %v2631 = vpop.f32.mrf.mxu0
      %2632 = vmatprep.mubr.f32.mxu0 0.0
      %2633 = vmatmul.mubr.f32.gmra.mxu0 %v2411
      %v2634 = vpop.f32.mrf.mxu0
      %v2635 = vadd.f32 0.0, %v2634
      %v2636 = vpop.f32.mrf.mxu0
      %2637 = vdwg.mxu0
      %v2638 = vadd.f32 %v2371, %v2480
      %v2639 = vadd.f32 %v2372, %v2485
      %v2640 = vadd.f32 %v2373, %v2490
      %v2641 = vadd.f32 %v2374, %v2495
      %v2642 = vadd.f32 %v2375, %v2500
      %v2643 = vadd.f32 %v2376, %v2505
      %v2644 = vadd.f32 %v2377, %v2510
      %v2645 = vadd.f32 %v2378, %v2515
      %v2646 = vadd.f32 %v2379, %v2520
      %v2647 = vadd.f32 %v2380, %v2525
      %v2648 = vadd.f32 %v2381, %v2530
      %v2649 = vadd.f32 %v2382, %v2535
      %v2650 = vadd.f32 %v2383, %v2540
      %v2651 = vadd.f32 %v2384, %v2545
      %v2652 = vadd.f32 %v2385, %v2550
      %v2653 = vadd.f32 %v2386, %v2555
      %v2654 = vadd.f32 %v2387, %v2560
      %v2655 = vadd.f32 %v2388, %v2565
      %v2656 = vadd.f32 %v2389, %v2570
      %v2657 = vadd.f32 %v2390, %v2575
      %v2658 = vadd.f32 %v2391, %v2580
      %v2659 = vadd.f32 %v2392, %v2585
      %v2660 = vadd.f32 %v2393, %v2590
      %v2661 = vadd.f32 %v2394, %v2595
      %v2662 = vadd.f32 %v2395, %v2600
      %v2663 = vadd.f32 %v2396, %v2605
      %v2664 = vadd.f32 %v2397, %v2610
      %v2665 = vadd.f32 %v2398, %v2615
      %v2666 = vadd.f32 %v2399, %v2620
      %v2667 = vadd.f32 %v2400, %v2625
      %v2668 = vadd.f32 %v2401, %v2630
      %v2669 = vadd.f32 %v2402, %v2635
      %v2670 = vrot.slane %v222, 2
      %v2671 = vrot.slane %v223, 2
      %v2672 = vsel %vm942, %v2670, %v2671
      %v2673 = vrot.slane %v224, 2
      %v2674 = vsel %vm942, %v2671, %v2673
      %v2675 = vsel %vm363, %v2672, 0
      %v2677 = vsel %vm363, %v2674, 0
      %2679 = vmatprep.subr.mxu0 0.0
      %2680 = vmatpush1.msra.mxu0 0.0
      %2681 = vmatprep.subr.mxu0 0.0
      %2682 = vmatpush1.msra.mxu0 0.0
      %2683 = vmatprep.subr.mxu0 0.0
      %2684 = vmatpush1.msra.mxu0 0.0
      %2685 = vmatprep.subr.mxu0 0.0
      %2686 = vmatpush1.msra.mxu0 0.0
      %2687 = vmatprep.subr.mxu0 0.0
      %2688 = vmatpush1.msra.mxu0 0.0
      %2689 = vmatprep.subr.mxu0 0.0
      %2690 = vmatpush1.msra.mxu0 0.0
      %2691 = vmatprep.subr.mxu0 0.0
      %2692 = vmatpush1.msra.mxu0 0.0
      %2693 = vmatprep.subr.mxu0 0.0
      %2694 = vmatpush1.msra.mxu0 0.0
      %2695 = vmatprep.subr.mxu0 0.0
      %2696 = vmatpush1.msra.mxu0 0.0
      %2697 = vmatprep.subr.mxu0 0.0
      %2698 = vmatpush1.msra.mxu0 0.0
      %2699 = vmatprep.subr.mxu0 0.0
      %2700 = vmatpush1.msra.mxu0 0.0
      %2701 = vmatprep.subr.mxu0 0.0
      %2702 = vmatpush1.msra.mxu0 0.0
      %2703 = vmatprep.subr.mxu0 0.0
      %2704 = vmatpush1.msra.mxu0 0.0
      %2705 = vmatprep.subr.mxu0 0.0
      %2706 = vmatpush1.msra.mxu0 0.0
      %2707 = vmatprep.subr.mxu0 0.0
      %2708 = vmatpush1.msra.mxu0 0.0
      %2709 = vmatprep.subr.mxu0 0.0
      %2710 = vmatpush1.msra.mxu0 %v233
      %2711 = vmatprep.subr.mxu0 0.0
      %2712 = vmatpush2.msra.mxu0 0.0
      %2713 = vmatprep.subr.mxu0 0.0
      %2714 = vmatpush2.msra.mxu0 0.0
      %2715 = vmatprep.subr.mxu0 0.0
      %2716 = vmatpush2.msra.mxu0 0.0
      %2717 = vmatprep.subr.mxu0 0.0
      %2718 = vmatpush2.msra.mxu0 0.0
      %2719 = vmatprep.subr.mxu0 0.0
      %2720 = vmatpush2.msra.mxu0 0.0
      %2721 = vmatprep.subr.mxu0 0.0
      %2722 = vmatpush2.msra.mxu0 0.0
      %2723 = vmatprep.subr.mxu0 0.0
      %2724 = vmatpush2.msra.mxu0 0.0
      %2725 = vmatprep.subr.mxu0 0.0
      %2726 = vmatpush2.msra.mxu0 0.0
      %2727 = vmatprep.subr.mxu0 0.0
      %2728 = vmatpush2.msra.mxu0 0.0
      %2729 = vmatprep.subr.mxu0 0.0
      %2730 = vmatpush2.msra.mxu0 0.0
      %2731 = vmatprep.subr.mxu0 0.0
      %2732 = vmatpush2.msra.mxu0 0.0
      %2733 = vmatprep.subr.mxu0 0.0
      %2734 = vmatpush2.msra.mxu0 0.0
      %2735 = vmatprep.subr.mxu0 0.0
      %2736 = vmatpush2.msra.mxu0 0.0
      %2737 = vmatprep.subr.mxu0 0.0
      %2738 = vmatpush2.msra.mxu0 0.0
      %2739 = vmatprep.subr.mxu0 0.0
      %2740 = vmatpush2.msra.mxu0 0.0
      %2741 = vmatprep.subr.mxu0 0.0
      %2742 = vmatpush2.msra.mxu0 0.0
      %2743 = vmatprep.mubr.f32.mxu0 0.0
      %2744 = vmatmul.mubr.f32.gmra.mxu0 %v1031
      %v2745 = vpop.f32.mrf.mxu0
      %v2746 = vadd.f32 0.0, %v2745
      %v2747 = vpop.f32.mrf.mxu0
      %2748 = vmatprep.mubr.f32.mxu0 0.0
      %2749 = vmatmul.mubr.f32.gmra.mxu0 %v1033
      %v2750 = vpop.f32.mrf.mxu0
      %v2751 = vadd.f32 0.0, %v2750
      %v2752 = vpop.f32.mrf.mxu0
      %2753 = vmatprep.mubr.f32.mxu0 0.0
      %2754 = vmatmul.mubr.f32.gmra.mxu0 %v1035
      %v2755 = vpop.f32.mrf.mxu0
      %v2756 = vadd.f32 0.0, %v2755
      %v2757 = vpop.f32.mrf.mxu0
      %2758 = vmatprep.mubr.f32.mxu0 0.0
      %2759 = vmatmul.mubr.f32.gmra.mxu0 %v1037
      %v2760 = vpop.f32.mrf.mxu0
      %v2761 = vadd.f32 0.0, %v2760
      %v2762 = vpop.f32.mrf.mxu0
      %2763 = vmatprep.mubr.f32.mxu0 0.0
      %2764 = vmatmul.mubr.f32.gmra.mxu0 %v1039
      %v2765 = vpop.f32.mrf.mxu0
      %v2766 = vadd.f32 0.0, %v2765
      %v2767 = vpop.f32.mrf.mxu0
      %2768 = vmatprep.mubr.f32.mxu0 0.0
      %2769 = vmatmul.mubr.f32.gmra.mxu0 %v1041
      %v2770 = vpop.f32.mrf.mxu0
      %v2771 = vadd.f32 0.0, %v2770
      %v2772 = vpop.f32.mrf.mxu0
      %2773 = vmatprep.mubr.f32.mxu0 0.0
      %2774 = vmatmul.mubr.f32.gmra.mxu0 %v1043
      %v2775 = vpop.f32.mrf.mxu0
      %v2776 = vadd.f32 0.0, %v2775
      %v2777 = vpop.f32.mrf.mxu0
      %2778 = vmatprep.mubr.f32.mxu0 0.0
      %2779 = vmatmul.mubr.f32.gmra.mxu0 %v1045
      %v2780 = vpop.f32.mrf.mxu0
      %v2781 = vadd.f32 0.0, %v2780
      %v2782 = vpop.f32.mrf.mxu0
      %2783 = vmatprep.mubr.f32.mxu0 0.0
      %2784 = vmatmul.mubr.f32.gmra.mxu0 %v1047
      %v2785 = vpop.f32.mrf.mxu0
      %v2786 = vadd.f32 0.0, %v2785
      %v2787 = vpop.f32.mrf.mxu0
      %2788 = vmatprep.mubr.f32.mxu0 0.0
      %2789 = vmatmul.mubr.f32.gmra.mxu0 %v1049
      %v2790 = vpop.f32.mrf.mxu0
      %v2791 = vadd.f32 0.0, %v2790
      %v2792 = vpop.f32.mrf.mxu0
      %2793 = vmatprep.mubr.f32.mxu0 0.0
      %2794 = vmatmul.mubr.f32.gmra.mxu0 %v1051
      %v2795 = vpop.f32.mrf.mxu0
      %v2796 = vadd.f32 0.0, %v2795
      %v2797 = vpop.f32.mrf.mxu0
      %2798 = vmatprep.mubr.f32.mxu0 0.0
      %2799 = vmatmul.mubr.f32.gmra.mxu0 %v1053
      %v2800 = vpop.f32.mrf.mxu0
      %v2801 = vadd.f32 0.0, %v2800
      %v2802 = vpop.f32.mrf.mxu0
      %2803 = vmatprep.mubr.f32.mxu0 0.0
      %2804 = vmatmul.mubr.f32.gmra.mxu0 %v1055
      %v2805 = vpop.f32.mrf.mxu0
      %v2806 = vadd.f32 0.0, %v2805
      %v2807 = vpop.f32.mrf.mxu0
      %2808 = vmatprep.mubr.f32.mxu0 0.0
      %2809 = vmatmul.mubr.f32.gmra.mxu0 %v1057
      %v2810 = vpop.f32.mrf.mxu0
      %v2811 = vadd.f32 0.0, %v2810
      %v2812 = vpop.f32.mrf.mxu0
      %2813 = vmatprep.mubr.f32.mxu0 0.0
      %2814 = vmatmul.mubr.f32.gmra.mxu0 %v1059
      %v2815 = vpop.f32.mrf.mxu0
      %v2816 = vadd.f32 0.0, %v2815
      %v2817 = vpop.f32.mrf.mxu0
      %2818 = vmatprep.mubr.f32.mxu0 0.0
      %2819 = vmatmul.mubr.f32.gmra.mxu0 %v1061
      %v2820 = vpop.f32.mrf.mxu0
      %v2821 = vadd.f32 0.0, %v2820
      %v2822 = vpop.f32.mrf.mxu0
      %2823 = vmatprep.mubr.f32.mxu0 0.0
      %2824 = vmatmul.mubr.f32.gmra.mxu0 %v1063
      %v2825 = vpop.f32.mrf.mxu0
      %v2826 = vadd.f32 0.0, %v2825
      %v2827 = vpop.f32.mrf.mxu0
      %2828 = vmatprep.mubr.f32.mxu0 0.0
      %2829 = vmatmul.mubr.f32.gmra.mxu0 %v1065
      %v2830 = vpop.f32.mrf.mxu0
      %v2831 = vadd.f32 0.0, %v2830
      %v2832 = vpop.f32.mrf.mxu0
      %2833 = vmatprep.mubr.f32.mxu0 0.0
      %2834 = vmatmul.mubr.f32.gmra.mxu0 %v1067
      %v2835 = vpop.f32.mrf.mxu0
      %v2836 = vadd.f32 0.0, %v2835
      %v2837 = vpop.f32.mrf.mxu0
      %2838 = vmatprep.mubr.f32.mxu0 0.0
      %2839 = vmatmul.mubr.f32.gmra.mxu0 %v1069
      %v2840 = vpop.f32.mrf.mxu0
      %v2841 = vadd.f32 0.0, %v2840
      %v2842 = vpop.f32.mrf.mxu0
      %2843 = vmatprep.mubr.f32.mxu0 0.0
      %2844 = vmatmul.mubr.f32.gmra.mxu0 %v1071
      %v2845 = vpop.f32.mrf.mxu0
      %v2846 = vadd.f32 0.0, %v2845
      %v2847 = vpop.f32.mrf.mxu0
      %2848 = vmatprep.mubr.f32.mxu0 0.0
      %2849 = vmatmul.mubr.f32.gmra.mxu0 %v1073
      %v2850 = vpop.f32.mrf.mxu0
      %v2851 = vadd.f32 0.0, %v2850
      %v2852 = vpop.f32.mrf.mxu0
      %2853 = vmatprep.mubr.f32.mxu0 0.0
      %2854 = vmatmul.mubr.f32.gmra.mxu0 %v1075
      %v2855 = vpop.f32.mrf.mxu0
      %v2856 = vadd.f32 0.0, %v2855
      %v2857 = vpop.f32.mrf.mxu0
      %2858 = vmatprep.mubr.f32.mxu0 0.0
      %2859 = vmatmul.mubr.f32.gmra.mxu0 %v1077
      %v2860 = vpop.f32.mrf.mxu0
      %v2861 = vadd.f32 0.0, %v2860
      %v2862 = vpop.f32.mrf.mxu0
      %2863 = vmatprep.mubr.f32.mxu0 0.0
      %2864 = vmatmul.mubr.f32.gmra.mxu0 %v1079
      %v2865 = vpop.f32.mrf.mxu0
      %v2866 = vadd.f32 0.0, %v2865
      %v2867 = vpop.f32.mrf.mxu0
      %2868 = vmatprep.mubr.f32.mxu0 0.0
      %2869 = vmatmul.mubr.f32.gmra.mxu0 %v1081
      %v2870 = vpop.f32.mrf.mxu0
      %v2871 = vadd.f32 0.0, %v2870
      %v2872 = vpop.f32.mrf.mxu0
      %2873 = vmatprep.mubr.f32.mxu0 0.0
      %2874 = vmatmul.mubr.f32.gmra.mxu0 %v1083
      %v2875 = vpop.f32.mrf.mxu0
      %v2876 = vadd.f32 0.0, %v2875
      %v2877 = vpop.f32.mrf.mxu0
      %2878 = vmatprep.mubr.f32.mxu0 0.0
      %2879 = vmatmul.mubr.f32.gmra.mxu0 %v1085
      %v2880 = vpop.f32.mrf.mxu0
      %v2881 = vadd.f32 0.0, %v2880
      %v2882 = vpop.f32.mrf.mxu0
      %2883 = vmatprep.mubr.f32.mxu0 0.0
      %2884 = vmatmul.mubr.f32.gmra.mxu0 %v1879
      %v2885 = vpop.f32.mrf.mxu0
      %v2886 = vadd.f32 0.0, %v2885
      %v2887 = vpop.f32.mrf.mxu0
      %2888 = vmatprep.mubr.f32.mxu0 0.0
      %2889 = vmatmul.mubr.f32.gmra.mxu0 %v1881
      %v2890 = vpop.f32.mrf.mxu0
      %v2891 = vadd.f32 0.0, %v2890
      %v2892 = vpop.f32.mrf.mxu0
      %2893 = vmatprep.mubr.f32.mxu0 0.0
      %2894 = vmatmul.mubr.f32.gmra.mxu0 %v2675
      %v2895 = vpop.f32.mrf.mxu0
      %v2896 = vadd.f32 0.0, %v2895
      %v2897 = vpop.f32.mrf.mxu0
      %2898 = vmatprep.mubr.f32.mxu0 0.0
      %2899 = vmatmul.mubr.f32.gmra.mxu0 %v2677
      %v2900 = vpop.f32.mrf.mxu0
      %v2901 = vadd.f32 0.0, %v2900
      %v2902 = vpop.f32.mrf.mxu0
      %2903 = vdwg.mxu0
      %v2904 = vadd.f32 %v2638, %v2746
      %v2905 = vadd.f32 %v2639, %v2751
      %v2906 = vadd.f32 %v2640, %v2756
      %v2907 = vadd.f32 %v2641, %v2761
      %v2908 = vadd.f32 %v2642, %v2766
      %v2909 = vadd.f32 %v2643, %v2771
      %v2910 = vadd.f32 %v2644, %v2776
      %v2911 = vadd.f32 %v2645, %v2781
      %v2912 = vadd.f32 %v2646, %v2786
      %v2913 = vadd.f32 %v2647, %v2791
      %v2914 = vadd.f32 %v2648, %v2796
      %v2915 = vadd.f32 %v2649, %v2801
      %v2916 = vadd.f32 %v2650, %v2806
      %v2917 = vadd.f32 %v2651, %v2811
      %v2918 = vadd.f32 %v2652, %v2816
      %v2919 = vadd.f32 %v2653, %v2821
      %v2920 = vadd.f32 %v2654, %v2826
      %v2921 = vadd.f32 %v2655, %v2831
      %v2922 = vadd.f32 %v2656, %v2836
      %v2923 = vadd.f32 %v2657, %v2841
      %v2924 = vadd.f32 %v2658, %v2846
      %v2925 = vadd.f32 %v2659, %v2851
      %v2926 = vadd.f32 %v2660, %v2856
      %v2927 = vadd.f32 %v2661, %v2861
      %v2928 = vadd.f32 %v2662, %v2866
      %v2929 = vadd.f32 %v2663, %v2871
      %v2930 = vadd.f32 %v2664, %v2876
      %v2931 = vadd.f32 %v2665, %v2881
      %v2932 = vadd.f32 %v2666, %v2886
      %v2933 = vadd.f32 %v2667, %v2891
      %v2934 = vadd.f32 %v2668, %v2896
      %v2935 = vadd.f32 %v2669, %v2901
      %v2936 = vld [vmem:[%s2] sm:$0x1]
      %v2938 = vlaneseq
      %v2939 = vshrl.u32 %v2938, 7
      %v2940 = vsub.s32 0, %v2939
      %v2941 = vrot.slane %v2936, %v2940
      %v2943 = vadd.f32 %v2904, %v2941
      %v2944 = vadd.f32 %v2905, %v2941
      %v2945 = vadd.f32 %v2906, %v2941
      %v2946 = vadd.f32 %v2907, %v2941
      %v2947 = vadd.f32 %v2908, %v2941
      %v2948 = vadd.f32 %v2909, %v2941
      %v2949 = vadd.f32 %v2910, %v2941
      %v2950 = vadd.f32 %v2911, %v2941
      %v2951 = vadd.f32 %v2912, %v2941
      %v2952 = vadd.f32 %v2913, %v2941
      %v2953 = vadd.f32 %v2914, %v2941
      %v2954 = vadd.f32 %v2915, %v2941
      %v2955 = vadd.f32 %v2916, %v2941
      %v2956 = vadd.f32 %v2917, %v2941
      %v2957 = vadd.f32 %v2918, %v2941
      %v2958 = vadd.f32 %v2919, %v2941
      %v2959 = vadd.f32 %v2920, %v2941
      %v2960 = vadd.f32 %v2921, %v2941
      %v2961 = vadd.f32 %v2922, %v2941
      %v2962 = vadd.f32 %v2923, %v2941
      %v2963 = vadd.f32 %v2924, %v2941
      %v2964 = vadd.f32 %v2925, %v2941
      %v2965 = vadd.f32 %v2926, %v2941
      %v2966 = vadd.f32 %v2927, %v2941
      %v2967 = vadd.f32 %v2928, %v2941
      %v2968 = vadd.f32 %v2929, %v2941
      %v2969 = vadd.f32 %v2930, %v2941
      %v2970 = vadd.f32 %v2931, %v2941
      %v2971 = vadd.f32 %v2932, %v2941
      %v2972 = vadd.f32 %v2933, %v2941
      %v2973 = vadd.f32 %v2934, %v2941
      %v2974 = vadd.f32 %v2935, %v2941
      %2975 = vst.msk [vmem:[%s170] sm:$0xff] %vm363, %v2943
      %2976 = vst.msk [vmem:[%s170 + $0x8] sm:$0xff] %vm363, %v2944
      %2977 = vst.msk [vmem:[%s170 + $0x10] sm:$0xff] %vm363, %v2945
      %2978 = vst.msk [vmem:[%s170 + $0x18] sm:$0xff] %vm363, %v2946
      %2979 = vst.msk [vmem:[%s170 + $0x20] sm:$0xff] %vm363, %v2947
      %2980 = vst.msk [vmem:[%s170 + $0x28] sm:$0xff] %vm363, %v2948
      %2981 = vst.msk [vmem:[%s170 + $0x30] sm:$0xff] %vm363, %v2949
      %2982 = vst.msk [vmem:[%s170 + $0x38] sm:$0xff] %vm363, %v2950
      %2983 = vst.msk [vmem:[%s170 + $0x40] sm:$0xff] %vm363, %v2951
      %2984 = vst.msk [vmem:[%s170 + $0x48] sm:$0xff] %vm363, %v2952
      %2985 = vst.msk [vmem:[%s170 + $0x50] sm:$0xff] %vm363, %v2953
      %2986 = vst.msk [vmem:[%s170 + $0x58] sm:$0xff] %vm363, %v2954
      %2987 = vst.msk [vmem:[%s170 + $0x60] sm:$0xff] %vm363, %v2955
      %2988 = vst.msk [vmem:[%s170 + $0x68] sm:$0xff] %vm363, %v2956
      %2989 = vst.msk [vmem:[%s170 + $0x70] sm:$0xff] %vm363, %v2957
      %2990 = vst.msk [vmem:[%s170 + $0x78] sm:$0xff] %vm363, %v2958
      %2991 = vst.msk [vmem:[%s170 + $0x80] sm:$0xff] %vm363, %v2959
      %2992 = vst.msk [vmem:[%s170 + $0x88] sm:$0xff] %vm363, %v2960
      %2993 = vst.msk [vmem:[%s170 + $0x90] sm:$0xff] %vm363, %v2961
      %2994 = vst.msk [vmem:[%s170 + $0x98] sm:$0xff] %vm363, %v2962
      %2995 = vst.msk [vmem:[%s170 + $0xa0] sm:$0xff] %vm363, %v2963
      %2996 = vst.msk [vmem:[%s170 + $0xa8] sm:$0xff] %vm363, %v2964
      %2997 = vst.msk [vmem:[%s170 + $0xb0] sm:$0xff] %vm363, %v2965
      %2998 = vst.msk [vmem:[%s170 + $0xb8] sm:$0xff] %vm363, %v2966
      %2999 = vst.msk [vmem:[%s170 + $0xc0] sm:$0xff] %vm363, %v2967
      %3000 = vst.msk [vmem:[%s170 + $0xc8] sm:$0xff] %vm363, %v2968
      %3001 = vst.msk [vmem:[%s170 + $0xd0] sm:$0xff] %vm363, %v2969
      %3002 = vst.msk [vmem:[%s170 + $0xd8] sm:$0xff] %vm363, %v2970
      %3003 = vst.msk [vmem:[%s170 + $0xe0] sm:$0xff] %vm363, %v2971
      %3004 = vst.msk [vmem:[%s170 + $0xe8] sm:$0xff] %vm363, %v2972
      %3005 = vst.msk [vmem:[%s170 + $0xf0] sm:$0xff] %vm363, %v2973
      %3006 = vst.msk [vmem:[%s170 + $0xf8] sm:$0xff] %vm363, %v2974
      %p3007 = scmp.lt.s32.totalorder %s14, 1
      %s3008 = scalar_select %p3007, %s14, 1
      %s3009 = smul.addr %s3008, 32
      %s3010 = smul.addr %s3009, 8
      %s3011 = scalar_lea.vmem %s3, %s3010
      // Predicated region
      $region33: #{esab_forward.9} parent=31 // pred_check
        %p3012 = pneg %p100
      $region34: #{esab_forward.9} parent=31 // pred_check_branch
        %3014 = sbr.rel (%p3012) target = $region36
      $region35: #{esab_forward.9} parent=31 // pred_region
        _
      $region36: #{esab_forward.9} parent=31 // pred_fallthru
        _
    $region32: #{esab_forward.9} parent=5 // pred_fallthru
      _
    %p3015 = scmp.le.s32.totalorder 2, %s9
    // Predicated region
    $region37: #{esab_forward.9} parent=5 // pred_check
      %p3016 = pneg %p3015
    $region38: #{esab_forward.9} parent=5 // pred_check_branch
      %3018 = sbr.rel (%p3016) target = $region40
    $region39: #{esab_forward.9} parent=5 // pred_region
      %s3019 = ssub.s32 %s9, 2
      // Predicated region
      $region41: #{esab_forward.9} parent=39 // pred_check
        %p3020 = pneg %p106
      $region42: #{esab_forward.9} parent=39 // pred_check_branch
        %3022 = sbr.rel (%p3020) target = $region44
      $region43: #{esab_forward.9} parent=39 // pred_region
        %p3023 = scmp.lt.s32.totalorder %s15, 1
        %s3024 = scalar_select %p3023, %s15, 1
        %s3025 = smul.addr %s3024, 32
        %s3026 = smul.addr %s3025, 8
        %s3027 = scalar_lea.vmem %s3, %s3026
      $region44: #{esab_forward.9} parent=39 // pred_fallthru
        _
    $region40: #{esab_forward.9} parent=5 // pred_fallthru
      _
  $region6: #{esab_forward.9} parent=0 // loop_footer
    %s13 = sadd.s32 1, %s9
  $region7: #{esab_forward.9} parent=0 // loop_footer_branch
    %8 = sbr.rel target = $region3
  $region8: #{esab_forward.9} parent=0 // loop_exit
    _

// kernel: esab_forward.14
$region0: #{esab_forward.14}
  #allocation0 [shape = 'u32[]', space=smem, size = 0x4, offset = 0x4, fixed_abs, tag = 'smem constant byte address 0x4 - core index']
  #allocation1 [shape = 'u32[144,128]{1,0:T(1,128)}', space=vmem, size = 0x12000, scoped, tag = 'internal scratch']
  %s0 = inlined_call_operand.vmem [shape: f32[2,20,16,8], index: 0, kind: input, shape index: {}]
  %s1 = inlined_call_operand.vmem [shape: f32[5,8,8], index: 1, kind: input, shape index: {}]
  %s2 = inlined_call_operand.vmem [shape: f32[1,8], index: 2, kind: input, shape index: {}]
  %s3 = inlined_call_operand.vmem [shape: f32[2,16,16,8], index: 3, kind: output, shape index: {}]
  %s4 = sld [smem:[#allocation0]]
  $region45: #{esab_forward.14} parent=0
    _
  %s6 = ssub.s32 1, %s4
  %s7 = scalar_select 0, %s6, %s4
  loop: start=0, step=1, limit=4
  $region2: #{esab_forward.14} parent=0 // loop_pre_header
    _
  $region3: #{esab_forward.14} parent=0 // loop_header
    %s9 = sphi 0, %s13
    %p10 = scmp.ge.s32.totalorder %s9, 4
    %s19 = sphi 0, %s21
    %s22 = sphi 0, %s19
    %s23 = sphi 0, %s22
    %s39 = sphi 0, %s23
    %s43 = sphi 0, %s43
    %s45 = sphi 0, %s43
    %s46 = sphi 0, %s45
    %s60 = sphi 0, %s46
    %s64 = sphi 0, %s64
    %s66 = sphi 0, %s64
    %s67 = sphi 0, %s66
    %s81 = sphi 0, %s67
    %s87 = sphi 0, %s89
    %s90 = sphi 0, %s87
    %s91 = sphi 0, %s90
    %s107 = sphi 0, %s91
  $region4: #{esab_forward.14} parent=0 // loop_header_branch
    %12 = sbr.rel (%p10) target = $region8
  $region5: #{esab_forward.14} parent=0 // loop_body
    %s14 = ssub.s32 %s9, 1
    %s15 = ssub.s32 %s9, 2
    %s16 = sadd.s32 %s9, 1
    %s17 = ssub.s32 %s9, %s16
    %p18 = scmp.eq.s32.totalorder %s17, 0
    %s20 = sadd.s32 %s19, 1
    %s21 = scalar_select %p18, %s19, %s20
    %p24 = pneg %p18
    %p25 = scmp.eq.s32.totalorder %s9, 1
    %p26 = por %p24, %p25
    %p27 = scmp.ne.s32.totalorder %s19, %s22
    %p28 = scmp.eq.s32.totalorder %s9, 0
    %p29 = por %p27, %p28
    %p30 = scmp.ne.s32.totalorder %s19, %s22
    %p31 = scmp.eq.s32.totalorder %s14, 1
    %p32 = por %p30, %p31
    %p33 = scmp.ne.s32.totalorder %s22, %s23
    %p34 = scmp.eq.s32.totalorder %s14, 0
    %p35 = por %p33, %p34
    %p36 = scmp.ne.s32.totalorder %s22, %s23
    %p37 = scmp.eq.s32.totalorder %s15, 1
    %p38 = por %p36, %p37
    %p40 = scmp.ne.s32.totalorder %s23, %s39
    %p41 = scmp.eq.s32.totalorder %s15, 0
    %p42 = por %p40, %p41
    %s44 = sadd.s32 %s43, 1
    %p47 = scmp.eq.s32.totalorder %s9, 1
    %p48 = scmp.ne.s32.totalorder %s43, %s45
    %p49 = scmp.eq.s32.totalorder %s9, 0
    %p50 = por %p48, %p49
    %p51 = scmp.ne.s32.totalorder %s43, %s45
    %p52 = scmp.eq.s32.totalorder %s14, 1
    %p53 = por %p51, %p52
    %p54 = scmp.ne.s32.totalorder %s45, %s46
    %p55 = scmp.eq.s32.totalorder %s14, 0
    %p56 = por %p54, %p55
    %p57 = scmp.ne.s32.totalorder %s45, %s46
    %p58 = scmp.eq.s32.totalorder %s15, 1
    %p59 = por %p57, %p58
    %p61 = scmp.ne.s32.totalorder %s46, %s60
    %p62 = scmp.eq.s32.totalorder %s15, 0
    %p63 = por %p61, %p62
    %s65 = sadd.s32 %s64, 1
    %p68 = scmp.eq.s32.totalorder %s9, 1
    %p69 = scmp.ne.s32.totalorder %s64, %s66
    %p70 = scmp.eq.s32.totalorder %s9, 0
    %p71 = por %p69, %p70
    %p72 = scmp.ne.s32.totalorder %s64, %s66
    %p73 = scmp.eq.s32.totalorder %s14, 1
    %p74 = por %p72, %p73
    %p75 = scmp.ne.s32.totalorder %s66, %s67
    %p76 = scmp.eq.s32.totalorder %s14, 0
    %p77 = por %p75, %p76
    %p78 = scmp.ne.s32.totalorder %s66, %s67
    %p79 = scmp.eq.s32.totalorder %s15, 1
    %p80 = por %p78, %p79
    %p82 = scmp.ne.s32.totalorder %s67, %s81
    %p83 = scmp.eq.s32.totalorder %s15, 0
    %p84 = por %p82, %p83
    %s85 = ssub.s32 %s9, %s16
    %p86 = scmp.eq.s32.totalorder %s85, 0
    %s88 = sadd.s32 %s87, 1
    %s89 = scalar_select %p86, %s87, %s88
    %p92 = pneg %p86
    %p93 = scmp.eq.s32.totalorder %s9, 1
    %p94 = por %p92, %p93
    %p95 = scmp.ne.s32.totalorder %s87, %s90
    %p96 = scmp.eq.s32.totalorder %s9, 0
    %p97 = por %p95, %p96
    %p98 = scmp.ne.s32.totalorder %s87, %s90
    %p99 = scmp.eq.s32.totalorder %s14, 1
    %p100 = por %p98, %p99
    %p101 = scmp.ne.s32.totalorder %s90, %s91
    %p102 = scmp.eq.s32.totalorder %s14, 0
    %p103 = por %p101, %p102
    %p104 = scmp.ne.s32.totalorder %s90, %s91
    %p105 = scmp.eq.s32.totalorder %s15, 1
    %p106 = por %p104, %p105
    %p108 = scmp.ne.s32.totalorder %s91, %s107
    %p109 = scmp.eq.s32.totalorder %s15, 0
    %p110 = por %p108, %p109
    %p111 = scmp.le.s32.totalorder 1, %s9
    %p112 = scmp.lt.s32.totalorder %s9, 3
    %p113 = pnand %p111, %p112
    %p114 = pneg %p113
    // Predicated region
    $region9: #{esab_forward.14} parent=5 // pred_check
      _
    $region10: #{esab_forward.14} parent=5 // pred_check_branch
      %116 = sbr.rel (%p113) target = $region12
    $region11: #{esab_forward.14} parent=5 // pred_region
      %s117 = ssub.s32 %s9, 1
      // Predicated region
      $region13: #{esab_forward.14} parent=11 // pred_check
        %p118 = pneg %p56
      $region14: #{esab_forward.14} parent=11 // pred_check_branch
        %120 = sbr.rel (%p118) target = $region16
      $region15: #{esab_forward.14} parent=11 // pred_region
        _
      $region16: #{esab_forward.14} parent=11 // pred_fallthru
        _
      // Predicated region
      $region17: #{esab_forward.14} parent=11 // pred_check
        %p121 = pneg %p77
      $region18: #{esab_forward.14} parent=11 // pred_check_branch
        %123 = sbr.rel (%p121) target = $region20
      $region19: #{esab_forward.14} parent=11 // pred_region
        _
      $region20: #{esab_forward.14} parent=11 // pred_fallthru
        _
    $region12: #{esab_forward.14} parent=5 // pred_fallthru
      _
    %p124 = scmp.lt.s32.totalorder %s9, 2
    // Predicated region
    $region21: #{esab_forward.14} parent=5 // pred_check
      %p125 = pneg %p124
    $region22: #{esab_forward.14} parent=5 // pred_check_branch
      %127 = sbr.rel (%p125) target = $region24
    $region23: #{esab_forward.14} parent=5 // pred_region
      // Predicated region
      $region25: #{esab_forward.14} parent=23 // pred_check
        %p128 = pneg %p29
      $region26: #{esab_forward.14} parent=23 // pred_check_branch
        %130 = sbr.rel (%p128) target = $region28
      $region27: #{esab_forward.14} parent=23 // pred_region
        %p131 = scmp.lt.s32.totalorder %s9, 1
        %s132 = scalar_select %p131, %s9, 1
        %s133 = smul.addr %s132, 40
        %s134 = smul.addr %s133, 8
        %s135 = scalar_lea.vmem %s0, %s134
      $region28: #{esab_forward.14} parent=23 // pred_fallthru
        _
    $region24: #{esab_forward.14} parent=5 // pred_fallthru
      _
    %p136 = scmp.le.s32.totalorder 1, %s9
    %p137 = scmp.lt.s32.totalorder %s9, 3
    %p138 = pnand %p136, %p137
    %p139 = pneg %p138
    // Predicated region
    $region29: #{esab_forward.14} parent=5 // pred_check
      _
    $region30: #{esab_forward.14} parent=5 // pred_check_branch
      %141 = sbr.rel (%p138) target = $region32
    $region31: #{esab_forward.14} parent=5 // pred_region
      %s142 = ssub.s32 %s9, 1
      %p143 = scmp.lt.s32.totalorder %s14, 1
      %s144 = scalar_select %p143, %s14, 1
      %s145 = smul.addr %s144, 40
      %s146 = smul.addr %s145, 8
      %s147 = scalar_lea.vmem %s0, %s146
      %p148 = pneg %p35
      %p149 = pneg %p32
      %p150 = pneg %p56
      %p151 = pneg %p53
      %p152 = pneg %p77
      %p153 = pneg %p74
      %p154 = pneg %p103
      %p155 = pneg %p100
      %p156 = scmp.lt.s32.totalorder %s14, 1
      %s157 = scalar_select %p156, %s14, 1
      %s158 = smul.addr %s157, 32
      %s159 = smul.addr %s158, 8
      %s160 = scalar_lea.vmem %s3, %s159
      %p161 = scmp.lt.s32.totalorder %s14, 1
      %s162 = scalar_select %p161, %s14, 1
      %s163 = smul.addr %s162, 40
      %s164 = smul.addr %s163, 8
      %s165 = scalar_lea.vmem %s0, %s164
      %p166 = scmp.lt.s32.totalorder %s14, 1
      %s167 = scalar_select %p166, %s14, 1
      %s168 = smul.addr %s167, 32
      %s169 = smul.addr %s168, 8
      %s170 = scalar_lea.vmem %s3, %s169
      %v171 = vld [vmem:[%s165] sm:$0xff]
      %v172 = vld [vmem:[%s165 + $0x8] sm:$0xff]
      %v173 = vld [vmem:[%s165 + $0x10] sm:$0xff]
      %v174 = vld [vmem:[%s165 + $0x18] sm:$0xff]
      %v175 = vld [vmem:[%s165 + $0x20] sm:$0xff]
      %v176 = vld [vmem:[%s165 + $0x28] sm:$0xff]
      %v177 = vld [vmem:[%s165 + $0x30] sm:$0xff]
      %v178 = vld [vmem:[%s165 + $0x38] sm:$0xff]
      %v179 = vld [vmem:[%s165 + $0x40] sm:$0xff]
      %v180 = vld [vmem:[%s165 + $0x48] sm:$0xff]
      %v181 = vld [vmem:[%s165 + $0x50] sm:$0xff]
      %v182 = vld [vmem:[%s165 + $0x58] sm:$0xff]
      %v183 = vld [vmem:[%s165 + $0x60] sm:$0xff]
      %v184 = vld [vmem:[%s165 + $0x68] sm:$0xff]
      %v185 = vld [vmem:[%s165 + $0x70] sm:$0xff]
      %v186 = vld [vmem:[%s165 + $0x78] sm:$0xff]
      %v187 = vld [vmem:[%s165 + $0x80] sm:$0xff]
      %v188 = vld [vmem:[%s165 + $0x88] sm:$0xff]
      %v189 = vld [vmem:[%s165 + $0x90] sm:$0xff]
      %v190 = vld [vmem:[%s165 + $0x98] sm:$0xff]
      %v191 = vld [vmem:[%s165 + $0xa0] sm:$0xff]
      %v192 = vld [vmem:[%s165 + $0xa8] sm:$0xff]
      %v193 = vld [vmem:[%s165 + $0xb0] sm:$0xff]
      %v194 = vld [vmem:[%s165 + $0xb8] sm:$0xff]
      %v195 = vld [vmem:[%s165 + $0xc0] sm:$0xff]
      %v196 = vld [vmem:[%s165 + $0xc8] sm:$0xff]
      %v197 = vld [vmem:[%s165 + $0xd0] sm:$0xff]
      %v198 = vld [vmem:[%s165 + $0xd8] sm:$0xff]
      %v199 = vld [vmem:[%s165 + $0xe0] sm:$0xff]
      %v200 = vld [vmem:[%s165 + $0xe8] sm:$0xff]
      %v201 = vld [vmem:[%s165 + $0xf0] sm:$0xff]
      %v202 = vld [vmem:[%s165 + $0xf8] sm:$0xff]
      %v203 = vld [vmem:[%s165 + $0x100] sm:$0xff]
      %v204 = vld [vmem:[%s165 + $0x108] sm:$0xff]
      %v205 = vld [vmem:[%s165 + $0x110] sm:$0xff]
      %v206 = vld [vmem:[%s165 + $0x118] sm:$0xff]
      %v207 = vld [vmem:[%s165 + $0x120] sm:$0xff]
      %v208 = vld [vmem:[%s165 + $0x128] sm:$0xff]
      %v209 = vld [vmem:[%s165 + $0x130] sm:$0xff]
      %v210 = vld [vmem:[%s165 + $0x138] sm:$0xff]
      %v211 = vld [vmem:[%s1] sm:$0xff]
      %v212 = vld [vmem:[%s1 + $0x8] sm:$0xff]
      %v213 = vld [vmem:[%s1 + $0x10] sm:$0xff]
      %v214 = vld [vmem:[%s1 + $0x18] sm:$0xff]
      %v215 = vld [vmem:[%s1 + $0x20] sm:$0xff]
      %vm216 = vcmask 64512
      %v218 = vsel %vm216, %v173, 0
      %v221 = vsel %vm216, %v174, 0
      %v224 = vsel %vm216, %v175, 0
      %v227 = vsel %vm216, %v176, 0
      %v230 = vsel %vm216, %v177, 0
      %v233 = vsel %vm216, %v178, 0
      %v236 = vsel %vm216, %v179, 0
      %v239 = vsel %vm216, %v180, 0
      %v242 = vsel %vm216, %v181, 0
      %v245 = vsel %vm216, %v182, 0
      %v248 = vsel %vm216, %v183, 0
      %v251 = vsel %vm216, %v184, 0
      %v254 = vsel %vm216, %v185, 0
      %v257 = vsel %vm216, %v186, 0
      %v260 = vsel %vm216, %v187, 0
      %v263 = vsel %vm216, %v188, 0
      %v266 = vsel %vm216, %v189, 0
      %v269 = vsel %vm216, %v190, 0
      %v272 = vsel %vm216, %v191, 0
      %v275 = vsel %vm216, %v192, 0
      %v278 = vsel %vm216, %v193, 0
      %v281 = vsel %vm216, %v194, 0
      %v284 = vsel %vm216, %v195, 0
      %v287 = vsel %vm216, %v196, 0
      %v290 = vsel %vm216, %v197, 0
      %v293 = vsel %vm216, %v198, 0
      %v296 = vsel %vm216, %v199, 0
      %v299 = vsel %vm216, %v200, 0
      %v302 = vsel %vm216, %v201, 0
      %v305 = vsel %vm216, %v202, 0
      %v308 = vsel %vm216, %v203, 0
      %v311 = vsel %vm216, %v204, 0
      %313 = vmatprep.subr.mxu0 0.0
      %314 = vmatpush1.msra.mxu0 0.0
      %315 = vmatprep.subr.mxu0 0.0
      %316 = vmatpush1.msra.mxu0 0.0
      %317 = vmatprep.subr.mxu0 0.0
      %318 = vmatpush1.msra.mxu0 0.0
      %319 = vmatprep.subr.mxu0 0.0
      %320 = vmatpush1.msra.mxu0 0.0
      %321 = vmatprep.subr.mxu0 0.0
      %322 = vmatpush1.msra.mxu0 0.0
      %323 = vmatprep.subr.mxu0 0.0
      %324 = vmatpush1.msra.mxu0 0.0
      %325 = vmatprep.subr.mxu0 0.0
      %326 = vmatpush1.msra.mxu0 0.0
      %327 = vmatprep.subr.mxu0 0.0
      %328 = vmatpush1.msra.mxu0 0.0
      %329 = vmatprep.subr.mxu0 0.0
      %330 = vmatpush1.msra.mxu0 0.0
      %331 = vmatprep.subr.mxu0 0.0
      %332 = vmatpush1.msra.mxu0 0.0
      %333 = vmatprep.subr.mxu0 0.0
      %334 = vmatpush1.msra.mxu0 0.0
      %335 = vmatprep.subr.mxu0 0.0
      %336 = vmatpush1.msra.mxu0 0.0
      %337 = vmatprep.subr.mxu0 0.0
      %338 = vmatpush1.msra.mxu0 0.0
      %339 = vmatprep.subr.mxu0 0.0
      %340 = vmatpush1.msra.mxu0 0.0
      %341 = vmatprep.subr.mxu0 0.0
      %342 = vmatpush1.msra.mxu0 0.0
      %343 = vmatprep.subr.mxu0 0.0
      %344 = vmatpush1.msra.mxu0 %v212
      %345 = vmatprep.subr.mxu0 0.0
      %346 = vmatpush2.msra.mxu0 0.0
      %347 = vmatprep.subr.mxu0 0.0
      %348 = vmatpush2.msra.mxu0 0.0
      %349 = vmatprep.subr.mxu0 0.0
      %350 = vmatpush2.msra.mxu0 0.0
      %351 = vmatprep.subr.mxu0 0.0
      %352 = vmatpush2.msra.mxu0 0.0
      %353 = vmatprep.subr.mxu0 0.0
      %354 = vmatpush2.msra.mxu0 0.0
      %355 = vmatprep.subr.mxu0 0.0
      %356 = vmatpush2.msra.mxu0 0.0
      %357 = vmatprep.subr.mxu0 0.0
      %358 = vmatpush2.msra.mxu0 0.0
      %359 = vmatprep.subr.mxu0 0.0
      %360 = vmatpush2.msra.mxu0 0.0
      %361 = vmatprep.subr.mxu0 0.0
      %362 = vmatpush2.msra.mxu0 0.0
      %363 = vmatprep.subr.mxu0 0.0
      %364 = vmatpush2.msra.mxu0 0.0
      %365 = vmatprep.subr.mxu0 0.0
      %366 = vmatpush2.msra.mxu0 0.0
      %367 = vmatprep.subr.mxu0 0.0
      %368 = vmatpush2.msra.mxu0 0.0
      %369 = vmatprep.subr.mxu0 0.0
      %370 = vmatpush2.msra.mxu0 0.0
      %371 = vmatprep.subr.mxu0 0.0
      %372 = vmatpush2.msra.mxu0 0.0
      %373 = vmatprep.subr.mxu0 0.0
      %374 = vmatpush2.msra.mxu0 0.0
      %375 = vmatprep.subr.mxu0 0.0
      %376 = vmatpush2.msra.mxu0 0.0
      %377 = vmatprep.mubr.f32.mxu0 0.0
      %378 = vmatmul.mubr.f32.gmra.mxu0 %v218
      %v379 = vpop.f32.mrf.mxu0
      %v380 = vadd.f32 0.0, %v379
      %v381 = vpop.f32.mrf.mxu0
      %382 = vmatprep.mubr.f32.mxu0 0.0
      %383 = vmatmul.mubr.f32.gmra.mxu0 %v221
      %v384 = vpop.f32.mrf.mxu0
      %v385 = vadd.f32 0.0, %v384
      %v386 = vpop.f32.mrf.mxu0
      %387 = vmatprep.mubr.f32.mxu0 0.0
      %388 = vmatmul.mubr.f32.gmra.mxu0 %v224
      %v389 = vpop.f32.mrf.mxu0
      %v390 = vadd.f32 0.0, %v389
      %v391 = vpop.f32.mrf.mxu0
      %392 = vmatprep.mubr.f32.mxu0 0.0
      %393 = vmatmul.mubr.f32.gmra.mxu0 %v227
      %v394 = vpop.f32.mrf.mxu0
      %v395 = vadd.f32 0.0, %v394
      %v396 = vpop.f32.mrf.mxu0
      %397 = vmatprep.mubr.f32.mxu0 0.0
      %398 = vmatmul.mubr.f32.gmra.mxu0 %v230
      %v399 = vpop.f32.mrf.mxu0
      %v400 = vadd.f32 0.0, %v399
      %v401 = vpop.f32.mrf.mxu0
      %402 = vmatprep.mubr.f32.mxu0 0.0
      %403 = vmatmul.mubr.f32.gmra.mxu0 %v233
      %v404 = vpop.f32.mrf.mxu0
      %v405 = vadd.f32 0.0, %v404
      %v406 = vpop.f32.mrf.mxu0
      %407 = vmatprep.mubr.f32.mxu0 0.0
      %408 = vmatmul.mubr.f32.gmra.mxu0 %v236
      %v409 = vpop.f32.mrf.mxu0
      %v410 = vadd.f32 0.0, %v409
      %v411 = vpop.f32.mrf.mxu0
      %412 = vmatprep.mubr.f32.mxu0 0.0
      %413 = vmatmul.mubr.f32.gmra.mxu0 %v239
      %v414 = vpop.f32.mrf.mxu0
      %v415 = vadd.f32 0.0, %v414
      %v416 = vpop.f32.mrf.mxu0
      %417 = vmatprep.mubr.f32.mxu0 0.0
      %418 = vmatmul.mubr.f32.gmra.mxu0 %v242
      %v419 = vpop.f32.mrf.mxu0
      %v420 = vadd.f32 0.0, %v419
      %v421 = vpop.f32.mrf.mxu0
      %422 = vmatprep.mubr.f32.mxu0 0.0
      %423 = vmatmul.mubr.f32.gmra.mxu0 %v245
      %v424 = vpop.f32.mrf.mxu0
      %v425 = vadd.f32 0.0, %v424
      %v426 = vpop.f32.mrf.mxu0
      %427 = vmatprep.mubr.f32.mxu0 0.0
      %428 = vmatmul.mubr.f32.gmra.mxu0 %v248
      %v429 = vpop.f32.mrf.mxu0
      %v430 = vadd.f32 0.0, %v429
      %v431 = vpop.f32.mrf.mxu0
      %432 = vmatprep.mubr.f32.mxu0 0.0
      %433 = vmatmul.mubr.f32.gmra.mxu0 %v251
      %v434 = vpop.f32.mrf.mxu0
      %v435 = vadd.f32 0.0, %v434
      %v436 = vpop.f32.mrf.mxu0
      %437 = vmatprep.mubr.f32.mxu0 0.0
      %438 = vmatmul.mubr.f32.gmra.mxu0 %v254
      %v439 = vpop.f32.mrf.mxu0
      %v440 = vadd.f32 0.0, %v439
      %v441 = vpop.f32.mrf.mxu0
      %442 = vmatprep.mubr.f32.mxu0 0.0
      %443 = vmatmul.mubr.f32.gmra.mxu0 %v257
      %v444 = vpop.f32.mrf.mxu0
      %v445 = vadd.f32 0.0, %v444
      %v446 = vpop.f32.mrf.mxu0
      %447 = vmatprep.mubr.f32.mxu0 0.0
      %448 = vmatmul.mubr.f32.gmra.mxu0 %v260
      %v449 = vpop.f32.mrf.mxu0
      %v450 = vadd.f32 0.0, %v449
      %v451 = vpop.f32.mrf.mxu0
      %452 = vmatprep.mubr.f32.mxu0 0.0
      %453 = vmatmul.mubr.f32.gmra.mxu0 %v263
      %v454 = vpop.f32.mrf.mxu0
      %v455 = vadd.f32 0.0, %v454
      %v456 = vpop.f32.mrf.mxu0
      %457 = vmatprep.mubr.f32.mxu0 0.0
      %458 = vmatmul.mubr.f32.gmra.mxu0 %v266
      %v459 = vpop.f32.mrf.mxu0
      %v460 = vadd.f32 0.0, %v459
      %v461 = vpop.f32.mrf.mxu0
      %462 = vmatprep.mubr.f32.mxu0 0.0
      %463 = vmatmul.mubr.f32.gmra.mxu0 %v269
      %v464 = vpop.f32.mrf.mxu0
      %v465 = vadd.f32 0.0, %v464
      %v466 = vpop.f32.mrf.mxu0
      %467 = vmatprep.mubr.f32.mxu0 0.0
      %468 = vmatmul.mubr.f32.gmra.mxu0 %v272
      %v469 = vpop.f32.mrf.mxu0
      %v470 = vadd.f32 0.0, %v469
      %v471 = vpop.f32.mrf.mxu0
      %472 = vmatprep.mubr.f32.mxu0 0.0
      %473 = vmatmul.mubr.f32.gmra.mxu0 %v275
      %v474 = vpop.f32.mrf.mxu0
      %v475 = vadd.f32 0.0, %v474
      %v476 = vpop.f32.mrf.mxu0
      %477 = vmatprep.mubr.f32.mxu0 0.0
      %478 = vmatmul.mubr.f32.gmra.mxu0 %v278
      %v479 = vpop.f32.mrf.mxu0
      %v480 = vadd.f32 0.0, %v479
      %v481 = vpop.f32.mrf.mxu0
      %482 = vmatprep.mubr.f32.mxu0 0.0
      %483 = vmatmul.mubr.f32.gmra.mxu0 %v281
      %v484 = vpop.f32.mrf.mxu0
      %v485 = vadd.f32 0.0, %v484
      %v486 = vpop.f32.mrf.mxu0
      %487 = vmatprep.mubr.f32.mxu0 0.0
      %488 = vmatmul.mubr.f32.gmra.mxu0 %v284
      %v489 = vpop.f32.mrf.mxu0
      %v490 = vadd.f32 0.0, %v489
      %v491 = vpop.f32.mrf.mxu0
      %492 = vmatprep.mubr.f32.mxu0 0.0
      %493 = vmatmul.mubr.f32.gmra.mxu0 %v287
      %v494 = vpop.f32.mrf.mxu0
      %v495 = vadd.f32 0.0, %v494
      %v496 = vpop.f32.mrf.mxu0
      %497 = vmatprep.mubr.f32.mxu0 0.0
      %498 = vmatmul.mubr.f32.gmra.mxu0 %v290
      %v499 = vpop.f32.mrf.mxu0
      %v500 = vadd.f32 0.0, %v499
      %v501 = vpop.f32.mrf.mxu0
      %502 = vmatprep.mubr.f32.mxu0 0.0
      %503 = vmatmul.mubr.f32.gmra.mxu0 %v293
      %v504 = vpop.f32.mrf.mxu0
      %v505 = vadd.f32 0.0, %v504
      %v506 = vpop.f32.mrf.mxu0
      %507 = vmatprep.mubr.f32.mxu0 0.0
      %508 = vmatmul.mubr.f32.gmra.mxu0 %v296
      %v509 = vpop.f32.mrf.mxu0
      %v510 = vadd.f32 0.0, %v509
      %v511 = vpop.f32.mrf.mxu0
      %512 = vmatprep.mubr.f32.mxu0 0.0
      %513 = vmatmul.mubr.f32.gmra.mxu0 %v299
      %v514 = vpop.f32.mrf.mxu0
      %v515 = vadd.f32 0.0, %v514
      %v516 = vpop.f32.mrf.mxu0
      %517 = vmatprep.mubr.f32.mxu0 0.0
      %518 = vmatmul.mubr.f32.gmra.mxu0 %v302
      %v519 = vpop.f32.mrf.mxu0
      %v520 = vadd.f32 0.0, %v519
      %v521 = vpop.f32.mrf.mxu0
      %522 = vmatprep.mubr.f32.mxu0 0.0
      %523 = vmatmul.mubr.f32.gmra.mxu0 %v305
      %v524 = vpop.f32.mrf.mxu0
      %v525 = vadd.f32 0.0, %v524
      %v526 = vpop.f32.mrf.mxu0
      %527 = vmatprep.mubr.f32.mxu0 0.0
      %528 = vmatmul.mubr.f32.gmra.mxu0 %v308
      %v529 = vpop.f32.mrf.mxu0
      %v530 = vadd.f32 0.0, %v529
      %v531 = vpop.f32.mrf.mxu0
      %532 = vmatprep.mubr.f32.mxu0 0.0
      %533 = vmatmul.mubr.f32.gmra.mxu0 %v311
      %v534 = vpop.f32.mrf.mxu0
      %v535 = vadd.f32 0.0, %v534
      %v536 = vpop.f32.mrf.mxu0
      %537 = vdwg.mxu0
      %v539 = vsel %vm216, %v171, 0
      %v542 = vsel %vm216, %v172, 0
      %544 = vmatprep.subr.mxu0 0.0
      %545 = vmatpush1.msra.mxu0 0.0
      %546 = vmatprep.subr.mxu0 0.0
      %547 = vmatpush1.msra.mxu0 0.0
      %548 = vmatprep.subr.mxu0 0.0
      %549 = vmatpush1.msra.mxu0 0.0
      %550 = vmatprep.subr.mxu0 0.0
      %551 = vmatpush1.msra.mxu0 0.0
      %552 = vmatprep.subr.mxu0 0.0
      %553 = vmatpush1.msra.mxu0 0.0
      %554 = vmatprep.subr.mxu0 0.0
      %555 = vmatpush1.msra.mxu0 0.0
      %556 = vmatprep.subr.mxu0 0.0
      %557 = vmatpush1.msra.mxu0 0.0
      %558 = vmatprep.subr.mxu0 0.0
      %559 = vmatpush1.msra.mxu0 0.0
      %560 = vmatprep.subr.mxu0 0.0
      %561 = vmatpush1.msra.mxu0 0.0
      %562 = vmatprep.subr.mxu0 0.0
      %563 = vmatpush1.msra.mxu0 0.0
      %564 = vmatprep.subr.mxu0 0.0
      %565 = vmatpush1.msra.mxu0 0.0
      %566 = vmatprep.subr.mxu0 0.0
      %567 = vmatpush1.msra.mxu0 0.0
      %568 = vmatprep.subr.mxu0 0.0
      %569 = vmatpush1.msra.mxu0 0.0
      %570 = vmatprep.subr.mxu0 0.0
      %571 = vmatpush1.msra.mxu0 0.0
      %572 = vmatprep.subr.mxu0 0.0
      %573 = vmatpush1.msra.mxu0 0.0
      %574 = vmatprep.subr.mxu0 0.0
      %575 = vmatpush1.msra.mxu0 %v211
      %576 = vmatprep.subr.mxu0 0.0
      %577 = vmatpush2.msra.mxu0 0.0
      %578 = vmatprep.subr.mxu0 0.0
      %579 = vmatpush2.msra.mxu0 0.0
      %580 = vmatprep.subr.mxu0 0.0
      %581 = vmatpush2.msra.mxu0 0.0
      %582 = vmatprep.subr.mxu0 0.0
      %583 = vmatpush2.msra.mxu0 0.0
      %584 = vmatprep.subr.mxu0 0.0
      %585 = vmatpush2.msra.mxu0 0.0
      %586 = vmatprep.subr.mxu0 0.0
      %587 = vmatpush2.msra.mxu0 0.0
      %588 = vmatprep.subr.mxu0 0.0
      %589 = vmatpush2.msra.mxu0 0.0
      %590 = vmatprep.subr.mxu0 0.0
      %591 = vmatpush2.msra.mxu0 0.0
      %592 = vmatprep.subr.mxu0 0.0
      %593 = vmatpush2.msra.mxu0 0.0
      %594 = vmatprep.subr.mxu0 0.0
      %595 = vmatpush2.msra.mxu0 0.0
      %596 = vmatprep.subr.mxu0 0.0
      %597 = vmatpush2.msra.mxu0 0.0
      %598 = vmatprep.subr.mxu0 0.0
      %599 = vmatpush2.msra.mxu0 0.0
      %600 = vmatprep.subr.mxu0 0.0
      %601 = vmatpush2.msra.mxu0 0.0
      %602 = vmatprep.subr.mxu0 0.0
      %603 = vmatpush2.msra.mxu0 0.0
      %604 = vmatprep.subr.mxu0 0.0
      %605 = vmatpush2.msra.mxu0 0.0
      %606 = vmatprep.subr.mxu0 0.0
      %607 = vmatpush2.msra.mxu0 0.0
      %608 = vmatprep.mubr.f32.mxu0 0.0
      %609 = vmatmul.mubr.f32.gmra.mxu0 %v539
      %v610 = vpop.f32.mrf.mxu0
      %v611 = vadd.f32 %v380, %v610
      %v612 = vpop.f32.mrf.mxu0
      %613 = vmatprep.mubr.f32.mxu0 0.0
      %614 = vmatmul.mubr.f32.gmra.mxu0 %v542
      %v615 = vpop.f32.mrf.mxu0
      %v616 = vadd.f32 %v385, %v615
      %v617 = vpop.f32.mrf.mxu0
      %618 = vmatprep.mubr.f32.mxu0 0.0
      %619 = vmatmul.mubr.f32.gmra.mxu0 %v218
      %v620 = vpop.f32.mrf.mxu0
      %v621 = vadd.f32 %v390, %v620
      %v622 = vpop.f32.mrf.mxu0
      %623 = vmatprep.mubr.f32.mxu0 0.0
      %624 = vmatmul.mubr.f32.gmra.mxu0 %v221
      %v625 = vpop.f32.mrf.mxu0
      %v626 = vadd.f32 %v395, %v625
      %v627 = vpop.f32.mrf.mxu0
      %628 = vmatprep.mubr.f32.mxu0 0.0
      %629 = vmatmul.mubr.f32.gmra.mxu0 %v224
      %v630 = vpop.f32.mrf.mxu0
      %v631 = vadd.f32 %v400, %v630
      %v632 = vpop.f32.mrf.mxu0
      %633 = vmatprep.mubr.f32.mxu0 0.0
      %634 = vmatmul.mubr.f32.gmra.mxu0 %v227
      %v635 = vpop.f32.mrf.mxu0
      %v636 = vadd.f32 %v405, %v635
      %v637 = vpop.f32.mrf.mxu0
      %638 = vmatprep.mubr.f32.mxu0 0.0
      %639 = vmatmul.mubr.f32.gmra.mxu0 %v230
      %v640 = vpop.f32.mrf.mxu0
      %v641 = vadd.f32 %v410, %v640
      %v642 = vpop.f32.mrf.mxu0
      %643 = vmatprep.mubr.f32.mxu0 0.0
      %644 = vmatmul.mubr.f32.gmra.mxu0 %v233
      %v645 = vpop.f32.mrf.mxu0
      %v646 = vadd.f32 %v415, %v645
      %v647 = vpop.f32.mrf.mxu0
      %648 = vmatprep.mubr.f32.mxu0 0.0
      %649 = vmatmul.mubr.f32.gmra.mxu0 %v236
      %v650 = vpop.f32.mrf.mxu0
      %v651 = vadd.f32 %v420, %v650
      %v652 = vpop.f32.mrf.mxu0
      %653 = vmatprep.mubr.f32.mxu0 0.0
      %654 = vmatmul.mubr.f32.gmra.mxu0 %v239
      %v655 = vpop.f32.mrf.mxu0
      %v656 = vadd.f32 %v425, %v655
      %v657 = vpop.f32.mrf.mxu0
      %658 = vmatprep.mubr.f32.mxu0 0.0
      %659 = vmatmul.mubr.f32.gmra.mxu0 %v242
      %v660 = vpop.f32.mrf.mxu0
      %v661 = vadd.f32 %v430, %v660
      %v662 = vpop.f32.mrf.mxu0
      %663 = vmatprep.mubr.f32.mxu0 0.0
      %664 = vmatmul.mubr.f32.gmra.mxu0 %v245
      %v665 = vpop.f32.mrf.mxu0
      %v666 = vadd.f32 %v435, %v665
      %v667 = vpop.f32.mrf.mxu0
      %668 = vmatprep.mubr.f32.mxu0 0.0
      %669 = vmatmul.mubr.f32.gmra.mxu0 %v248
      %v670 = vpop.f32.mrf.mxu0
      %v671 = vadd.f32 %v440, %v670
      %v672 = vpop.f32.mrf.mxu0
      %673 = vmatprep.mubr.f32.mxu0 0.0
      %674 = vmatmul.mubr.f32.gmra.mxu0 %v251
      %v675 = vpop.f32.mrf.mxu0
      %v676 = vadd.f32 %v445, %v675
      %v677 = vpop.f32.mrf.mxu0
      %678 = vmatprep.mubr.f32.mxu0 0.0
      %679 = vmatmul.mubr.f32.gmra.mxu0 %v254
      %v680 = vpop.f32.mrf.mxu0
      %v681 = vadd.f32 %v450, %v680
      %v682 = vpop.f32.mrf.mxu0
      %683 = vmatprep.mubr.f32.mxu0 0.0
      %684 = vmatmul.mubr.f32.gmra.mxu0 %v257
      %v685 = vpop.f32.mrf.mxu0
      %v686 = vadd.f32 %v455, %v685
      %v687 = vpop.f32.mrf.mxu0
      %688 = vmatprep.mubr.f32.mxu0 0.0
      %689 = vmatmul.mubr.f32.gmra.mxu0 %v260
      %v690 = vpop.f32.mrf.mxu0
      %v691 = vadd.f32 %v460, %v690
      %v692 = vpop.f32.mrf.mxu0
      %693 = vmatprep.mubr.f32.mxu0 0.0
      %694 = vmatmul.mubr.f32.gmra.mxu0 %v263
      %v695 = vpop.f32.mrf.mxu0
      %v696 = vadd.f32 %v465, %v695
      %v697 = vpop.f32.mrf.mxu0
      %698 = vmatprep.mubr.f32.mxu0 0.0
      %699 = vmatmul.mubr.f32.gmra.mxu0 %v266
      %v700 = vpop.f32.mrf.mxu0
      %v701 = vadd.f32 %v470, %v700
      %v702 = vpop.f32.mrf.mxu0
      %703 = vmatprep.mubr.f32.mxu0 0.0
      %704 = vmatmul.mubr.f32.gmra.mxu0 %v269
      %v705 = vpop.f32.mrf.mxu0
      %v706 = vadd.f32 %v475, %v705
      %v707 = vpop.f32.mrf.mxu0
      %708 = vmatprep.mubr.f32.mxu0 0.0
      %709 = vmatmul.mubr.f32.gmra.mxu0 %v272
      %v710 = vpop.f32.mrf.mxu0
      %v711 = vadd.f32 %v480, %v710
      %v712 = vpop.f32.mrf.mxu0
      %713 = vmatprep.mubr.f32.mxu0 0.0
      %714 = vmatmul.mubr.f32.gmra.mxu0 %v275
      %v715 = vpop.f32.mrf.mxu0
      %v716 = vadd.f32 %v485, %v715
      %v717 = vpop.f32.mrf.mxu0
      %718 = vmatprep.mubr.f32.mxu0 0.0
      %719 = vmatmul.mubr.f32.gmra.mxu0 %v278
      %v720 = vpop.f32.mrf.mxu0
      %v721 = vadd.f32 %v490, %v720
      %v722 = vpop.f32.mrf.mxu0
      %723 = vmatprep.mubr.f32.mxu0 0.0
      %724 = vmatmul.mubr.f32.gmra.mxu0 %v281
      %v725 = vpop.f32.mrf.mxu0
      %v726 = vadd.f32 %v495, %v725
      %v727 = vpop.f32.mrf.mxu0
      %728 = vmatprep.mubr.f32.mxu0 0.0
      %729 = vmatmul.mubr.f32.gmra.mxu0 %v284
      %v730 = vpop.f32.mrf.mxu0
      %v731 = vadd.f32 %v500, %v730
      %v732 = vpop.f32.mrf.mxu0
      %733 = vmatprep.mubr.f32.mxu0 0.0
      %734 = vmatmul.mubr.f32.gmra.mxu0 %v287
      %v735 = vpop.f32.mrf.mxu0
      %v736 = vadd.f32 %v505, %v735
      %v737 = vpop.f32.mrf.mxu0
      %738 = vmatprep.mubr.f32.mxu0 0.0
      %739 = vmatmul.mubr.f32.gmra.mxu0 %v290
      %v740 = vpop.f32.mrf.mxu0
      %v741 = vadd.f32 %v510, %v740
      %v742 = vpop.f32.mrf.mxu0
      %743 = vmatprep.mubr.f32.mxu0 0.0
      %744 = vmatmul.mubr.f32.gmra.mxu0 %v293
      %v745 = vpop.f32.mrf.mxu0
      %v746 = vadd.f32 %v515, %v745
      %v747 = vpop.f32.mrf.mxu0
      %748 = vmatprep.mubr.f32.mxu0 0.0
      %749 = vmatmul.mubr.f32.gmra.mxu0 %v296
      %v750 = vpop.f32.mrf.mxu0
      %v751 = vadd.f32 %v520, %v750
      %v752 = vpop.f32.mrf.mxu0
      %753 = vmatprep.mubr.f32.mxu0 0.0
      %754 = vmatmul.mubr.f32.gmra.mxu0 %v299
      %v755 = vpop.f32.mrf.mxu0
      %v756 = vadd.f32 %v525, %v755
      %v757 = vpop.f32.mrf.mxu0
      %758 = vmatprep.mubr.f32.mxu0 0.0
      %759 = vmatmul.mubr.f32.gmra.mxu0 %v302
      %v760 = vpop.f32.mrf.mxu0
      %v761 = vadd.f32 %v530, %v760
      %v762 = vpop.f32.mrf.mxu0
      %763 = vmatprep.mubr.f32.mxu0 0.0
      %764 = vmatmul.mubr.f32.gmra.mxu0 %v305
      %v765 = vpop.f32.mrf.mxu0
      %v766 = vadd.f32 %v535, %v765
      %v767 = vpop.f32.mrf.mxu0
      %768 = vdwg.mxu0
      %v770 = vsel %vm216, %v205, 0
      %v773 = vsel %vm216, %v206, 0
      %775 = vmatprep.subr.mxu0 0.0
      %776 = vmatpush1.msra.mxu0 0.0
      %777 = vmatprep.subr.mxu0 0.0
      %778 = vmatpush1.msra.mxu0 0.0
      %779 = vmatprep.subr.mxu0 0.0
      %780 = vmatpush1.msra.mxu0 0.0
      %781 = vmatprep.subr.mxu0 0.0
      %782 = vmatpush1.msra.mxu0 0.0
      %783 = vmatprep.subr.mxu0 0.0
      %784 = vmatpush1.msra.mxu0 0.0
      %785 = vmatprep.subr.mxu0 0.0
      %786 = vmatpush1.msra.mxu0 0.0
      %787 = vmatprep.subr.mxu0 0.0
      %788 = vmatpush1.msra.mxu0 0.0
      %789 = vmatprep.subr.mxu0 0.0
      %790 = vmatpush1.msra.mxu0 0.0
      %791 = vmatprep.subr.mxu0 0.0
      %792 = vmatpush1.msra.mxu0 0.0
      %793 = vmatprep.subr.mxu0 0.0
      %794 = vmatpush1.msra.mxu0 0.0
      %795 = vmatprep.subr.mxu0 0.0
      %796 = vmatpush1.msra.mxu0 0.0
      %797 = vmatprep.subr.mxu0 0.0
      %798 = vmatpush1.msra.mxu0 0.0
      %799 = vmatprep.subr.mxu0 0.0
      %800 = vmatpush1.msra.mxu0 0.0
      %801 = vmatprep.subr.mxu0 0.0
      %802 = vmatpush1.msra.mxu0 0.0
      %803 = vmatprep.subr.mxu0 0.0
      %804 = vmatpush1.msra.mxu0 0.0
      %805 = vmatprep.subr.mxu0 0.0
      %806 = vmatpush1.msra.mxu0 %v213
      %807 = vmatprep.subr.mxu0 0.0
      %808 = vmatpush2.msra.mxu0 0.0
      %809 = vmatprep.subr.mxu0 0.0
      %810 = vmatpush2.msra.mxu0 0.0
      %811 = vmatprep.subr.mxu0 0.0
      %812 = vmatpush2.msra.mxu0 0.0
      %813 = vmatprep.subr.mxu0 0.0
      %814 = vmatpush2.msra.mxu0 0.0
      %815 = vmatprep.subr.mxu0 0.0
      %816 = vmatpush2.msra.mxu0 0.0
      %817 = vmatprep.subr.mxu0 0.0
      %818 = vmatpush2.msra.mxu0 0.0
      %819 = vmatprep.subr.mxu0 0.0
      %820 = vmatpush2.msra.mxu0 0.0
      %821 = vmatprep.subr.mxu0 0.0
      %822 = vmatpush2.msra.mxu0 0.0
      %823 = vmatprep.subr.mxu0 0.0
      %824 = vmatpush2.msra.mxu0 0.0
      %825 = vmatprep.subr.mxu0 0.0
      %826 = vmatpush2.msra.mxu0 0.0
      %827 = vmatprep.subr.mxu0 0.0
      %828 = vmatpush2.msra.mxu0 0.0
      %829 = vmatprep.subr.mxu0 0.0
      %830 = vmatpush2.msra.mxu0 0.0
      %831 = vmatprep.subr.mxu0 0.0
      %832 = vmatpush2.msra.mxu0 0.0
      %833 = vmatprep.subr.mxu0 0.0
      %834 = vmatpush2.msra.mxu0 0.0
      %835 = vmatprep.subr.mxu0 0.0
      %836 = vmatpush2.msra.mxu0 0.0
      %837 = vmatprep.subr.mxu0 0.0
      %838 = vmatpush2.msra.mxu0 0.0
      %839 = vmatprep.mubr.f32.mxu0 0.0
      %840 = vmatmul.mubr.f32.gmra.mxu0 %v224
      %v841 = vpop.f32.mrf.mxu0
      %v842 = vadd.f32 0.0, %v841
      %v843 = vpop.f32.mrf.mxu0
      %844 = vmatprep.mubr.f32.mxu0 0.0
      %845 = vmatmul.mubr.f32.gmra.mxu0 %v227
      %v846 = vpop.f32.mrf.mxu0
      %v847 = vadd.f32 0.0, %v846
      %v848 = vpop.f32.mrf.mxu0
      %849 = vmatprep.mubr.f32.mxu0 0.0
      %850 = vmatmul.mubr.f32.gmra.mxu0 %v230
      %v851 = vpop.f32.mrf.mxu0
      %v852 = vadd.f32 0.0, %v851
      %v853 = vpop.f32.mrf.mxu0
      %854 = vmatprep.mubr.f32.mxu0 0.0
      %855 = vmatmul.mubr.f32.gmra.mxu0 %v233
      %v856 = vpop.f32.mrf.mxu0
      %v857 = vadd.f32 0.0, %v856
      %v858 = vpop.f32.mrf.mxu0
      %859 = vmatprep.mubr.f32.mxu0 0.0
      %860 = vmatmul.mubr.f32.gmra.mxu0 %v236
      %v861 = vpop.f32.mrf.mxu0
      %v862 = vadd.f32 0.0, %v861
      %v863 = vpop.f32.mrf.mxu0
      %864 = vmatprep.mubr.f32.mxu0 0.0
      %865 = vmatmul.mubr.f32.gmra.mxu0 %v239
      %v866 = vpop.f32.mrf.mxu0
      %v867 = vadd.f32 0.0, %v866
      %v868 = vpop.f32.mrf.mxu0
      %869 = vmatprep.mubr.f32.mxu0 0.0
      %870 = vmatmul.mubr.f32.gmra.mxu0 %v242
      %v871 = vpop.f32.mrf.mxu0
      %v872 = vadd.f32 0.0, %v871
      %v873 = vpop.f32.mrf.mxu0
      %874 = vmatprep.mubr.f32.mxu0 0.0
      %875 = vmatmul.mubr.f32.gmra.mxu0 %v245
      %v876 = vpop.f32.mrf.mxu0
      %v877 = vadd.f32 0.0, %v876
      %v878 = vpop.f32.mrf.mxu0
      %879 = vmatprep.mubr.f32.mxu0 0.0
      %880 = vmatmul.mubr.f32.gmra.mxu0 %v248
      %v881 = vpop.f32.mrf.mxu0
      %v882 = vadd.f32 0.0, %v881
      %v883 = vpop.f32.mrf.mxu0
      %884 = vmatprep.mubr.f32.mxu0 0.0
      %885 = vmatmul.mubr.f32.gmra.mxu0 %v251
      %v886 = vpop.f32.mrf.mxu0
      %v887 = vadd.f32 0.0, %v886
      %v888 = vpop.f32.mrf.mxu0
      %889 = vmatprep.mubr.f32.mxu0 0.0
      %890 = vmatmul.mubr.f32.gmra.mxu0 %v254
      %v891 = vpop.f32.mrf.mxu0
      %v892 = vadd.f32 0.0, %v891
      %v893 = vpop.f32.mrf.mxu0
      %894 = vmatprep.mubr.f32.mxu0 0.0
      %895 = vmatmul.mubr.f32.gmra.mxu0 %v257
      %v896 = vpop.f32.mrf.mxu0
      %v897 = vadd.f32 0.0, %v896
      %v898 = vpop.f32.mrf.mxu0
      %899 = vmatprep.mubr.f32.mxu0 0.0
      %900 = vmatmul.mubr.f32.gmra.mxu0 %v260
      %v901 = vpop.f32.mrf.mxu0
      %v902 = vadd.f32 0.0, %v901
      %v903 = vpop.f32.mrf.mxu0
      %904 = vmatprep.mubr.f32.mxu0 0.0
      %905 = vmatmul.mubr.f32.gmra.mxu0 %v263
      %v906 = vpop.f32.mrf.mxu0
      %v907 = vadd.f32 0.0, %v906
      %v908 = vpop.f32.mrf.mxu0
      %909 = vmatprep.mubr.f32.mxu0 0.0
      %910 = vmatmul.mubr.f32.gmra.mxu0 %v266
      %v911 = vpop.f32.mrf.mxu0
      %v912 = vadd.f32 0.0, %v911
      %v913 = vpop.f32.mrf.mxu0
      %914 = vmatprep.mubr.f32.mxu0 0.0
      %915 = vmatmul.mubr.f32.gmra.mxu0 %v269
      %v916 = vpop.f32.mrf.mxu0
      %v917 = vadd.f32 0.0, %v916
      %v918 = vpop.f32.mrf.mxu0
      %919 = vmatprep.mubr.f32.mxu0 0.0
      %920 = vmatmul.mubr.f32.gmra.mxu0 %v272
      %v921 = vpop.f32.mrf.mxu0
      %v922 = vadd.f32 0.0, %v921
      %v923 = vpop.f32.mrf.mxu0
      %924 = vmatprep.mubr.f32.mxu0 0.0
      %925 = vmatmul.mubr.f32.gmra.mxu0 %v275
      %v926 = vpop.f32.mrf.mxu0
      %v927 = vadd.f32 0.0, %v926
      %v928 = vpop.f32.mrf.mxu0
      %929 = vmatprep.mubr.f32.mxu0 0.0
      %930 = vmatmul.mubr.f32.gmra.mxu0 %v278
      %v931 = vpop.f32.mrf.mxu0
      %v932 = vadd.f32 0.0, %v931
      %v933 = vpop.f32.mrf.mxu0
      %934 = vmatprep.mubr.f32.mxu0 0.0
      %935 = vmatmul.mubr.f32.gmra.mxu0 %v281
      %v936 = vpop.f32.mrf.mxu0
      %v937 = vadd.f32 0.0, %v936
      %v938 = vpop.f32.mrf.mxu0
      %939 = vmatprep.mubr.f32.mxu0 0.0
      %940 = vmatmul.mubr.f32.gmra.mxu0 %v284
      %v941 = vpop.f32.mrf.mxu0
      %v942 = vadd.f32 0.0, %v941
      %v943 = vpop.f32.mrf.mxu0
      %944 = vmatprep.mubr.f32.mxu0 0.0
      %945 = vmatmul.mubr.f32.gmra.mxu0 %v287
      %v946 = vpop.f32.mrf.mxu0
      %v947 = vadd.f32 0.0, %v946
      %v948 = vpop.f32.mrf.mxu0
      %949 = vmatprep.mubr.f32.mxu0 0.0
      %950 = vmatmul.mubr.f32.gmra.mxu0 %v290
      %v951 = vpop.f32.mrf.mxu0
      %v952 = vadd.f32 0.0, %v951
      %v953 = vpop.f32.mrf.mxu0
      %954 = vmatprep.mubr.f32.mxu0 0.0
      %955 = vmatmul.mubr.f32.gmra.mxu0 %v293
      %v956 = vpop.f32.mrf.mxu0
      %v957 = vadd.f32 0.0, %v956
      %v958 = vpop.f32.mrf.mxu0
      %959 = vmatprep.mubr.f32.mxu0 0.0
      %960 = vmatmul.mubr.f32.gmra.mxu0 %v296
      %v961 = vpop.f32.mrf.mxu0
      %v962 = vadd.f32 0.0, %v961
      %v963 = vpop.f32.mrf.mxu0
      %964 = vmatprep.mubr.f32.mxu0 0.0
      %965 = vmatmul.mubr.f32.gmra.mxu0 %v299
      %v966 = vpop.f32.mrf.mxu0
      %v967 = vadd.f32 0.0, %v966
      %v968 = vpop.f32.mrf.mxu0
      %969 = vmatprep.mubr.f32.mxu0 0.0
      %970 = vmatmul.mubr.f32.gmra.mxu0 %v302
      %v971 = vpop.f32.mrf.mxu0
      %v972 = vadd.f32 0.0, %v971
      %v973 = vpop.f32.mrf.mxu0
      %974 = vmatprep.mubr.f32.mxu0 0.0
      %975 = vmatmul.mubr.f32.gmra.mxu0 %v305
      %v976 = vpop.f32.mrf.mxu0
      %v977 = vadd.f32 0.0, %v976
      %v978 = vpop.f32.mrf.mxu0
      %979 = vmatprep.mubr.f32.mxu0 0.0
      %980 = vmatmul.mubr.f32.gmra.mxu0 %v308
      %v981 = vpop.f32.mrf.mxu0
      %v982 = vadd.f32 0.0, %v981
      %v983 = vpop.f32.mrf.mxu0
      %984 = vmatprep.mubr.f32.mxu0 0.0
      %985 = vmatmul.mubr.f32.gmra.mxu0 %v311
      %v986 = vpop.f32.mrf.mxu0
      %v987 = vadd.f32 0.0, %v986
      %v988 = vpop.f32.mrf.mxu0
      %989 = vmatprep.mubr.f32.mxu0 0.0
      %990 = vmatmul.mubr.f32.gmra.mxu0 %v770
      %v991 = vpop.f32.mrf.mxu0
      %v992 = vadd.f32 0.0, %v991
      %v993 = vpop.f32.mrf.mxu0
      %994 = vmatprep.mubr.f32.mxu0 0.0
      %995 = vmatmul.mubr.f32.gmra.mxu0 %v773
      %v996 = vpop.f32.mrf.mxu0
      %v997 = vadd.f32 0.0, %v996
      %v998 = vpop.f32.mrf.mxu0
      %999 = vdwg.mxu0
      %v1000 = vadd.f32 %v611, %v842
      %v1001 = vadd.f32 %v616, %v847
      %v1002 = vadd.f32 %v621, %v852
      %v1003 = vadd.f32 %v626, %v857
      %v1004 = vadd.f32 %v631, %v862
      %v1005 = vadd.f32 %v636, %v867
      %v1006 = vadd.f32 %v641, %v872
      %v1007 = vadd.f32 %v646, %v877
      %v1008 = vadd.f32 %v651, %v882
      %v1009 = vadd.f32 %v656, %v887
      %v1010 = vadd.f32 %v661, %v892
      %v1011 = vadd.f32 %v666, %v897
      %v1012 = vadd.f32 %v671, %v902
      %v1013 = vadd.f32 %v676, %v907
      %v1014 = vadd.f32 %v681, %v912
      %v1015 = vadd.f32 %v686, %v917
      %v1016 = vadd.f32 %v691, %v922
      %v1017 = vadd.f32 %v696, %v927
      %v1018 = vadd.f32 %v701, %v932
      %v1019 = vadd.f32 %v706, %v937
      %v1020 = vadd.f32 %v711, %v942
      %v1021 = vadd.f32 %v716, %v947
      %v1022 = vadd.f32 %v721, %v952
      %v1023 = vadd.f32 %v726, %v957
      %v1024 = vadd.f32 %v731, %v962
      %v1025 = vadd.f32 %v736, %v967
      %v1026 = vadd.f32 %v741, %v972
      %v1027 = vadd.f32 %v746, %v977
      %v1028 = vadd.f32 %v751, %v982
      %v1029 = vadd.f32 %v756, %v987
      %v1030 = vadd.f32 %v761, %v992
      %v1031 = vadd.f32 %v766, %v997
      %v1033 = vsel %vm216, %v207, 0
      %v1036 = vsel %vm216, %v208, 0
      %1038 = vmatprep.subr.mxu0 0.0
      %1039 = vmatpush1.msra.mxu0 0.0
      %1040 = vmatprep.subr.mxu0 0.0
      %1041 = vmatpush1.msra.mxu0 0.0
      %1042 = vmatprep.subr.mxu0 0.0
      %1043 = vmatpush1.msra.mxu0 0.0
      %1044 = vmatprep.subr.mxu0 0.0
      %1045 = vmatpush1.msra.mxu0 0.0
      %1046 = vmatprep.subr.mxu0 0.0
      %1047 = vmatpush1.msra.mxu0 0.0
      %1048 = vmatprep.subr.mxu0 0.0
      %1049 = vmatpush1.msra.mxu0 0.0
      %1050 = vmatprep.subr.mxu0 0.0
      %1051 = vmatpush1.msra.mxu0 0.0
      %1052 = vmatprep.subr.mxu0 0.0
      %1053 = vmatpush1.msra.mxu0 0.0
      %1054 = vmatprep.subr.mxu0 0.0
      %1055 = vmatpush1.msra.mxu0 0.0
      %1056 = vmatprep.subr.mxu0 0.0
      %1057 = vmatpush1.msra.mxu0 0.0
      %1058 = vmatprep.subr.mxu0 0.0
      %1059 = vmatpush1.msra.mxu0 0.0
      %1060 = vmatprep.subr.mxu0 0.0
      %1061 = vmatpush1.msra.mxu0 0.0
      %1062 = vmatprep.subr.mxu0 0.0
      %1063 = vmatpush1.msra.mxu0 0.0
      %1064 = vmatprep.subr.mxu0 0.0
      %1065 = vmatpush1.msra.mxu0 0.0
      %1066 = vmatprep.subr.mxu0 0.0
      %1067 = vmatpush1.msra.mxu0 0.0
      %1068 = vmatprep.subr.mxu0 0.0
      %1069 = vmatpush1.msra.mxu0 %v214
      %1070 = vmatprep.subr.mxu0 0.0
      %1071 = vmatpush2.msra.mxu0 0.0
      %1072 = vmatprep.subr.mxu0 0.0
      %1073 = vmatpush2.msra.mxu0 0.0
      %1074 = vmatprep.subr.mxu0 0.0
      %1075 = vmatpush2.msra.mxu0 0.0
      %1076 = vmatprep.subr.mxu0 0.0
      %1077 = vmatpush2.msra.mxu0 0.0
      %1078 = vmatprep.subr.mxu0 0.0
      %1079 = vmatpush2.msra.mxu0 0.0
      %1080 = vmatprep.subr.mxu0 0.0
      %1081 = vmatpush2.msra.mxu0 0.0
      %1082 = vmatprep.subr.mxu0 0.0
      %1083 = vmatpush2.msra.mxu0 0.0
      %1084 = vmatprep.subr.mxu0 0.0
      %1085 = vmatpush2.msra.mxu0 0.0
      %1086 = vmatprep.subr.mxu0 0.0
      %1087 = vmatpush2.msra.mxu0 0.0
      %1088 = vmatprep.subr.mxu0 0.0
      %1089 = vmatpush2.msra.mxu0 0.0
      %1090 = vmatprep.subr.mxu0 0.0
      %1091 = vmatpush2.msra.mxu0 0.0
      %1092 = vmatprep.subr.mxu0 0.0
      %1093 = vmatpush2.msra.mxu0 0.0
      %1094 = vmatprep.subr.mxu0 0.0
      %1095 = vmatpush2.msra.mxu0 0.0
      %1096 = vmatprep.subr.mxu0 0.0
      %1097 = vmatpush2.msra.mxu0 0.0
      %1098 = vmatprep.subr.mxu0 0.0
      %1099 = vmatpush2.msra.mxu0 0.0
      %1100 = vmatprep.subr.mxu0 0.0
      %1101 = vmatpush2.msra.mxu0 0.0
      %1102 = vmatprep.mubr.f32.mxu0 0.0
      %1103 = vmatmul.mubr.f32.gmra.mxu0 %v230
      %v1104 = vpop.f32.mrf.mxu0
      %v1105 = vadd.f32 0.0, %v1104
      %v1106 = vpop.f32.mrf.mxu0
      %1107 = vmatprep.mubr.f32.mxu0 0.0
      %1108 = vmatmul.mubr.f32.gmra.mxu0 %v233
      %v1109 = vpop.f32.mrf.mxu0
      %v1110 = vadd.f32 0.0, %v1109
      %v1111 = vpop.f32.mrf.mxu0
      %1112 = vmatprep.mubr.f32.mxu0 0.0
      %1113 = vmatmul.mubr.f32.gmra.mxu0 %v236
      %v1114 = vpop.f32.mrf.mxu0
      %v1115 = vadd.f32 0.0, %v1114
      %v1116 = vpop.f32.mrf.mxu0
      %1117 = vmatprep.mubr.f32.mxu0 0.0
      %1118 = vmatmul.mubr.f32.gmra.mxu0 %v239
      %v1119 = vpop.f32.mrf.mxu0
      %v1120 = vadd.f32 0.0, %v1119
      %v1121 = vpop.f32.mrf.mxu0
      %1122 = vmatprep.mubr.f32.mxu0 0.0
      %1123 = vmatmul.mubr.f32.gmra.mxu0 %v242
      %v1124 = vpop.f32.mrf.mxu0
      %v1125 = vadd.f32 0.0, %v1124
      %v1126 = vpop.f32.mrf.mxu0
      %1127 = vmatprep.mubr.f32.mxu0 0.0
      %1128 = vmatmul.mubr.f32.gmra.mxu0 %v245
      %v1129 = vpop.f32.mrf.mxu0
      %v1130 = vadd.f32 0.0, %v1129
      %v1131 = vpop.f32.mrf.mxu0
      %1132 = vmatprep.mubr.f32.mxu0 0.0
      %1133 = vmatmul.mubr.f32.gmra.mxu0 %v248
      %v1134 = vpop.f32.mrf.mxu0
      %v1135 = vadd.f32 0.0, %v1134
      %v1136 = vpop.f32.mrf.mxu0
      %1137 = vmatprep.mubr.f32.mxu0 0.0
      %1138 = vmatmul.mubr.f32.gmra.mxu0 %v251
      %v1139 = vpop.f32.mrf.mxu0
      %v1140 = vadd.f32 0.0, %v1139
      %v1141 = vpop.f32.mrf.mxu0
      %1142 = vmatprep.mubr.f32.mxu0 0.0
      %1143 = vmatmul.mubr.f32.gmra.mxu0 %v254
      %v1144 = vpop.f32.mrf.mxu0
      %v1145 = vadd.f32 0.0, %v1144
      %v1146 = vpop.f32.mrf.mxu0
      %1147 = vmatprep.mubr.f32.mxu0 0.0
      %1148 = vmatmul.mubr.f32.gmra.mxu0 %v257
      %v1149 = vpop.f32.mrf.mxu0
      %v1150 = vadd.f32 0.0, %v1149
      %v1151 = vpop.f32.mrf.mxu0
      %1152 = vmatprep.mubr.f32.mxu0 0.0
      %1153 = vmatmul.mubr.f32.gmra.mxu0 %v260
      %v1154 = vpop.f32.mrf.mxu0
      %v1155 = vadd.f32 0.0, %v1154
      %v1156 = vpop.f32.mrf.mxu0
      %1157 = vmatprep.mubr.f32.mxu0 0.0
      %1158 = vmatmul.mubr.f32.gmra.mxu0 %v263
      %v1159 = vpop.f32.mrf.mxu0
      %v1160 = vadd.f32 0.0, %v1159
      %v1161 = vpop.f32.mrf.mxu0
      %1162 = vmatprep.mubr.f32.mxu0 0.0
      %1163 = vmatmul.mubr.f32.gmra.mxu0 %v266
      %v1164 = vpop.f32.mrf.mxu0
      %v1165 = vadd.f32 0.0, %v1164
      %v1166 = vpop.f32.mrf.mxu0
      %1167 = vmatprep.mubr.f32.mxu0 0.0
      %1168 = vmatmul.mubr.f32.gmra.mxu0 %v269
      %v1169 = vpop.f32.mrf.mxu0
      %v1170 = vadd.f32 0.0, %v1169
      %v1171 = vpop.f32.mrf.mxu0
      %1172 = vmatprep.mubr.f32.mxu0 0.0
      %1173 = vmatmul.mubr.f32.gmra.mxu0 %v272
      %v1174 = vpop.f32.mrf.mxu0
      %v1175 = vadd.f32 0.0, %v1174
      %v1176 = vpop.f32.mrf.mxu0
      %1177 = vmatprep.mubr.f32.mxu0 0.0
      %1178 = vmatmul.mubr.f32.gmra.mxu0 %v275
      %v1179 = vpop.f32.mrf.mxu0
      %v1180 = vadd.f32 0.0, %v1179
      %v1181 = vpop.f32.mrf.mxu0
      %1182 = vmatprep.mubr.f32.mxu0 0.0
      %1183 = vmatmul.mubr.f32.gmra.mxu0 %v278
      %v1184 = vpop.f32.mrf.mxu0
      %v1185 = vadd.f32 0.0, %v1184
      %v1186 = vpop.f32.mrf.mxu0
      %1187 = vmatprep.mubr.f32.mxu0 0.0
      %1188 = vmatmul.mubr.f32.gmra.mxu0 %v281
      %v1189 = vpop.f32.mrf.mxu0
      %v1190 = vadd.f32 0.0, %v1189
      %v1191 = vpop.f32.mrf.mxu0
      %1192 = vmatprep.mubr.f32.mxu0 0.0
      %1193 = vmatmul.mubr.f32.gmra.mxu0 %v284
      %v1194 = vpop.f32.mrf.mxu0
      %v1195 = vadd.f32 0.0, %v1194
      %v1196 = vpop.f32.mrf.mxu0
      %1197 = vmatprep.mubr.f32.mxu0 0.0
      %1198 = vmatmul.mubr.f32.gmra.mxu0 %v287
      %v1199 = vpop.f32.mrf.mxu0
      %v1200 = vadd.f32 0.0, %v1199
      %v1201 = vpop.f32.mrf.mxu0
      %1202 = vmatprep.mubr.f32.mxu0 0.0
      %1203 = vmatmul.mubr.f32.gmra.mxu0 %v290
      %v1204 = vpop.f32.mrf.mxu0
      %v1205 = vadd.f32 0.0, %v1204
      %v1206 = vpop.f32.mrf.mxu0
      %1207 = vmatprep.mubr.f32.mxu0 0.0
      %1208 = vmatmul.mubr.f32.gmra.mxu0 %v293
      %v1209 = vpop.f32.mrf.mxu0
      %v1210 = vadd.f32 0.0, %v1209
      %v1211 = vpop.f32.mrf.mxu0
      %1212 = vmatprep.mubr.f32.mxu0 0.0
      %1213 = vmatmul.mubr.f32.gmra.mxu0 %v296
      %v1214 = vpop.f32.mrf.mxu0
      %v1215 = vadd.f32 0.0, %v1214
      %v1216 = vpop.f32.mrf.mxu0
      %1217 = vmatprep.mubr.f32.mxu0 0.0
      %1218 = vmatmul.mubr.f32.gmra.mxu0 %v299
      %v1219 = vpop.f32.mrf.mxu0
      %v1220 = vadd.f32 0.0, %v1219
      %v1221 = vpop.f32.mrf.mxu0
      %1222 = vmatprep.mubr.f32.mxu0 0.0
      %1223 = vmatmul.mubr.f32.gmra.mxu0 %v302
      %v1224 = vpop.f32.mrf.mxu0
      %v1225 = vadd.f32 0.0, %v1224
      %v1226 = vpop.f32.mrf.mxu0
      %1227 = vmatprep.mubr.f32.mxu0 0.0
      %1228 = vmatmul.mubr.f32.gmra.mxu0 %v305
      %v1229 = vpop.f32.mrf.mxu0
      %v1230 = vadd.f32 0.0, %v1229
      %v1231 = vpop.f32.mrf.mxu0
      %1232 = vmatprep.mubr.f32.mxu0 0.0
      %1233 = vmatmul.mubr.f32.gmra.mxu0 %v308
      %v1234 = vpop.f32.mrf.mxu0
      %v1235 = vadd.f32 0.0, %v1234
      %v1236 = vpop.f32.mrf.mxu0
      %1237 = vmatprep.mubr.f32.mxu0 0.0
      %1238 = vmatmul.mubr.f32.gmra.mxu0 %v311
      %v1239 = vpop.f32.mrf.mxu0
      %v1240 = vadd.f32 0.0, %v1239
      %v1241 = vpop.f32.mrf.mxu0
      %1242 = vmatprep.mubr.f32.mxu0 0.0
      %1243 = vmatmul.mubr.f32.gmra.mxu0 %v770
      %v1244 = vpop.f32.mrf.mxu0
      %v1245 = vadd.f32 0.0, %v1244
      %v1246 = vpop.f32.mrf.mxu0
      %1247 = vmatprep.mubr.f32.mxu0 0.0
      %1248 = vmatmul.mubr.f32.gmra.mxu0 %v773
      %v1249 = vpop.f32.mrf.mxu0
      %v1250 = vadd.f32 0.0, %v1249
      %v1251 = vpop.f32.mrf.mxu0
      %1252 = vmatprep.mubr.f32.mxu0 0.0
      %1253 = vmatmul.mubr.f32.gmra.mxu0 %v1033
      %v1254 = vpop.f32.mrf.mxu0
      %v1255 = vadd.f32 0.0, %v1254
      %v1256 = vpop.f32.mrf.mxu0
      %1257 = vmatprep.mubr.f32.mxu0 0.0
      %1258 = vmatmul.mubr.f32.gmra.mxu0 %v1036
      %v1259 = vpop.f32.mrf.mxu0
      %v1260 = vadd.f32 0.0, %v1259
      %v1261 = vpop.f32.mrf.mxu0
      %1262 = vdwg.mxu0
      %v1263 = vadd.f32 %v1000, %v1105
      %v1264 = vadd.f32 %v1001, %v1110
      %v1265 = vadd.f32 %v1002, %v1115
      %v1266 = vadd.f32 %v1003, %v1120
      %v1267 = vadd.f32 %v1004, %v1125
      %v1268 = vadd.f32 %v1005, %v1130
      %v1269 = vadd.f32 %v1006, %v1135
      %v1270 = vadd.f32 %v1007, %v1140
      %v1271 = vadd.f32 %v1008, %v1145
      %v1272 = vadd.f32 %v1009, %v1150
      %v1273 = vadd.f32 %v1010, %v1155
      %v1274 = vadd.f32 %v1011, %v1160
      %v1275 = vadd.f32 %v1012, %v1165
      %v1276 = vadd.f32 %v1013, %v1170
      %v1277 = vadd.f32 %v1014, %v1175
      %v1278 = vadd.f32 %v1015, %v1180
      %v1279 = vadd.f32 %v1016, %v1185
      %v1280 = vadd.f32 %v1017, %v1190
      %v1281 = vadd.f32 %v1018, %v1195
      %v1282 = vadd.f32 %v1019, %v1200
      %v1283 = vadd.f32 %v1020, %v1205
      %v1284 = vadd.f32 %v1021, %v1210
      %v1285 = vadd.f32 %v1022, %v1215
      %v1286 = vadd.f32 %v1023, %v1220
      %v1287 = vadd.f32 %v1024, %v1225
      %v1288 = vadd.f32 %v1025, %v1230
      %v1289 = vadd.f32 %v1026, %v1235
      %v1290 = vadd.f32 %v1027, %v1240
      %v1291 = vadd.f32 %v1028, %v1245
      %v1292 = vadd.f32 %v1029, %v1250
      %v1293 = vadd.f32 %v1030, %v1255
      %v1294 = vadd.f32 %v1031, %v1260
      %v1296 = vsel %vm216, %v209, 0
      %v1299 = vsel %vm216, %v210, 0
      %1301 = vmatprep.subr.mxu0 0.0
      %1302 = vmatpush1.msra.mxu0 0.0
      %1303 = vmatprep.subr.mxu0 0.0
      %1304 = vmatpush1.msra.mxu0 0.0
      %1305 = vmatprep.subr.mxu0 0.0
      %1306 = vmatpush1.msra.mxu0 0.0
      %1307 = vmatprep.subr.mxu0 0.0
      %1308 = vmatpush1.msra.mxu0 0.0
      %1309 = vmatprep.subr.mxu0 0.0
      %1310 = vmatpush1.msra.mxu0 0.0
      %1311 = vmatprep.subr.mxu0 0.0
      %1312 = vmatpush1.msra.mxu0 0.0
      %1313 = vmatprep.subr.mxu0 0.0
      %1314 = vmatpush1.msra.mxu0 0.0
      %1315 = vmatprep.subr.mxu0 0.0
      %1316 = vmatpush1.msra.mxu0 0.0
      %1317 = vmatprep.subr.mxu0 0.0
      %1318 = vmatpush1.msra.mxu0 0.0
      %1319 = vmatprep.subr.mxu0 0.0
      %1320 = vmatpush1.msra.mxu0 0.0
      %1321 = vmatprep.subr.mxu0 0.0
      %1322 = vmatpush1.msra.mxu0 0.0
      %1323 = vmatprep.subr.mxu0 0.0
      %1324 = vmatpush1.msra.mxu0 0.0
      %1325 = vmatprep.subr.mxu0 0.0
      %1326 = vmatpush1.msra.mxu0 0.0
      %1327 = vmatprep.subr.mxu0 0.0
      %1328 = vmatpush1.msra.mxu0 0.0
      %1329 = vmatprep.subr.mxu0 0.0
      %1330 = vmatpush1.msra.mxu0 0.0
      %1331 = vmatprep.subr.mxu0 0.0
      %1332 = vmatpush1.msra.mxu0 %v215
      %1333 = vmatprep.subr.mxu0 0.0
      %1334 = vmatpush2.msra.mxu0 0.0
      %1335 = vmatprep.subr.mxu0 0.0
      %1336 = vmatpush2.msra.mxu0 0.0
      %1337 = vmatprep.subr.mxu0 0.0
      %1338 = vmatpush2.msra.mxu0 0.0
      %1339 = vmatprep.subr.mxu0 0.0
      %1340 = vmatpush2.msra.mxu0 0.0
      %1341 = vmatprep.subr.mxu0 0.0
      %1342 = vmatpush2.msra.mxu0 0.0
      %1343 = vmatprep.subr.mxu0 0.0
      %1344 = vmatpush2.msra.mxu0 0.0
      %1345 = vmatprep.subr.mxu0 0.0
      %1346 = vmatpush2.msra.mxu0 0.0
      %1347 = vmatprep.subr.mxu0 0.0
      %1348 = vmatpush2.msra.mxu0 0.0
      %1349 = vmatprep.subr.mxu0 0.0
      %1350 = vmatpush2.msra.mxu0 0.0
      %1351 = vmatprep.subr.mxu0 0.0
      %1352 = vmatpush2.msra.mxu0 0.0
      %1353 = vmatprep.subr.mxu0 0.0
      %1354 = vmatpush2.msra.mxu0 0.0
      %1355 = vmatprep.subr.mxu0 0.0
      %1356 = vmatpush2.msra.mxu0 0.0
      %1357 = vmatprep.subr.mxu0 0.0
      %1358 = vmatpush2.msra.mxu0 0.0
      %1359 = vmatprep.subr.mxu0 0.0
      %1360 = vmatpush2.msra.mxu0 0.0
      %1361 = vmatprep.subr.mxu0 0.0
      %1362 = vmatpush2.msra.mxu0 0.0
      %1363 = vmatprep.subr.mxu0 0.0
      %1364 = vmatpush2.msra.mxu0 0.0
      %1365 = vmatprep.mubr.f32.mxu0 0.0
      %1366 = vmatmul.mubr.f32.gmra.mxu0 %v236
      %v1367 = vpop.f32.mrf.mxu0
      %v1368 = vadd.f32 0.0, %v1367
      %v1369 = vpop.f32.mrf.mxu0
      %1370 = vmatprep.mubr.f32.mxu0 0.0
      %1371 = vmatmul.mubr.f32.gmra.mxu0 %v239
      %v1372 = vpop.f32.mrf.mxu0
      %v1373 = vadd.f32 0.0, %v1372
      %v1374 = vpop.f32.mrf.mxu0
      %1375 = vmatprep.mubr.f32.mxu0 0.0
      %1376 = vmatmul.mubr.f32.gmra.mxu0 %v242
      %v1377 = vpop.f32.mrf.mxu0
      %v1378 = vadd.f32 0.0, %v1377
      %v1379 = vpop.f32.mrf.mxu0
      %1380 = vmatprep.mubr.f32.mxu0 0.0
      %1381 = vmatmul.mubr.f32.gmra.mxu0 %v245
      %v1382 = vpop.f32.mrf.mxu0
      %v1383 = vadd.f32 0.0, %v1382
      %v1384 = vpop.f32.mrf.mxu0
      %1385 = vmatprep.mubr.f32.mxu0 0.0
      %1386 = vmatmul.mubr.f32.gmra.mxu0 %v248
      %v1387 = vpop.f32.mrf.mxu0
      %v1388 = vadd.f32 0.0, %v1387
      %v1389 = vpop.f32.mrf.mxu0
      %1390 = vmatprep.mubr.f32.mxu0 0.0
      %1391 = vmatmul.mubr.f32.gmra.mxu0 %v251
      %v1392 = vpop.f32.mrf.mxu0
      %v1393 = vadd.f32 0.0, %v1392
      %v1394 = vpop.f32.mrf.mxu0
      %1395 = vmatprep.mubr.f32.mxu0 0.0
      %1396 = vmatmul.mubr.f32.gmra.mxu0 %v254
      %v1397 = vpop.f32.mrf.mxu0
      %v1398 = vadd.f32 0.0, %v1397
      %v1399 = vpop.f32.mrf.mxu0
      %1400 = vmatprep.mubr.f32.mxu0 0.0
      %1401 = vmatmul.mubr.f32.gmra.mxu0 %v257
      %v1402 = vpop.f32.mrf.mxu0
      %v1403 = vadd.f32 0.0, %v1402
      %v1404 = vpop.f32.mrf.mxu0
      %1405 = vmatprep.mubr.f32.mxu0 0.0
      %1406 = vmatmul.mubr.f32.gmra.mxu0 %v260
      %v1407 = vpop.f32.mrf.mxu0
      %v1408 = vadd.f32 0.0, %v1407
      %v1409 = vpop.f32.mrf.mxu0
      %1410 = vmatprep.mubr.f32.mxu0 0.0
      %1411 = vmatmul.mubr.f32.gmra.mxu0 %v263
      %v1412 = vpop.f32.mrf.mxu0
      %v1413 = vadd.f32 0.0, %v1412
      %v1414 = vpop.f32.mrf.mxu0
      %1415 = vmatprep.mubr.f32.mxu0 0.0
      %1416 = vmatmul.mubr.f32.gmra.mxu0 %v266
      %v1417 = vpop.f32.mrf.mxu0
      %v1418 = vadd.f32 0.0, %v1417
      %v1419 = vpop.f32.mrf.mxu0
      %1420 = vmatprep.mubr.f32.mxu0 0.0
      %1421 = vmatmul.mubr.f32.gmra.mxu0 %v269
      %v1422 = vpop.f32.mrf.mxu0
      %v1423 = vadd.f32 0.0, %v1422
      %v1424 = vpop.f32.mrf.mxu0
      %1425 = vmatprep.mubr.f32.mxu0 0.0
      %1426 = vmatmul.mubr.f32.gmra.mxu0 %v272
      %v1427 = vpop.f32.mrf.mxu0
      %v1428 = vadd.f32 0.0, %v1427
      %v1429 = vpop.f32.mrf.mxu0
      %1430 = vmatprep.mubr.f32.mxu0 0.0
      %1431 = vmatmul.mubr.f32.gmra.mxu0 %v275
      %v1432 = vpop.f32.mrf.mxu0
      %v1433 = vadd.f32 0.0, %v1432
      %v1434 = vpop.f32.mrf.mxu0
      %1435 = vmatprep.mubr.f32.mxu0 0.0
      %1436 = vmatmul.mubr.f32.gmra.mxu0 %v278
      %v1437 = vpop.f32.mrf.mxu0
      %v1438 = vadd.f32 0.0, %v1437
      %v1439 = vpop.f32.mrf.mxu0
      %1440 = vmatprep.mubr.f32.mxu0 0.0
      %1441 = vmatmul.mubr.f32.gmra.mxu0 %v281
      %v1442 = vpop.f32.mrf.mxu0
      %v1443 = vadd.f32 0.0, %v1442
      %v1444 = vpop.f32.mrf.mxu0
      %1445 = vmatprep.mubr.f32.mxu0 0.0
      %1446 = vmatmul.mubr.f32.gmra.mxu0 %v284
      %v1447 = vpop.f32.mrf.mxu0
      %v1448 = vadd.f32 0.0, %v1447
      %v1449 = vpop.f32.mrf.mxu0
      %1450 = vmatprep.mubr.f32.mxu0 0.0
      %1451 = vmatmul.mubr.f32.gmra.mxu0 %v287
      %v1452 = vpop.f32.mrf.mxu0
      %v1453 = vadd.f32 0.0, %v1452
      %v1454 = vpop.f32.mrf.mxu0
      %1455 = vmatprep.mubr.f32.mxu0 0.0
      %1456 = vmatmul.mubr.f32.gmra.mxu0 %v290
      %v1457 = vpop.f32.mrf.mxu0
      %v1458 = vadd.f32 0.0, %v1457
      %v1459 = vpop.f32.mrf.mxu0
      %1460 = vmatprep.mubr.f32.mxu0 0.0
      %1461 = vmatmul.mubr.f32.gmra.mxu0 %v293
      %v1462 = vpop.f32.mrf.mxu0
      %v1463 = vadd.f32 0.0, %v1462
      %v1464 = vpop.f32.mrf.mxu0
      %1465 = vmatprep.mubr.f32.mxu0 0.0
      %1466 = vmatmul.mubr.f32.gmra.mxu0 %v296
      %v1467 = vpop.f32.mrf.mxu0
      %v1468 = vadd.f32 0.0, %v1467
      %v1469 = vpop.f32.mrf.mxu0
      %1470 = vmatprep.mubr.f32.mxu0 0.0
      %1471 = vmatmul.mubr.f32.gmra.mxu0 %v299
      %v1472 = vpop.f32.mrf.mxu0
      %v1473 = vadd.f32 0.0, %v1472
      %v1474 = vpop.f32.mrf.mxu0
      %1475 = vmatprep.mubr.f32.mxu0 0.0
      %1476 = vmatmul.mubr.f32.gmra.mxu0 %v302
      %v1477 = vpop.f32.mrf.mxu0
      %v1478 = vadd.f32 0.0, %v1477
      %v1479 = vpop.f32.mrf.mxu0
      %1480 = vmatprep.mubr.f32.mxu0 0.0
      %1481 = vmatmul.mubr.f32.gmra.mxu0 %v305
      %v1482 = vpop.f32.mrf.mxu0
      %v1483 = vadd.f32 0.0, %v1482
      %v1484 = vpop.f32.mrf.mxu0
      %1485 = vmatprep.mubr.f32.mxu0 0.0
      %1486 = vmatmul.mubr.f32.gmra.mxu0 %v308
      %v1487 = vpop.f32.mrf.mxu0
      %v1488 = vadd.f32 0.0, %v1487
      %v1489 = vpop.f32.mrf.mxu0
      %1490 = vmatprep.mubr.f32.mxu0 0.0
      %1491 = vmatmul.mubr.f32.gmra.mxu0 %v311
      %v1492 = vpop.f32.mrf.mxu0
      %v1493 = vadd.f32 0.0, %v1492
      %v1494 = vpop.f32.mrf.mxu0
      %1495 = vmatprep.mubr.f32.mxu0 0.0
      %1496 = vmatmul.mubr.f32.gmra.mxu0 %v770
      %v1497 = vpop.f32.mrf.mxu0
      %v1498 = vadd.f32 0.0, %v1497
      %v1499 = vpop.f32.mrf.mxu0
      %1500 = vmatprep.mubr.f32.mxu0 0.0
      %1501 = vmatmul.mubr.f32.gmra.mxu0 %v773
      %v1502 = vpop.f32.mrf.mxu0
      %v1503 = vadd.f32 0.0, %v1502
      %v1504 = vpop.f32.mrf.mxu0
      %1505 = vmatprep.mubr.f32.mxu0 0.0
      %1506 = vmatmul.mubr.f32.gmra.mxu0 %v1033
      %v1507 = vpop.f32.mrf.mxu0
      %v1508 = vadd.f32 0.0, %v1507
      %v1509 = vpop.f32.mrf.mxu0
      %1510 = vmatprep.mubr.f32.mxu0 0.0
      %1511 = vmatmul.mubr.f32.gmra.mxu0 %v1036
      %v1512 = vpop.f32.mrf.mxu0
      %v1513 = vadd.f32 0.0, %v1512
      %v1514 = vpop.f32.mrf.mxu0
      %1515 = vmatprep.mubr.f32.mxu0 0.0
      %1516 = vmatmul.mubr.f32.gmra.mxu0 %v1296
      %v1517 = vpop.f32.mrf.mxu0
      %v1518 = vadd.f32 0.0, %v1517
      %v1519 = vpop.f32.mrf.mxu0
      %1520 = vmatprep.mubr.f32.mxu0 0.0
      %1521 = vmatmul.mubr.f32.gmra.mxu0 %v1299
      %v1522 = vpop.f32.mrf.mxu0
      %v1523 = vadd.f32 0.0, %v1522
      %v1524 = vpop.f32.mrf.mxu0
      %1525 = vdwg.mxu0
      %v1526 = vadd.f32 %v1263, %v1368
      %v1527 = vadd.f32 %v1264, %v1373
      %v1528 = vadd.f32 %v1265, %v1378
      %v1529 = vadd.f32 %v1266, %v1383
      %v1530 = vadd.f32 %v1267, %v1388
      %v1531 = vadd.f32 %v1268, %v1393
      %v1532 = vadd.f32 %v1269, %v1398
      %v1533 = vadd.f32 %v1270, %v1403
      %v1534 = vadd.f32 %v1271, %v1408
      %v1535 = vadd.f32 %v1272, %v1413
      %v1536 = vadd.f32 %v1273, %v1418
      %v1537 = vadd.f32 %v1274, %v1423
      %v1538 = vadd.f32 %v1275, %v1428
      %v1539 = vadd.f32 %v1276, %v1433
      %v1540 = vadd.f32 %v1277, %v1438
      %v1541 = vadd.f32 %v1278, %v1443
      %v1542 = vadd.f32 %v1279, %v1448
      %v1543 = vadd.f32 %v1280, %v1453
      %v1544 = vadd.f32 %v1281, %v1458
      %v1545 = vadd.f32 %v1282, %v1463
      %v1546 = vadd.f32 %v1283, %v1468
      %v1547 = vadd.f32 %v1284, %v1473
      %v1548 = vadd.f32 %v1285, %v1478
      %v1549 = vadd.f32 %v1286, %v1483
      %v1550 = vadd.f32 %v1287, %v1488
      %v1551 = vadd.f32 %v1288, %v1493
      %v1552 = vadd.f32 %v1289, %v1498
      %v1553 = vadd.f32 %v1290, %v1503
      %v1554 = vadd.f32 %v1291, %v1508
      %v1555 = vadd.f32 %v1292, %v1513
      %v1556 = vadd.f32 %v1293, %v1518
      %v1557 = vadd.f32 %v1294, %v1523
      %v1558 = vld [vmem:[%s2] sm:$0x1]
      %v1560 = vlaneseq
      %v1561 = vshrl.u32 %v1560, 7
      %v1562 = vsub.s32 0, %v1561
      %v1563 = vrot.slane %v1558, %v1562
      %v1565 = vadd.f32 %v1526, %v1563
      %v1566 = vadd.f32 %v1527, %v1563
      %v1567 = vadd.f32 %v1528, %v1563
      %v1568 = vadd.f32 %v1529, %v1563
      %v1569 = vadd.f32 %v1530, %v1563
      %v1570 = vadd.f32 %v1531, %v1563
      %v1571 = vadd.f32 %v1532, %v1563
      %v1572 = vadd.f32 %v1533, %v1563
      %v1573 = vadd.f32 %v1534, %v1563
      %v1574 = vadd.f32 %v1535, %v1563
      %v1575 = vadd.f32 %v1536, %v1563
      %v1576 = vadd.f32 %v1537, %v1563
      %v1577 = vadd.f32 %v1538, %v1563
      %v1578 = vadd.f32 %v1539, %v1563
      %v1579 = vadd.f32 %v1540, %v1563
      %v1580 = vadd.f32 %v1541, %v1563
      %v1581 = vadd.f32 %v1542, %v1563
      %v1582 = vadd.f32 %v1543, %v1563
      %v1583 = vadd.f32 %v1544, %v1563
      %v1584 = vadd.f32 %v1545, %v1563
      %v1585 = vadd.f32 %v1546, %v1563
      %v1586 = vadd.f32 %v1547, %v1563
      %v1587 = vadd.f32 %v1548, %v1563
      %v1588 = vadd.f32 %v1549, %v1563
      %v1589 = vadd.f32 %v1550, %v1563
      %v1590 = vadd.f32 %v1551, %v1563
      %v1591 = vadd.f32 %v1552, %v1563
      %v1592 = vadd.f32 %v1553, %v1563
      %v1593 = vadd.f32 %v1554, %v1563
      %v1594 = vadd.f32 %v1555, %v1563
      %v1595 = vadd.f32 %v1556, %v1563
      %v1596 = vadd.f32 %v1557, %v1563
      %vm1597 = vcmp.ge.f32.partialorder %v1565, 0.0
      %vm1598 = vcmp.ge.f32.partialorder %v1566, 0.0
      %vm1599 = vcmp.ge.f32.partialorder %v1567, 0.0
      %vm1600 = vcmp.ge.f32.partialorder %v1568, 0.0
      %vm1601 = vcmp.ge.f32.partialorder %v1569, 0.0
      %vm1602 = vcmp.ge.f32.partialorder %v1570, 0.0
      %vm1603 = vcmp.ge.f32.partialorder %v1571, 0.0
      %vm1604 = vcmp.ge.f32.partialorder %v1572, 0.0
      %vm1605 = vcmp.ge.f32.partialorder %v1573, 0.0
      %vm1606 = vcmp.ge.f32.partialorder %v1574, 0.0
      %vm1607 = vcmp.ge.f32.partialorder %v1575, 0.0
      %vm1608 = vcmp.ge.f32.partialorder %v1576, 0.0
      %vm1609 = vcmp.ge.f32.partialorder %v1577, 0.0
      %vm1610 = vcmp.ge.f32.partialorder %v1578, 0.0
      %vm1611 = vcmp.ge.f32.partialorder %v1579, 0.0
      %vm1612 = vcmp.ge.f32.partialorder %v1580, 0.0
      %vm1613 = vcmp.ge.f32.partialorder %v1581, 0.0
      %vm1614 = vcmp.ge.f32.partialorder %v1582, 0.0
      %vm1615 = vcmp.ge.f32.partialorder %v1583, 0.0
      %vm1616 = vcmp.ge.f32.partialorder %v1584, 0.0
      %vm1617 = vcmp.ge.f32.partialorder %v1585, 0.0
      %vm1618 = vcmp.ge.f32.partialorder %v1586, 0.0
      %vm1619 = vcmp.ge.f32.partialorder %v1587, 0.0
      %vm1620 = vcmp.ge.f32.partialorder %v1588, 0.0
      %vm1621 = vcmp.ge.f32.partialorder %v1589, 0.0
      %vm1622 = vcmp.ge.f32.partialorder %v1590, 0.0
      %vm1623 = vcmp.ge.f32.partialorder %v1591, 0.0
      %vm1624 = vcmp.ge.f32.partialorder %v1592, 0.0
      %vm1625 = vcmp.ge.f32.partialorder %v1593, 0.0
      %vm1626 = vcmp.ge.f32.partialorder %v1594, 0.0
      %vm1627 = vcmp.ge.f32.partialorder %v1595, 0.0
      %vm1628 = vcmp.ge.f32.partialorder %v1596, 0.0
      %v1629 = vmul.f32 %v1565, 0.01
      %v1630 = vmul.f32 %v1566, 0.01
      %v1631 = vmul.f32 %v1567, 0.01
      %v1632 = vmul.f32 %v1568, 0.01
      %v1633 = vmul.f32 %v1569, 0.01
      %v1634 = vmul.f32 %v1570, 0.01
      %v1635 = vmul.f32 %v1571, 0.01
      %v1636 = vmul.f32 %v1572, 0.01
      %v1637 = vmul.f32 %v1573, 0.01
      %v1638 = vmul.f32 %v1574, 0.01
      %v1639 = vmul.f32 %v1575, 0.01
      %v1640 = vmul.f32 %v1576, 0.01
      %v1641 = vmul.f32 %v1577, 0.01
      %v1642 = vmul.f32 %v1578, 0.01
      %v1643 = vmul.f32 %v1579, 0.01
      %v1644 = vmul.f32 %v1580, 0.01
      %v1645 = vmul.f32 %v1581, 0.01
      %v1646 = vmul.f32 %v1582, 0.01
      %v1647 = vmul.f32 %v1583, 0.01
      %v1648 = vmul.f32 %v1584, 0.01
      %v1649 = vmul.f32 %v1585, 0.01
      %v1650 = vmul.f32 %v1586, 0.01
      %v1651 = vmul.f32 %v1587, 0.01
      %v1652 = vmul.f32 %v1588, 0.01
      %v1653 = vmul.f32 %v1589, 0.01
      %v1654 = vmul.f32 %v1590, 0.01
      %v1655 = vmul.f32 %v1591, 0.01
      %v1656 = vmul.f32 %v1592, 0.01
      %v1657 = vmul.f32 %v1593, 0.01
      %v1658 = vmul.f32 %v1594, 0.01
      %v1659 = vmul.f32 %v1595, 0.01
      %v1660 = vmul.f32 %v1596, 0.01
      %v1661 = vsel %vm1597, %v1565, %v1629
      %v1662 = vsel %vm1598, %v1566, %v1630
      %v1663 = vsel %vm1599, %v1567, %v1631
      %v1664 = vsel %vm1600, %v1568, %v1632
      %v1665 = vsel %vm1601, %v1569, %v1633
      %v1666 = vsel %vm1602, %v1570, %v1634
      %v1667 = vsel %vm1603, %v1571, %v1635
      %v1668 = vsel %vm1604, %v1572, %v1636
      %v1669 = vsel %vm1605, %v1573, %v1637
      %v1670 = vsel %vm1606, %v1574, %v1638
      %v1671 = vsel %vm1607, %v1575, %v1639
      %v1672 = vsel %vm1608, %v1576, %v1640
      %v1673 = vsel %vm1609, %v1577, %v1641
      %v1674 = vsel %vm1610, %v1578, %v1642
      %v1675 = vsel %vm1611, %v1579, %v1643
      %v1676 = vsel %vm1612, %v1580, %v1644
      %v1677 = vsel %vm1613, %v1581, %v1645
      %v1678 = vsel %vm1614, %v1582, %v1646
      %v1679 = vsel %vm1615, %v1583, %v1647
      %v1680 = vsel %vm1616, %v1584, %v1648
      %v1681 = vsel %vm1617, %v1585, %v1649
      %v1682 = vsel %vm1618, %v1586, %v1650
      %v1683 = vsel %vm1619, %v1587, %v1651
      %v1684 = vsel %vm1620, %v1588, %v1652
      %v1685 = vsel %vm1621, %v1589, %v1653
      %v1686 = vsel %vm1622, %v1590, %v1654
      %v1687 = vsel %vm1623, %v1591, %v1655
      %v1688 = vsel %vm1624, %v1592, %v1656
      %v1689 = vsel %vm1625, %v1593, %v1657
      %v1690 = vsel %vm1626, %v1594, %v1658
      %v1691 = vsel %vm1627, %v1595, %v1659
      %v1692 = vsel %vm1628, %v1596, %v1660
      %1693 = vst.msk [vmem:[%s170] sm:$0xff] %vm216, %v1661
      %1694 = vst.msk [vmem:[%s170 + $0x8] sm:$0xff] %vm216, %v1662
      %1695 = vst.msk [vmem:[%s170 + $0x10] sm:$0xff] %vm216, %v1663
      %1696 = vst.msk [vmem:[%s170 + $0x18] sm:$0xff] %vm216, %v1664
      %1697 = vst.msk [vmem:[%s170 + $0x20] sm:$0xff] %vm216, %v1665
      %1698 = vst.msk [vmem:[%s170 + $0x28] sm:$0xff] %vm216, %v1666
      %1699 = vst.msk [vmem:[%s170 + $0x30] sm:$0xff] %vm216, %v1667
      %1700 = vst.msk [vmem:[%s170 + $0x38] sm:$0xff] %vm216, %v1668
      %1701 = vst.msk [vmem:[%s170 + $0x40] sm:$0xff] %vm216, %v1669
      %1702 = vst.msk [vmem:[%s170 + $0x48] sm:$0xff] %vm216, %v1670
      %1703 = vst.msk [vmem:[%s170 + $0x50] sm:$0xff] %vm216, %v1671
      %1704 = vst.msk [vmem:[%s170 + $0x58] sm:$0xff] %vm216, %v1672
      %1705 = vst.msk [vmem:[%s170 + $0x60] sm:$0xff] %vm216, %v1673
      %1706 = vst.msk [vmem:[%s170 + $0x68] sm:$0xff] %vm216, %v1674
      %1707 = vst.msk [vmem:[%s170 + $0x70] sm:$0xff] %vm216, %v1675
      %1708 = vst.msk [vmem:[%s170 + $0x78] sm:$0xff] %vm216, %v1676
      %1709 = vst.msk [vmem:[%s170 + $0x80] sm:$0xff] %vm216, %v1677
      %1710 = vst.msk [vmem:[%s170 + $0x88] sm:$0xff] %vm216, %v1678
      %1711 = vst.msk [vmem:[%s170 + $0x90] sm:$0xff] %vm216, %v1679
      %1712 = vst.msk [vmem:[%s170 + $0x98] sm:$0xff] %vm216, %v1680
      %1713 = vst.msk [vmem:[%s170 + $0xa0] sm:$0xff] %vm216, %v1681
      %1714 = vst.msk [vmem:[%s170 + $0xa8] sm:$0xff] %vm216, %v1682
      %1715 = vst.msk [vmem:[%s170 + $0xb0] sm:$0xff] %vm216, %v1683
      %1716 = vst.msk [vmem:[%s170 + $0xb8] sm:$0xff] %vm216, %v1684
      %1717 = vst.msk [vmem:[%s170 + $0xc0] sm:$0xff] %vm216, %v1685
      %1718 = vst.msk [vmem:[%s170 + $0xc8] sm:$0xff] %vm216, %v1686
      %1719 = vst.msk [vmem:[%s170 + $0xd0] sm:$0xff] %vm216, %v1687
      %1720 = vst.msk [vmem:[%s170 + $0xd8] sm:$0xff] %vm216, %v1688
      %1721 = vst.msk [vmem:[%s170 + $0xe0] sm:$0xff] %vm216, %v1689
      %1722 = vst.msk [vmem:[%s170 + $0xe8] sm:$0xff] %vm216, %v1690
      %1723 = vst.msk [vmem:[%s170 + $0xf0] sm:$0xff] %vm216, %v1691
      %1724 = vst.msk [vmem:[%s170 + $0xf8] sm:$0xff] %vm216, %v1692
      %p1725 = scmp.lt.s32.totalorder %s14, 1
      %s1726 = scalar_select %p1725, %s14, 1
      %s1727 = smul.addr %s1726, 32
      %s1728 = smul.addr %s1727, 8
      %s1729 = scalar_lea.vmem %s3, %s1728
      // Predicated region
      $region33: #{esab_forward.14} parent=31 // pred_check
        %p1730 = pneg %p100
      $region34: #{esab_forward.14} parent=31 // pred_check_branch
        %1732 = sbr.rel (%p1730) target = $region36
      $region35: #{esab_forward.14} parent=31 // pred_region
        _
      $region36: #{esab_forward.14} parent=31 // pred_fallthru
        _
    $region32: #{esab_forward.14} parent=5 // pred_fallthru
      _
    %p1733 = scmp.le.s32.totalorder 2, %s9
    // Predicated region
    $region37: #{esab_forward.14} parent=5 // pred_check
      %p1734 = pneg %p1733
    $region38: #{esab_forward.14} parent=5 // pred_check_branch
      %1736 = sbr.rel (%p1734) target = $region40
    $region39: #{esab_forward.14} parent=5 // pred_region
      %s1737 = ssub.s32 %s9, 2
      // Predicated region
      $region41: #{esab_forward.14} parent=39 // pred_check
        %p1738 = pneg %p106
      $region42: #{esab_forward.14} parent=39 // pred_check_branch
        %1740 = sbr.rel (%p1738) target = $region44
      $region43: #{esab_forward.14} parent=39 // pred_region
        %p1741 = scmp.lt.s32.totalorder %s15, 1
        %s1742 = scalar_select %p1741, %s15, 1
        %s1743 = smul.addr %s1742, 32
        %s1744 = smul.addr %s1743, 8
        %s1745 = scalar_lea.vmem %s3, %s1744
      $region44: #{esab_forward.14} parent=39 // pred_fallthru
        _
    $region40: #{esab_forward.14} parent=5 // pred_fallthru
      _
  $region6: #{esab_forward.14} parent=0 // loop_footer
    %s13 = sadd.s32 1, %s9
  $region7: #{esab_forward.14} parent=0 // loop_footer_branch
    %8 = sbr.rel target = $region3
  $region8: #{esab_forward.14} parent=0 // loop_exit
    _

</llo_original>
